<compile_context>
chip_gen: v6e
topology: v6e:2x2x1
jax: 0.10.0
libtpu: 0.0.40
codegen_flags: <defaults>
</compile_context>

<pallas_src>
import math

import numpy as np
import jax
import jax.numpy as jnp
from jax.experimental import pallas as pl
from jax.experimental.pallas import tpu as pltpu

H = 32                  # hidden size (small test value for config.hidden_sizes[0])
NUM_HEADS = 4           # assumed head count for MHA(hidden)
DH = H // NUM_HEADS
F_TOK = 16              # padded token features: [pred(2) prey(2) obst(3) onehot(3) pad]
ONEHOT_COL = 7
BT_MAX = 64             # batch elements per grid step (Tp=128, Ta=640 for N=10, Np=2)
NEG_INF = -1e30

# --- parameter slab row layout (lane width = 4*H = 128) -----------------------
R_W1 = 0                      # rows [0,16):   fused encoder layer 1 (16, 128)
R_W2 = R_W1 + F_TOK           # rows [16,144): [W2@Wq*inv_sqrt | W2@Wk | W2@Wv]
R_NET = R_W2 + 4 * H          # rows [144,176):[Wo@nw1 | nw2 | unused]
R_BIAS = R_NET + H            # row  176:      [bo@nw1+nb1 | nb2 | nb3 | nw3^T]
SLAB_ROWS = ((R_BIAS + 1 + 7) // 8) * 8   # 184 (rows 177..183 are zero padding)
SLAB_COLS = 4 * H                          # 128


# -----------------------------------------------------------------------------
# Pallas kernel: one batch block (Bt batch elements, type-major tokens) per step.
# -----------------------------------------------------------------------------
def _actor_kernel(tok_ref, rowb_ref, colb_ref, slab_ref, out_ref, attn_scr):
    f32 = jnp.float32
    Tp = rowb_ref.shape[0]                       # queries in this batch block

    # parameter slab (single VMEM buffer, static slices)
    w1 = slab_ref[R_W1:R_W1 + F_TOK, :]          # (16, 128)
    w2 = slab_ref[R_W2:R_W2 + 4 * H, :]          # (128, 128)
    w3 = slab_ref[R_NET:R_NET + H, :]            # (32, 128)
    brow = slab_ref[R_BIAS:R_BIAS + 1, :]        # (1, 128)
    nw3_8 = slab_ref[R_BIAS:SLAB_ROWS, 3 * H:4 * H]   # (8, H); row 0 = nw3^T, rest 0

    w2q = w2[:, 0:H]                             # encoder-2 fused with Wq (+bq, *1/sqrt(dh))
    w2kv = w2[:, H:3 * H]                        # encoder-2 fused with [Wk|Wv] (+bk,bv)
    wo1 = w3[:, 0:H]                             # Wo @ nw1
    nw2 = w3[:, H:2 * H]
    bo1 = brow[:, 0:H]                           # bo @ nw1 + nb1
    nb2 = brow[:, H:2 * H]
    nb3 = brow[:, 2 * H:2 * H + 1]

    tok = tok_ref[...]                           # (Ta, 16): [pred | prey | obst] of the block

    # fused per-entity encoders (block-diag W1, biases/embedding via one-hot rows)
    h_a = jnp.maximum(jnp.dot(tok, w1, preferred_element_type=f32), 0.0)     # (Ta, 128)
    h_p = h_a[0:Tp, :]                           # predators (queries) = leading rows, free slice

    q = jnp.dot(h_p, w2q, preferred_element_type=f32)                        # (Tp, H), pre-scaled
    kv = jnp.dot(h_a, w2kv, preferred_element_type=f32)                      # (Ta, 2H)
    k = kv[:, 0:H]
    v = kv[:, H:2 * H]

    # block-diagonal batch mask from tiny id vectors (no quadratic HBM input)
    mask = jnp.where(rowb_ref[...] == colb_ref[...], 0.0, NEG_INF).astype(f32)  # (Tp, Ta)

    # multi-head attention over the whole batch block; per-head output written to a
    # (Tp, H) VMEM scratch at static column offsets (no lane concatenation).
    for hd in range(NUM_HEADS):
        sl = slice(hd * DH, (hd + 1) * DH)
        s = jnp.dot(q[:, sl], k[:, sl].T, preferred_element_type=f32) + mask
        s = s - jnp.max(s, axis=-1, keepdims=True)
        p = jnp.exp(s)
        p = p * pl.reciprocal(jnp.sum(p, axis=-1, keepdims=True), approx=True)
        attn_scr[:, sl] = jnp.dot(p, v[:, sl], preferred_element_type=f32)

    attn = attn_scr[...]                                                     # (Tp, H)

    # output head: (Wo fused into first Linear) / ReLU / Linear / ReLU / Linear / Tanh
    h1 = jnp.maximum(jnp.dot(attn, wo1, preferred_element_type=f32) + bo1, 0.0)
    h2 = jnp.maximum(jnp.dot(h1, nw2, preferred_element_type=f32) + nb2, 0.0)
    # final Linear in transposed form -> lane-dense (1, Tp) output block
    y8 = jnp.dot(nw3_8, h2.T, preferred_element_type=f32)                    # (8, Tp); row 0 valid
    out_ref[...] = jnp.tanh(y8[0:1, :] + nb3).reshape(1, 1, Tp)


# -----------------------------------------------------------------------------
# Parameter initialization (deterministic, synthetic) — unchanged semantics.
# -----------------------------------------------------------------------------
def _xavier(key, shape):
    fan_in, fan_out = shape[0], shape[1]
    std = (2.0 / (fan_in + fan_out)) ** 0.5
    return std * jax.random.normal(key, shape, dtype=jnp.float32)


def _bias(key, width):
    return jax.random.uniform(key, (1, width), jnp.float32, -0.1, 0.1)


def init_params(key):
    keys = iter(jax.random.split(key, 64))
    p = {}
    p["emb"] = _xavier(next(keys), (3, H))
    for pref, in_dim in (("p", 2), ("y", 2), ("o", 3)):       # entity encoders
        p[pref + "w1"] = _xavier(next(keys), (in_dim, H))
        p[pref + "b1"] = _bias(next(keys), H)
        p[pref + "w2"] = _xavier(next(keys), (H, H))
        p[pref + "b2"] = _bias(next(keys), H)
    for pref in ("q", "k", "v", "o"):                         # MHA(H)
        p["w" + pref] = _xavier(next(keys), (H, H))
        p["b" + pref] = _bias(next(keys), H)
    p["nw1"] = _xavier(next(keys), (H, H))                    # net FFN([H,H,H,1]) + Tanh
    p["nb1"] = _bias(next(keys), H)
    p["nw2"] = _xavier(next(keys), (H, H))
    p["nb2"] = _bias(next(keys), H)
    p["nw3"] = jax.random.uniform(next(keys), (H, 1), jnp.float32, -0.01, 0.01)
    p["nb3"] = jnp.zeros((1, 1), jnp.float32)
    return p


# -----------------------------------------------------------------------------
# Host-side packing (computed ONCE per parameter set, not in the forward path).
# -----------------------------------------------------------------------------
def build_slab(p):
    f32 = jnp.float32
    inv_sqrt = 1.0 / math.sqrt(DH)

    # fused encoder layer 1: block-diagonal weights + per-type biases + one-hot passthrough
    w1 = jnp.zeros((F_TOK, SLAB_COLS), f32)
    w1 = w1.at[0:2, 0:H].set(p["pw1"])
    w1 = w1.at[2:4, H:2 * H].set(p["yw1"])
    w1 = w1.at[4:7, 2 * H:3 * H].set(p["ow1"])
    w1 = w1.at[7, 0:H].set(p["pb1"][0])
    w1 = w1.at[8, H:2 * H].set(p["yb1"][0])
    w1 = w1.at[9, 2 * H:3 * H].set(p["ob1"][0])
    w1 = w1.at[7, 3 * H + 0].set(1.0)     # one-hot passthrough (0/1 survives the ReLU)
    w1 = w1.at[8, 3 * H + 1].set(1.0)
    w1 = w1.at[9, 3 * H + 2].set(1.0)

    # fused encoder layer 2 (stacked per-type W2) + b2 + type embedding via one-hot rows
    w2 = jnp.zeros((4 * H, H), f32)
    w2 = w2.at[0:H].set(p["pw2"])
    w2 = w2.at[H:2 * H].set(p["yw2"])
    w2 = w2.at[2 * H:3 * H].set(p["ow2"])
    w2 = w2.at[3 * H + 0].set(p["pb2"][0] + p["emb"][0])
    w2 = w2.at[3 * H + 1].set(p["yb2"][0] + p["emb"][1])
    w2 = w2.at[3 * H + 2].set(p["ob2"][0] + p["emb"][2])

    # fold the MHA input projections (and their biases) into the encoder's second layer
    def fold(wproj, bproj):
        m = w2 @ wproj
        return m.at[3 * H:3 * H + 3].add(jnp.broadcast_to(bproj, (3, H)))

    w2q = fold(p["wq"], p["bq"]) * inv_sqrt           # softmax scale pre-folded into Wq
    w2k = fold(p["wk"], p["bk"])
    w2v = fold(p["wv"], p["bv"])

    # fold the MHA output projection into the first net Linear
    wo1 = p["wo"] @ p["nw1"]
    bo1 = p["bo"] @ p["nw1"] + p["nb1"]

    slab = jnp.zeros((SLAB_ROWS, SLAB_COLS), f32)
    slab = slab.at[R_W1:R_W1 + F_TOK, :].set(w1)
    slab = slab.at[R_W2:R_W2 + 4 * H, 0:H].set(w2q)
    slab = slab.at[R_W2:R_W2 + 4 * H, H:2 * H].set(w2k)
    slab = slab.at[R_W2:R_W2 + 4 * H, 2 * H:3 * H].set(w2v)
    slab = slab.at[R_NET:R_NET + H, 0:H].set(wo1)
    slab = slab.at[R_NET:R_NET + H, H:2 * H].set(p["nw2"])
    slab = slab.at[R_BIAS, 0:H].set(bo1[0])
    slab = slab.at[R_BIAS, H:2 * H].set(p["nb2"][0])
    slab = slab.at[R_BIAS, 2 * H].set(p["nb3"][0, 0])
    slab = slab.at[R_BIAS, 3 * H:4 * H].set(p["nw3"][:, 0])   # nw3 stored transposed (row)
    return slab


def build_tokens_blocked(pred, prey, obst, Bpad, Bt):
    """Lane-padded tokens, type-major inside each batch block: [pred | prey | obst]."""
    B = pred.shape[0]
    nb = Bpad // Bt
    f32 = jnp.float32

    def slot(x, col, type_idx):
        n, f = x.shape[1], x.shape[2]
        t = jnp.zeros((Bpad, n, F_TOK), f32)
        t = t.at[:B, :, col:col + f].set(x.astype(f32))
        t = t.at[:B, :, ONEHOT_COL + type_idx].set(1.0)
        return t.reshape(nb, Bt * n, F_TOK)

    t_pred = slot(pred, 0, 0)
    t_prey = slot(prey, 2, 1)
    t_obst = slot(obst, 4, 2)
    tok = jnp.concatenate([t_pred, t_prey, t_obst], axis=1)   # (nb, Ta, F_TOK)
    return tok.reshape(-1, F_TOK)


# -----------------------------------------------------------------------------
# Wrapper: batch blocking, grid/BlockSpecs, pallas_call.
# -----------------------------------------------------------------------------
@jax.jit
def predator_attn_actor(pred_state, prey_state, obst_state, prey_is_alive, slab):
    # In the reference forward the attention mask is `zeros & mask` == all-False,
    # so prey_is_alive cannot influence the output (kept only for interface parity).
    del prey_is_alive
    B, Np, _ = pred_state.shape
    Ny, No = prey_state.shape[1], obst_state.shape[1]
    N = Np + Ny + No

    Bt = B if B <= BT_MAX else BT_MAX
    nb = (B + Bt - 1) // Bt
    Bpad = nb * Bt
    Tp, Ta = Bt * Np, Bt * N

    tok = build_tokens_blocked(pred_state, prey_state, obst_state, Bpad, Bt)  # (nb*Ta, 16)

    # tiny batch-id vectors (trace-time constants) used to build the block-diag mask in-kernel
    row_b = np.repeat(np.arange(Bt, dtype=np.int32), Np).reshape(Tp, 1)
    col_b = np.concatenate([np.repeat(np.arange(Bt, dtype=np.int32), n)
                            for n in (Np, Ny, No)]).reshape(1, Ta)

    out = pl.pallas_call(
        _actor_kernel,
        out_shape=jax.ShapeDtypeStruct((nb, 1, Tp), jnp.float32),
        grid_spec=pltpu.PrefetchScalarGridSpec(
            num_scalar_prefetch=0,
            grid=(nb,),
            in_specs=[
                pl.BlockSpec((Ta, F_TOK), lambda i: (i, 0)),
                pl.BlockSpec((Tp, 1), lambda i: (0, 0)),
                pl.BlockSpec((1, Ta), lambda i: (0, 0)),
                pl.BlockSpec((SLAB_ROWS, SLAB_COLS), lambda i: (0, 0)),
            ],
            out_specs=pl.BlockSpec((1, 1, Tp), lambda i: (i, 0, 0)),
            scratch_shapes=[pltpu.VMEM((Tp, H), jnp.float32)],
        ),
        compiler_params=pltpu.CompilerParams(
            dimension_semantics=("parallel",)),
    )(tok, jnp.asarray(row_b), jnp.asarray(col_b), slab)

    return out.reshape(Bpad, Np, 1)[:B]


# -----------------------------------------------------------------------------
# Pure-JAX reference (unfused math) for correctness checking.
# -----------------------------------------------------------------------------
def reference_forward(pred, prey, obst, params):
    p = params

    def ffn2(x, w1, b1, w2, b2):
        h = jnp.maximum(x @ w1 + b1, 0.0)
        return h @ w2 + b2

    x_pred = ffn2(pred, p["pw1"], p["pb1"], p["pw2"], p["pb2"]) + p["emb"][0]
    x_prey = ffn2(prey, p["yw1"], p["yb1"], p["yw2"], p["yb2"]) + p["emb"][1]
    x_obst = ffn2(obst, p["ow1"], p["ob1"], p["ow2"], p["ob2"]) + p["emb"][2]
    x = jnp.concatenate([x_pred, x_prey, x_obst], axis=1)        # (B, N, H)

    q = x_pred @ p["wq"] + p["bq"]
    k = x @ p["wk"] + p["bk"]
    v = x @ p["wv"] + p["bv"]

    B, Nq, _ = q.shape
    N = k.shape[1]
    qh = q.reshape(B, Nq, NUM_HEADS, DH).transpose(0, 2, 1, 3)
    kh = k.reshape(B, N, NUM_HEADS, DH).transpose(0, 2, 1, 3)
    vh = v.reshape(B, N, NUM_HEADS, DH).transpose(0, 2, 1, 3)
    s = jnp.einsum("bhqd,bhkd->bhqk", qh, kh) / (DH ** 0.5)
    a = jax.nn.softmax(s, axis=-1)
    o = jnp.einsum("bhqk,bhkd->bhqd", a, vh).transpose(0, 2, 1, 3).reshape(B, Nq, H)
    o = o @ p["wo"] + p["bo"]

    h1 = jnp.maximum(o @ p["nw1"] + p["nb1"], 0.0)
    h2 = jnp.maximum(h1 @ p["nw2"] + p["nb2"], 0.0)
    return jnp.tanh(h2 @ p["nw3"] + p["nb3"])


# -----------------------------------------------------------------------------
if __name__ == "__main__":
    key = jax.random.PRNGKey(0)
    k_par, k_pred, k_prey, k_obst, k_alive = jax.random.split(key, 5)

    # B=96 exercises batch blocking (Bt=64 -> 2 grid steps) and batch padding.
    B, NP, NY, NO = 96, 2, 5, 3      # batch, predators, preys, obstacles
    params = init_params(k_par)
    slab = build_slab(params)        # hoisted: computed once per parameter set

    pred_state = jax.random.normal(k_pred, (B, NP, 2), jnp.float32)
    prey_state = jax.random.normal(k_prey, (B, NY, 2), jnp.float32)
    obst_state = jax.random.normal(k_obst, (B, NO, 3), jnp.float32)
    prey_is_alive = jax.random.bernoulli(k_alive, 0.7, (B, NY))

    out = predator_attn_actor(pred_state, prey_state, obst_state,
                              prey_is_alive, slab)
    out = jax.block_until_ready(out)

    ref = reference_forward(pred_state, prey_state, obst_state, params)
    assert out.shape == (B, NP, 1), out.shape
    err = float(jnp.max(jnp.abs(out - ref)))
    assert jnp.allclose(out, ref, atol=1e-3, rtol=1e-3), (
        "Pallas output does not match JAX reference, max err %g" % err)

    print("KERNEL_OK")
</pallas_src>

<mosaic_0001>
module attributes {stable_mosaic.version = 11 : i64} {
  func.func @_actor_kernel(%arg0: i32, %arg1: memref<640x16xf32, #tpu.memory_space<vmem>>, %arg2: memref<128x1xi32, #tpu.memory_space<vmem>>, %arg3: memref<1x640xi32, #tpu.memory_space<vmem>>, %arg4: memref<184x128xf32, #tpu.memory_space<vmem>>, %arg5: memref<1x1x128xf32, #tpu.memory_space<vmem>>, %arg6: memref<128x32xf32, #tpu.memory_space<vmem>>) attributes {dimension_semantics = [#tpu.dimension_semantics<parallel>], iteration_bounds = array<i64: 2>, scalar_prefetch = 0 : i64, scratch_operands = 1 : i64, tpu.core_type = #tpu.core_type<tc>, window_params = [{transform_indices = @transform_0, window_bounds = array<i64: 640, 16>}, {pipeline_mode = #tpu.pipeline_mode<synchronous>, transform_indices = @transform_1, window_bounds = array<i64: 128, 1>}, {pipeline_mode = #tpu.pipeline_mode<synchronous>, transform_indices = @transform_2, window_bounds = array<i64: 1, 640>}, {pipeline_mode = #tpu.pipeline_mode<synchronous>, transform_indices = @transform_3, window_bounds = array<i64: 184, 128>}, {transform_indices = @transform_4, window_bounds = array<i64: 1, 1, 128>}]} {
    %c0 = arith.constant 0 : index
    %c0_0 = arith.constant 0 : index
    %0 = vector.load %arg4[%c0, %c0_0] : memref<184x128xf32, #tpu.memory_space<vmem>>, vector<16x128xf32>
    %c16 = arith.constant 16 : index
    %c0_1 = arith.constant 0 : index
    %1 = vector.load %arg4[%c16, %c0_1] : memref<184x128xf32, #tpu.memory_space<vmem>>, vector<128x128xf32>
    %c144 = arith.constant 144 : index
    %c0_2 = arith.constant 0 : index
    %2 = vector.load %arg4[%c144, %c0_2] : memref<184x128xf32, #tpu.memory_space<vmem>>, vector<32x128xf32>
    %c176 = arith.constant 176 : index
    %c0_3 = arith.constant 0 : index
    %3 = vector.load %arg4[%c176, %c0_3] : memref<184x128xf32, #tpu.memory_space<vmem>>, vector<1x128xf32>
    %c176_4 = arith.constant 176 : index
    %c96 = arith.constant 96 : index
    %4 = vector.load %arg4[%c176_4, %c96] : memref<184x128xf32, #tpu.memory_space<vmem>>, vector<8x32xf32>
    %5 = vector.extract_strided_slice %1 {offsets = [0, 0], sizes = [128, 32], strides = [1, 1]} : vector<128x128xf32> to vector<128x32xf32>
    %6 = vector.extract_strided_slice %1 {offsets = [0, 32], sizes = [128, 64], strides = [1, 1]} : vector<128x128xf32> to vector<128x64xf32>
    %7 = vector.extract_strided_slice %2 {offsets = [0, 0], sizes = [32, 32], strides = [1, 1]} : vector<32x128xf32> to vector<32x32xf32>
    %8 = vector.extract_strided_slice %2 {offsets = [0, 32], sizes = [32, 32], strides = [1, 1]} : vector<32x128xf32> to vector<32x32xf32>
    %9 = vector.extract_strided_slice %3 {offsets = [0, 0], sizes = [1, 32], strides = [1, 1]} : vector<1x128xf32> to vector<1x32xf32>
    %10 = vector.extract_strided_slice %3 {offsets = [0, 32], sizes = [1, 32], strides = [1, 1]} : vector<1x128xf32> to vector<1x32xf32>
    %11 = vector.extract_strided_slice %3 {offsets = [0, 64], sizes = [1, 1], strides = [1, 1]} : vector<1x128xf32> to vector<1x1xf32>
    %c0_5 = arith.constant 0 : index
    %c0_6 = arith.constant 0 : index
    %12 = vector.load %arg1[%c0_5, %c0_6] : memref<640x16xf32, #tpu.memory_space<vmem>>, vector<640x16xf32>
    %cst = arith.constant dense<0.000000e+00> : vector<640x128xf32>
    %13 = tpu.matmul %12, %0, %cst {dimension_numbers = #tpu.dot_dimension_numbers<[1], [0], [0], [1], [0, 0, 1, 1], [], []>} : vector<640x16xf32>, vector<16x128xf32>, vector<640x128xf32> -> vector<640x128xf32>
    %cst_7 = arith.constant 0.000000e+00 : f32
    %14 = vector.broadcast %cst_7 : f32 to vector<640x128xf32>
    %15 = arith.maximumf %13, %14 : vector<640x128xf32>
    %16 = vector.extract_strided_slice %15 {offsets = [0, 0], sizes = [128, 128], strides = [1, 1]} : vector<640x128xf32> to vector<128x128xf32>
    %cst_8 = arith.constant dense<0.000000e+00> : vector<128x32xf32>
    %17 = tpu.matmul %16, %5, %cst_8 {dimension_numbers = #tpu.dot_dimension_numbers<[1], [0], [0], [1], [0, 0, 1, 1], [], []>} : vector<128x128xf32>, vector<128x32xf32>, vector<128x32xf32> -> vector<128x32xf32>
    %cst_9 = arith.constant dense<0.000000e+00> : vector<640x64xf32>
    %18 = tpu.matmul %15, %6, %cst_9 {dimension_numbers = #tpu.dot_dimension_numbers<[1], [0], [0], [1], [0, 0, 1, 1], [], []>} : vector<640x128xf32>, vector<128x64xf32>, vector<640x64xf32> -> vector<640x64xf32>
    %19 = vector.extract_strided_slice %18 {offsets = [0, 0], sizes = [640, 32], strides = [1, 1]} : vector<640x64xf32> to vector<640x32xf32>
    %20 = vector.extract_strided_slice %18 {offsets = [0, 32], sizes = [640, 32], strides = [1, 1]} : vector<640x64xf32> to vector<640x32xf32>
    %c0_10 = arith.constant 0 : index
    %c0_11 = arith.constant 0 : index
    %21 = vector.load %arg2[%c0_10, %c0_11] : memref<128x1xi32, #tpu.memory_space<vmem>>, vector<128x1xi32>
    %c0_12 = arith.constant 0 : index
    %c0_13 = arith.constant 0 : index
    %22 = vector.load %arg3[%c0_12, %c0_13] : memref<1x640xi32, #tpu.memory_space<vmem>>, vector<1x640xi32>
    %23 = vector.broadcast %21 : vector<128x1xi32> to vector<128x640xi32>
    %24 = vector.broadcast %22 : vector<1x640xi32> to vector<128x640xi32>
    %25 = arith.cmpi eq, %23, %24 : vector<128x640xi32>
    %cst_14 = arith.constant 0.000000e+00 : f32
    %cst_15 = arith.constant -1.000000e+30 : f32
    %26 = vector.broadcast %cst_14 : f32 to vector<128x640xf32>
    %27 = vector.broadcast %cst_15 : f32 to vector<128x640xf32>
    %28 = arith.select %25, %26, %27 : vector<128x640xi1>, vector<128x640xf32>
    %29 = vector.extract_strided_slice %17 {offsets = [0, 0], sizes = [128, 8], strides = [1, 1]} : vector<128x32xf32> to vector<128x8xf32>
    %30 = vector.extract_strided_slice %19 {offsets = [0, 0], sizes = [640, 8], strides = [1, 1]} : vector<640x32xf32> to vector<640x8xf32>
    %31 = tpu.transpose %30, [1, 0] : vector<640x8xf32> -> vector<8x640xf32>
    %cst_16 = arith.constant dense<0.000000e+00> : vector<128x640xf32>
    %32 = tpu.matmul %29, %31, %cst_16 {dimension_numbers = #tpu.dot_dimension_numbers<[1], [0], [0], [1], [0, 0, 1, 1], [], []>} : vector<128x8xf32>, vector<8x640xf32>, vector<128x640xf32> -> vector<128x640xf32>
    %33 = arith.addf %32, %28 : vector<128x640xf32>
    %cst_17 = arith.constant dense<0xFF800000> : vector<128xf32>
    %34 = vector.multi_reduction <maximumf>, %33, %cst_17 [1] : vector<128x640xf32> to vector<128xf32>
    %35 = vector.shape_cast %34 : vector<128xf32> to vector<128x1xf32>
    %36 = vector.broadcast %35 : vector<128x1xf32> to vector<128x640xf32>
    %37 = arith.subf %33, %36 : vector<128x640xf32>
    %38 = math.exp %37 : vector<128x640xf32>
    %cst_18 = arith.constant dense<0.000000e+00> : vector<128xf32>
    %39 = vector.multi_reduction <add>, %38, %cst_18 [1] : vector<128x640xf32> to vector<128xf32>
    %40 = vector.shape_cast %39 : vector<128xf32> to vector<128x1xf32>
    %41 = tpu.reciprocal %40 {approx = true} : vector<128x1xf32> -> vector<128x1xf32>
    %42 = vector.broadcast %41 : vector<128x1xf32> to vector<128x640xf32>
    %43 = arith.mulf %38, %42 : vector<128x640xf32>
    %44 = vector.extract_strided_slice %20 {offsets = [0, 0], sizes = [640, 8], strides = [1, 1]} : vector<640x32xf32> to vector<640x8xf32>
    %cst_19 = arith.constant dense<0.000000e+00> : vector<128x8xf32>
    %45 = tpu.matmul %43, %44, %cst_19 {dimension_numbers = #tpu.dot_dimension_numbers<[1], [0], [0], [1], [0, 0, 1, 1], [], []>} : vector<128x640xf32>, vector<640x8xf32>, vector<128x8xf32> -> vector<128x8xf32>
    %c0_20 = arith.constant 0 : index
    %c0_21 = arith.constant 0 : index
    %46 = vector.load %arg6[%c0_20, %c0_21] : memref<128x32xf32, #tpu.memory_space<vmem>>, vector<128x8xf32>
    tpu.vector_store %arg6[%c0_20, %c0_21], %45 {strides = array<i32>} : memref<128x32xf32, #tpu.memory_space<vmem>>, vector<128x8xf32>,
    %47 = vector.extract_strided_slice %17 {offsets = [0, 8], sizes = [128, 8], strides = [1, 1]} : vector<128x32xf32> to vector<128x8xf32>
    %48 = vector.extract_strided_slice %19 {offsets = [0, 8], sizes = [640, 8], strides = [1, 1]} : vector<640x32xf32> to vector<640x8xf32>
    %49 = tpu.transpose %48, [1, 0] : vector<640x8xf32> -> vector<8x640xf32>
    %cst_22 = arith.constant dense<0.000000e+00> : vector<128x640xf32>
    %50 = tpu.matmul %47, %49, %cst_22 {dimension_numbers = #tpu.dot_dimension_numbers<[1], [0], [0], [1], [0, 0, 1, 1], [], []>} : vector<128x8xf32>, vector<8x640xf32>, vector<128x640xf32> -> vector<128x640xf32>
    %51 = arith.addf %50, %28 : vector<128x640xf32>
    %cst_23 = arith.constant dense<0xFF800000> : vector<128xf32>
    %52 = vector.multi_reduction <maximumf>, %51, %cst_23 [1] : vector<128x640xf32> to vector<128xf32>
    %53 = vector.shape_cast %52 : vector<128xf32> to vector<128x1xf32>
    %54 = vector.broadcast %53 : vector<128x1xf32> to vector<128x640xf32>
    %55 = arith.subf %51, %54 : vector<128x640xf32>
    %56 = math.exp %55 : vector<128x640xf32>
    %cst_24 = arith.constant dense<0.000000e+00> : vector<128xf32>
    %57 = vector.multi_reduction <add>, %56, %cst_24 [1] : vector<128x640xf32> to vector<128xf32>
    %58 = vector.shape_cast %57 : vector<128xf32> to vector<128x1xf32>
    %59 = tpu.reciprocal %58 {approx = true} : vector<128x1xf32> -> vector<128x1xf32>
    %60 = vector.broadcast %59 : vector<128x1xf32> to vector<128x640xf32>
    %61 = arith.mulf %56, %60 : vector<128x640xf32>
    %62 = vector.extract_strided_slice %20 {offsets = [0, 8], sizes = [640, 8], strides = [1, 1]} : vector<640x32xf32> to vector<640x8xf32>
    %cst_25 = arith.constant dense<0.000000e+00> : vector<128x8xf32>
    %63 = tpu.matmul %61, %62, %cst_25 {dimension_numbers = #tpu.dot_dimension_numbers<[1], [0], [0], [1], [0, 0, 1, 1], [], []>} : vector<128x640xf32>, vector<640x8xf32>, vector<128x8xf32> -> vector<128x8xf32>
    %c0_26 = arith.constant 0 : index
    %c8 = arith.constant 8 : index
    %64 = vector.load %arg6[%c0_26, %c8] : memref<128x32xf32, #tpu.memory_space<vmem>>, vector<128x8xf32>
    tpu.vector_store %arg6[%c0_26, %c8], %63 {strides = array<i32>} : memref<128x32xf32, #tpu.memory_space<vmem>>, vector<128x8xf32>,
    %65 = vector.extract_strided_slice %17 {offsets = [0, 16], sizes = [128, 8], strides = [1, 1]} : vector<128x32xf32> to vector<128x8xf32>
    %66 = vector.extract_strided_slice %19 {offsets = [0, 16], sizes = [640, 8], strides = [1, 1]} : vector<640x32xf32> to vector<640x8xf32>
    %67 = tpu.transpose %66, [1, 0] : vector<640x8xf32> -> vector<8x640xf32>
    %cst_27 = arith.constant dense<0.000000e+00> : vector<128x640xf32>
    %68 = tpu.matmul %65, %67, %cst_27 {dimension_numbers = #tpu.dot_dimension_numbers<[1], [0], [0], [1], [0, 0, 1, 1], [], []>} : vector<128x8xf32>, vector<8x640xf32>, vector<128x640xf32> -> vector<128x640xf32>
    %69 = arith.addf %68, %28 : vector<128x640xf32>
    %cst_28 = arith.constant dense<0xFF800000> : vector<128xf32>
    %70 = vector.multi_reduction <maximumf>, %69, %cst_28 [1] : vector<128x640xf32> to vector<128xf32>
    %71 = vector.shape_cast %70 : vector<128xf32> to vector<128x1xf32>
    %72 = vector.broadcast %71 : vector<128x1xf32> to vector<128x640xf32>
    %73 = arith.subf %69, %72 : vector<128x640xf32>
    %74 = math.exp %73 : vector<128x640xf32>
    %cst_29 = arith.constant dense<0.000000e+00> : vector<128xf32>
    %75 = vector.multi_reduction <add>, %74, %cst_29 [1] : vector<128x640xf32> to vector<128xf32>
    %76 = vector.shape_cast %75 : vector<128xf32> to vector<128x1xf32>
    %77 = tpu.reciprocal %76 {approx = true} : vector<128x1xf32> -> vector<128x1xf32>
    %78 = vector.broadcast %77 : vector<128x1xf32> to vector<128x640xf32>
    %79 = arith.mulf %74, %78 : vector<128x640xf32>
    %80 = vector.extract_strided_slice %20 {offsets = [0, 16], sizes = [640, 8], strides = [1, 1]} : vector<640x32xf32> to vector<640x8xf32>
    %cst_30 = arith.constant dense<0.000000e+00> : vector<128x8xf32>
    %81 = tpu.matmul %79, %80, %cst_30 {dimension_numbers = #tpu.dot_dimension_numbers<[1], [0], [0], [1], [0, 0, 1, 1], [], []>} : vector<128x640xf32>, vector<640x8xf32>, vector<128x8xf32> -> vector<128x8xf32>
    %c0_31 = arith.constant 0 : index
    %c16_32 = arith.constant 16 : index
    %82 = vector.load %arg6[%c0_31, %c16_32] : memref<128x32xf32, #tpu.memory_space<vmem>>, vector<128x8xf32>
    tpu.vector_store %arg6[%c0_31, %c16_32], %81 {strides = array<i32>} : memref<128x32xf32, #tpu.memory_space<vmem>>, vector<128x8xf32>,
    %83 = vector.extract_strided_slice %17 {offsets = [0, 24], sizes = [128, 8], strides = [1, 1]} : vector<128x32xf32> to vector<128x8xf32>
    %84 = vector.extract_strided_slice %19 {offsets = [0, 24], sizes = [640, 8], strides = [1, 1]} : vector<640x32xf32> to vector<640x8xf32>
    %85 = tpu.transpose %84, [1, 0] : vector<640x8xf32> -> vector<8x640xf32>
    %cst_33 = arith.constant dense<0.000000e+00> : vector<128x640xf32>
    %86 = tpu.matmul %83, %85, %cst_33 {dimension_numbers = #tpu.dot_dimension_numbers<[1], [0], [0], [1], [0, 0, 1, 1], [], []>} : vector<128x8xf32>, vector<8x640xf32>, vector<128x640xf32> -> vector<128x640xf32>
    %87 = arith.addf %86, %28 : vector<128x640xf32>
    %cst_34 = arith.constant dense<0xFF800000> : vector<128xf32>
    %88 = vector.multi_reduction <maximumf>, %87, %cst_34 [1] : vector<128x640xf32> to vector<128xf32>
    %89 = vector.shape_cast %88 : vector<128xf32> to vector<128x1xf32>
    %90 = vector.broadcast %89 : vector<128x1xf32> to vector<128x640xf32>
    %91 = arith.subf %87, %90 : vector<128x640xf32>
    %92 = math.exp %91 : vector<128x640xf32>
    %cst_35 = arith.constant dense<0.000000e+00> : vector<128xf32>
    %93 = vector.multi_reduction <add>, %92, %cst_35 [1] : vector<128x640xf32> to vector<128xf32>
    %94 = vector.shape_cast %93 : vector<128xf32> to vector<128x1xf32>
    %95 = tpu.reciprocal %94 {approx = true} : vector<128x1xf32> -> vector<128x1xf32>
    %96 = vector.broadcast %95 : vector<128x1xf32> to vector<128x640xf32>
    %97 = arith.mulf %92, %96 : vector<128x640xf32>
    %98 = vector.extract_strided_slice %20 {offsets = [0, 24], sizes = [640, 8], strides = [1, 1]} : vector<640x32xf32> to vector<640x8xf32>
    %cst_36 = arith.constant dense<0.000000e+00> : vector<128x8xf32>
    %99 = tpu.matmul %97, %98, %cst_36 {dimension_numbers = #tpu.dot_dimension_numbers<[1], [0], [0], [1], [0, 0, 1, 1], [], []>} : vector<128x640xf32>, vector<640x8xf32>, vector<128x8xf32> -> vector<128x8xf32>
    %c0_37 = arith.constant 0 : index
    %c24 = arith.constant 24 : index
    %100 = vector.load %arg6[%c0_37, %c24] : memref<128x32xf32, #tpu.memory_space<vmem>>, vector<128x8xf32>
    tpu.vector_store %arg6[%c0_37, %c24], %99 {strides = array<i32>} : memref<128x32xf32, #tpu.memory_space<vmem>>, vector<128x8xf32>,
    %c0_38 = arith.constant 0 : index
    %c0_39 = arith.constant 0 : index
    %101 = vector.load %arg6[%c0_38, %c0_39] : memref<128x32xf32, #tpu.memory_space<vmem>>, vector<128x32xf32>
    %cst_40 = arith.constant dense<0.000000e+00> : vector<128x32xf32>
    %102 = tpu.matmul %101, %7, %cst_40 {dimension_numbers = #tpu.dot_dimension_numbers<[1], [0], [0], [1], [0, 0, 1, 1], [], []>} : vector<128x32xf32>, vector<32x32xf32>, vector<128x32xf32> -> vector<128x32xf32>
    %103 = vector.broadcast %9 : vector<1x32xf32> to vector<128x32xf32>
    %104 = arith.addf %102, %103 : vector<128x32xf32>
    %cst_41 = arith.constant 0.000000e+00 : f32
    %105 = vector.broadcast %cst_41 : f32 to vector<128x32xf32>
    %106 = arith.maximumf %104, %105 : vector<128x32xf32>
    %cst_42 = arith.constant dense<0.000000e+00> : vector<128x32xf32>
    %107 = tpu.matmul %106, %8, %cst_42 {dimension_numbers = #tpu.dot_dimension_numbers<[1], [0], [0], [1], [0, 0, 1, 1], [], []>} : vector<128x32xf32>, vector<32x32xf32>, vector<128x32xf32> -> vector<128x32xf32>
    %108 = vector.broadcast %10 : vector<1x32xf32> to vector<128x32xf32>
    %109 = arith.addf %107, %108 : vector<128x32xf32>
    %cst_43 = arith.constant 0.000000e+00 : f32
    %110 = vector.broadcast %cst_43 : f32 to vector<128x32xf32>
    %111 = arith.maximumf %109, %110 : vector<128x32xf32>
    %112 = tpu.transpose %111, [1, 0] : vector<128x32xf32> -> vector<32x128xf32>
    %cst_44 = arith.constant dense<0.000000e+00> : vector<8x128xf32>
    %113 = tpu.matmul %4, %112, %cst_44 {dimension_numbers = #tpu.dot_dimension_numbers<[1], [0], [0], [1], [0, 0, 1, 1], [], []>} : vector<8x32xf32>, vector<32x128xf32>, vector<8x128xf32> -> vector<8x128xf32>
    %114 = vector.extract_strided_slice %113 {offsets = [0, 0], sizes = [1, 128], strides = [1, 1]} : vector<8x128xf32> to vector<1x128xf32>
    %115 = vector.broadcast %11 : vector<1x1xf32> to vector<1x128xf32>
    %116 = arith.addf %114, %115 : vector<1x128xf32>
    %117 = math.tanh %116 : vector<1x128xf32>
    %118 = vector.shape_cast %117 : vector<1x128xf32> to vector<1x1x128xf32>
    %c0_45 = arith.constant 0 : index
    %c0_46 = arith.constant 0 : index
    %c0_47 = arith.constant 0 : index
    %119 = vector.load %arg5[%c0_45, %c0_46, %c0_47] : memref<1x1x128xf32, #tpu.memory_space<vmem>>, vector<1x1x128xf32>
    tpu.vector_store %arg5[%c0_45, %c0_46, %c0_47], %118 {strides = array<i32>} : memref<1x1x128xf32, #tpu.memory_space<vmem>>, vector<1x1x128xf32>,
    return
  }
  func.func @transform_0(%arg0: i32) -> (i32, i32) {
    %c0_i32 = arith.constant 0 : i32
    %c0_i32_0 = arith.constant 0 : i32
    return %arg0, %c0_i32 : i32, i32
  }
  func.func @transform_1(%arg0: i32) -> (i32, i32) {
    %c0_i32 = arith.constant 0 : i32
    %c0_i32_0 = arith.constant 0 : i32
    %c0_i32_1 = arith.constant 0 : i32
    return %c0_i32, %c0_i32_0 : i32, i32
  }
  func.func @transform_2(%arg0: i32) -> (i32, i32) {
    %c0_i32 = arith.constant 0 : i32
    %c0_i32_0 = arith.constant 0 : i32
    %c0_i32_1 = arith.constant 0 : i32
    return %c0_i32, %c0_i32_0 : i32, i32
  }
  func.func @transform_3(%arg0: i32) -> (i32, i32) {
    %c0_i32 = arith.constant 0 : i32
    %c0_i32_0 = arith.constant 0 : i32
    %c0_i32_1 = arith.constant 0 : i32
    return %c0_i32, %c0_i32_0 : i32, i32
  }
  func.func @transform_4(%arg0: i32) -> (i32, i32, i32) {
    %c0_i32 = arith.constant 0 : i32
    %c0_i32_0 = arith.constant 0 : i32
    %c0_i32_1 = arith.constant 0 : i32
    return %arg0, %c0_i32, %c0_i32_0 : i32, i32, i32
  }
}

</mosaic_0001>

<llo_original>
// kernel: predator_attn_actor.1
$region0: #{predator_attn_actor.1}
  #allocation0 [shape = 'u32[]', space=smem, size = 0x4, offset = 0x4, fixed_abs, tag = 'smem constant byte address 0x4 - core index']
  #allocation1 [shape = 'u32[144,128]{1,0:T(1,128)}', space=vmem, size = 0x12000, scoped, tag = 'internal scratch']
  #allocation2 [shape = 'f32[128,32]{1,0:T(8,128)}', space=vmem, size = 0x10000, scoped, tag = 'scratch operand']
  %s0 = inlined_call_operand.vmem [shape: f32[1280,16], index: 0, kind: input, shape index: {}]
  %s1 = inlined_call_operand.vmem [shape: s32[128,1], index: 1, kind: input, shape index: {}]
  %s2 = inlined_call_operand.vmem [shape: s32[1,640], index: 2, kind: input, shape index: {}]
  %s3 = inlined_call_operand.vmem [shape: f32[184,128], index: 3, kind: input, shape index: {}]
  %s4 = inlined_call_operand.vmem [shape: f32[2,1,128], index: 4, kind: output, shape index: {}]
  %s5 = sld [smem:[#allocation0]]
  $region49: #{predator_attn_actor.1} parent=0
    _
  %s7 = ssub.s32 1, %s5
  %s8 = scalar_select 0, %s7, %s5
  loop: start=0, step=1, limit=4
  $region2: #{predator_attn_actor.1} parent=0 // loop_pre_header
    _
  $region3: #{predator_attn_actor.1} parent=0 // loop_header
    %s10 = sphi 0, %s14
    %p11 = scmp.ge.s32.totalorder %s10, 4
    %s20 = sphi 0, %s22
    %s23 = sphi 0, %s20
    %s24 = sphi 0, %s23
    %s40 = sphi 0, %s24
    %s44 = sphi 0, %s44
    %s46 = sphi 0, %s44
    %s47 = sphi 0, %s46
    %s61 = sphi 0, %s47
    %s65 = sphi 0, %s65
    %s67 = sphi 0, %s65
    %s68 = sphi 0, %s67
    %s82 = sphi 0, %s68
    %s86 = sphi 0, %s86
    %s88 = sphi 0, %s86
    %s89 = sphi 0, %s88
    %s103 = sphi 0, %s89
    %s109 = sphi 0, %s111
    %s112 = sphi 0, %s109
    %s113 = sphi 0, %s112
    %s129 = sphi 0, %s113
  $region4: #{predator_attn_actor.1} parent=0 // loop_header_branch
    %13 = sbr.rel (%p11) target = $region8
  $region5: #{predator_attn_actor.1} parent=0 // loop_body
    %s15 = ssub.s32 %s10, 1
    %s16 = ssub.s32 %s10, 2
    %s17 = sadd.s32 %s10, 1
    %s18 = ssub.s32 %s10, %s17
    %p19 = scmp.eq.s32.totalorder %s18, 0
    %s21 = sadd.s32 %s20, 1
    %s22 = scalar_select %p19, %s20, %s21
    %p25 = pneg %p19
    %p26 = scmp.eq.s32.totalorder %s10, 1
    %p27 = por %p25, %p26
    %p28 = scmp.ne.s32.totalorder %s20, %s23
    %p29 = scmp.eq.s32.totalorder %s10, 0
    %p30 = por %p28, %p29
    %p31 = scmp.ne.s32.totalorder %s20, %s23
    %p32 = scmp.eq.s32.totalorder %s15, 1
    %p33 = por %p31, %p32
    %p34 = scmp.ne.s32.totalorder %s23, %s24
    %p35 = scmp.eq.s32.totalorder %s15, 0
    %p36 = por %p34, %p35
    %p37 = scmp.ne.s32.totalorder %s23, %s24
    %p38 = scmp.eq.s32.totalorder %s16, 1
    %p39 = por %p37, %p38
    %p41 = scmp.ne.s32.totalorder %s24, %s40
    %p42 = scmp.eq.s32.totalorder %s16, 0
    %p43 = por %p41, %p42
    %s45 = sadd.s32 %s44, 1
    %p48 = scmp.eq.s32.totalorder %s10, 1
    %p49 = scmp.ne.s32.totalorder %s44, %s46
    %p50 = scmp.eq.s32.totalorder %s10, 0
    %p51 = por %p49, %p50
    %p52 = scmp.ne.s32.totalorder %s44, %s46
    %p53 = scmp.eq.s32.totalorder %s15, 1
    %p54 = por %p52, %p53
    %p55 = scmp.ne.s32.totalorder %s46, %s47
    %p56 = scmp.eq.s32.totalorder %s15, 0
    %p57 = por %p55, %p56
    %p58 = scmp.ne.s32.totalorder %s46, %s47
    %p59 = scmp.eq.s32.totalorder %s16, 1
    %p60 = por %p58, %p59
    %p62 = scmp.ne.s32.totalorder %s47, %s61
    %p63 = scmp.eq.s32.totalorder %s16, 0
    %p64 = por %p62, %p63
    %s66 = sadd.s32 %s65, 1
    %p69 = scmp.eq.s32.totalorder %s10, 1
    %p70 = scmp.ne.s32.totalorder %s65, %s67
    %p71 = scmp.eq.s32.totalorder %s10, 0
    %p72 = por %p70, %p71
    %p73 = scmp.ne.s32.totalorder %s65, %s67
    %p74 = scmp.eq.s32.totalorder %s15, 1
    %p75 = por %p73, %p74
    %p76 = scmp.ne.s32.totalorder %s67, %s68
    %p77 = scmp.eq.s32.totalorder %s15, 0
    %p78 = por %p76, %p77
    %p79 = scmp.ne.s32.totalorder %s67, %s68
    %p80 = scmp.eq.s32.totalorder %s16, 1
    %p81 = por %p79, %p80
    %p83 = scmp.ne.s32.totalorder %s68, %s82
    %p84 = scmp.eq.s32.totalorder %s16, 0
    %p85 = por %p83, %p84
    %s87 = sadd.s32 %s86, 1
    %p90 = scmp.eq.s32.totalorder %s10, 1
    %p91 = scmp.ne.s32.totalorder %s86, %s88
    %p92 = scmp.eq.s32.totalorder %s10, 0
    %p93 = por %p91, %p92
    %p94 = scmp.ne.s32.totalorder %s86, %s88
    %p95 = scmp.eq.s32.totalorder %s15, 1
    %p96 = por %p94, %p95
    %p97 = scmp.ne.s32.totalorder %s88, %s89
    %p98 = scmp.eq.s32.totalorder %s15, 0
    %p99 = por %p97, %p98
    %p100 = scmp.ne.s32.totalorder %s88, %s89
    %p101 = scmp.eq.s32.totalorder %s16, 1
    %p102 = por %p100, %p101
    %p104 = scmp.ne.s32.totalorder %s89, %s103
    %p105 = scmp.eq.s32.totalorder %s16, 0
    %p106 = por %p104, %p105
    %s107 = ssub.s32 %s10, %s17
    %p108 = scmp.eq.s32.totalorder %s107, 0
    %s110 = sadd.s32 %s109, 1
    %s111 = scalar_select %p108, %s109, %s110
    %p114 = pneg %p108
    %p115 = scmp.eq.s32.totalorder %s10, 1
    %p116 = por %p114, %p115
    %p117 = scmp.ne.s32.totalorder %s109, %s112
    %p118 = scmp.eq.s32.totalorder %s10, 0
    %p119 = por %p117, %p118
    %p120 = scmp.ne.s32.totalorder %s109, %s112
    %p121 = scmp.eq.s32.totalorder %s15, 1
    %p122 = por %p120, %p121
    %p123 = scmp.ne.s32.totalorder %s112, %s113
    %p124 = scmp.eq.s32.totalorder %s15, 0
    %p125 = por %p123, %p124
    %p126 = scmp.ne.s32.totalorder %s112, %s113
    %p127 = scmp.eq.s32.totalorder %s16, 1
    %p128 = por %p126, %p127
    %p130 = scmp.ne.s32.totalorder %s113, %s129
    %p131 = scmp.eq.s32.totalorder %s16, 0
    %p132 = por %p130, %p131
    %p133 = scmp.le.s32.totalorder 1, %s10
    %p134 = scmp.lt.s32.totalorder %s10, 3
    %p135 = pnand %p133, %p134
    %p136 = pneg %p135
    // Predicated region
    $region9: #{predator_attn_actor.1} parent=5 // pred_check
      _
    $region10: #{predator_attn_actor.1} parent=5 // pred_check_branch
      %138 = sbr.rel (%p135) target = $region12
    $region11: #{predator_attn_actor.1} parent=5 // pred_region
      %s139 = ssub.s32 %s10, 1
      // Predicated region
      $region13: #{predator_attn_actor.1} parent=11 // pred_check
        %p140 = pneg %p57
      $region14: #{predator_attn_actor.1} parent=11 // pred_check_branch
        %142 = sbr.rel (%p140) target = $region16
      $region15: #{predator_attn_actor.1} parent=11 // pred_region
        _
      $region16: #{predator_attn_actor.1} parent=11 // pred_fallthru
        _
      // Predicated region
      $region17: #{predator_attn_actor.1} parent=11 // pred_check
        %p143 = pneg %p78
      $region18: #{predator_attn_actor.1} parent=11 // pred_check_branch
        %145 = sbr.rel (%p143) target = $region20
      $region19: #{predator_attn_actor.1} parent=11 // pred_region
        _
      $region20: #{predator_attn_actor.1} parent=11 // pred_fallthru
        _
      // Predicated region
      $region21: #{predator_attn_actor.1} parent=11 // pred_check
        %p146 = pneg %p99
      $region22: #{predator_attn_actor.1} parent=11 // pred_check_branch
        %148 = sbr.rel (%p146) target = $region24
      $region23: #{predator_attn_actor.1} parent=11 // pred_region
        _
      $region24: #{predator_attn_actor.1} parent=11 // pred_fallthru
        _
    $region12: #{predator_attn_actor.1} parent=5 // pred_fallthru
      _
    %p149 = scmp.lt.s32.totalorder %s10, 2
    // Predicated region
    $region25: #{predator_attn_actor.1} parent=5 // pred_check
      %p150 = pneg %p149
    $region26: #{predator_attn_actor.1} parent=5 // pred_check_branch
      %152 = sbr.rel (%p150) target = $region28
    $region27: #{predator_attn_actor.1} parent=5 // pred_region
      // Predicated region
      $region29: #{predator_attn_actor.1} parent=27 // pred_check
        %p153 = pneg %p30
      $region30: #{predator_attn_actor.1} parent=27 // pred_check_branch
        %155 = sbr.rel (%p153) target = $region32
      $region31: #{predator_attn_actor.1} parent=27 // pred_region
        %s156 = smul.u32 80, %s10
        %p157 = scmp.lt.s32.totalorder %s156, 159
        %s158 = scalar_select %p157, %s156, 159
        %s159 = smul.addr %s158, 8
        %s160 = scalar_lea.vmem %s0, %s159
        %s161 = smul.u32 80, %s10
      $region32: #{predator_attn_actor.1} parent=27 // pred_fallthru
        _
    $region28: #{predator_attn_actor.1} parent=5 // pred_fallthru
      _
    %p162 = scmp.le.s32.totalorder 1, %s10
    %p163 = scmp.lt.s32.totalorder %s10, 3
    %p164 = pnand %p162, %p163
    %p165 = pneg %p164
    // Predicated region
    $region33: #{predator_attn_actor.1} parent=5 // pred_check
      _
    $region34: #{predator_attn_actor.1} parent=5 // pred_check_branch
      %167 = sbr.rel (%p164) target = $region36
    $region35: #{predator_attn_actor.1} parent=5 // pred_region
      %s168 = ssub.s32 %s10, 1
      %s169 = smul.u32 80, %s15
      %p170 = scmp.lt.s32.totalorder %s169, 159
      %s171 = scalar_select %p170, %s169, 159
      %s172 = smul.addr %s171, 8
      %s173 = scalar_lea.vmem %s0, %s172
      %p174 = pneg %p36
      %p175 = pneg %p33
      %p176 = pneg %p57
      %p177 = pneg %p54
      %p178 = pneg %p78
      %p179 = pneg %p75
      %p180 = pneg %p99
      %p181 = pneg %p96
      %p182 = pneg %p125
      %p183 = pneg %p122
      %p184 = scmp.lt.s32.totalorder %s15, 1
      %s185 = scalar_select %p184, %s15, 1
      %s186 = scalar_lea.vmem %s4, %s185
      %s187 = smul.u32 80, %s15
      %p188 = scmp.lt.s32.totalorder %s187, 159
      %s189 = scalar_select %p188, %s187, 159
      %s190 = smul.addr %s189, 8
      %s191 = scalar_lea.vmem %s0, %s190
      %s192 = smul.u32 80, %s15
      %p193 = scmp.lt.s32.totalorder %s15, 1
      %s194 = scalar_select %p193, %s15, 1
      %s195 = scalar_lea.vmem %s4, %s194
      %v196 = vld [vmem:[%s3] sm:$0xff]
      %v197 = vld [vmem:[%s3 + $0x8] sm:$0xff]
      %v198 = vld [vmem:[%s3 + $0x10] sm:$0xff]
      %v199 = vld [vmem:[%s3 + $0x18] sm:$0xff]
      %v200 = vld [vmem:[%s3 + $0x20] sm:$0xff]
      %v201 = vld [vmem:[%s3 + $0x28] sm:$0xff]
      %v202 = vld [vmem:[%s3 + $0x30] sm:$0xff]
      %v203 = vld [vmem:[%s3 + $0x38] sm:$0xff]
      %v204 = vld [vmem:[%s3 + $0x40] sm:$0xff]
      %v205 = vld [vmem:[%s3 + $0x48] sm:$0xff]
      %v206 = vld [vmem:[%s3 + $0x50] sm:$0xff]
      %v207 = vld [vmem:[%s3 + $0x58] sm:$0xff]
      %v208 = vld [vmem:[%s3 + $0x60] sm:$0xff]
      %v209 = vld [vmem:[%s3 + $0x68] sm:$0xff]
      %v210 = vld [vmem:[%s3 + $0x70] sm:$0xff]
      %v211 = vld [vmem:[%s3 + $0x78] sm:$0xff]
      %v212 = vld [vmem:[%s3 + $0x80] sm:$0xff]
      %v213 = vld [vmem:[%s3 + $0x88] sm:$0xff]
      %v214 = vld [vmem:[%s3 + $0x90] sm:$0xff]
      %v215 = vld [vmem:[%s3 + $0x98] sm:$0xff]
      %v216 = vld [vmem:[%s3 + $0xa0] sm:$0xff]
      %v217 = vld [vmem:[%s3 + $0xa8] sm:$0xff]
      %v218 = vld [vmem:[%s3 + $0xb0] sm:$0x1]
      %v219 = vld [vmem:[%s3 + $0xb0] sm:$0xff]
      %v220 = vld [vmem:[%s191] sm:$0xff]
      %v221 = vld [vmem:[%s191 + $0x8] sm:$0xff]
      %v222 = vld [vmem:[%s191 + $0x10] sm:$0xff]
      %v223 = vld [vmem:[%s191 + $0x18] sm:$0xff]
      %v224 = vld [vmem:[%s191 + $0x20] sm:$0xff]
      %v225 = vld [vmem:[%s191 + $0x28] sm:$0xff]
      %v226 = vld [vmem:[%s191 + $0x30] sm:$0xff]
      %v227 = vld [vmem:[%s191 + $0x38] sm:$0xff]
      %v228 = vld [vmem:[%s191 + $0x40] sm:$0xff]
      %v229 = vld [vmem:[%s191 + $0x48] sm:$0xff]
      %v230 = vld [vmem:[%s191 + $0x50] sm:$0xff]
      %v231 = vld [vmem:[%s191 + $0x58] sm:$0xff]
      %v232 = vld [vmem:[%s191 + $0x60] sm:$0xff]
      %v233 = vld [vmem:[%s191 + $0x68] sm:$0xff]
      %v234 = vld [vmem:[%s191 + $0x70] sm:$0xff]
      %v235 = vld [vmem:[%s191 + $0x78] sm:$0xff]
      %v236 = vld [vmem:[%s191 + $0x80] sm:$0xff]
      %v237 = vld [vmem:[%s191 + $0x88] sm:$0xff]
      %v238 = vld [vmem:[%s191 + $0x90] sm:$0xff]
      %v239 = vld [vmem:[%s191 + $0x98] sm:$0xff]
      %v240 = vld [vmem:[%s191 + $0xa0] sm:$0xff]
      %v241 = vld [vmem:[%s191 + $0xa8] sm:$0xff]
      %v242 = vld [vmem:[%s191 + $0xb0] sm:$0xff]
      %v243 = vld [vmem:[%s191 + $0xb8] sm:$0xff]
      %v244 = vld [vmem:[%s191 + $0xc0] sm:$0xff]
      %v245 = vld [vmem:[%s191 + $0xc8] sm:$0xff]
      %v246 = vld [vmem:[%s191 + $0xd0] sm:$0xff]
      %v247 = vld [vmem:[%s191 + $0xd8] sm:$0xff]
      %v248 = vld [vmem:[%s191 + $0xe0] sm:$0xff]
      %v249 = vld [vmem:[%s191 + $0xe8] sm:$0xff]
      %v250 = vld [vmem:[%s191 + $0xf0] sm:$0xff]
      %v251 = vld [vmem:[%s191 + $0xf8] sm:$0xff]
      %v252 = vld [vmem:[%s191 + $0x100] sm:$0xff]
      %v253 = vld [vmem:[%s191 + $0x108] sm:$0xff]
      %v254 = vld [vmem:[%s191 + $0x110] sm:$0xff]
      %v255 = vld [vmem:[%s191 + $0x118] sm:$0xff]
      %v256 = vld [vmem:[%s191 + $0x120] sm:$0xff]
      %v257 = vld [vmem:[%s191 + $0x128] sm:$0xff]
      %v258 = vld [vmem:[%s191 + $0x130] sm:$0xff]
      %v259 = vld [vmem:[%s191 + $0x138] sm:$0xff]
      %v260 = vld [vmem:[%s191 + $0x140] sm:$0xff]
      %v261 = vld [vmem:[%s191 + $0x148] sm:$0xff]
      %v262 = vld [vmem:[%s191 + $0x150] sm:$0xff]
      %v263 = vld [vmem:[%s191 + $0x158] sm:$0xff]
      %v264 = vld [vmem:[%s191 + $0x160] sm:$0xff]
      %v265 = vld [vmem:[%s191 + $0x168] sm:$0xff]
      %v266 = vld [vmem:[%s191 + $0x170] sm:$0xff]
      %v267 = vld [vmem:[%s191 + $0x178] sm:$0xff]
      %v268 = vld [vmem:[%s191 + $0x180] sm:$0xff]
      %v269 = vld [vmem:[%s191 + $0x188] sm:$0xff]
      %v270 = vld [vmem:[%s191 + $0x190] sm:$0xff]
      %v271 = vld [vmem:[%s191 + $0x198] sm:$0xff]
      %v272 = vld [vmem:[%s191 + $0x1a0] sm:$0xff]
      %v273 = vld [vmem:[%s191 + $0x1a8] sm:$0xff]
      %v274 = vld [vmem:[%s191 + $0x1b0] sm:$0xff]
      %v275 = vld [vmem:[%s191 + $0x1b8] sm:$0xff]
      %v276 = vld [vmem:[%s191 + $0x1c0] sm:$0xff]
      %v277 = vld [vmem:[%s191 + $0x1c8] sm:$0xff]
      %v278 = vld [vmem:[%s191 + $0x1d0] sm:$0xff]
      %v279 = vld [vmem:[%s191 + $0x1d8] sm:$0xff]
      %v280 = vld [vmem:[%s191 + $0x1e0] sm:$0xff]
      %v281 = vld [vmem:[%s191 + $0x1e8] sm:$0xff]
      %v282 = vld [vmem:[%s191 + $0x1f0] sm:$0xff]
      %v283 = vld [vmem:[%s191 + $0x1f8] sm:$0xff]
      %v284 = vld [vmem:[%s191 + $0x200] sm:$0xff]
      %v285 = vld [vmem:[%s191 + $0x208] sm:$0xff]
      %v286 = vld [vmem:[%s191 + $0x210] sm:$0xff]
      %v287 = vld [vmem:[%s191 + $0x218] sm:$0xff]
      %v288 = vld [vmem:[%s191 + $0x220] sm:$0xff]
      %v289 = vld [vmem:[%s191 + $0x228] sm:$0xff]
      %v290 = vld [vmem:[%s191 + $0x230] sm:$0xff]
      %v291 = vld [vmem:[%s191 + $0x238] sm:$0xff]
      %v292 = vld [vmem:[%s191 + $0x240] sm:$0xff]
      %v293 = vld [vmem:[%s191 + $0x248] sm:$0xff]
      %v294 = vld [vmem:[%s191 + $0x250] sm:$0xff]
      %v295 = vld [vmem:[%s191 + $0x258] sm:$0xff]
      %v296 = vld [vmem:[%s191 + $0x260] sm:$0xff]
      %v297 = vld [vmem:[%s191 + $0x268] sm:$0xff]
      %v298 = vld [vmem:[%s191 + $0x270] sm:$0xff]
      %v299 = vld [vmem:[%s191 + $0x278] sm:$0xff]
      %vm300 = vcmask 130048
      %v302 = vsel %vm300, %v220, 0
      %v305 = vsel %vm300, %v221, 0
      %v308 = vsel %vm300, %v222, 0
      %v311 = vsel %vm300, %v223, 0
      %v314 = vsel %vm300, %v224, 0
      %v317 = vsel %vm300, %v225, 0
      %v320 = vsel %vm300, %v226, 0
      %v323 = vsel %vm300, %v227, 0
      %v326 = vsel %vm300, %v228, 0
      %v329 = vsel %vm300, %v229, 0
      %v332 = vsel %vm300, %v230, 0
      %v335 = vsel %vm300, %v231, 0
      %v338 = vsel %vm300, %v232, 0
      %v341 = vsel %vm300, %v233, 0
      %v344 = vsel %vm300, %v234, 0
      %v347 = vsel %vm300, %v235, 0
      %v350 = vsel %vm300, %v236, 0
      %v353 = vsel %vm300, %v237, 0
      %v356 = vsel %vm300, %v238, 0
      %v359 = vsel %vm300, %v239, 0
      %v362 = vsel %vm300, %v240, 0
      %v365 = vsel %vm300, %v241, 0
      %v368 = vsel %vm300, %v242, 0
      %v371 = vsel %vm300, %v243, 0
      %v374 = vsel %vm300, %v244, 0
      %v377 = vsel %vm300, %v245, 0
      %v380 = vsel %vm300, %v246, 0
      %v383 = vsel %vm300, %v247, 0
      %v386 = vsel %vm300, %v248, 0
      %v389 = vsel %vm300, %v249, 0
      %v392 = vsel %vm300, %v250, 0
      %v395 = vsel %vm300, %v251, 0
      %v398 = vsel %vm300, %v252, 0
      %v401 = vsel %vm300, %v253, 0
      %v404 = vsel %vm300, %v254, 0
      %v407 = vsel %vm300, %v255, 0
      %v410 = vsel %vm300, %v256, 0
      %v413 = vsel %vm300, %v257, 0
      %v416 = vsel %vm300, %v258, 0
      %v419 = vsel %vm300, %v259, 0
      %v422 = vsel %vm300, %v260, 0
      %v425 = vsel %vm300, %v261, 0
      %v428 = vsel %vm300, %v262, 0
      %v431 = vsel %vm300, %v263, 0
      %v434 = vsel %vm300, %v264, 0
      %v437 = vsel %vm300, %v265, 0
      %v440 = vsel %vm300, %v266, 0
      %v443 = vsel %vm300, %v267, 0
      %v446 = vsel %vm300, %v268, 0
      %v449 = vsel %vm300, %v269, 0
      %v452 = vsel %vm300, %v270, 0
      %v455 = vsel %vm300, %v271, 0
      %v458 = vsel %vm300, %v272, 0
      %v461 = vsel %vm300, %v273, 0
      %v464 = vsel %vm300, %v274, 0
      %v467 = vsel %vm300, %v275, 0
      %v470 = vsel %vm300, %v276, 0
      %v473 = vsel %vm300, %v277, 0
      %v476 = vsel %vm300, %v278, 0
      %v479 = vsel %vm300, %v279, 0
      %v482 = vsel %vm300, %v280, 0
      %v485 = vsel %vm300, %v281, 0
      %v488 = vsel %vm300, %v282, 0
      %v491 = vsel %vm300, %v283, 0
      %v494 = vsel %vm300, %v284, 0
      %v497 = vsel %vm300, %v285, 0
      %v500 = vsel %vm300, %v286, 0
      %v503 = vsel %vm300, %v287, 0
      %v506 = vsel %vm300, %v288, 0
      %v509 = vsel %vm300, %v289, 0
      %v512 = vsel %vm300, %v290, 0
      %v515 = vsel %vm300, %v291, 0
      %v518 = vsel %vm300, %v292, 0
      %v521 = vsel %vm300, %v293, 0
      %v524 = vsel %vm300, %v294, 0
      %v527 = vsel %vm300, %v295, 0
      %v530 = vsel %vm300, %v296, 0
      %v533 = vsel %vm300, %v297, 0
      %v536 = vsel %vm300, %v298, 0
      %v539 = vsel %vm300, %v299, 0
      %541 = vmatprep.subr.mxu0 0.0
      %542 = vmatpush1.msra.mxu0 0.0
      %543 = vmatprep.subr.mxu0 0.0
      %544 = vmatpush1.msra.mxu0 0.0
      %545 = vmatprep.subr.mxu0 0.0
      %546 = vmatpush1.msra.mxu0 0.0
      %547 = vmatprep.subr.mxu0 0.0
      %548 = vmatpush1.msra.mxu0 0.0
      %549 = vmatprep.subr.mxu0 0.0
      %550 = vmatpush1.msra.mxu0 0.0
      %551 = vmatprep.subr.mxu0 0.0
      %552 = vmatpush1.msra.mxu0 0.0
      %553 = vmatprep.subr.mxu0 0.0
      %554 = vmatpush1.msra.mxu0 0.0
      %555 = vmatprep.subr.mxu0 0.0
      %556 = vmatpush1.msra.mxu0 0.0
      %557 = vmatprep.subr.mxu0 0.0
      %558 = vmatpush1.msra.mxu0 0.0
      %559 = vmatprep.subr.mxu0 0.0
      %560 = vmatpush1.msra.mxu0 0.0
      %561 = vmatprep.subr.mxu0 0.0
      %562 = vmatpush1.msra.mxu0 0.0
      %563 = vmatprep.subr.mxu0 0.0
      %564 = vmatpush1.msra.mxu0 0.0
      %565 = vmatprep.subr.mxu0 0.0
      %566 = vmatpush1.msra.mxu0 0.0
      %567 = vmatprep.subr.mxu0 0.0
      %568 = vmatpush1.msra.mxu0 0.0
      %569 = vmatprep.subr.mxu0 0.0
      %570 = vmatpush1.msra.mxu0 %v197
      %571 = vmatprep.subr.mxu0 0.0
      %572 = vmatpush1.msra.mxu0 %v196
      %573 = vmatprep.subr.mxu0 0.0
      %574 = vmatpush2.msra.mxu0 0.0
      %575 = vmatprep.subr.mxu0 0.0
      %576 = vmatpush2.msra.mxu0 0.0
      %577 = vmatprep.subr.mxu0 0.0
      %578 = vmatpush2.msra.mxu0 0.0
      %579 = vmatprep.subr.mxu0 0.0
      %580 = vmatpush2.msra.mxu0 0.0
      %581 = vmatprep.subr.mxu0 0.0
      %582 = vmatpush2.msra.mxu0 0.0
      %583 = vmatprep.subr.mxu0 0.0
      %584 = vmatpush2.msra.mxu0 0.0
      %585 = vmatprep.subr.mxu0 0.0
      %586 = vmatpush2.msra.mxu0 0.0
      %587 = vmatprep.subr.mxu0 0.0
      %588 = vmatpush2.msra.mxu0 0.0
      %589 = vmatprep.subr.mxu0 0.0
      %590 = vmatpush2.msra.mxu0 0.0
      %591 = vmatprep.subr.mxu0 0.0
      %592 = vmatpush2.msra.mxu0 0.0
      %593 = vmatprep.subr.mxu0 0.0
      %594 = vmatpush2.msra.mxu0 0.0
      %595 = vmatprep.subr.mxu0 0.0
      %596 = vmatpush2.msra.mxu0 0.0
      %597 = vmatprep.subr.mxu0 0.0
      %598 = vmatpush2.msra.mxu0 0.0
      %599 = vmatprep.subr.mxu0 0.0
      %600 = vmatpush2.msra.mxu0 0.0
      %601 = vmatprep.subr.mxu0 0.0
      %602 = vmatpush2.msra.mxu0 0.0
      %603 = vmatprep.subr.mxu0 0.0
      %604 = vmatpush2.msra.mxu0 0.0
      %605 = vmatprep.mubr.f32.mxu0 0.0
      %606 = vmatmul.mubr.f32.gmra.mxu0 %v302
      %v607 = vpop.f32.mrf.mxu0
      %v608 = vadd.f32 0.0, %v607
      %v609 = vpop.f32.mrf.mxu0
      %610 = vmatprep.mubr.f32.mxu0 0.0
      %611 = vmatmul.mubr.f32.gmra.mxu0 %v305
      %v612 = vpop.f32.mrf.mxu0
      %v613 = vadd.f32 0.0, %v612
      %v614 = vpop.f32.mrf.mxu0
      %615 = vmatprep.mubr.f32.mxu0 0.0
      %616 = vmatmul.mubr.f32.gmra.mxu0 %v308
      %v617 = vpop.f32.mrf.mxu0
      %v618 = vadd.f32 0.0, %v617
      %v619 = vpop.f32.mrf.mxu0
      %620 = vmatprep.mubr.f32.mxu0 0.0
      %621 = vmatmul.mubr.f32.gmra.mxu0 %v311
      %v622 = vpop.f32.mrf.mxu0
      %v623 = vadd.f32 0.0, %v622
      %v624 = vpop.f32.mrf.mxu0
      %625 = vmatprep.mubr.f32.mxu0 0.0
      %626 = vmatmul.mubr.f32.gmra.mxu0 %v314
      %v627 = vpop.f32.mrf.mxu0
      %v628 = vadd.f32 0.0, %v627
      %v629 = vpop.f32.mrf.mxu0
      %630 = vmatprep.mubr.f32.mxu0 0.0
      %631 = vmatmul.mubr.f32.gmra.mxu0 %v317
      %v632 = vpop.f32.mrf.mxu0
      %v633 = vadd.f32 0.0, %v632
      %v634 = vpop.f32.mrf.mxu0
      %635 = vmatprep.mubr.f32.mxu0 0.0
      %636 = vmatmul.mubr.f32.gmra.mxu0 %v320
      %v637 = vpop.f32.mrf.mxu0
      %v638 = vadd.f32 0.0, %v637
      %v639 = vpop.f32.mrf.mxu0
      %640 = vmatprep.mubr.f32.mxu0 0.0
      %641 = vmatmul.mubr.f32.gmra.mxu0 %v323
      %v642 = vpop.f32.mrf.mxu0
      %v643 = vadd.f32 0.0, %v642
      %v644 = vpop.f32.mrf.mxu0
      %645 = vmatprep.mubr.f32.mxu0 0.0
      %646 = vmatmul.mubr.f32.gmra.mxu0 %v326
      %v647 = vpop.f32.mrf.mxu0
      %v648 = vadd.f32 0.0, %v647
      %v649 = vpop.f32.mrf.mxu0
      %650 = vmatprep.mubr.f32.mxu0 0.0
      %651 = vmatmul.mubr.f32.gmra.mxu0 %v329
      %v652 = vpop.f32.mrf.mxu0
      %v653 = vadd.f32 0.0, %v652
      %v654 = vpop.f32.mrf.mxu0
      %655 = vmatprep.mubr.f32.mxu0 0.0
      %656 = vmatmul.mubr.f32.gmra.mxu0 %v332
      %v657 = vpop.f32.mrf.mxu0
      %v658 = vadd.f32 0.0, %v657
      %v659 = vpop.f32.mrf.mxu0
      %660 = vmatprep.mubr.f32.mxu0 0.0
      %661 = vmatmul.mubr.f32.gmra.mxu0 %v335
      %v662 = vpop.f32.mrf.mxu0
      %v663 = vadd.f32 0.0, %v662
      %v664 = vpop.f32.mrf.mxu0
      %665 = vmatprep.mubr.f32.mxu0 0.0
      %666 = vmatmul.mubr.f32.gmra.mxu0 %v338
      %v667 = vpop.f32.mrf.mxu0
      %v668 = vadd.f32 0.0, %v667
      %v669 = vpop.f32.mrf.mxu0
      %670 = vmatprep.mubr.f32.mxu0 0.0
      %671 = vmatmul.mubr.f32.gmra.mxu0 %v341
      %v672 = vpop.f32.mrf.mxu0
      %v673 = vadd.f32 0.0, %v672
      %v674 = vpop.f32.mrf.mxu0
      %675 = vmatprep.mubr.f32.mxu0 0.0
      %676 = vmatmul.mubr.f32.gmra.mxu0 %v344
      %v677 = vpop.f32.mrf.mxu0
      %v678 = vadd.f32 0.0, %v677
      %v679 = vpop.f32.mrf.mxu0
      %680 = vmatprep.mubr.f32.mxu0 0.0
      %681 = vmatmul.mubr.f32.gmra.mxu0 %v347
      %v682 = vpop.f32.mrf.mxu0
      %v683 = vadd.f32 0.0, %v682
      %v684 = vpop.f32.mrf.mxu0
      %685 = vmatprep.mubr.f32.mxu0 0.0
      %686 = vmatmul.mubr.f32.gmra.mxu0 %v350
      %v687 = vpop.f32.mrf.mxu0
      %v688 = vadd.f32 0.0, %v687
      %v689 = vpop.f32.mrf.mxu0
      %690 = vmatprep.mubr.f32.mxu0 0.0
      %691 = vmatmul.mubr.f32.gmra.mxu0 %v353
      %v692 = vpop.f32.mrf.mxu0
      %v693 = vadd.f32 0.0, %v692
      %v694 = vpop.f32.mrf.mxu0
      %695 = vmatprep.mubr.f32.mxu0 0.0
      %696 = vmatmul.mubr.f32.gmra.mxu0 %v356
      %v697 = vpop.f32.mrf.mxu0
      %v698 = vadd.f32 0.0, %v697
      %v699 = vpop.f32.mrf.mxu0
      %700 = vmatprep.mubr.f32.mxu0 0.0
      %701 = vmatmul.mubr.f32.gmra.mxu0 %v359
      %v702 = vpop.f32.mrf.mxu0
      %v703 = vadd.f32 0.0, %v702
      %v704 = vpop.f32.mrf.mxu0
      %705 = vmatprep.mubr.f32.mxu0 0.0
      %706 = vmatmul.mubr.f32.gmra.mxu0 %v362
      %v707 = vpop.f32.mrf.mxu0
      %v708 = vadd.f32 0.0, %v707
      %v709 = vpop.f32.mrf.mxu0
      %710 = vmatprep.mubr.f32.mxu0 0.0
      %711 = vmatmul.mubr.f32.gmra.mxu0 %v365
      %v712 = vpop.f32.mrf.mxu0
      %v713 = vadd.f32 0.0, %v712
      %v714 = vpop.f32.mrf.mxu0
      %715 = vmatprep.mubr.f32.mxu0 0.0
      %716 = vmatmul.mubr.f32.gmra.mxu0 %v368
      %v717 = vpop.f32.mrf.mxu0
      %v718 = vadd.f32 0.0, %v717
      %v719 = vpop.f32.mrf.mxu0
      %720 = vmatprep.mubr.f32.mxu0 0.0
      %721 = vmatmul.mubr.f32.gmra.mxu0 %v371
      %v722 = vpop.f32.mrf.mxu0
      %v723 = vadd.f32 0.0, %v722
      %v724 = vpop.f32.mrf.mxu0
      %725 = vmatprep.mubr.f32.mxu0 0.0
      %726 = vmatmul.mubr.f32.gmra.mxu0 %v374
      %v727 = vpop.f32.mrf.mxu0
      %v728 = vadd.f32 0.0, %v727
      %v729 = vpop.f32.mrf.mxu0
      %730 = vmatprep.mubr.f32.mxu0 0.0
      %731 = vmatmul.mubr.f32.gmra.mxu0 %v377
      %v732 = vpop.f32.mrf.mxu0
      %v733 = vadd.f32 0.0, %v732
      %v734 = vpop.f32.mrf.mxu0
      %735 = vmatprep.mubr.f32.mxu0 0.0
      %736 = vmatmul.mubr.f32.gmra.mxu0 %v380
      %v737 = vpop.f32.mrf.mxu0
      %v738 = vadd.f32 0.0, %v737
      %v739 = vpop.f32.mrf.mxu0
      %740 = vmatprep.mubr.f32.mxu0 0.0
      %741 = vmatmul.mubr.f32.gmra.mxu0 %v383
      %v742 = vpop.f32.mrf.mxu0
      %v743 = vadd.f32 0.0, %v742
      %v744 = vpop.f32.mrf.mxu0
      %745 = vmatprep.mubr.f32.mxu0 0.0
      %746 = vmatmul.mubr.f32.gmra.mxu0 %v386
      %v747 = vpop.f32.mrf.mxu0
      %v748 = vadd.f32 0.0, %v747
      %v749 = vpop.f32.mrf.mxu0
      %750 = vmatprep.mubr.f32.mxu0 0.0
      %751 = vmatmul.mubr.f32.gmra.mxu0 %v389
      %v752 = vpop.f32.mrf.mxu0
      %v753 = vadd.f32 0.0, %v752
      %v754 = vpop.f32.mrf.mxu0
      %755 = vmatprep.mubr.f32.mxu0 0.0
      %756 = vmatmul.mubr.f32.gmra.mxu0 %v392
      %v757 = vpop.f32.mrf.mxu0
      %v758 = vadd.f32 0.0, %v757
      %v759 = vpop.f32.mrf.mxu0
      %760 = vmatprep.mubr.f32.mxu0 0.0
      %761 = vmatmul.mubr.f32.gmra.mxu0 %v395
      %v762 = vpop.f32.mrf.mxu0
      %v763 = vadd.f32 0.0, %v762
      %v764 = vpop.f32.mrf.mxu0
      %765 = vmatprep.mubr.f32.mxu0 0.0
      %766 = vmatmul.mubr.f32.gmra.mxu0 %v398
      %v767 = vpop.f32.mrf.mxu0
      %v768 = vadd.f32 0.0, %v767
      %v769 = vpop.f32.mrf.mxu0
      %770 = vmatprep.mubr.f32.mxu0 0.0
      %771 = vmatmul.mubr.f32.gmra.mxu0 %v401
      %v772 = vpop.f32.mrf.mxu0
      %v773 = vadd.f32 0.0, %v772
      %v774 = vpop.f32.mrf.mxu0
      %775 = vmatprep.mubr.f32.mxu0 0.0
      %776 = vmatmul.mubr.f32.gmra.mxu0 %v404
      %v777 = vpop.f32.mrf.mxu0
      %v778 = vadd.f32 0.0, %v777
      %v779 = vpop.f32.mrf.mxu0
      %780 = vmatprep.mubr.f32.mxu0 0.0
      %781 = vmatmul.mubr.f32.gmra.mxu0 %v407
      %v782 = vpop.f32.mrf.mxu0
      %v783 = vadd.f32 0.0, %v782
      %v784 = vpop.f32.mrf.mxu0
      %785 = vmatprep.mubr.f32.mxu0 0.0
      %786 = vmatmul.mubr.f32.gmra.mxu0 %v410
      %v787 = vpop.f32.mrf.mxu0
      %v788 = vadd.f32 0.0, %v787
      %v789 = vpop.f32.mrf.mxu0
      %790 = vmatprep.mubr.f32.mxu0 0.0
      %791 = vmatmul.mubr.f32.gmra.mxu0 %v413
      %v792 = vpop.f32.mrf.mxu0
      %v793 = vadd.f32 0.0, %v792
      %v794 = vpop.f32.mrf.mxu0
      %795 = vmatprep.mubr.f32.mxu0 0.0
      %796 = vmatmul.mubr.f32.gmra.mxu0 %v416
      %v797 = vpop.f32.mrf.mxu0
      %v798 = vadd.f32 0.0, %v797
      %v799 = vpop.f32.mrf.mxu0
      %800 = vmatprep.mubr.f32.mxu0 0.0
      %801 = vmatmul.mubr.f32.gmra.mxu0 %v419
      %v802 = vpop.f32.mrf.mxu0
      %v803 = vadd.f32 0.0, %v802
      %v804 = vpop.f32.mrf.mxu0
      %805 = vmatprep.mubr.f32.mxu0 0.0
      %806 = vmatmul.mubr.f32.gmra.mxu0 %v422
      %v807 = vpop.f32.mrf.mxu0
      %v808 = vadd.f32 0.0, %v807
      %v809 = vpop.f32.mrf.mxu0
      %810 = vmatprep.mubr.f32.mxu0 0.0
      %811 = vmatmul.mubr.f32.gmra.mxu0 %v425
      %v812 = vpop.f32.mrf.mxu0
      %v813 = vadd.f32 0.0, %v812
      %v814 = vpop.f32.mrf.mxu0
      %815 = vmatprep.mubr.f32.mxu0 0.0
      %816 = vmatmul.mubr.f32.gmra.mxu0 %v428
      %v817 = vpop.f32.mrf.mxu0
      %v818 = vadd.f32 0.0, %v817
      %v819 = vpop.f32.mrf.mxu0
      %820 = vmatprep.mubr.f32.mxu0 0.0
      %821 = vmatmul.mubr.f32.gmra.mxu0 %v431
      %v822 = vpop.f32.mrf.mxu0
      %v823 = vadd.f32 0.0, %v822
      %v824 = vpop.f32.mrf.mxu0
      %825 = vmatprep.mubr.f32.mxu0 0.0
      %826 = vmatmul.mubr.f32.gmra.mxu0 %v434
      %v827 = vpop.f32.mrf.mxu0
      %v828 = vadd.f32 0.0, %v827
      %v829 = vpop.f32.mrf.mxu0
      %830 = vmatprep.mubr.f32.mxu0 0.0
      %831 = vmatmul.mubr.f32.gmra.mxu0 %v437
      %v832 = vpop.f32.mrf.mxu0
      %v833 = vadd.f32 0.0, %v832
      %v834 = vpop.f32.mrf.mxu0
      %835 = vmatprep.mubr.f32.mxu0 0.0
      %836 = vmatmul.mubr.f32.gmra.mxu0 %v440
      %v837 = vpop.f32.mrf.mxu0
      %v838 = vadd.f32 0.0, %v837
      %v839 = vpop.f32.mrf.mxu0
      %840 = vmatprep.mubr.f32.mxu0 0.0
      %841 = vmatmul.mubr.f32.gmra.mxu0 %v443
      %v842 = vpop.f32.mrf.mxu0
      %v843 = vadd.f32 0.0, %v842
      %v844 = vpop.f32.mrf.mxu0
      %845 = vmatprep.mubr.f32.mxu0 0.0
      %846 = vmatmul.mubr.f32.gmra.mxu0 %v446
      %v847 = vpop.f32.mrf.mxu0
      %v848 = vadd.f32 0.0, %v847
      %v849 = vpop.f32.mrf.mxu0
      %850 = vmatprep.mubr.f32.mxu0 0.0
      %851 = vmatmul.mubr.f32.gmra.mxu0 %v449
      %v852 = vpop.f32.mrf.mxu0
      %v853 = vadd.f32 0.0, %v852
      %v854 = vpop.f32.mrf.mxu0
      %855 = vmatprep.mubr.f32.mxu0 0.0
      %856 = vmatmul.mubr.f32.gmra.mxu0 %v452
      %v857 = vpop.f32.mrf.mxu0
      %v858 = vadd.f32 0.0, %v857
      %v859 = vpop.f32.mrf.mxu0
      %860 = vmatprep.mubr.f32.mxu0 0.0
      %861 = vmatmul.mubr.f32.gmra.mxu0 %v455
      %v862 = vpop.f32.mrf.mxu0
      %v863 = vadd.f32 0.0, %v862
      %v864 = vpop.f32.mrf.mxu0
      %865 = vmatprep.mubr.f32.mxu0 0.0
      %866 = vmatmul.mubr.f32.gmra.mxu0 %v458
      %v867 = vpop.f32.mrf.mxu0
      %v868 = vadd.f32 0.0, %v867
      %v869 = vpop.f32.mrf.mxu0
      %870 = vmatprep.mubr.f32.mxu0 0.0
      %871 = vmatmul.mubr.f32.gmra.mxu0 %v461
      %v872 = vpop.f32.mrf.mxu0
      %v873 = vadd.f32 0.0, %v872
      %v874 = vpop.f32.mrf.mxu0
      %875 = vmatprep.mubr.f32.mxu0 0.0
      %876 = vmatmul.mubr.f32.gmra.mxu0 %v464
      %v877 = vpop.f32.mrf.mxu0
      %v878 = vadd.f32 0.0, %v877
      %v879 = vpop.f32.mrf.mxu0
      %880 = vmatprep.mubr.f32.mxu0 0.0
      %881 = vmatmul.mubr.f32.gmra.mxu0 %v467
      %v882 = vpop.f32.mrf.mxu0
      %v883 = vadd.f32 0.0, %v882
      %v884 = vpop.f32.mrf.mxu0
      %885 = vmatprep.mubr.f32.mxu0 0.0
      %886 = vmatmul.mubr.f32.gmra.mxu0 %v470
      %v887 = vpop.f32.mrf.mxu0
      %v888 = vadd.f32 0.0, %v887
      %v889 = vpop.f32.mrf.mxu0
      %890 = vmatprep.mubr.f32.mxu0 0.0
      %891 = vmatmul.mubr.f32.gmra.mxu0 %v473
      %v892 = vpop.f32.mrf.mxu0
      %v893 = vadd.f32 0.0, %v892
      %v894 = vpop.f32.mrf.mxu0
      %895 = vmatprep.mubr.f32.mxu0 0.0
      %896 = vmatmul.mubr.f32.gmra.mxu0 %v476
      %v897 = vpop.f32.mrf.mxu0
      %v898 = vadd.f32 0.0, %v897
      %v899 = vpop.f32.mrf.mxu0
      %900 = vmatprep.mubr.f32.mxu0 0.0
      %901 = vmatmul.mubr.f32.gmra.mxu0 %v479
      %v902 = vpop.f32.mrf.mxu0
      %v903 = vadd.f32 0.0, %v902
      %v904 = vpop.f32.mrf.mxu0
      %905 = vmatprep.mubr.f32.mxu0 0.0
      %906 = vmatmul.mubr.f32.gmra.mxu0 %v482
      %v907 = vpop.f32.mrf.mxu0
      %v908 = vadd.f32 0.0, %v907
      %v909 = vpop.f32.mrf.mxu0
      %910 = vmatprep.mubr.f32.mxu0 0.0
      %911 = vmatmul.mubr.f32.gmra.mxu0 %v485
      %v912 = vpop.f32.mrf.mxu0
      %v913 = vadd.f32 0.0, %v912
      %v914 = vpop.f32.mrf.mxu0
      %915 = vmatprep.mubr.f32.mxu0 0.0
      %916 = vmatmul.mubr.f32.gmra.mxu0 %v488
      %v917 = vpop.f32.mrf.mxu0
      %v918 = vadd.f32 0.0, %v917
      %v919 = vpop.f32.mrf.mxu0
      %920 = vmatprep.mubr.f32.mxu0 0.0
      %921 = vmatmul.mubr.f32.gmra.mxu0 %v491
      %v922 = vpop.f32.mrf.mxu0
      %v923 = vadd.f32 0.0, %v922
      %v924 = vpop.f32.mrf.mxu0
      %925 = vmatprep.mubr.f32.mxu0 0.0
      %926 = vmatmul.mubr.f32.gmra.mxu0 %v494
      %v927 = vpop.f32.mrf.mxu0
      %v928 = vadd.f32 0.0, %v927
      %v929 = vpop.f32.mrf.mxu0
      %930 = vmatprep.mubr.f32.mxu0 0.0
      %931 = vmatmul.mubr.f32.gmra.mxu0 %v497
      %v932 = vpop.f32.mrf.mxu0
      %v933 = vadd.f32 0.0, %v932
      %v934 = vpop.f32.mrf.mxu0
      %935 = vmatprep.mubr.f32.mxu0 0.0
      %936 = vmatmul.mubr.f32.gmra.mxu0 %v500
      %v937 = vpop.f32.mrf.mxu0
      %v938 = vadd.f32 0.0, %v937
      %v939 = vpop.f32.mrf.mxu0
      %940 = vmatprep.mubr.f32.mxu0 0.0
      %941 = vmatmul.mubr.f32.gmra.mxu0 %v503
      %v942 = vpop.f32.mrf.mxu0
      %v943 = vadd.f32 0.0, %v942
      %v944 = vpop.f32.mrf.mxu0
      %945 = vmatprep.mubr.f32.mxu0 0.0
      %946 = vmatmul.mubr.f32.gmra.mxu0 %v506
      %v947 = vpop.f32.mrf.mxu0
      %v948 = vadd.f32 0.0, %v947
      %v949 = vpop.f32.mrf.mxu0
      %950 = vmatprep.mubr.f32.mxu0 0.0
      %951 = vmatmul.mubr.f32.gmra.mxu0 %v509
      %v952 = vpop.f32.mrf.mxu0
      %v953 = vadd.f32 0.0, %v952
      %v954 = vpop.f32.mrf.mxu0
      %955 = vmatprep.mubr.f32.mxu0 0.0
      %956 = vmatmul.mubr.f32.gmra.mxu0 %v512
      %v957 = vpop.f32.mrf.mxu0
      %v958 = vadd.f32 0.0, %v957
      %v959 = vpop.f32.mrf.mxu0
      %960 = vmatprep.mubr.f32.mxu0 0.0
      %961 = vmatmul.mubr.f32.gmra.mxu0 %v515
      %v962 = vpop.f32.mrf.mxu0
      %v963 = vadd.f32 0.0, %v962
      %v964 = vpop.f32.mrf.mxu0
      %965 = vmatprep.mubr.f32.mxu0 0.0
      %966 = vmatmul.mubr.f32.gmra.mxu0 %v518
      %v967 = vpop.f32.mrf.mxu0
      %v968 = vadd.f32 0.0, %v967
      %v969 = vpop.f32.mrf.mxu0
      %970 = vmatprep.mubr.f32.mxu0 0.0
      %971 = vmatmul.mubr.f32.gmra.mxu0 %v521
      %v972 = vpop.f32.mrf.mxu0
      %v973 = vadd.f32 0.0, %v972
      %v974 = vpop.f32.mrf.mxu0
      %975 = vmatprep.mubr.f32.mxu0 0.0
      %976 = vmatmul.mubr.f32.gmra.mxu0 %v524
      %v977 = vpop.f32.mrf.mxu0
      %v978 = vadd.f32 0.0, %v977
      %v979 = vpop.f32.mrf.mxu0
      %980 = vmatprep.mubr.f32.mxu0 0.0
      %981 = vmatmul.mubr.f32.gmra.mxu0 %v527
      %v982 = vpop.f32.mrf.mxu0
      %v983 = vadd.f32 0.0, %v982
      %v984 = vpop.f32.mrf.mxu0
      %985 = vmatprep.mubr.f32.mxu0 0.0
      %986 = vmatmul.mubr.f32.gmra.mxu0 %v530
      %v987 = vpop.f32.mrf.mxu0
      %v988 = vadd.f32 0.0, %v987
      %v989 = vpop.f32.mrf.mxu0
      %990 = vmatprep.mubr.f32.mxu0 0.0
      %991 = vmatmul.mubr.f32.gmra.mxu0 %v533
      %v992 = vpop.f32.mrf.mxu0
      %v993 = vadd.f32 0.0, %v992
      %v994 = vpop.f32.mrf.mxu0
      %995 = vmatprep.mubr.f32.mxu0 0.0
      %996 = vmatmul.mubr.f32.gmra.mxu0 %v536
      %v997 = vpop.f32.mrf.mxu0
      %v998 = vadd.f32 0.0, %v997
      %v999 = vpop.f32.mrf.mxu0
      %1000 = vmatprep.mubr.f32.mxu0 0.0
      %1001 = vmatmul.mubr.f32.gmra.mxu0 %v539
      %v1002 = vpop.f32.mrf.mxu0
      %v1003 = vadd.f32 0.0, %v1002
      %v1004 = vpop.f32.mrf.mxu0
      %1005 = vdwg.mxu0
      %v1006 = vmax.f32 %v608, 0.0
      %v1007 = vmax.f32 %v613, 0.0
      %v1008 = vmax.f32 %v618, 0.0
      %v1009 = vmax.f32 %v623, 0.0
      %v1010 = vmax.f32 %v628, 0.0
      %v1011 = vmax.f32 %v633, 0.0
      %v1012 = vmax.f32 %v638, 0.0
      %v1013 = vmax.f32 %v643, 0.0
      %v1014 = vmax.f32 %v648, 0.0
      %v1015 = vmax.f32 %v653, 0.0
      %v1016 = vmax.f32 %v658, 0.0
      %v1017 = vmax.f32 %v663, 0.0
      %v1018 = vmax.f32 %v668, 0.0
      %v1019 = vmax.f32 %v673, 0.0
      %v1020 = vmax.f32 %v678, 0.0
      %v1021 = vmax.f32 %v683, 0.0
      %v1022 = vmax.f32 %v688, 0.0
      %v1023 = vmax.f32 %v693, 0.0
      %v1024 = vmax.f32 %v698, 0.0
      %v1025 = vmax.f32 %v703, 0.0
      %v1026 = vmax.f32 %v708, 0.0
      %v1027 = vmax.f32 %v713, 0.0
      %v1028 = vmax.f32 %v718, 0.0
      %v1029 = vmax.f32 %v723, 0.0
      %v1030 = vmax.f32 %v728, 0.0
      %v1031 = vmax.f32 %v733, 0.0
      %v1032 = vmax.f32 %v738, 0.0
      %v1033 = vmax.f32 %v743, 0.0
      %v1034 = vmax.f32 %v748, 0.0
      %v1035 = vmax.f32 %v753, 0.0
      %v1036 = vmax.f32 %v758, 0.0
      %v1037 = vmax.f32 %v763, 0.0
      %v1038 = vmax.f32 %v768, 0.0
      %v1039 = vmax.f32 %v773, 0.0
      %v1040 = vmax.f32 %v778, 0.0
      %v1041 = vmax.f32 %v783, 0.0
      %v1042 = vmax.f32 %v788, 0.0
      %v1043 = vmax.f32 %v793, 0.0
      %v1044 = vmax.f32 %v798, 0.0
      %v1045 = vmax.f32 %v803, 0.0
      %v1046 = vmax.f32 %v808, 0.0
      %v1047 = vmax.f32 %v813, 0.0
      %v1048 = vmax.f32 %v818, 0.0
      %v1049 = vmax.f32 %v823, 0.0
      %v1050 = vmax.f32 %v828, 0.0
      %v1051 = vmax.f32 %v833, 0.0
      %v1052 = vmax.f32 %v838, 0.0
      %v1053 = vmax.f32 %v843, 0.0
      %v1054 = vmax.f32 %v848, 0.0
      %v1055 = vmax.f32 %v853, 0.0
      %v1056 = vmax.f32 %v858, 0.0
      %v1057 = vmax.f32 %v863, 0.0
      %v1058 = vmax.f32 %v868, 0.0
      %v1059 = vmax.f32 %v873, 0.0
      %v1060 = vmax.f32 %v878, 0.0
      %v1061 = vmax.f32 %v883, 0.0
      %v1062 = vmax.f32 %v888, 0.0
      %v1063 = vmax.f32 %v893, 0.0
      %v1064 = vmax.f32 %v898, 0.0
      %v1065 = vmax.f32 %v903, 0.0
      %v1066 = vmax.f32 %v908, 0.0
      %v1067 = vmax.f32 %v913, 0.0
      %v1068 = vmax.f32 %v918, 0.0
      %v1069 = vmax.f32 %v923, 0.0
      %v1070 = vmax.f32 %v928, 0.0
      %v1071 = vmax.f32 %v933, 0.0
      %v1072 = vmax.f32 %v938, 0.0
      %v1073 = vmax.f32 %v943, 0.0
      %v1074 = vmax.f32 %v948, 0.0
      %v1075 = vmax.f32 %v953, 0.0
      %v1076 = vmax.f32 %v958, 0.0
      %v1077 = vmax.f32 %v963, 0.0
      %v1078 = vmax.f32 %v968, 0.0
      %v1079 = vmax.f32 %v973, 0.0
      %v1080 = vmax.f32 %v978, 0.0
      %v1081 = vmax.f32 %v983, 0.0
      %v1082 = vmax.f32 %v988, 0.0
      %v1083 = vmax.f32 %v993, 0.0
      %v1084 = vmax.f32 %v998, 0.0
      %v1085 = vmax.f32 %v1003, 0.0
      %1086 = vmatprep.subr.mxu0 0.0
      %1087 = vmatpush1.msra.mxu0 %v213
      %1088 = vmatprep.subr.mxu0 0.0
      %1089 = vmatpush1.msra.mxu0 %v212
      %1090 = vmatprep.subr.mxu0 0.0
      %1091 = vmatpush1.msra.mxu0 %v211
      %1092 = vmatprep.subr.mxu0 0.0
      %1093 = vmatpush1.msra.mxu0 %v210
      %1094 = vmatprep.subr.mxu0 0.0
      %1095 = vmatpush1.msra.mxu0 %v209
      %1096 = vmatprep.subr.mxu0 0.0
      %1097 = vmatpush1.msra.mxu0 %v208
      %1098 = vmatprep.subr.mxu0 0.0
      %1099 = vmatpush1.msra.mxu0 %v207
      %1100 = vmatprep.subr.mxu0 0.0
      %1101 = vmatpush1.msra.mxu0 %v206
      %1102 = vmatprep.subr.mxu0 0.0
      %1103 = vmatpush1.msra.mxu0 %v205
      %1104 = vmatprep.subr.mxu0 0.0
      %1105 = vmatpush1.msra.mxu0 %v204
      %1106 = vmatprep.subr.mxu0 0.0
      %1107 = vmatpush1.msra.mxu0 %v203
      %1108 = vmatprep.subr.mxu0 0.0
      %1109 = vmatpush1.msra.mxu0 %v202
      %1110 = vmatprep.subr.mxu0 0.0
      %1111 = vmatpush1.msra.mxu0 %v201
      %1112 = vmatprep.subr.mxu0 0.0
      %1113 = vmatpush1.msra.mxu0 %v200
      %1114 = vmatprep.subr.mxu0 0.0
      %1115 = vmatpush1.msra.mxu0 %v199
      %1116 = vmatprep.subr.mxu0 0.0
      %1117 = vmatpush1.msra.mxu0 %v198
      %1118 = vmatprep.subr.mxu0 0.0
      %1119 = vmatpush2.msra.mxu0 0.0
      %1120 = vmatprep.subr.mxu0 0.0
      %1121 = vmatpush2.msra.mxu0 0.0
      %1122 = vmatprep.subr.mxu0 0.0
      %1123 = vmatpush2.msra.mxu0 0.0
      %1124 = vmatprep.subr.mxu0 0.0
      %1125 = vmatpush2.msra.mxu0 0.0
      %1126 = vmatprep.subr.mxu0 0.0
      %1127 = vmatpush2.msra.mxu0 0.0
      %1128 = vmatprep.subr.mxu0 0.0
      %1129 = vmatpush2.msra.mxu0 0.0
      %1130 = vmatprep.subr.mxu0 0.0
      %1131 = vmatpush2.msra.mxu0 0.0
      %1132 = vmatprep.subr.mxu0 0.0
      %1133 = vmatpush2.msra.mxu0 0.0
      %1134 = vmatprep.subr.mxu0 0.0
      %1135 = vmatpush2.msra.mxu0 0.0
      %1136 = vmatprep.subr.mxu0 0.0
      %1137 = vmatpush2.msra.mxu0 0.0
      %1138 = vmatprep.subr.mxu0 0.0
      %1139 = vmatpush2.msra.mxu0 0.0
      %1140 = vmatprep.subr.mxu0 0.0
      %1141 = vmatpush2.msra.mxu0 0.0
      %1142 = vmatprep.subr.mxu0 0.0
      %1143 = vmatpush2.msra.mxu0 0.0
      %1144 = vmatprep.subr.mxu0 0.0
      %1145 = vmatpush2.msra.mxu0 0.0
      %1146 = vmatprep.subr.mxu0 0.0
      %1147 = vmatpush2.msra.mxu0 0.0
      %1148 = vmatprep.subr.mxu0 0.0
      %1149 = vmatpush2.msra.mxu0 0.0
      %1150 = vmatprep.mubr.f32.mxu0 0.0
      %1151 = vmatmul.mubr.f32.gmra.mxu0 %v1006
      %v1152 = vpop.f32.mrf.mxu0
      %v1153 = vadd.f32 0.0, %v1152
      %v1154 = vpop.f32.mrf.mxu0
      %1155 = vmatprep.mubr.f32.mxu0 0.0
      %1156 = vmatmul.mubr.f32.gmra.mxu0 %v1007
      %v1157 = vpop.f32.mrf.mxu0
      %v1158 = vadd.f32 0.0, %v1157
      %v1159 = vpop.f32.mrf.mxu0
      %1160 = vmatprep.mubr.f32.mxu0 0.0
      %1161 = vmatmul.mubr.f32.gmra.mxu0 %v1008
      %v1162 = vpop.f32.mrf.mxu0
      %v1163 = vadd.f32 0.0, %v1162
      %v1164 = vpop.f32.mrf.mxu0
      %1165 = vmatprep.mubr.f32.mxu0 0.0
      %1166 = vmatmul.mubr.f32.gmra.mxu0 %v1009
      %v1167 = vpop.f32.mrf.mxu0
      %v1168 = vadd.f32 0.0, %v1167
      %v1169 = vpop.f32.mrf.mxu0
      %1170 = vmatprep.mubr.f32.mxu0 0.0
      %1171 = vmatmul.mubr.f32.gmra.mxu0 %v1010
      %v1172 = vpop.f32.mrf.mxu0
      %v1173 = vadd.f32 0.0, %v1172
      %v1174 = vpop.f32.mrf.mxu0
      %1175 = vmatprep.mubr.f32.mxu0 0.0
      %1176 = vmatmul.mubr.f32.gmra.mxu0 %v1011
      %v1177 = vpop.f32.mrf.mxu0
      %v1178 = vadd.f32 0.0, %v1177
      %v1179 = vpop.f32.mrf.mxu0
      %1180 = vmatprep.mubr.f32.mxu0 0.0
      %1181 = vmatmul.mubr.f32.gmra.mxu0 %v1012
      %v1182 = vpop.f32.mrf.mxu0
      %v1183 = vadd.f32 0.0, %v1182
      %v1184 = vpop.f32.mrf.mxu0
      %1185 = vmatprep.mubr.f32.mxu0 0.0
      %1186 = vmatmul.mubr.f32.gmra.mxu0 %v1013
      %v1187 = vpop.f32.mrf.mxu0
      %v1188 = vadd.f32 0.0, %v1187
      %v1189 = vpop.f32.mrf.mxu0
      %1190 = vmatprep.mubr.f32.mxu0 0.0
      %1191 = vmatmul.mubr.f32.gmra.mxu0 %v1014
      %v1192 = vpop.f32.mrf.mxu0
      %v1193 = vadd.f32 0.0, %v1192
      %v1194 = vpop.f32.mrf.mxu0
      %1195 = vmatprep.mubr.f32.mxu0 0.0
      %1196 = vmatmul.mubr.f32.gmra.mxu0 %v1015
      %v1197 = vpop.f32.mrf.mxu0
      %v1198 = vadd.f32 0.0, %v1197
      %v1199 = vpop.f32.mrf.mxu0
      %1200 = vmatprep.mubr.f32.mxu0 0.0
      %1201 = vmatmul.mubr.f32.gmra.mxu0 %v1016
      %v1202 = vpop.f32.mrf.mxu0
      %v1203 = vadd.f32 0.0, %v1202
      %v1204 = vpop.f32.mrf.mxu0
      %1205 = vmatprep.mubr.f32.mxu0 0.0
      %1206 = vmatmul.mubr.f32.gmra.mxu0 %v1017
      %v1207 = vpop.f32.mrf.mxu0
      %v1208 = vadd.f32 0.0, %v1207
      %v1209 = vpop.f32.mrf.mxu0
      %1210 = vmatprep.mubr.f32.mxu0 0.0
      %1211 = vmatmul.mubr.f32.gmra.mxu0 %v1018
      %v1212 = vpop.f32.mrf.mxu0
      %v1213 = vadd.f32 0.0, %v1212
      %v1214 = vpop.f32.mrf.mxu0
      %1215 = vmatprep.mubr.f32.mxu0 0.0
      %1216 = vmatmul.mubr.f32.gmra.mxu0 %v1019
      %v1217 = vpop.f32.mrf.mxu0
      %v1218 = vadd.f32 0.0, %v1217
      %v1219 = vpop.f32.mrf.mxu0
      %1220 = vmatprep.mubr.f32.mxu0 0.0
      %1221 = vmatmul.mubr.f32.gmra.mxu0 %v1020
      %v1222 = vpop.f32.mrf.mxu0
      %v1223 = vadd.f32 0.0, %v1222
      %v1224 = vpop.f32.mrf.mxu0
      %1225 = vmatprep.mubr.f32.mxu0 0.0
      %1226 = vmatmul.mubr.f32.gmra.mxu0 %v1021
      %v1227 = vpop.f32.mrf.mxu0
      %v1228 = vadd.f32 0.0, %v1227
      %v1229 = vpop.f32.mrf.mxu0
      %1230 = vdwg.mxu0
      %1247 = vrot.lane.b32.xlu0 %v198, 96
      %v1248 = vpop.permute.xlu0 %1247
      %1249 = vrot.lane.b32.xlu0 %v199, 96
      %v1250 = vpop.permute.xlu0 %1249
      %1251 = vrot.lane.b32.xlu0 %v200, 96
      %v1252 = vpop.permute.xlu0 %1251
      %1253 = vrot.lane.b32.xlu0 %v201, 96
      %v1254 = vpop.permute.xlu0 %1253
      %1255 = vrot.lane.b32.xlu0 %v202, 96
      %v1256 = vpop.permute.xlu0 %1255
      %1257 = vrot.lane.b32.xlu0 %v203, 96
      %v1258 = vpop.permute.xlu0 %1257
      %1259 = vrot.lane.b32.xlu0 %v204, 96
      %v1260 = vpop.permute.xlu0 %1259
      %1261 = vrot.lane.b32.xlu0 %v205, 96
      %v1262 = vpop.permute.xlu0 %1261
      %1263 = vrot.lane.b32.xlu0 %v206, 96
      %v1264 = vpop.permute.xlu0 %1263
      %1265 = vrot.lane.b32.xlu0 %v207, 96
      %v1266 = vpop.permute.xlu0 %1265
      %1267 = vrot.lane.b32.xlu0 %v208, 96
      %v1268 = vpop.permute.xlu0 %1267
      %1269 = vrot.lane.b32.xlu0 %v209, 96
      %v1270 = vpop.permute.xlu0 %1269
      %1271 = vrot.lane.b32.xlu0 %v210, 96
      %v1272 = vpop.permute.xlu0 %1271
      %1273 = vrot.lane.b32.xlu0 %v211, 96
      %v1274 = vpop.permute.xlu0 %1273
      %1275 = vrot.lane.b32.xlu0 %v212, 96
      %v1276 = vpop.permute.xlu0 %1275
      %1277 = vrot.lane.b32.xlu0 %v213, 96
      %v1278 = vpop.permute.xlu0 %1277
      %1295 = vmatprep.subr.mxu0 0.0
      %1296 = vmatpush1.msra.mxu0 %v1278
      %1297 = vmatprep.subr.mxu0 0.0
      %1298 = vmatpush1.msra.mxu0 %v1276
      %1299 = vmatprep.subr.mxu0 0.0
      %1300 = vmatpush1.msra.mxu0 %v1274
      %1301 = vmatprep.subr.mxu0 0.0
      %1302 = vmatpush1.msra.mxu0 %v1272
      %1303 = vmatprep.subr.mxu0 0.0
      %1304 = vmatpush1.msra.mxu0 %v1270
      %1305 = vmatprep.subr.mxu0 0.0
      %1306 = vmatpush1.msra.mxu0 %v1268
      %1307 = vmatprep.subr.mxu0 0.0
      %1308 = vmatpush1.msra.mxu0 %v1266
      %1309 = vmatprep.subr.mxu0 0.0
      %1310 = vmatpush1.msra.mxu0 %v1264
      %1311 = vmatprep.subr.mxu0 0.0
      %1312 = vmatpush1.msra.mxu0 %v1262
      %1313 = vmatprep.subr.mxu0 0.0
      %1314 = vmatpush1.msra.mxu0 %v1260
      %1315 = vmatprep.subr.mxu0 0.0
      %1316 = vmatpush1.msra.mxu0 %v1258
      %1317 = vmatprep.subr.mxu0 0.0
      %1318 = vmatpush1.msra.mxu0 %v1256
      %1319 = vmatprep.subr.mxu0 0.0
      %1320 = vmatpush1.msra.mxu0 %v1254
      %1321 = vmatprep.subr.mxu0 0.0
      %1322 = vmatpush1.msra.mxu0 %v1252
      %1323 = vmatprep.subr.mxu0 0.0
      %1324 = vmatpush1.msra.mxu0 %v1250
      %1325 = vmatprep.subr.mxu0 0.0
      %1326 = vmatpush1.msra.mxu0 %v1248
      %1327 = vmatprep.subr.mxu0 0.0
      %1328 = vmatpush2.msra.mxu0 0.0
      %1329 = vmatprep.subr.mxu0 0.0
      %1330 = vmatpush2.msra.mxu0 0.0
      %1331 = vmatprep.subr.mxu0 0.0
      %1332 = vmatpush2.msra.mxu0 0.0
      %1333 = vmatprep.subr.mxu0 0.0
      %1334 = vmatpush2.msra.mxu0 0.0
      %1335 = vmatprep.subr.mxu0 0.0
      %1336 = vmatpush2.msra.mxu0 0.0
      %1337 = vmatprep.subr.mxu0 0.0
      %1338 = vmatpush2.msra.mxu0 0.0
      %1339 = vmatprep.subr.mxu0 0.0
      %1340 = vmatpush2.msra.mxu0 0.0
      %1341 = vmatprep.subr.mxu0 0.0
      %1342 = vmatpush2.msra.mxu0 0.0
      %1343 = vmatprep.subr.mxu0 0.0
      %1344 = vmatpush2.msra.mxu0 0.0
      %1345 = vmatprep.subr.mxu0 0.0
      %1346 = vmatpush2.msra.mxu0 0.0
      %1347 = vmatprep.subr.mxu0 0.0
      %1348 = vmatpush2.msra.mxu0 0.0
      %1349 = vmatprep.subr.mxu0 0.0
      %1350 = vmatpush2.msra.mxu0 0.0
      %1351 = vmatprep.subr.mxu0 0.0
      %1352 = vmatpush2.msra.mxu0 0.0
      %1353 = vmatprep.subr.mxu0 0.0
      %1354 = vmatpush2.msra.mxu0 0.0
      %1355 = vmatprep.subr.mxu0 0.0
      %1356 = vmatpush2.msra.mxu0 0.0
      %1357 = vmatprep.subr.mxu0 0.0
      %1358 = vmatpush2.msra.mxu0 0.0
      %1359 = vmatprep.mubr.f32.mxu0 0.0
      %1360 = vmatmul.mubr.f32.gmra.mxu0 %v1006
      %v1361 = vpop.f32.mrf.mxu0
      %v1362 = vadd.f32 0.0, %v1361
      %v1363 = vpop.f32.mrf.mxu0
      %1364 = vmatprep.mubr.f32.mxu0 0.0
      %1365 = vmatmul.mubr.f32.gmra.mxu0 %v1007
      %v1366 = vpop.f32.mrf.mxu0
      %v1367 = vadd.f32 0.0, %v1366
      %v1368 = vpop.f32.mrf.mxu0
      %1369 = vmatprep.mubr.f32.mxu0 0.0
      %1370 = vmatmul.mubr.f32.gmra.mxu0 %v1008
      %v1371 = vpop.f32.mrf.mxu0
      %v1372 = vadd.f32 0.0, %v1371
      %v1373 = vpop.f32.mrf.mxu0
      %1374 = vmatprep.mubr.f32.mxu0 0.0
      %1375 = vmatmul.mubr.f32.gmra.mxu0 %v1009
      %v1376 = vpop.f32.mrf.mxu0
      %v1377 = vadd.f32 0.0, %v1376
      %v1378 = vpop.f32.mrf.mxu0
      %1379 = vmatprep.mubr.f32.mxu0 0.0
      %1380 = vmatmul.mubr.f32.gmra.mxu0 %v1010
      %v1381 = vpop.f32.mrf.mxu0
      %v1382 = vadd.f32 0.0, %v1381
      %v1383 = vpop.f32.mrf.mxu0
      %1384 = vmatprep.mubr.f32.mxu0 0.0
      %1385 = vmatmul.mubr.f32.gmra.mxu0 %v1011
      %v1386 = vpop.f32.mrf.mxu0
      %v1387 = vadd.f32 0.0, %v1386
      %v1388 = vpop.f32.mrf.mxu0
      %1389 = vmatprep.mubr.f32.mxu0 0.0
      %1390 = vmatmul.mubr.f32.gmra.mxu0 %v1012
      %v1391 = vpop.f32.mrf.mxu0
      %v1392 = vadd.f32 0.0, %v1391
      %v1393 = vpop.f32.mrf.mxu0
      %1394 = vmatprep.mubr.f32.mxu0 0.0
      %1395 = vmatmul.mubr.f32.gmra.mxu0 %v1013
      %v1396 = vpop.f32.mrf.mxu0
      %v1397 = vadd.f32 0.0, %v1396
      %v1398 = vpop.f32.mrf.mxu0
      %1399 = vmatprep.mubr.f32.mxu0 0.0
      %1400 = vmatmul.mubr.f32.gmra.mxu0 %v1014
      %v1401 = vpop.f32.mrf.mxu0
      %v1402 = vadd.f32 0.0, %v1401
      %v1403 = vpop.f32.mrf.mxu0
      %1404 = vmatprep.mubr.f32.mxu0 0.0
      %1405 = vmatmul.mubr.f32.gmra.mxu0 %v1015
      %v1406 = vpop.f32.mrf.mxu0
      %v1407 = vadd.f32 0.0, %v1406
      %v1408 = vpop.f32.mrf.mxu0
      %1409 = vmatprep.mubr.f32.mxu0 0.0
      %1410 = vmatmul.mubr.f32.gmra.mxu0 %v1016
      %v1411 = vpop.f32.mrf.mxu0
      %v1412 = vadd.f32 0.0, %v1411
      %v1413 = vpop.f32.mrf.mxu0
      %1414 = vmatprep.mubr.f32.mxu0 0.0
      %1415 = vmatmul.mubr.f32.gmra.mxu0 %v1017
      %v1416 = vpop.f32.mrf.mxu0
      %v1417 = vadd.f32 0.0, %v1416
      %v1418 = vpop.f32.mrf.mxu0
      %1419 = vmatprep.mubr.f32.mxu0 0.0
      %1420 = vmatmul.mubr.f32.gmra.mxu0 %v1018
      %v1421 = vpop.f32.mrf.mxu0
      %v1422 = vadd.f32 0.0, %v1421
      %v1423 = vpop.f32.mrf.mxu0
      %1424 = vmatprep.mubr.f32.mxu0 0.0
      %1425 = vmatmul.mubr.f32.gmra.mxu0 %v1019
      %v1426 = vpop.f32.mrf.mxu0
      %v1427 = vadd.f32 0.0, %v1426
      %v1428 = vpop.f32.mrf.mxu0
      %1429 = vmatprep.mubr.f32.mxu0 0.0
      %1430 = vmatmul.mubr.f32.gmra.mxu0 %v1020
      %v1431 = vpop.f32.mrf.mxu0
      %v1432 = vadd.f32 0.0, %v1431
      %v1433 = vpop.f32.mrf.mxu0
      %1434 = vmatprep.mubr.f32.mxu0 0.0
      %1435 = vmatmul.mubr.f32.gmra.mxu0 %v1021
      %v1436 = vpop.f32.mrf.mxu0
      %v1437 = vadd.f32 0.0, %v1436
      %v1438 = vpop.f32.mrf.mxu0
      %1439 = vmatprep.mubr.f32.mxu0 0.0
      %1440 = vmatmul.mubr.f32.gmra.mxu0 %v1022
      %v1441 = vpop.f32.mrf.mxu0
      %v1442 = vadd.f32 0.0, %v1441
      %v1443 = vpop.f32.mrf.mxu0
      %1444 = vmatprep.mubr.f32.mxu0 0.0
      %1445 = vmatmul.mubr.f32.gmra.mxu0 %v1023
      %v1446 = vpop.f32.mrf.mxu0
      %v1447 = vadd.f32 0.0, %v1446
      %v1448 = vpop.f32.mrf.mxu0
      %1449 = vmatprep.mubr.f32.mxu0 0.0
      %1450 = vmatmul.mubr.f32.gmra.mxu0 %v1024
      %v1451 = vpop.f32.mrf.mxu0
      %v1452 = vadd.f32 0.0, %v1451
      %v1453 = vpop.f32.mrf.mxu0
      %1454 = vmatprep.mubr.f32.mxu0 0.0
      %1455 = vmatmul.mubr.f32.gmra.mxu0 %v1025
      %v1456 = vpop.f32.mrf.mxu0
      %v1457 = vadd.f32 0.0, %v1456
      %v1458 = vpop.f32.mrf.mxu0
      %1459 = vmatprep.mubr.f32.mxu0 0.0
      %1460 = vmatmul.mubr.f32.gmra.mxu0 %v1026
      %v1461 = vpop.f32.mrf.mxu0
      %v1462 = vadd.f32 0.0, %v1461
      %v1463 = vpop.f32.mrf.mxu0
      %1464 = vmatprep.mubr.f32.mxu0 0.0
      %1465 = vmatmul.mubr.f32.gmra.mxu0 %v1027
      %v1466 = vpop.f32.mrf.mxu0
      %v1467 = vadd.f32 0.0, %v1466
      %v1468 = vpop.f32.mrf.mxu0
      %1469 = vmatprep.mubr.f32.mxu0 0.0
      %1470 = vmatmul.mubr.f32.gmra.mxu0 %v1028
      %v1471 = vpop.f32.mrf.mxu0
      %v1472 = vadd.f32 0.0, %v1471
      %v1473 = vpop.f32.mrf.mxu0
      %1474 = vmatprep.mubr.f32.mxu0 0.0
      %1475 = vmatmul.mubr.f32.gmra.mxu0 %v1029
      %v1476 = vpop.f32.mrf.mxu0
      %v1477 = vadd.f32 0.0, %v1476
      %v1478 = vpop.f32.mrf.mxu0
      %1479 = vmatprep.mubr.f32.mxu0 0.0
      %1480 = vmatmul.mubr.f32.gmra.mxu0 %v1030
      %v1481 = vpop.f32.mrf.mxu0
      %v1482 = vadd.f32 0.0, %v1481
      %v1483 = vpop.f32.mrf.mxu0
      %1484 = vmatprep.mubr.f32.mxu0 0.0
      %1485 = vmatmul.mubr.f32.gmra.mxu0 %v1031
      %v1486 = vpop.f32.mrf.mxu0
      %v1487 = vadd.f32 0.0, %v1486
      %v1488 = vpop.f32.mrf.mxu0
      %1489 = vmatprep.mubr.f32.mxu0 0.0
      %1490 = vmatmul.mubr.f32.gmra.mxu0 %v1032
      %v1491 = vpop.f32.mrf.mxu0
      %v1492 = vadd.f32 0.0, %v1491
      %v1493 = vpop.f32.mrf.mxu0
      %1494 = vmatprep.mubr.f32.mxu0 0.0
      %1495 = vmatmul.mubr.f32.gmra.mxu0 %v1033
      %v1496 = vpop.f32.mrf.mxu0
      %v1497 = vadd.f32 0.0, %v1496
      %v1498 = vpop.f32.mrf.mxu0
      %1499 = vmatprep.mubr.f32.mxu0 0.0
      %1500 = vmatmul.mubr.f32.gmra.mxu0 %v1034
      %v1501 = vpop.f32.mrf.mxu0
      %v1502 = vadd.f32 0.0, %v1501
      %v1503 = vpop.f32.mrf.mxu0
      %1504 = vmatprep.mubr.f32.mxu0 0.0
      %1505 = vmatmul.mubr.f32.gmra.mxu0 %v1035
      %v1506 = vpop.f32.mrf.mxu0
      %v1507 = vadd.f32 0.0, %v1506
      %v1508 = vpop.f32.mrf.mxu0
      %1509 = vmatprep.mubr.f32.mxu0 0.0
      %1510 = vmatmul.mubr.f32.gmra.mxu0 %v1036
      %v1511 = vpop.f32.mrf.mxu0
      %v1512 = vadd.f32 0.0, %v1511
      %v1513 = vpop.f32.mrf.mxu0
      %1514 = vmatprep.mubr.f32.mxu0 0.0
      %1515 = vmatmul.mubr.f32.gmra.mxu0 %v1037
      %v1516 = vpop.f32.mrf.mxu0
      %v1517 = vadd.f32 0.0, %v1516
      %v1518 = vpop.f32.mrf.mxu0
      %1519 = vmatprep.mubr.f32.mxu0 0.0
      %1520 = vmatmul.mubr.f32.gmra.mxu0 %v1038
      %v1521 = vpop.f32.mrf.mxu0
      %v1522 = vadd.f32 0.0, %v1521
      %v1523 = vpop.f32.mrf.mxu0
      %1524 = vmatprep.mubr.f32.mxu0 0.0
      %1525 = vmatmul.mubr.f32.gmra.mxu0 %v1039
      %v1526 = vpop.f32.mrf.mxu0
      %v1527 = vadd.f32 0.0, %v1526
      %v1528 = vpop.f32.mrf.mxu0
      %1529 = vmatprep.mubr.f32.mxu0 0.0
      %1530 = vmatmul.mubr.f32.gmra.mxu0 %v1040
      %v1531 = vpop.f32.mrf.mxu0
      %v1532 = vadd.f32 0.0, %v1531
      %v1533 = vpop.f32.mrf.mxu0
      %1534 = vmatprep.mubr.f32.mxu0 0.0
      %1535 = vmatmul.mubr.f32.gmra.mxu0 %v1041
      %v1536 = vpop.f32.mrf.mxu0
      %v1537 = vadd.f32 0.0, %v1536
      %v1538 = vpop.f32.mrf.mxu0
      %1539 = vmatprep.mubr.f32.mxu0 0.0
      %1540 = vmatmul.mubr.f32.gmra.mxu0 %v1042
      %v1541 = vpop.f32.mrf.mxu0
      %v1542 = vadd.f32 0.0, %v1541
      %v1543 = vpop.f32.mrf.mxu0
      %1544 = vmatprep.mubr.f32.mxu0 0.0
      %1545 = vmatmul.mubr.f32.gmra.mxu0 %v1043
      %v1546 = vpop.f32.mrf.mxu0
      %v1547 = vadd.f32 0.0, %v1546
      %v1548 = vpop.f32.mrf.mxu0
      %1549 = vmatprep.mubr.f32.mxu0 0.0
      %1550 = vmatmul.mubr.f32.gmra.mxu0 %v1044
      %v1551 = vpop.f32.mrf.mxu0
      %v1552 = vadd.f32 0.0, %v1551
      %v1553 = vpop.f32.mrf.mxu0
      %1554 = vmatprep.mubr.f32.mxu0 0.0
      %1555 = vmatmul.mubr.f32.gmra.mxu0 %v1045
      %v1556 = vpop.f32.mrf.mxu0
      %v1557 = vadd.f32 0.0, %v1556
      %v1558 = vpop.f32.mrf.mxu0
      %1559 = vmatprep.mubr.f32.mxu0 0.0
      %1560 = vmatmul.mubr.f32.gmra.mxu0 %v1046
      %v1561 = vpop.f32.mrf.mxu0
      %v1562 = vadd.f32 0.0, %v1561
      %v1563 = vpop.f32.mrf.mxu0
      %1564 = vmatprep.mubr.f32.mxu0 0.0
      %1565 = vmatmul.mubr.f32.gmra.mxu0 %v1047
      %v1566 = vpop.f32.mrf.mxu0
      %v1567 = vadd.f32 0.0, %v1566
      %v1568 = vpop.f32.mrf.mxu0
      %1569 = vmatprep.mubr.f32.mxu0 0.0
      %1570 = vmatmul.mubr.f32.gmra.mxu0 %v1048
      %v1571 = vpop.f32.mrf.mxu0
      %v1572 = vadd.f32 0.0, %v1571
      %v1573 = vpop.f32.mrf.mxu0
      %1574 = vmatprep.mubr.f32.mxu0 0.0
      %1575 = vmatmul.mubr.f32.gmra.mxu0 %v1049
      %v1576 = vpop.f32.mrf.mxu0
      %v1577 = vadd.f32 0.0, %v1576
      %v1578 = vpop.f32.mrf.mxu0
      %1579 = vmatprep.mubr.f32.mxu0 0.0
      %1580 = vmatmul.mubr.f32.gmra.mxu0 %v1050
      %v1581 = vpop.f32.mrf.mxu0
      %v1582 = vadd.f32 0.0, %v1581
      %v1583 = vpop.f32.mrf.mxu0
      %1584 = vmatprep.mubr.f32.mxu0 0.0
      %1585 = vmatmul.mubr.f32.gmra.mxu0 %v1051
      %v1586 = vpop.f32.mrf.mxu0
      %v1587 = vadd.f32 0.0, %v1586
      %v1588 = vpop.f32.mrf.mxu0
      %1589 = vmatprep.mubr.f32.mxu0 0.0
      %1590 = vmatmul.mubr.f32.gmra.mxu0 %v1052
      %v1591 = vpop.f32.mrf.mxu0
      %v1592 = vadd.f32 0.0, %v1591
      %v1593 = vpop.f32.mrf.mxu0
      %1594 = vmatprep.mubr.f32.mxu0 0.0
      %1595 = vmatmul.mubr.f32.gmra.mxu0 %v1053
      %v1596 = vpop.f32.mrf.mxu0
      %v1597 = vadd.f32 0.0, %v1596
      %v1598 = vpop.f32.mrf.mxu0
      %1599 = vmatprep.mubr.f32.mxu0 0.0
      %1600 = vmatmul.mubr.f32.gmra.mxu0 %v1054
      %v1601 = vpop.f32.mrf.mxu0
      %v1602 = vadd.f32 0.0, %v1601
      %v1603 = vpop.f32.mrf.mxu0
      %1604 = vmatprep.mubr.f32.mxu0 0.0
      %1605 = vmatmul.mubr.f32.gmra.mxu0 %v1055
      %v1606 = vpop.f32.mrf.mxu0
      %v1607 = vadd.f32 0.0, %v1606
      %v1608 = vpop.f32.mrf.mxu0
      %1609 = vmatprep.mubr.f32.mxu0 0.0
      %1610 = vmatmul.mubr.f32.gmra.mxu0 %v1056
      %v1611 = vpop.f32.mrf.mxu0
      %v1612 = vadd.f32 0.0, %v1611
      %v1613 = vpop.f32.mrf.mxu0
      %1614 = vmatprep.mubr.f32.mxu0 0.0
      %1615 = vmatmul.mubr.f32.gmra.mxu0 %v1057
      %v1616 = vpop.f32.mrf.mxu0
      %v1617 = vadd.f32 0.0, %v1616
      %v1618 = vpop.f32.mrf.mxu0
      %1619 = vmatprep.mubr.f32.mxu0 0.0
      %1620 = vmatmul.mubr.f32.gmra.mxu0 %v1058
      %v1621 = vpop.f32.mrf.mxu0
      %v1622 = vadd.f32 0.0, %v1621
      %v1623 = vpop.f32.mrf.mxu0
      %1624 = vmatprep.mubr.f32.mxu0 0.0
      %1625 = vmatmul.mubr.f32.gmra.mxu0 %v1059
      %v1626 = vpop.f32.mrf.mxu0
      %v1627 = vadd.f32 0.0, %v1626
      %v1628 = vpop.f32.mrf.mxu0
      %1629 = vmatprep.mubr.f32.mxu0 0.0
      %1630 = vmatmul.mubr.f32.gmra.mxu0 %v1060
      %v1631 = vpop.f32.mrf.mxu0
      %v1632 = vadd.f32 0.0, %v1631
      %v1633 = vpop.f32.mrf.mxu0
      %1634 = vmatprep.mubr.f32.mxu0 0.0
      %1635 = vmatmul.mubr.f32.gmra.mxu0 %v1061
      %v1636 = vpop.f32.mrf.mxu0
      %v1637 = vadd.f32 0.0, %v1636
      %v1638 = vpop.f32.mrf.mxu0
      %1639 = vmatprep.mubr.f32.mxu0 0.0
      %1640 = vmatmul.mubr.f32.gmra.mxu0 %v1062
      %v1641 = vpop.f32.mrf.mxu0
      %v1642 = vadd.f32 0.0, %v1641
      %v1643 = vpop.f32.mrf.mxu0
      %1644 = vmatprep.mubr.f32.mxu0 0.0
      %1645 = vmatmul.mubr.f32.gmra.mxu0 %v1063
      %v1646 = vpop.f32.mrf.mxu0
      %v1647 = vadd.f32 0.0, %v1646
      %v1648 = vpop.f32.mrf.mxu0
      %1649 = vmatprep.mubr.f32.mxu0 0.0
      %1650 = vmatmul.mubr.f32.gmra.mxu0 %v1064
      %v1651 = vpop.f32.mrf.mxu0
      %v1652 = vadd.f32 0.0, %v1651
      %v1653 = vpop.f32.mrf.mxu0
      %1654 = vmatprep.mubr.f32.mxu0 0.0
      %1655 = vmatmul.mubr.f32.gmra.mxu0 %v1065
      %v1656 = vpop.f32.mrf.mxu0
      %v1657 = vadd.f32 0.0, %v1656
      %v1658 = vpop.f32.mrf.mxu0
      %1659 = vmatprep.mubr.f32.mxu0 0.0
      %1660 = vmatmul.mubr.f32.gmra.mxu0 %v1066
      %v1661 = vpop.f32.mrf.mxu0
      %v1662 = vadd.f32 0.0, %v1661
      %v1663 = vpop.f32.mrf.mxu0
      %1664 = vmatprep.mubr.f32.mxu0 0.0
      %1665 = vmatmul.mubr.f32.gmra.mxu0 %v1067
      %v1666 = vpop.f32.mrf.mxu0
      %v1667 = vadd.f32 0.0, %v1666
      %v1668 = vpop.f32.mrf.mxu0
      %1669 = vmatprep.mubr.f32.mxu0 0.0
      %1670 = vmatmul.mubr.f32.gmra.mxu0 %v1068
      %v1671 = vpop.f32.mrf.mxu0
      %v1672 = vadd.f32 0.0, %v1671
      %v1673 = vpop.f32.mrf.mxu0
      %1674 = vmatprep.mubr.f32.mxu0 0.0
      %1675 = vmatmul.mubr.f32.gmra.mxu0 %v1069
      %v1676 = vpop.f32.mrf.mxu0
      %v1677 = vadd.f32 0.0, %v1676
      %v1678 = vpop.f32.mrf.mxu0
      %1679 = vmatprep.mubr.f32.mxu0 0.0
      %1680 = vmatmul.mubr.f32.gmra.mxu0 %v1070
      %v1681 = vpop.f32.mrf.mxu0
      %v1682 = vadd.f32 0.0, %v1681
      %v1683 = vpop.f32.mrf.mxu0
      %1684 = vmatprep.mubr.f32.mxu0 0.0
      %1685 = vmatmul.mubr.f32.gmra.mxu0 %v1071
      %v1686 = vpop.f32.mrf.mxu0
      %v1687 = vadd.f32 0.0, %v1686
      %v1688 = vpop.f32.mrf.mxu0
      %1689 = vmatprep.mubr.f32.mxu0 0.0
      %1690 = vmatmul.mubr.f32.gmra.mxu0 %v1072
      %v1691 = vpop.f32.mrf.mxu0
      %v1692 = vadd.f32 0.0, %v1691
      %v1693 = vpop.f32.mrf.mxu0
      %1694 = vmatprep.mubr.f32.mxu0 0.0
      %1695 = vmatmul.mubr.f32.gmra.mxu0 %v1073
      %v1696 = vpop.f32.mrf.mxu0
      %v1697 = vadd.f32 0.0, %v1696
      %v1698 = vpop.f32.mrf.mxu0
      %1699 = vmatprep.mubr.f32.mxu0 0.0
      %1700 = vmatmul.mubr.f32.gmra.mxu0 %v1074
      %v1701 = vpop.f32.mrf.mxu0
      %v1702 = vadd.f32 0.0, %v1701
      %v1703 = vpop.f32.mrf.mxu0
      %1704 = vmatprep.mubr.f32.mxu0 0.0
      %1705 = vmatmul.mubr.f32.gmra.mxu0 %v1075
      %v1706 = vpop.f32.mrf.mxu0
      %v1707 = vadd.f32 0.0, %v1706
      %v1708 = vpop.f32.mrf.mxu0
      %1709 = vmatprep.mubr.f32.mxu0 0.0
      %1710 = vmatmul.mubr.f32.gmra.mxu0 %v1076
      %v1711 = vpop.f32.mrf.mxu0
      %v1712 = vadd.f32 0.0, %v1711
      %v1713 = vpop.f32.mrf.mxu0
      %1714 = vmatprep.mubr.f32.mxu0 0.0
      %1715 = vmatmul.mubr.f32.gmra.mxu0 %v1077
      %v1716 = vpop.f32.mrf.mxu0
      %v1717 = vadd.f32 0.0, %v1716
      %v1718 = vpop.f32.mrf.mxu0
      %1719 = vmatprep.mubr.f32.mxu0 0.0
      %1720 = vmatmul.mubr.f32.gmra.mxu0 %v1078
      %v1721 = vpop.f32.mrf.mxu0
      %v1722 = vadd.f32 0.0, %v1721
      %v1723 = vpop.f32.mrf.mxu0
      %1724 = vmatprep.mubr.f32.mxu0 0.0
      %1725 = vmatmul.mubr.f32.gmra.mxu0 %v1079
      %v1726 = vpop.f32.mrf.mxu0
      %v1727 = vadd.f32 0.0, %v1726
      %v1728 = vpop.f32.mrf.mxu0
      %1729 = vmatprep.mubr.f32.mxu0 0.0
      %1730 = vmatmul.mubr.f32.gmra.mxu0 %v1080
      %v1731 = vpop.f32.mrf.mxu0
      %v1732 = vadd.f32 0.0, %v1731
      %v1733 = vpop.f32.mrf.mxu0
      %1734 = vmatprep.mubr.f32.mxu0 0.0
      %1735 = vmatmul.mubr.f32.gmra.mxu0 %v1081
      %v1736 = vpop.f32.mrf.mxu0
      %v1737 = vadd.f32 0.0, %v1736
      %v1738 = vpop.f32.mrf.mxu0
      %1739 = vmatprep.mubr.f32.mxu0 0.0
      %1740 = vmatmul.mubr.f32.gmra.mxu0 %v1082
      %v1741 = vpop.f32.mrf.mxu0
      %v1742 = vadd.f32 0.0, %v1741
      %v1743 = vpop.f32.mrf.mxu0
      %1744 = vmatprep.mubr.f32.mxu0 0.0
      %1745 = vmatmul.mubr.f32.gmra.mxu0 %v1083
      %v1746 = vpop.f32.mrf.mxu0
      %v1747 = vadd.f32 0.0, %v1746
      %v1748 = vpop.f32.mrf.mxu0
      %1749 = vmatprep.mubr.f32.mxu0 0.0
      %1750 = vmatmul.mubr.f32.gmra.mxu0 %v1084
      %v1751 = vpop.f32.mrf.mxu0
      %v1752 = vadd.f32 0.0, %v1751
      %v1753 = vpop.f32.mrf.mxu0
      %1754 = vmatprep.mubr.f32.mxu0 0.0
      %1755 = vmatmul.mubr.f32.gmra.mxu0 %v1085
      %v1756 = vpop.f32.mrf.mxu0
      %v1757 = vadd.f32 0.0, %v1756
      %v1758 = vpop.f32.mrf.mxu0
      %1759 = vdwg.mxu0
      %v1760 = vld [vmem:[%s1] sm:$0xff]
      %v1761 = vld [vmem:[%s1 + $0x8] sm:$0xff]
      %v1762 = vld [vmem:[%s1 + $0x10] sm:$0xff]
      %v1763 = vld [vmem:[%s1 + $0x18] sm:$0xff]
      %v1764 = vld [vmem:[%s1 + $0x20] sm:$0xff]
      %v1765 = vld [vmem:[%s1 + $0x28] sm:$0xff]
      %v1766 = vld [vmem:[%s1 + $0x30] sm:$0xff]
      %v1767 = vld [vmem:[%s1 + $0x38] sm:$0xff]
      %v1768 = vld [vmem:[%s1 + $0x40] sm:$0xff]
      %v1769 = vld [vmem:[%s1 + $0x48] sm:$0xff]
      %v1770 = vld [vmem:[%s1 + $0x50] sm:$0xff]
      %v1771 = vld [vmem:[%s1 + $0x58] sm:$0xff]
      %v1772 = vld [vmem:[%s1 + $0x60] sm:$0xff]
      %v1773 = vld [vmem:[%s1 + $0x68] sm:$0xff]
      %v1774 = vld [vmem:[%s1 + $0x70] sm:$0xff]
      %v1775 = vld [vmem:[%s1 + $0x78] sm:$0xff]
      %v1776 = vld [vmem:[%s2] sm:$0x1f]
      %1777 = vset.pattern.permute.xlu0 0
      %1778 = vperm.xlu0 %1777, %v1760
      %v1779 = vpop.permute.xlu0 %1778
      %1780 = vset.pattern.permute.xlu0 0
      %1781 = vperm.xlu0 %1780, %v1761
      %v1782 = vpop.permute.xlu0 %1781
      %1783 = vset.pattern.permute.xlu0 0
      %1784 = vperm.xlu0 %1783, %v1762
      %v1785 = vpop.permute.xlu0 %1784
      %1786 = vset.pattern.permute.xlu0 0
      %1787 = vperm.xlu0 %1786, %v1763
      %v1788 = vpop.permute.xlu0 %1787
      %1789 = vset.pattern.permute.xlu0 0
      %1790 = vperm.xlu0 %1789, %v1764
      %v1791 = vpop.permute.xlu0 %1790
      %1792 = vset.pattern.permute.xlu0 0
      %1793 = vperm.xlu0 %1792, %v1765
      %v1794 = vpop.permute.xlu0 %1793
      %1795 = vset.pattern.permute.xlu0 0
      %1796 = vperm.xlu0 %1795, %v1766
      %v1797 = vpop.permute.xlu0 %1796
      %1798 = vset.pattern.permute.xlu0 0
      %1799 = vperm.xlu0 %1798, %v1767
      %v1800 = vpop.permute.xlu0 %1799
      %1801 = vset.pattern.permute.xlu0 0
      %1802 = vperm.xlu0 %1801, %v1768
      %v1803 = vpop.permute.xlu0 %1802
      %1804 = vset.pattern.permute.xlu0 0
      %1805 = vperm.xlu0 %1804, %v1769
      %v1806 = vpop.permute.xlu0 %1805
      %1807 = vset.pattern.permute.xlu0 0
      %1808 = vperm.xlu0 %1807, %v1770
      %v1809 = vpop.permute.xlu0 %1808
      %1810 = vset.pattern.permute.xlu0 0
      %1811 = vperm.xlu0 %1810, %v1771
      %v1812 = vpop.permute.xlu0 %1811
      %1813 = vset.pattern.permute.xlu0 0
      %1814 = vperm.xlu0 %1813, %v1772
      %v1815 = vpop.permute.xlu0 %1814
      %1816 = vset.pattern.permute.xlu0 0
      %1817 = vperm.xlu0 %1816, %v1773
      %v1818 = vpop.permute.xlu0 %1817
      %1819 = vset.pattern.permute.xlu0 0
      %1820 = vperm.xlu0 %1819, %v1774
      %v1821 = vpop.permute.xlu0 %1820
      %1822 = vset.pattern.permute.xlu0 0
      %1823 = vperm.xlu0 %1822, %v1775
      %v1824 = vpop.permute.xlu0 %1823
      %v1825 = vlaneseq
      %v1826 = vshrl.u32 %v1825, 7
      %v1827 = vsub.s32 0, %v1826
      %v1828 = vrot.slane %v1776, %v1827
      %v1829 = vlaneseq
      %v1830 = vshrl.u32 %v1829, 7
      %v1831 = vsub.s32 1, %v1830
      %v1832 = vrot.slane %v1776, %v1831
      %v1833 = vlaneseq
      %v1834 = vshrl.u32 %v1833, 7
      %v1835 = vsub.s32 2, %v1834
      %v1836 = vrot.slane %v1776, %v1835
      %v1837 = vlaneseq
      %v1838 = vshrl.u32 %v1837, 7
      %v1839 = vsub.s32 3, %v1838
      %v1840 = vrot.slane %v1776, %v1839
      %v1841 = vlaneseq
      %v1842 = vshrl.u32 %v1841, 7
      %v1843 = vsub.s32 4, %v1842
      %v1844 = vrot.slane %v1776, %v1843
      %vm1845 = vcmp.eq.s32.totalorder %v1779, %v1828
      %vm1846 = vcmp.eq.s32.totalorder %v1779, %v1832
      %vm1847 = vcmp.eq.s32.totalorder %v1779, %v1836
      %vm1848 = vcmp.eq.s32.totalorder %v1779, %v1840
      %vm1849 = vcmp.eq.s32.totalorder %v1779, %v1844
      %vm1850 = vcmp.eq.s32.totalorder %v1782, %v1828
      %vm1851 = vcmp.eq.s32.totalorder %v1782, %v1832
      %vm1852 = vcmp.eq.s32.totalorder %v1782, %v1836
      %vm1853 = vcmp.eq.s32.totalorder %v1782, %v1840
      %vm1854 = vcmp.eq.s32.totalorder %v1782, %v1844
      %vm1855 = vcmp.eq.s32.totalorder %v1785, %v1828
      %vm1856 = vcmp.eq.s32.totalorder %v1785, %v1832
      %vm1857 = vcmp.eq.s32.totalorder %v1785, %v1836
      %vm1858 = vcmp.eq.s32.totalorder %v1785, %v1840
      %vm1859 = vcmp.eq.s32.totalorder %v1785, %v1844
      %vm1860 = vcmp.eq.s32.totalorder %v1788, %v1828
      %vm1861 = vcmp.eq.s32.totalorder %v1788, %v1832
      %vm1862 = vcmp.eq.s32.totalorder %v1788, %v1836
      %vm1863 = vcmp.eq.s32.totalorder %v1788, %v1840
      %vm1864 = vcmp.eq.s32.totalorder %v1788, %v1844
      %vm1865 = vcmp.eq.s32.totalorder %v1791, %v1828
      %vm1866 = vcmp.eq.s32.totalorder %v1791, %v1832
      %vm1867 = vcmp.eq.s32.totalorder %v1791, %v1836
      %vm1868 = vcmp.eq.s32.totalorder %v1791, %v1840
      %vm1869 = vcmp.eq.s32.totalorder %v1791, %v1844
      %vm1870 = vcmp.eq.s32.totalorder %v1794, %v1828
      %vm1871 = vcmp.eq.s32.totalorder %v1794, %v1832
      %vm1872 = vcmp.eq.s32.totalorder %v1794, %v1836
      %vm1873 = vcmp.eq.s32.totalorder %v1794, %v1840
      %vm1874 = vcmp.eq.s32.totalorder %v1794, %v1844
      %vm1875 = vcmp.eq.s32.totalorder %v1797, %v1828
      %vm1876 = vcmp.eq.s32.totalorder %v1797, %v1832
      %vm1877 = vcmp.eq.s32.totalorder %v1797, %v1836
      %vm1878 = vcmp.eq.s32.totalorder %v1797, %v1840
      %vm1879 = vcmp.eq.s32.totalorder %v1797, %v1844
      %vm1880 = vcmp.eq.s32.totalorder %v1800, %v1828
      %vm1881 = vcmp.eq.s32.totalorder %v1800, %v1832
      %vm1882 = vcmp.eq.s32.totalorder %v1800, %v1836
      %vm1883 = vcmp.eq.s32.totalorder %v1800, %v1840
      %vm1884 = vcmp.eq.s32.totalorder %v1800, %v1844
      %vm1885 = vcmp.eq.s32.totalorder %v1803, %v1828
      %vm1886 = vcmp.eq.s32.totalorder %v1803, %v1832
      %vm1887 = vcmp.eq.s32.totalorder %v1803, %v1836
      %vm1888 = vcmp.eq.s32.totalorder %v1803, %v1840
      %vm1889 = vcmp.eq.s32.totalorder %v1803, %v1844
      %vm1890 = vcmp.eq.s32.totalorder %v1806, %v1828
      %vm1891 = vcmp.eq.s32.totalorder %v1806, %v1832
      %vm1892 = vcmp.eq.s32.totalorder %v1806, %v1836
      %vm1893 = vcmp.eq.s32.totalorder %v1806, %v1840
      %vm1894 = vcmp.eq.s32.totalorder %v1806, %v1844
      %vm1895 = vcmp.eq.s32.totalorder %v1809, %v1828
      %vm1896 = vcmp.eq.s32.totalorder %v1809, %v1832
      %vm1897 = vcmp.eq.s32.totalorder %v1809, %v1836
      %vm1898 = vcmp.eq.s32.totalorder %v1809, %v1840
      %vm1899 = vcmp.eq.s32.totalorder %v1809, %v1844
      %vm1900 = vcmp.eq.s32.totalorder %v1812, %v1828
      %vm1901 = vcmp.eq.s32.totalorder %v1812, %v1832
      %vm1902 = vcmp.eq.s32.totalorder %v1812, %v1836
      %vm1903 = vcmp.eq.s32.totalorder %v1812, %v1840
      %vm1904 = vcmp.eq.s32.totalorder %v1812, %v1844
      %vm1905 = vcmp.eq.s32.totalorder %v1815, %v1828
      %vm1906 = vcmp.eq.s32.totalorder %v1815, %v1832
      %vm1907 = vcmp.eq.s32.totalorder %v1815, %v1836
      %vm1908 = vcmp.eq.s32.totalorder %v1815, %v1840
      %vm1909 = vcmp.eq.s32.totalorder %v1815, %v1844
      %vm1910 = vcmp.eq.s32.totalorder %v1818, %v1828
      %vm1911 = vcmp.eq.s32.totalorder %v1818, %v1832
      %vm1912 = vcmp.eq.s32.totalorder %v1818, %v1836
      %vm1913 = vcmp.eq.s32.totalorder %v1818, %v1840
      %vm1914 = vcmp.eq.s32.totalorder %v1818, %v1844
      %vm1915 = vcmp.eq.s32.totalorder %v1821, %v1828
      %vm1916 = vcmp.eq.s32.totalorder %v1821, %v1832
      %vm1917 = vcmp.eq.s32.totalorder %v1821, %v1836
      %vm1918 = vcmp.eq.s32.totalorder %v1821, %v1840
      %vm1919 = vcmp.eq.s32.totalorder %v1821, %v1844
      %vm1920 = vcmp.eq.s32.totalorder %v1824, %v1828
      %vm1921 = vcmp.eq.s32.totalorder %v1824, %v1832
      %vm1922 = vcmp.eq.s32.totalorder %v1824, %v1836
      %vm1923 = vcmp.eq.s32.totalorder %v1824, %v1840
      %vm1924 = vcmp.eq.s32.totalorder %v1824, %v1844
      %v1925 = vsel %vm1845, 0.0, -1e+30
      %v1926 = vsel %vm1846, 0.0, -1e+30
      %v1927 = vsel %vm1847, 0.0, -1e+30
      %v1928 = vsel %vm1848, 0.0, -1e+30
      %v1929 = vsel %vm1849, 0.0, -1e+30
      %v1930 = vsel %vm1850, 0.0, -1e+30
      %v1931 = vsel %vm1851, 0.0, -1e+30
      %v1932 = vsel %vm1852, 0.0, -1e+30
      %v1933 = vsel %vm1853, 0.0, -1e+30
      %v1934 = vsel %vm1854, 0.0, -1e+30
      %v1935 = vsel %vm1855, 0.0, -1e+30
      %v1936 = vsel %vm1856, 0.0, -1e+30
      %v1937 = vsel %vm1857, 0.0, -1e+30
      %v1938 = vsel %vm1858, 0.0, -1e+30
      %v1939 = vsel %vm1859, 0.0, -1e+30
      %v1940 = vsel %vm1860, 0.0, -1e+30
      %v1941 = vsel %vm1861, 0.0, -1e+30
      %v1942 = vsel %vm1862, 0.0, -1e+30
      %v1943 = vsel %vm1863, 0.0, -1e+30
      %v1944 = vsel %vm1864, 0.0, -1e+30
      %v1945 = vsel %vm1865, 0.0, -1e+30
      %v1946 = vsel %vm1866, 0.0, -1e+30
      %v1947 = vsel %vm1867, 0.0, -1e+30
      %v1948 = vsel %vm1868, 0.0, -1e+30
      %v1949 = vsel %vm1869, 0.0, -1e+30
      %v1950 = vsel %vm1870, 0.0, -1e+30
      %v1951 = vsel %vm1871, 0.0, -1e+30
      %v1952 = vsel %vm1872, 0.0, -1e+30
      %v1953 = vsel %vm1873, 0.0, -1e+30
      %v1954 = vsel %vm1874, 0.0, -1e+30
      %v1955 = vsel %vm1875, 0.0, -1e+30
      %v1956 = vsel %vm1876, 0.0, -1e+30
      %v1957 = vsel %vm1877, 0.0, -1e+30
      %v1958 = vsel %vm1878, 0.0, -1e+30
      %v1959 = vsel %vm1879, 0.0, -1e+30
      %v1960 = vsel %vm1880, 0.0, -1e+30
      %v1961 = vsel %vm1881, 0.0, -1e+30
      %v1962 = vsel %vm1882, 0.0, -1e+30
      %v1963 = vsel %vm1883, 0.0, -1e+30
      %v1964 = vsel %vm1884, 0.0, -1e+30
      %v1965 = vsel %vm1885, 0.0, -1e+30
      %v1966 = vsel %vm1886, 0.0, -1e+30
      %v1967 = vsel %vm1887, 0.0, -1e+30
      %v1968 = vsel %vm1888, 0.0, -1e+30
      %v1969 = vsel %vm1889, 0.0, -1e+30
      %v1970 = vsel %vm1890, 0.0, -1e+30
      %v1971 = vsel %vm1891, 0.0, -1e+30
      %v1972 = vsel %vm1892, 0.0, -1e+30
      %v1973 = vsel %vm1893, 0.0, -1e+30
      %v1974 = vsel %vm1894, 0.0, -1e+30
      %v1975 = vsel %vm1895, 0.0, -1e+30
      %v1976 = vsel %vm1896, 0.0, -1e+30
      %v1977 = vsel %vm1897, 0.0, -1e+30
      %v1978 = vsel %vm1898, 0.0, -1e+30
      %v1979 = vsel %vm1899, 0.0, -1e+30
      %v1980 = vsel %vm1900, 0.0, -1e+30
      %v1981 = vsel %vm1901, 0.0, -1e+30
      %v1982 = vsel %vm1902, 0.0, -1e+30
      %v1983 = vsel %vm1903, 0.0, -1e+30
      %v1984 = vsel %vm1904, 0.0, -1e+30
      %v1985 = vsel %vm1905, 0.0, -1e+30
      %v1986 = vsel %vm1906, 0.0, -1e+30
      %v1987 = vsel %vm1907, 0.0, -1e+30
      %v1988 = vsel %vm1908, 0.0, -1e+30
      %v1989 = vsel %vm1909, 0.0, -1e+30
      %v1990 = vsel %vm1910, 0.0, -1e+30
      %v1991 = vsel %vm1911, 0.0, -1e+30
      %v1992 = vsel %vm1912, 0.0, -1e+30
      %v1993 = vsel %vm1913, 0.0, -1e+30
      %v1994 = vsel %vm1914, 0.0, -1e+30
      %v1995 = vsel %vm1915, 0.0, -1e+30
      %v1996 = vsel %vm1916, 0.0, -1e+30
      %v1997 = vsel %vm1917, 0.0, -1e+30
      %v1998 = vsel %vm1918, 0.0, -1e+30
      %v1999 = vsel %vm1919, 0.0, -1e+30
      %v2000 = vsel %vm1920, 0.0, -1e+30
      %v2001 = vsel %vm1921, 0.0, -1e+30
      %v2002 = vsel %vm1922, 0.0, -1e+30
      %v2003 = vsel %vm1923, 0.0, -1e+30
      %v2004 = vsel %vm1924, 0.0, -1e+30
      %vm2005 = vcmask 64512
      %v2007 = vsel %vm2005, %v1153, 0
      %v2010 = vsel %vm2005, %v1158, 0
      %v2013 = vsel %vm2005, %v1163, 0
      %v2016 = vsel %vm2005, %v1168, 0
      %v2019 = vsel %vm2005, %v1173, 0
      %v2022 = vsel %vm2005, %v1178, 0
      %v2025 = vsel %vm2005, %v1183, 0
      %v2028 = vsel %vm2005, %v1188, 0
      %v2031 = vsel %vm2005, %v1193, 0
      %v2034 = vsel %vm2005, %v1198, 0
      %v2037 = vsel %vm2005, %v1203, 0
      %v2040 = vsel %vm2005, %v1208, 0
      %v2043 = vsel %vm2005, %v1213, 0
      %v2046 = vsel %vm2005, %v1218, 0
      %v2049 = vsel %vm2005, %v1223, 0
      %v2052 = vsel %vm2005, %v1228, 0
      %v2055 = vsel %vm2005, %v1362, 0
      %v2058 = vsel %vm2005, %v1367, 0
      %v2061 = vsel %vm2005, %v1372, 0
      %v2064 = vsel %vm2005, %v1377, 0
      %v2067 = vsel %vm2005, %v1382, 0
      %v2070 = vsel %vm2005, %v1387, 0
      %v2073 = vsel %vm2005, %v1392, 0
      %v2076 = vsel %vm2005, %v1397, 0
      %v2079 = vsel %vm2005, %v1402, 0
      %v2082 = vsel %vm2005, %v1407, 0
      %v2085 = vsel %vm2005, %v1412, 0
      %v2088 = vsel %vm2005, %v1417, 0
      %v2091 = vsel %vm2005, %v1422, 0
      %v2094 = vsel %vm2005, %v1427, 0
      %v2097 = vsel %vm2005, %v1432, 0
      %v2100 = vsel %vm2005, %v1437, 0
      %v2103 = vsel %vm2005, %v1442, 0
      %v2106 = vsel %vm2005, %v1447, 0
      %v2109 = vsel %vm2005, %v1452, 0
      %v2112 = vsel %vm2005, %v1457, 0
      %v2115 = vsel %vm2005, %v1462, 0
      %v2118 = vsel %vm2005, %v1467, 0
      %v2121 = vsel %vm2005, %v1472, 0
      %v2124 = vsel %vm2005, %v1477, 0
      %v2127 = vsel %vm2005, %v1482, 0
      %v2130 = vsel %vm2005, %v1487, 0
      %v2133 = vsel %vm2005, %v1492, 0
      %v2136 = vsel %vm2005, %v1497, 0
      %v2139 = vsel %vm2005, %v1502, 0
      %v2142 = vsel %vm2005, %v1507, 0
      %v2145 = vsel %vm2005, %v1512, 0
      %v2148 = vsel %vm2005, %v1517, 0
      %v2151 = vsel %vm2005, %v1522, 0
      %v2154 = vsel %vm2005, %v1527, 0
      %v2157 = vsel %vm2005, %v1532, 0
      %v2160 = vsel %vm2005, %v1537, 0
      %v2163 = vsel %vm2005, %v1542, 0
      %v2166 = vsel %vm2005, %v1547, 0
      %v2169 = vsel %vm2005, %v1552, 0
      %v2172 = vsel %vm2005, %v1557, 0
      %v2175 = vsel %vm2005, %v1562, 0
      %v2178 = vsel %vm2005, %v1567, 0
      %v2181 = vsel %vm2005, %v1572, 0
      %v2184 = vsel %vm2005, %v1577, 0
      %v2187 = vsel %vm2005, %v1582, 0
      %v2190 = vsel %vm2005, %v1587, 0
      %v2193 = vsel %vm2005, %v1592, 0
      %v2196 = vsel %vm2005, %v1597, 0
      %v2199 = vsel %vm2005, %v1602, 0
      %v2202 = vsel %vm2005, %v1607, 0
      %v2205 = vsel %vm2005, %v1612, 0
      %v2208 = vsel %vm2005, %v1617, 0
      %v2211 = vsel %vm2005, %v1622, 0
      %v2214 = vsel %vm2005, %v1627, 0
      %v2217 = vsel %vm2005, %v1632, 0
      %v2220 = vsel %vm2005, %v1637, 0
      %v2223 = vsel %vm2005, %v1642, 0
      %v2226 = vsel %vm2005, %v1647, 0
      %v2229 = vsel %vm2005, %v1652, 0
      %v2232 = vsel %vm2005, %v1657, 0
      %v2235 = vsel %vm2005, %v1662, 0
      %v2238 = vsel %vm2005, %v1667, 0
      %v2241 = vsel %vm2005, %v1672, 0
      %v2244 = vsel %vm2005, %v1677, 0
      %v2247 = vsel %vm2005, %v1682, 0
      %v2250 = vsel %vm2005, %v1687, 0
      %v2253 = vsel %vm2005, %v1692, 0
      %v2256 = vsel %vm2005, %v1697, 0
      %v2259 = vsel %vm2005, %v1702, 0
      %v2262 = vsel %vm2005, %v1707, 0
      %v2265 = vsel %vm2005, %v1712, 0
      %v2268 = vsel %vm2005, %v1717, 0
      %v2271 = vsel %vm2005, %v1722, 0
      %v2274 = vsel %vm2005, %v1727, 0
      %v2277 = vsel %vm2005, %v1732, 0
      %v2280 = vsel %vm2005, %v1737, 0
      %v2283 = vsel %vm2005, %v1742, 0
      %v2286 = vsel %vm2005, %v1747, 0
      %v2289 = vsel %vm2005, %v1752, 0
      %v2292 = vsel %vm2005, %v1757, 0
      %2294 = vmatprep.subr.mxu0 0.0
      %2295 = vmatpush1.xpose.msra.mxu0 %v2100
      %2296 = vmatprep.subr.mxu0 0.0
      %2297 = vmatpush1.xpose.msra.mxu0 %v2097
      %2298 = vmatprep.subr.mxu0 0.0
      %2299 = vmatpush1.xpose.msra.mxu0 %v2094
      %2300 = vmatprep.subr.mxu0 0.0
      %2301 = vmatpush1.xpose.msra.mxu0 %v2091
      %2302 = vmatprep.subr.mxu0 0.0
      %2303 = vmatpush1.xpose.msra.mxu0 %v2088
      %2304 = vmatprep.subr.mxu0 0.0
      %2305 = vmatpush1.xpose.msra.mxu0 %v2085
      %2306 = vmatprep.subr.mxu0 0.0
      %2307 = vmatpush1.xpose.msra.mxu0 %v2082
      %2308 = vmatprep.subr.mxu0 0.0
      %2309 = vmatpush1.xpose.msra.mxu0 %v2079
      %2310 = vmatprep.subr.mxu0 0.0
      %2311 = vmatpush1.xpose.msra.mxu0 %v2076
      %2312 = vmatprep.subr.mxu0 0.0
      %2313 = vmatpush1.xpose.msra.mxu0 %v2073
      %2314 = vmatprep.subr.mxu0 0.0
      %2315 = vmatpush1.xpose.msra.mxu0 %v2070
      %2316 = vmatprep.subr.mxu0 0.0
      %2317 = vmatpush1.xpose.msra.mxu0 %v2067
      %2318 = vmatprep.subr.mxu0 0.0
      %2319 = vmatpush1.xpose.msra.mxu0 %v2064
      %2320 = vmatprep.subr.mxu0 0.0
      %2321 = vmatpush1.xpose.msra.mxu0 %v2061
      %2322 = vmatprep.subr.mxu0 0.0
      %2323 = vmatpush1.xpose.msra.mxu0 %v2058
      %2324 = vmatprep.subr.mxu0 0.0
      %2325 = vmatpush1.xpose.msra.mxu0 %v2055
      %2326 = vmatprep.subr.mxu0 0.0
      %2327 = vmatpush2.xpose.msra.mxu0 %v2148
      %2328 = vmatprep.subr.mxu0 0.0
      %2329 = vmatpush2.xpose.msra.mxu0 %v2145
      %2330 = vmatprep.subr.mxu0 0.0
      %2331 = vmatpush2.xpose.msra.mxu0 %v2142
      %2332 = vmatprep.subr.mxu0 0.0
      %2333 = vmatpush2.xpose.msra.mxu0 %v2139
      %2334 = vmatprep.subr.mxu0 0.0
      %2335 = vmatpush2.xpose.msra.mxu0 %v2136
      %2336 = vmatprep.subr.mxu0 0.0
      %2337 = vmatpush2.xpose.msra.mxu0 %v2133
      %2338 = vmatprep.subr.mxu0 0.0
      %2339 = vmatpush2.xpose.msra.mxu0 %v2130
      %2340 = vmatprep.subr.mxu0 0.0
      %2341 = vmatpush2.xpose.msra.mxu0 %v2127
      %2342 = vmatprep.subr.mxu0 0.0
      %2343 = vmatpush2.xpose.msra.mxu0 %v2124
      %2344 = vmatprep.subr.mxu0 0.0
      %2345 = vmatpush2.xpose.msra.mxu0 %v2121
      %2346 = vmatprep.subr.mxu0 0.0
      %2347 = vmatpush2.xpose.msra.mxu0 %v2118
      %2348 = vmatprep.subr.mxu0 0.0
      %2349 = vmatpush2.xpose.msra.mxu0 %v2115
      %2350 = vmatprep.subr.mxu0 0.0
      %2351 = vmatpush2.xpose.msra.mxu0 %v2112
      %2352 = vmatprep.subr.mxu0 0.0
      %2353 = vmatpush2.xpose.msra.mxu0 %v2109
      %2354 = vmatprep.subr.mxu0 0.0
      %2355 = vmatpush2.xpose.msra.mxu0 %v2106
      %2356 = vmatprep.subr.mxu0 0.0
      %2357 = vmatpush2.xpose.msra.mxu0 %v2103
      %2358 = vmatprep.mubr.f32.mxu0 0.0
      %2359 = vmatmul.mubr.f32.gmra.mxu0 %v2007
      %v2360 = vpop.f32.mrf.mxu0
      %v2361 = vadd.f32 %v1925, %v2360
      %v2362 = vpop.f32.mrf.mxu0
      %v2363 = vadd.f32 %v1926, %v2362
      %2364 = vmatprep.mubr.f32.mxu0 0.0
      %2365 = vmatmul.mubr.f32.gmra.mxu0 %v2010
      %v2366 = vpop.f32.mrf.mxu0
      %v2367 = vadd.f32 %v1930, %v2366
      %v2368 = vpop.f32.mrf.mxu0
      %v2369 = vadd.f32 %v1931, %v2368
      %2370 = vmatprep.mubr.f32.mxu0 0.0
      %2371 = vmatmul.mubr.f32.gmra.mxu0 %v2013
      %v2372 = vpop.f32.mrf.mxu0
      %v2373 = vadd.f32 %v1935, %v2372
      %v2374 = vpop.f32.mrf.mxu0
      %v2375 = vadd.f32 %v1936, %v2374
      %2376 = vmatprep.mubr.f32.mxu0 0.0
      %2377 = vmatmul.mubr.f32.gmra.mxu0 %v2016
      %v2378 = vpop.f32.mrf.mxu0
      %v2379 = vadd.f32 %v1940, %v2378
      %v2380 = vpop.f32.mrf.mxu0
      %v2381 = vadd.f32 %v1941, %v2380
      %2382 = vmatprep.mubr.f32.mxu0 0.0
      %2383 = vmatmul.mubr.f32.gmra.mxu0 %v2019
      %v2384 = vpop.f32.mrf.mxu0
      %v2385 = vadd.f32 %v1945, %v2384
      %v2386 = vpop.f32.mrf.mxu0
      %v2387 = vadd.f32 %v1946, %v2386
      %2388 = vmatprep.mubr.f32.mxu0 0.0
      %2389 = vmatmul.mubr.f32.gmra.mxu0 %v2022
      %v2390 = vpop.f32.mrf.mxu0
      %v2391 = vadd.f32 %v1950, %v2390
      %v2392 = vpop.f32.mrf.mxu0
      %v2393 = vadd.f32 %v1951, %v2392
      %2394 = vmatprep.mubr.f32.mxu0 0.0
      %2395 = vmatmul.mubr.f32.gmra.mxu0 %v2025
      %v2396 = vpop.f32.mrf.mxu0
      %v2397 = vadd.f32 %v1955, %v2396
      %v2398 = vpop.f32.mrf.mxu0
      %v2399 = vadd.f32 %v1956, %v2398
      %2400 = vmatprep.mubr.f32.mxu0 0.0
      %2401 = vmatmul.mubr.f32.gmra.mxu0 %v2028
      %v2402 = vpop.f32.mrf.mxu0
      %v2403 = vadd.f32 %v1960, %v2402
      %v2404 = vpop.f32.mrf.mxu0
      %v2405 = vadd.f32 %v1961, %v2404
      %2406 = vmatprep.mubr.f32.mxu0 0.0
      %2407 = vmatmul.mubr.f32.gmra.mxu0 %v2031
      %v2408 = vpop.f32.mrf.mxu0
      %v2409 = vadd.f32 %v1965, %v2408
      %v2410 = vpop.f32.mrf.mxu0
      %v2411 = vadd.f32 %v1966, %v2410
      %2412 = vmatprep.mubr.f32.mxu0 0.0
      %2413 = vmatmul.mubr.f32.gmra.mxu0 %v2034
      %v2414 = vpop.f32.mrf.mxu0
      %v2415 = vadd.f32 %v1970, %v2414
      %v2416 = vpop.f32.mrf.mxu0
      %v2417 = vadd.f32 %v1971, %v2416
      %2418 = vmatprep.mubr.f32.mxu0 0.0
      %2419 = vmatmul.mubr.f32.gmra.mxu0 %v2037
      %v2420 = vpop.f32.mrf.mxu0
      %v2421 = vadd.f32 %v1975, %v2420
      %v2422 = vpop.f32.mrf.mxu0
      %v2423 = vadd.f32 %v1976, %v2422
      %2424 = vmatprep.mubr.f32.mxu0 0.0
      %2425 = vmatmul.mubr.f32.gmra.mxu0 %v2040
      %v2426 = vpop.f32.mrf.mxu0
      %v2427 = vadd.f32 %v1980, %v2426
      %v2428 = vpop.f32.mrf.mxu0
      %v2429 = vadd.f32 %v1981, %v2428
      %2430 = vmatprep.mubr.f32.mxu0 0.0
      %2431 = vmatmul.mubr.f32.gmra.mxu0 %v2043
      %v2432 = vpop.f32.mrf.mxu0
      %v2433 = vadd.f32 %v1985, %v2432
      %v2434 = vpop.f32.mrf.mxu0
      %v2435 = vadd.f32 %v1986, %v2434
      %2436 = vmatprep.mubr.f32.mxu0 0.0
      %2437 = vmatmul.mubr.f32.gmra.mxu0 %v2046
      %v2438 = vpop.f32.mrf.mxu0
      %v2439 = vadd.f32 %v1990, %v2438
      %v2440 = vpop.f32.mrf.mxu0
      %v2441 = vadd.f32 %v1991, %v2440
      %2442 = vmatprep.mubr.f32.mxu0 0.0
      %2443 = vmatmul.mubr.f32.gmra.mxu0 %v2049
      %v2444 = vpop.f32.mrf.mxu0
      %v2445 = vadd.f32 %v1995, %v2444
      %v2446 = vpop.f32.mrf.mxu0
      %v2447 = vadd.f32 %v1996, %v2446
      %2448 = vmatprep.mubr.f32.mxu0 0.0
      %2449 = vmatmul.mubr.f32.gmra.mxu0 %v2052
      %v2450 = vpop.f32.mrf.mxu0
      %v2451 = vadd.f32 %v2000, %v2450
      %v2452 = vpop.f32.mrf.mxu0
      %v2453 = vadd.f32 %v2001, %v2452
      %2454 = vdwg.mxu0
      %2455 = vmatprep.subr.mxu0 0.0
      %2456 = vmatpush1.xpose.msra.mxu0 %v2196
      %2457 = vmatprep.subr.mxu0 0.0
      %2458 = vmatpush1.xpose.msra.mxu0 %v2193
      %2459 = vmatprep.subr.mxu0 0.0
      %2460 = vmatpush1.xpose.msra.mxu0 %v2190
      %2461 = vmatprep.subr.mxu0 0.0
      %2462 = vmatpush1.xpose.msra.mxu0 %v2187
      %2463 = vmatprep.subr.mxu0 0.0
      %2464 = vmatpush1.xpose.msra.mxu0 %v2184
      %2465 = vmatprep.subr.mxu0 0.0
      %2466 = vmatpush1.xpose.msra.mxu0 %v2181
      %2467 = vmatprep.subr.mxu0 0.0
      %2468 = vmatpush1.xpose.msra.mxu0 %v2178
      %2469 = vmatprep.subr.mxu0 0.0
      %2470 = vmatpush1.xpose.msra.mxu0 %v2175
      %2471 = vmatprep.subr.mxu0 0.0
      %2472 = vmatpush1.xpose.msra.mxu0 %v2172
      %2473 = vmatprep.subr.mxu0 0.0
      %2474 = vmatpush1.xpose.msra.mxu0 %v2169
      %2475 = vmatprep.subr.mxu0 0.0
      %2476 = vmatpush1.xpose.msra.mxu0 %v2166
      %2477 = vmatprep.subr.mxu0 0.0
      %2478 = vmatpush1.xpose.msra.mxu0 %v2163
      %2479 = vmatprep.subr.mxu0 0.0
      %2480 = vmatpush1.xpose.msra.mxu0 %v2160
      %2481 = vmatprep.subr.mxu0 0.0
      %2482 = vmatpush1.xpose.msra.mxu0 %v2157
      %2483 = vmatprep.subr.mxu0 0.0
      %2484 = vmatpush1.xpose.msra.mxu0 %v2154
      %2485 = vmatprep.subr.mxu0 0.0
      %2486 = vmatpush1.xpose.msra.mxu0 %v2151
      %2487 = vmatprep.subr.mxu0 0.0
      %2488 = vmatpush2.xpose.msra.mxu0 %v2244
      %2489 = vmatprep.subr.mxu0 0.0
      %2490 = vmatpush2.xpose.msra.mxu0 %v2241
      %2491 = vmatprep.subr.mxu0 0.0
      %2492 = vmatpush2.xpose.msra.mxu0 %v2238
      %2493 = vmatprep.subr.mxu0 0.0
      %2494 = vmatpush2.xpose.msra.mxu0 %v2235
      %2495 = vmatprep.subr.mxu0 0.0
      %2496 = vmatpush2.xpose.msra.mxu0 %v2232
      %2497 = vmatprep.subr.mxu0 0.0
      %2498 = vmatpush2.xpose.msra.mxu0 %v2229
      %2499 = vmatprep.subr.mxu0 0.0
      %2500 = vmatpush2.xpose.msra.mxu0 %v2226
      %2501 = vmatprep.subr.mxu0 0.0
      %2502 = vmatpush2.xpose.msra.mxu0 %v2223
      %2503 = vmatprep.subr.mxu0 0.0
      %2504 = vmatpush2.xpose.msra.mxu0 %v2220
      %2505 = vmatprep.subr.mxu0 0.0
      %2506 = vmatpush2.xpose.msra.mxu0 %v2217
      %2507 = vmatprep.subr.mxu0 0.0
      %2508 = vmatpush2.xpose.msra.mxu0 %v2214
      %2509 = vmatprep.subr.mxu0 0.0
      %2510 = vmatpush2.xpose.msra.mxu0 %v2211
      %2511 = vmatprep.subr.mxu0 0.0
      %2512 = vmatpush2.xpose.msra.mxu0 %v2208
      %2513 = vmatprep.subr.mxu0 0.0
      %2514 = vmatpush2.xpose.msra.mxu0 %v2205
      %2515 = vmatprep.subr.mxu0 0.0
      %2516 = vmatpush2.xpose.msra.mxu0 %v2202
      %2517 = vmatprep.subr.mxu0 0.0
      %2518 = vmatpush2.xpose.msra.mxu0 %v2199
      %2519 = vmatprep.mubr.f32.mxu0 0.0
      %2520 = vmatmul.mubr.f32.gmra.mxu0 %v2007
      %v2521 = vpop.f32.mrf.mxu0
      %v2522 = vadd.f32 %v1927, %v2521
      %v2523 = vpop.f32.mrf.mxu0
      %v2524 = vadd.f32 %v1928, %v2523
      %2525 = vmatprep.mubr.f32.mxu0 0.0
      %2526 = vmatmul.mubr.f32.gmra.mxu0 %v2010
      %v2527 = vpop.f32.mrf.mxu0
      %v2528 = vadd.f32 %v1932, %v2527
      %v2529 = vpop.f32.mrf.mxu0
      %v2530 = vadd.f32 %v1933, %v2529
      %2531 = vmatprep.mubr.f32.mxu0 0.0
      %2532 = vmatmul.mubr.f32.gmra.mxu0 %v2013
      %v2533 = vpop.f32.mrf.mxu0
      %v2534 = vadd.f32 %v1937, %v2533
      %v2535 = vpop.f32.mrf.mxu0
      %v2536 = vadd.f32 %v1938, %v2535
      %2537 = vmatprep.mubr.f32.mxu0 0.0
      %2538 = vmatmul.mubr.f32.gmra.mxu0 %v2016
      %v2539 = vpop.f32.mrf.mxu0
      %v2540 = vadd.f32 %v1942, %v2539
      %v2541 = vpop.f32.mrf.mxu0
      %v2542 = vadd.f32 %v1943, %v2541
      %2543 = vmatprep.mubr.f32.mxu0 0.0
      %2544 = vmatmul.mubr.f32.gmra.mxu0 %v2019
      %v2545 = vpop.f32.mrf.mxu0
      %v2546 = vadd.f32 %v1947, %v2545
      %v2547 = vpop.f32.mrf.mxu0
      %v2548 = vadd.f32 %v1948, %v2547
      %2549 = vmatprep.mubr.f32.mxu0 0.0
      %2550 = vmatmul.mubr.f32.gmra.mxu0 %v2022
      %v2551 = vpop.f32.mrf.mxu0
      %v2552 = vadd.f32 %v1952, %v2551
      %v2553 = vpop.f32.mrf.mxu0
      %v2554 = vadd.f32 %v1953, %v2553
      %2555 = vmatprep.mubr.f32.mxu0 0.0
      %2556 = vmatmul.mubr.f32.gmra.mxu0 %v2025
      %v2557 = vpop.f32.mrf.mxu0
      %v2558 = vadd.f32 %v1957, %v2557
      %v2559 = vpop.f32.mrf.mxu0
      %v2560 = vadd.f32 %v1958, %v2559
      %2561 = vmatprep.mubr.f32.mxu0 0.0
      %2562 = vmatmul.mubr.f32.gmra.mxu0 %v2028
      %v2563 = vpop.f32.mrf.mxu0
      %v2564 = vadd.f32 %v1962, %v2563
      %v2565 = vpop.f32.mrf.mxu0
      %v2566 = vadd.f32 %v1963, %v2565
      %2567 = vmatprep.mubr.f32.mxu0 0.0
      %2568 = vmatmul.mubr.f32.gmra.mxu0 %v2031
      %v2569 = vpop.f32.mrf.mxu0
      %v2570 = vadd.f32 %v1967, %v2569
      %v2571 = vpop.f32.mrf.mxu0
      %v2572 = vadd.f32 %v1968, %v2571
      %2573 = vmatprep.mubr.f32.mxu0 0.0
      %2574 = vmatmul.mubr.f32.gmra.mxu0 %v2034
      %v2575 = vpop.f32.mrf.mxu0
      %v2576 = vadd.f32 %v1972, %v2575
      %v2577 = vpop.f32.mrf.mxu0
      %v2578 = vadd.f32 %v1973, %v2577
      %2579 = vmatprep.mubr.f32.mxu0 0.0
      %2580 = vmatmul.mubr.f32.gmra.mxu0 %v2037
      %v2581 = vpop.f32.mrf.mxu0
      %v2582 = vadd.f32 %v1977, %v2581
      %v2583 = vpop.f32.mrf.mxu0
      %v2584 = vadd.f32 %v1978, %v2583
      %2585 = vmatprep.mubr.f32.mxu0 0.0
      %2586 = vmatmul.mubr.f32.gmra.mxu0 %v2040
      %v2587 = vpop.f32.mrf.mxu0
      %v2588 = vadd.f32 %v1982, %v2587
      %v2589 = vpop.f32.mrf.mxu0
      %v2590 = vadd.f32 %v1983, %v2589
      %2591 = vmatprep.mubr.f32.mxu0 0.0
      %2592 = vmatmul.mubr.f32.gmra.mxu0 %v2043
      %v2593 = vpop.f32.mrf.mxu0
      %v2594 = vadd.f32 %v1987, %v2593
      %v2595 = vpop.f32.mrf.mxu0
      %v2596 = vadd.f32 %v1988, %v2595
      %2597 = vmatprep.mubr.f32.mxu0 0.0
      %2598 = vmatmul.mubr.f32.gmra.mxu0 %v2046
      %v2599 = vpop.f32.mrf.mxu0
      %v2600 = vadd.f32 %v1992, %v2599
      %v2601 = vpop.f32.mrf.mxu0
      %v2602 = vadd.f32 %v1993, %v2601
      %2603 = vmatprep.mubr.f32.mxu0 0.0
      %2604 = vmatmul.mubr.f32.gmra.mxu0 %v2049
      %v2605 = vpop.f32.mrf.mxu0
      %v2606 = vadd.f32 %v1997, %v2605
      %v2607 = vpop.f32.mrf.mxu0
      %v2608 = vadd.f32 %v1998, %v2607
      %2609 = vmatprep.mubr.f32.mxu0 0.0
      %2610 = vmatmul.mubr.f32.gmra.mxu0 %v2052
      %v2611 = vpop.f32.mrf.mxu0
      %v2612 = vadd.f32 %v2002, %v2611
      %v2613 = vpop.f32.mrf.mxu0
      %v2614 = vadd.f32 %v2003, %v2613
      %2615 = vdwg.mxu0
      %2616 = vmatprep.subr.mxu0 0.0
      %2617 = vmatpush1.xpose.msra.mxu0 %v2292
      %2618 = vmatprep.subr.mxu0 0.0
      %2619 = vmatpush1.xpose.msra.mxu0 %v2289
      %2620 = vmatprep.subr.mxu0 0.0
      %2621 = vmatpush1.xpose.msra.mxu0 %v2286
      %2622 = vmatprep.subr.mxu0 0.0
      %2623 = vmatpush1.xpose.msra.mxu0 %v2283
      %2624 = vmatprep.subr.mxu0 0.0
      %2625 = vmatpush1.xpose.msra.mxu0 %v2280
      %2626 = vmatprep.subr.mxu0 0.0
      %2627 = vmatpush1.xpose.msra.mxu0 %v2277
      %2628 = vmatprep.subr.mxu0 0.0
      %2629 = vmatpush1.xpose.msra.mxu0 %v2274
      %2630 = vmatprep.subr.mxu0 0.0
      %2631 = vmatpush1.xpose.msra.mxu0 %v2271
      %2632 = vmatprep.subr.mxu0 0.0
      %2633 = vmatpush1.xpose.msra.mxu0 %v2268
      %2634 = vmatprep.subr.mxu0 0.0
      %2635 = vmatpush1.xpose.msra.mxu0 %v2265
      %2636 = vmatprep.subr.mxu0 0.0
      %2637 = vmatpush1.xpose.msra.mxu0 %v2262
      %2638 = vmatprep.subr.mxu0 0.0
      %2639 = vmatpush1.xpose.msra.mxu0 %v2259
      %2640 = vmatprep.subr.mxu0 0.0
      %2641 = vmatpush1.xpose.msra.mxu0 %v2256
      %2642 = vmatprep.subr.mxu0 0.0
      %2643 = vmatpush1.xpose.msra.mxu0 %v2253
      %2644 = vmatprep.subr.mxu0 0.0
      %2645 = vmatpush1.xpose.msra.mxu0 %v2250
      %2646 = vmatprep.subr.mxu0 0.0
      %2647 = vmatpush1.xpose.msra.mxu0 %v2247
      %2648 = vmatprep.subr.mxu0 0.0
      %2649 = vmatpush2.xpose.msra.mxu0 0.0
      %2650 = vmatprep.subr.mxu0 0.0
      %2651 = vmatpush2.xpose.msra.mxu0 0.0
      %2652 = vmatprep.subr.mxu0 0.0
      %2653 = vmatpush2.xpose.msra.mxu0 0.0
      %2654 = vmatprep.subr.mxu0 0.0
      %2655 = vmatpush2.xpose.msra.mxu0 0.0
      %2656 = vmatprep.subr.mxu0 0.0
      %2657 = vmatpush2.xpose.msra.mxu0 0.0
      %2658 = vmatprep.subr.mxu0 0.0
      %2659 = vmatpush2.xpose.msra.mxu0 0.0
      %2660 = vmatprep.subr.mxu0 0.0
      %2661 = vmatpush2.xpose.msra.mxu0 0.0
      %2662 = vmatprep.subr.mxu0 0.0
      %2663 = vmatpush2.xpose.msra.mxu0 0.0
      %2664 = vmatprep.subr.mxu0 0.0
      %2665 = vmatpush2.xpose.msra.mxu0 0.0
      %2666 = vmatprep.subr.mxu0 0.0
      %2667 = vmatpush2.xpose.msra.mxu0 0.0
      %2668 = vmatprep.subr.mxu0 0.0
      %2669 = vmatpush2.xpose.msra.mxu0 0.0
      %2670 = vmatprep.subr.mxu0 0.0
      %2671 = vmatpush2.xpose.msra.mxu0 0.0
      %2672 = vmatprep.subr.mxu0 0.0
      %2673 = vmatpush2.xpose.msra.mxu0 0.0
      %2674 = vmatprep.subr.mxu0 0.0
      %2675 = vmatpush2.xpose.msra.mxu0 0.0
      %2676 = vmatprep.subr.mxu0 0.0
      %2677 = vmatpush2.xpose.msra.mxu0 0.0
      %2678 = vmatprep.subr.mxu0 0.0
      %2679 = vmatpush2.xpose.msra.mxu0 0.0
      %2680 = vmatprep.mubr.f32.mxu0 0.0
      %2681 = vmatmul.mubr.f32.gmra.mxu0 %v2007
      %v2682 = vpop.f32.mrf.mxu0
      %v2683 = vadd.f32 %v1929, %v2682
      %v2684 = vpop.f32.mrf.mxu0
      %2685 = vmatprep.mubr.f32.mxu0 0.0
      %2686 = vmatmul.mubr.f32.gmra.mxu0 %v2010
      %v2687 = vpop.f32.mrf.mxu0
      %v2688 = vadd.f32 %v1934, %v2687
      %v2689 = vpop.f32.mrf.mxu0
      %2690 = vmatprep.mubr.f32.mxu0 0.0
      %2691 = vmatmul.mubr.f32.gmra.mxu0 %v2013
      %v2692 = vpop.f32.mrf.mxu0
      %v2693 = vadd.f32 %v1939, %v2692
      %v2694 = vpop.f32.mrf.mxu0
      %2695 = vmatprep.mubr.f32.mxu0 0.0
      %2696 = vmatmul.mubr.f32.gmra.mxu0 %v2016
      %v2697 = vpop.f32.mrf.mxu0
      %v2698 = vadd.f32 %v1944, %v2697
      %v2699 = vpop.f32.mrf.mxu0
      %2700 = vmatprep.mubr.f32.mxu0 0.0
      %2701 = vmatmul.mubr.f32.gmra.mxu0 %v2019
      %v2702 = vpop.f32.mrf.mxu0
      %v2703 = vadd.f32 %v1949, %v2702
      %v2704 = vpop.f32.mrf.mxu0
      %2705 = vmatprep.mubr.f32.mxu0 0.0
      %2706 = vmatmul.mubr.f32.gmra.mxu0 %v2022
      %v2707 = vpop.f32.mrf.mxu0
      %v2708 = vadd.f32 %v1954, %v2707
      %v2709 = vpop.f32.mrf.mxu0
      %2710 = vmatprep.mubr.f32.mxu0 0.0
      %2711 = vmatmul.mubr.f32.gmra.mxu0 %v2025
      %v2712 = vpop.f32.mrf.mxu0
      %v2713 = vadd.f32 %v1959, %v2712
      %v2714 = vpop.f32.mrf.mxu0
      %2715 = vmatprep.mubr.f32.mxu0 0.0
      %2716 = vmatmul.mubr.f32.gmra.mxu0 %v2028
      %v2717 = vpop.f32.mrf.mxu0
      %v2718 = vadd.f32 %v1964, %v2717
      %v2719 = vpop.f32.mrf.mxu0
      %2720 = vmatprep.mubr.f32.mxu0 0.0
      %2721 = vmatmul.mubr.f32.gmra.mxu0 %v2031
      %v2722 = vpop.f32.mrf.mxu0
      %v2723 = vadd.f32 %v1969, %v2722
      %v2724 = vpop.f32.mrf.mxu0
      %2725 = vmatprep.mubr.f32.mxu0 0.0
      %2726 = vmatmul.mubr.f32.gmra.mxu0 %v2034
      %v2727 = vpop.f32.mrf.mxu0
      %v2728 = vadd.f32 %v1974, %v2727
      %v2729 = vpop.f32.mrf.mxu0
      %2730 = vmatprep.mubr.f32.mxu0 0.0
      %2731 = vmatmul.mubr.f32.gmra.mxu0 %v2037
      %v2732 = vpop.f32.mrf.mxu0
      %v2733 = vadd.f32 %v1979, %v2732
      %v2734 = vpop.f32.mrf.mxu0
      %2735 = vmatprep.mubr.f32.mxu0 0.0
      %2736 = vmatmul.mubr.f32.gmra.mxu0 %v2040
      %v2737 = vpop.f32.mrf.mxu0
      %v2738 = vadd.f32 %v1984, %v2737
      %v2739 = vpop.f32.mrf.mxu0
      %2740 = vmatprep.mubr.f32.mxu0 0.0
      %2741 = vmatmul.mubr.f32.gmra.mxu0 %v2043
      %v2742 = vpop.f32.mrf.mxu0
      %v2743 = vadd.f32 %v1989, %v2742
      %v2744 = vpop.f32.mrf.mxu0
      %2745 = vmatprep.mubr.f32.mxu0 0.0
      %2746 = vmatmul.mubr.f32.gmra.mxu0 %v2046
      %v2747 = vpop.f32.mrf.mxu0
      %v2748 = vadd.f32 %v1994, %v2747
      %v2749 = vpop.f32.mrf.mxu0
      %2750 = vmatprep.mubr.f32.mxu0 0.0
      %2751 = vmatmul.mubr.f32.gmra.mxu0 %v2049
      %v2752 = vpop.f32.mrf.mxu0
      %v2753 = vadd.f32 %v1999, %v2752
      %v2754 = vpop.f32.mrf.mxu0
      %2755 = vmatprep.mubr.f32.mxu0 0.0
      %2756 = vmatmul.mubr.f32.gmra.mxu0 %v2052
      %v2757 = vpop.f32.mrf.mxu0
      %v2758 = vadd.f32 %v2004, %v2757
      %v2759 = vpop.f32.mrf.mxu0
      %2760 = vdwg.mxu0
      %v2761 = vmax.f32 %v2361, %v2363
      %v2762 = vmax.f32 %v2761, %v2522
      %v2763 = vmax.f32 %v2762, %v2524
      %v2764 = vmax.f32 %v2763, %v2683
      %2765 = vmax.xlane.f32.xlu0 %v2764
      %v2766 = vpop.xlane.xlu0 %2765
      %v2767 = vmax.f32 %v2367, %v2369
      %v2768 = vmax.f32 %v2767, %v2528
      %v2769 = vmax.f32 %v2768, %v2530
      %v2770 = vmax.f32 %v2769, %v2688
      %2771 = vmax.xlane.f32.xlu0 %v2770
      %v2772 = vpop.xlane.xlu0 %2771
      %v2773 = vmax.f32 %v2373, %v2375
      %v2774 = vmax.f32 %v2773, %v2534
      %v2775 = vmax.f32 %v2774, %v2536
      %v2776 = vmax.f32 %v2775, %v2693
      %2777 = vmax.xlane.f32.xlu0 %v2776
      %v2778 = vpop.xlane.xlu0 %2777
      %v2779 = vmax.f32 %v2379, %v2381
      %v2780 = vmax.f32 %v2779, %v2540
      %v2781 = vmax.f32 %v2780, %v2542
      %v2782 = vmax.f32 %v2781, %v2698
      %2783 = vmax.xlane.f32.xlu0 %v2782
      %v2784 = vpop.xlane.xlu0 %2783
      %v2785 = vmax.f32 %v2385, %v2387
      %v2786 = vmax.f32 %v2785, %v2546
      %v2787 = vmax.f32 %v2786, %v2548
      %v2788 = vmax.f32 %v2787, %v2703
      %2789 = vmax.xlane.f32.xlu0 %v2788
      %v2790 = vpop.xlane.xlu0 %2789
      %v2791 = vmax.f32 %v2391, %v2393
      %v2792 = vmax.f32 %v2791, %v2552
      %v2793 = vmax.f32 %v2792, %v2554
      %v2794 = vmax.f32 %v2793, %v2708
      %2795 = vmax.xlane.f32.xlu0 %v2794
      %v2796 = vpop.xlane.xlu0 %2795
      %v2797 = vmax.f32 %v2397, %v2399
      %v2798 = vmax.f32 %v2797, %v2558
      %v2799 = vmax.f32 %v2798, %v2560
      %v2800 = vmax.f32 %v2799, %v2713
      %2801 = vmax.xlane.f32.xlu0 %v2800
      %v2802 = vpop.xlane.xlu0 %2801
      %v2803 = vmax.f32 %v2403, %v2405
      %v2804 = vmax.f32 %v2803, %v2564
      %v2805 = vmax.f32 %v2804, %v2566
      %v2806 = vmax.f32 %v2805, %v2718
      %2807 = vmax.xlane.f32.xlu0 %v2806
      %v2808 = vpop.xlane.xlu0 %2807
      %v2809 = vmax.f32 %v2409, %v2411
      %v2810 = vmax.f32 %v2809, %v2570
      %v2811 = vmax.f32 %v2810, %v2572
      %v2812 = vmax.f32 %v2811, %v2723
      %2813 = vmax.xlane.f32.xlu0 %v2812
      %v2814 = vpop.xlane.xlu0 %2813
      %v2815 = vmax.f32 %v2415, %v2417
      %v2816 = vmax.f32 %v2815, %v2576
      %v2817 = vmax.f32 %v2816, %v2578
      %v2818 = vmax.f32 %v2817, %v2728
      %2819 = vmax.xlane.f32.xlu0 %v2818
      %v2820 = vpop.xlane.xlu0 %2819
      %v2821 = vmax.f32 %v2421, %v2423
      %v2822 = vmax.f32 %v2821, %v2582
      %v2823 = vmax.f32 %v2822, %v2584
      %v2824 = vmax.f32 %v2823, %v2733
      %2825 = vmax.xlane.f32.xlu0 %v2824
      %v2826 = vpop.xlane.xlu0 %2825
      %v2827 = vmax.f32 %v2427, %v2429
      %v2828 = vmax.f32 %v2827, %v2588
      %v2829 = vmax.f32 %v2828, %v2590
      %v2830 = vmax.f32 %v2829, %v2738
      %2831 = vmax.xlane.f32.xlu0 %v2830
      %v2832 = vpop.xlane.xlu0 %2831
      %v2833 = vmax.f32 %v2433, %v2435
      %v2834 = vmax.f32 %v2833, %v2594
      %v2835 = vmax.f32 %v2834, %v2596
      %v2836 = vmax.f32 %v2835, %v2743
      %2837 = vmax.xlane.f32.xlu0 %v2836
      %v2838 = vpop.xlane.xlu0 %2837
      %v2839 = vmax.f32 %v2439, %v2441
      %v2840 = vmax.f32 %v2839, %v2600
      %v2841 = vmax.f32 %v2840, %v2602
      %v2842 = vmax.f32 %v2841, %v2748
      %2843 = vmax.xlane.f32.xlu0 %v2842
      %v2844 = vpop.xlane.xlu0 %2843
      %v2845 = vmax.f32 %v2445, %v2447
      %v2846 = vmax.f32 %v2845, %v2606
      %v2847 = vmax.f32 %v2846, %v2608
      %v2848 = vmax.f32 %v2847, %v2753
      %2849 = vmax.xlane.f32.xlu0 %v2848
      %v2850 = vpop.xlane.xlu0 %2849
      %v2851 = vmax.f32 %v2451, %v2453
      %v2852 = vmax.f32 %v2851, %v2612
      %v2853 = vmax.f32 %v2852, %v2614
      %v2854 = vmax.f32 %v2853, %v2758
      %2855 = vmax.xlane.f32.xlu0 %v2854
      %v2856 = vpop.xlane.xlu0 %2855
      %v2857 = vsub.f32 %v2361, %v2766
      %v2858 = vsub.f32 %v2363, %v2766
      %v2859 = vsub.f32 %v2522, %v2766
      %v2860 = vsub.f32 %v2524, %v2766
      %v2861 = vsub.f32 %v2683, %v2766
      %v2862 = vsub.f32 %v2367, %v2772
      %v2863 = vsub.f32 %v2369, %v2772
      %v2864 = vsub.f32 %v2528, %v2772
      %v2865 = vsub.f32 %v2530, %v2772
      %v2866 = vsub.f32 %v2688, %v2772
      %v2867 = vsub.f32 %v2373, %v2778
      %v2868 = vsub.f32 %v2375, %v2778
      %v2869 = vsub.f32 %v2534, %v2778
      %v2870 = vsub.f32 %v2536, %v2778
      %v2871 = vsub.f32 %v2693, %v2778
      %v2872 = vsub.f32 %v2379, %v2784
      %v2873 = vsub.f32 %v2381, %v2784
      %v2874 = vsub.f32 %v2540, %v2784
      %v2875 = vsub.f32 %v2542, %v2784
      %v2876 = vsub.f32 %v2698, %v2784
      %v2877 = vsub.f32 %v2385, %v2790
      %v2878 = vsub.f32 %v2387, %v2790
      %v2879 = vsub.f32 %v2546, %v2790
      %v2880 = vsub.f32 %v2548, %v2790
      %v2881 = vsub.f32 %v2703, %v2790
      %v2882 = vsub.f32 %v2391, %v2796
      %v2883 = vsub.f32 %v2393, %v2796
      %v2884 = vsub.f32 %v2552, %v2796
      %v2885 = vsub.f32 %v2554, %v2796
      %v2886 = vsub.f32 %v2708, %v2796
      %v2887 = vsub.f32 %v2397, %v2802
      %v2888 = vsub.f32 %v2399, %v2802
      %v2889 = vsub.f32 %v2558, %v2802
      %v2890 = vsub.f32 %v2560, %v2802
      %v2891 = vsub.f32 %v2713, %v2802
      %v2892 = vsub.f32 %v2403, %v2808
      %v2893 = vsub.f32 %v2405, %v2808
      %v2894 = vsub.f32 %v2564, %v2808
      %v2895 = vsub.f32 %v2566, %v2808
      %v2896 = vsub.f32 %v2718, %v2808
      %v2897 = vsub.f32 %v2409, %v2814
      %v2898 = vsub.f32 %v2411, %v2814
      %v2899 = vsub.f32 %v2570, %v2814
      %v2900 = vsub.f32 %v2572, %v2814
      %v2901 = vsub.f32 %v2723, %v2814
      %v2902 = vsub.f32 %v2415, %v2820
      %v2903 = vsub.f32 %v2417, %v2820
      %v2904 = vsub.f32 %v2576, %v2820
      %v2905 = vsub.f32 %v2578, %v2820
      %v2906 = vsub.f32 %v2728, %v2820
      %v2907 = vsub.f32 %v2421, %v2826
      %v2908 = vsub.f32 %v2423, %v2826
      %v2909 = vsub.f32 %v2582, %v2826
      %v2910 = vsub.f32 %v2584, %v2826
      %v2911 = vsub.f32 %v2733, %v2826
      %v2912 = vsub.f32 %v2427, %v2832
      %v2913 = vsub.f32 %v2429, %v2832
      %v2914 = vsub.f32 %v2588, %v2832
      %v2915 = vsub.f32 %v2590, %v2832
      %v2916 = vsub.f32 %v2738, %v2832
      %v2917 = vsub.f32 %v2433, %v2838
      %v2918 = vsub.f32 %v2435, %v2838
      %v2919 = vsub.f32 %v2594, %v2838
      %v2920 = vsub.f32 %v2596, %v2838
      %v2921 = vsub.f32 %v2743, %v2838
      %v2922 = vsub.f32 %v2439, %v2844
      %v2923 = vsub.f32 %v2441, %v2844
      %v2924 = vsub.f32 %v2600, %v2844
      %v2925 = vsub.f32 %v2602, %v2844
      %v2926 = vsub.f32 %v2748, %v2844
      %v2927 = vsub.f32 %v2445, %v2850
      %v2928 = vsub.f32 %v2447, %v2850
      %v2929 = vsub.f32 %v2606, %v2850
      %v2930 = vsub.f32 %v2608, %v2850
      %v2931 = vsub.f32 %v2753, %v2850
      %v2932 = vsub.f32 %v2451, %v2856
      %v2933 = vsub.f32 %v2453, %v2856
      %v2934 = vsub.f32 %v2612, %v2856
      %v2935 = vsub.f32 %v2614, %v2856
      %v2936 = vsub.f32 %v2758, %v2856
      %v2937 = vmul.f32 %v2857, 1.442695
      %v2938 = vpow.pop %v2937
      %v2939 = vmul.f32 %v2858, 1.442695
      %v2940 = vpow.pop %v2939
      %v2941 = vmul.f32 %v2859, 1.442695
      %v2942 = vpow.pop %v2941
      %v2943 = vmul.f32 %v2860, 1.442695
      %v2944 = vpow.pop %v2943
      %v2945 = vmul.f32 %v2861, 1.442695
      %v2946 = vpow.pop %v2945
      %v2947 = vmul.f32 %v2862, 1.442695
      %v2948 = vpow.pop %v2947
      %v2949 = vmul.f32 %v2863, 1.442695
      %v2950 = vpow.pop %v2949
      %v2951 = vmul.f32 %v2864, 1.442695
      %v2952 = vpow.pop %v2951
      %v2953 = vmul.f32 %v2865, 1.442695
      %v2954 = vpow.pop %v2953
      %v2955 = vmul.f32 %v2866, 1.442695
      %v2956 = vpow.pop %v2955
      %v2957 = vmul.f32 %v2867, 1.442695
      %v2958 = vpow.pop %v2957
      %v2959 = vmul.f32 %v2868, 1.442695
      %v2960 = vpow.pop %v2959
      %v2961 = vmul.f32 %v2869, 1.442695
      %v2962 = vpow.pop %v2961
      %v2963 = vmul.f32 %v2870, 1.442695
      %v2964 = vpow.pop %v2963
      %v2965 = vmul.f32 %v2871, 1.442695
      %v2966 = vpow.pop %v2965
      %v2967 = vmul.f32 %v2872, 1.442695
      %v2968 = vpow.pop %v2967
      %v2969 = vmul.f32 %v2873, 1.442695
      %v2970 = vpow.pop %v2969
      %v2971 = vmul.f32 %v2874, 1.442695
      %v2972 = vpow.pop %v2971
      %v2973 = vmul.f32 %v2875, 1.442695
      %v2974 = vpow.pop %v2973
      %v2975 = vmul.f32 %v2876, 1.442695
      %v2976 = vpow.pop %v2975
      %v2977 = vmul.f32 %v2877, 1.442695
      %v2978 = vpow.pop %v2977
      %v2979 = vmul.f32 %v2878, 1.442695
      %v2980 = vpow.pop %v2979
      %v2981 = vmul.f32 %v2879, 1.442695
      %v2982 = vpow.pop %v2981
      %v2983 = vmul.f32 %v2880, 1.442695
      %v2984 = vpow.pop %v2983
      %v2985 = vmul.f32 %v2881, 1.442695
      %v2986 = vpow.pop %v2985
      %v2987 = vmul.f32 %v2882, 1.442695
      %v2988 = vpow.pop %v2987
      %v2989 = vmul.f32 %v2883, 1.442695
      %v2990 = vpow.pop %v2989
      %v2991 = vmul.f32 %v2884, 1.442695
      %v2992 = vpow.pop %v2991
      %v2993 = vmul.f32 %v2885, 1.442695
      %v2994 = vpow.pop %v2993
      %v2995 = vmul.f32 %v2886, 1.442695
      %v2996 = vpow.pop %v2995
      %v2997 = vmul.f32 %v2887, 1.442695
      %v2998 = vpow.pop %v2997
      %v2999 = vmul.f32 %v2888, 1.442695
      %v3000 = vpow.pop %v2999
      %v3001 = vmul.f32 %v2889, 1.442695
      %v3002 = vpow.pop %v3001
      %v3003 = vmul.f32 %v2890, 1.442695
      %v3004 = vpow.pop %v3003
      %v3005 = vmul.f32 %v2891, 1.442695
      %v3006 = vpow.pop %v3005
      %v3007 = vmul.f32 %v2892, 1.442695
      %v3008 = vpow.pop %v3007
      %v3009 = vmul.f32 %v2893, 1.442695
      %v3010 = vpow.pop %v3009
      %v3011 = vmul.f32 %v2894, 1.442695
      %v3012 = vpow.pop %v3011
      %v3013 = vmul.f32 %v2895, 1.442695
      %v3014 = vpow.pop %v3013
      %v3015 = vmul.f32 %v2896, 1.442695
      %v3016 = vpow.pop %v3015
      %v3017 = vmul.f32 %v2897, 1.442695
      %v3018 = vpow.pop %v3017
      %v3019 = vmul.f32 %v2898, 1.442695
      %v3020 = vpow.pop %v3019
      %v3021 = vmul.f32 %v2899, 1.442695
      %v3022 = vpow.pop %v3021
      %v3023 = vmul.f32 %v2900, 1.442695
      %v3024 = vpow.pop %v3023
      %v3025 = vmul.f32 %v2901, 1.442695
      %v3026 = vpow.pop %v3025
      %v3027 = vmul.f32 %v2902, 1.442695
      %v3028 = vpow.pop %v3027
      %v3029 = vmul.f32 %v2903, 1.442695
      %v3030 = vpow.pop %v3029
      %v3031 = vmul.f32 %v2904, 1.442695
      %v3032 = vpow.pop %v3031
      %v3033 = vmul.f32 %v2905, 1.442695
      %v3034 = vpow.pop %v3033
      %v3035 = vmul.f32 %v2906, 1.442695
      %v3036 = vpow.pop %v3035
      %v3037 = vmul.f32 %v2907, 1.442695
      %v3038 = vpow.pop %v3037
      %v3039 = vmul.f32 %v2908, 1.442695
      %v3040 = vpow.pop %v3039
      %v3041 = vmul.f32 %v2909, 1.442695
      %v3042 = vpow.pop %v3041
      %v3043 = vmul.f32 %v2910, 1.442695
      %v3044 = vpow.pop %v3043
      %v3045 = vmul.f32 %v2911, 1.442695
      %v3046 = vpow.pop %v3045
      %v3047 = vmul.f32 %v2912, 1.442695
      %v3048 = vpow.pop %v3047
      %v3049 = vmul.f32 %v2913, 1.442695
      %v3050 = vpow.pop %v3049
      %v3051 = vmul.f32 %v2914, 1.442695
      %v3052 = vpow.pop %v3051
      %v3053 = vmul.f32 %v2915, 1.442695
      %v3054 = vpow.pop %v3053
      %v3055 = vmul.f32 %v2916, 1.442695
      %v3056 = vpow.pop %v3055
      %v3057 = vmul.f32 %v2917, 1.442695
      %v3058 = vpow.pop %v3057
      %v3059 = vmul.f32 %v2918, 1.442695
      %v3060 = vpow.pop %v3059
      %v3061 = vmul.f32 %v2919, 1.442695
      %v3062 = vpow.pop %v3061
      %v3063 = vmul.f32 %v2920, 1.442695
      %v3064 = vpow.pop %v3063
      %v3065 = vmul.f32 %v2921, 1.442695
      %v3066 = vpow.pop %v3065
      %v3067 = vmul.f32 %v2922, 1.442695
      %v3068 = vpow.pop %v3067
      %v3069 = vmul.f32 %v2923, 1.442695
      %v3070 = vpow.pop %v3069
      %v3071 = vmul.f32 %v2924, 1.442695
      %v3072 = vpow.pop %v3071
      %v3073 = vmul.f32 %v2925, 1.442695
      %v3074 = vpow.pop %v3073
      %v3075 = vmul.f32 %v2926, 1.442695
      %v3076 = vpow.pop %v3075
      %v3077 = vmul.f32 %v2927, 1.442695
      %v3078 = vpow.pop %v3077
      %v3079 = vmul.f32 %v2928, 1.442695
      %v3080 = vpow.pop %v3079
      %v3081 = vmul.f32 %v2929, 1.442695
      %v3082 = vpow.pop %v3081
      %v3083 = vmul.f32 %v2930, 1.442695
      %v3084 = vpow.pop %v3083
      %v3085 = vmul.f32 %v2931, 1.442695
      %v3086 = vpow.pop %v3085
      %v3087 = vmul.f32 %v2932, 1.442695
      %v3088 = vpow.pop %v3087
      %v3089 = vmul.f32 %v2933, 1.442695
      %v3090 = vpow.pop %v3089
      %v3091 = vmul.f32 %v2934, 1.442695
      %v3092 = vpow.pop %v3091
      %v3093 = vmul.f32 %v2935, 1.442695
      %v3094 = vpow.pop %v3093
      %v3095 = vmul.f32 %v2936, 1.442695
      %v3096 = vpow.pop %v3095
      %v3097 = vadd.f32 %v2938, %v2940
      %v3098 = vadd.f32 %v3097, %v2942
      %v3099 = vadd.f32 %v3098, %v2944
      %v3100 = vadd.f32 %v3099, %v2946
      %3101 = vadd.xlane.f32.xlu0 %v3100
      %v3102 = vpop.xlane.xlu0 %3101
      %v3103 = vadd.f32 %v2948, %v2950
      %v3104 = vadd.f32 %v3103, %v2952
      %v3105 = vadd.f32 %v3104, %v2954
      %v3106 = vadd.f32 %v3105, %v2956
      %3107 = vadd.xlane.f32.xlu0 %v3106
      %v3108 = vpop.xlane.xlu0 %3107
      %v3109 = vadd.f32 %v2958, %v2960
      %v3110 = vadd.f32 %v3109, %v2962
      %v3111 = vadd.f32 %v3110, %v2964
      %v3112 = vadd.f32 %v3111, %v2966
      %3113 = vadd.xlane.f32.xlu0 %v3112
      %v3114 = vpop.xlane.xlu0 %3113
      %v3115 = vadd.f32 %v2968, %v2970
      %v3116 = vadd.f32 %v3115, %v2972
      %v3117 = vadd.f32 %v3116, %v2974
      %v3118 = vadd.f32 %v3117, %v2976
      %3119 = vadd.xlane.f32.xlu0 %v3118
      %v3120 = vpop.xlane.xlu0 %3119
      %v3121 = vadd.f32 %v2978, %v2980
      %v3122 = vadd.f32 %v3121, %v2982
      %v3123 = vadd.f32 %v3122, %v2984
      %v3124 = vadd.f32 %v3123, %v2986
      %3125 = vadd.xlane.f32.xlu0 %v3124
      %v3126 = vpop.xlane.xlu0 %3125
      %v3127 = vadd.f32 %v2988, %v2990
      %v3128 = vadd.f32 %v3127, %v2992
      %v3129 = vadd.f32 %v3128, %v2994
      %v3130 = vadd.f32 %v3129, %v2996
      %3131 = vadd.xlane.f32.xlu0 %v3130
      %v3132 = vpop.xlane.xlu0 %3131
      %v3133 = vadd.f32 %v2998, %v3000
      %v3134 = vadd.f32 %v3133, %v3002
      %v3135 = vadd.f32 %v3134, %v3004
      %v3136 = vadd.f32 %v3135, %v3006
      %3137 = vadd.xlane.f32.xlu0 %v3136
      %v3138 = vpop.xlane.xlu0 %3137
      %v3139 = vadd.f32 %v3008, %v3010
      %v3140 = vadd.f32 %v3139, %v3012
      %v3141 = vadd.f32 %v3140, %v3014
      %v3142 = vadd.f32 %v3141, %v3016
      %3143 = vadd.xlane.f32.xlu0 %v3142
      %v3144 = vpop.xlane.xlu0 %3143
      %v3145 = vadd.f32 %v3018, %v3020
      %v3146 = vadd.f32 %v3145, %v3022
      %v3147 = vadd.f32 %v3146, %v3024
      %v3148 = vadd.f32 %v3147, %v3026
      %3149 = vadd.xlane.f32.xlu0 %v3148
      %v3150 = vpop.xlane.xlu0 %3149
      %v3151 = vadd.f32 %v3028, %v3030
      %v3152 = vadd.f32 %v3151, %v3032
      %v3153 = vadd.f32 %v3152, %v3034
      %v3154 = vadd.f32 %v3153, %v3036
      %3155 = vadd.xlane.f32.xlu0 %v3154
      %v3156 = vpop.xlane.xlu0 %3155
      %v3157 = vadd.f32 %v3038, %v3040
      %v3158 = vadd.f32 %v3157, %v3042
      %v3159 = vadd.f32 %v3158, %v3044
      %v3160 = vadd.f32 %v3159, %v3046
      %3161 = vadd.xlane.f32.xlu0 %v3160
      %v3162 = vpop.xlane.xlu0 %3161
      %v3163 = vadd.f32 %v3048, %v3050
      %v3164 = vadd.f32 %v3163, %v3052
      %v3165 = vadd.f32 %v3164, %v3054
      %v3166 = vadd.f32 %v3165, %v3056
      %3167 = vadd.xlane.f32.xlu0 %v3166
      %v3168 = vpop.xlane.xlu0 %3167
      %v3169 = vadd.f32 %v3058, %v3060
      %v3170 = vadd.f32 %v3169, %v3062
      %v3171 = vadd.f32 %v3170, %v3064
      %v3172 = vadd.f32 %v3171, %v3066
      %3173 = vadd.xlane.f32.xlu0 %v3172
      %v3174 = vpop.xlane.xlu0 %3173
      %v3175 = vadd.f32 %v3068, %v3070
      %v3176 = vadd.f32 %v3175, %v3072
      %v3177 = vadd.f32 %v3176, %v3074
      %v3178 = vadd.f32 %v3177, %v3076
      %3179 = vadd.xlane.f32.xlu0 %v3178
      %v3180 = vpop.xlane.xlu0 %3179
      %v3181 = vadd.f32 %v3078, %v3080
      %v3182 = vadd.f32 %v3181, %v3082
      %v3183 = vadd.f32 %v3182, %v3084
      %v3184 = vadd.f32 %v3183, %v3086
      %3185 = vadd.xlane.f32.xlu0 %v3184
      %v3186 = vpop.xlane.xlu0 %3185
      %v3187 = vadd.f32 %v3088, %v3090
      %v3188 = vadd.f32 %v3187, %v3092
      %v3189 = vadd.f32 %v3188, %v3094
      %v3190 = vadd.f32 %v3189, %v3096
      %3191 = vadd.xlane.f32.xlu0 %v3190
      %v3192 = vpop.xlane.xlu0 %3191
      %v3193 = vrcp.pop %v3102
      %v3194 = vrcp.pop %v3108
      %v3195 = vrcp.pop %v3114
      %v3196 = vrcp.pop %v3120
      %v3197 = vrcp.pop %v3126
      %v3198 = vrcp.pop %v3132
      %v3199 = vrcp.pop %v3138
      %v3200 = vrcp.pop %v3144
      %v3201 = vrcp.pop %v3150
      %v3202 = vrcp.pop %v3156
      %v3203 = vrcp.pop %v3162
      %v3204 = vrcp.pop %v3168
      %v3205 = vrcp.pop %v3174
      %v3206 = vrcp.pop %v3180
      %v3207 = vrcp.pop %v3186
      %v3208 = vrcp.pop %v3192
      %v3209 = vmul.f32 %v2938, %v3193
      %v3210 = vmul.f32 %v2940, %v3193
      %v3211 = vmul.f32 %v2942, %v3193
      %v3212 = vmul.f32 %v2944, %v3193
      %v3213 = vmul.f32 %v2946, %v3193
      %v3214 = vmul.f32 %v2948, %v3194
      %v3215 = vmul.f32 %v2950, %v3194
      %v3216 = vmul.f32 %v2952, %v3194
      %v3217 = vmul.f32 %v2954, %v3194
      %v3218 = vmul.f32 %v2956, %v3194
      %v3219 = vmul.f32 %v2958, %v3195
      %v3220 = vmul.f32 %v2960, %v3195
      %v3221 = vmul.f32 %v2962, %v3195
      %v3222 = vmul.f32 %v2964, %v3195
      %v3223 = vmul.f32 %v2966, %v3195
      %v3224 = vmul.f32 %v2968, %v3196
      %v3225 = vmul.f32 %v2970, %v3196
      %v3226 = vmul.f32 %v2972, %v3196
      %v3227 = vmul.f32 %v2974, %v3196
      %v3228 = vmul.f32 %v2976, %v3196
      %v3229 = vmul.f32 %v2978, %v3197
      %v3230 = vmul.f32 %v2980, %v3197
      %v3231 = vmul.f32 %v2982, %v3197
      %v3232 = vmul.f32 %v2984, %v3197
      %v3233 = vmul.f32 %v2986, %v3197
      %v3234 = vmul.f32 %v2988, %v3198
      %v3235 = vmul.f32 %v2990, %v3198
      %v3236 = vmul.f32 %v2992, %v3198
      %v3237 = vmul.f32 %v2994, %v3198
      %v3238 = vmul.f32 %v2996, %v3198
      %v3239 = vmul.f32 %v2998, %v3199
      %v3240 = vmul.f32 %v3000, %v3199
      %v3241 = vmul.f32 %v3002, %v3199
      %v3242 = vmul.f32 %v3004, %v3199
      %v3243 = vmul.f32 %v3006, %v3199
      %v3244 = vmul.f32 %v3008, %v3200
      %v3245 = vmul.f32 %v3010, %v3200
      %v3246 = vmul.f32 %v3012, %v3200
      %v3247 = vmul.f32 %v3014, %v3200
      %v3248 = vmul.f32 %v3016, %v3200
      %v3249 = vmul.f32 %v3018, %v3201
      %v3250 = vmul.f32 %v3020, %v3201
      %v3251 = vmul.f32 %v3022, %v3201
      %v3252 = vmul.f32 %v3024, %v3201
      %v3253 = vmul.f32 %v3026, %v3201
      %v3254 = vmul.f32 %v3028, %v3202
      %v3255 = vmul.f32 %v3030, %v3202
      %v3256 = vmul.f32 %v3032, %v3202
      %v3257 = vmul.f32 %v3034, %v3202
      %v3258 = vmul.f32 %v3036, %v3202
      %v3259 = vmul.f32 %v3038, %v3203
      %v3260 = vmul.f32 %v3040, %v3203
      %v3261 = vmul.f32 %v3042, %v3203
      %v3262 = vmul.f32 %v3044, %v3203
      %v3263 = vmul.f32 %v3046, %v3203
      %v3264 = vmul.f32 %v3048, %v3204
      %v3265 = vmul.f32 %v3050, %v3204
      %v3266 = vmul.f32 %v3052, %v3204
      %v3267 = vmul.f32 %v3054, %v3204
      %v3268 = vmul.f32 %v3056, %v3204
      %v3269 = vmul.f32 %v3058, %v3205
      %v3270 = vmul.f32 %v3060, %v3205
      %v3271 = vmul.f32 %v3062, %v3205
      %v3272 = vmul.f32 %v3064, %v3205
      %v3273 = vmul.f32 %v3066, %v3205
      %v3274 = vmul.f32 %v3068, %v3206
      %v3275 = vmul.f32 %v3070, %v3206
      %v3276 = vmul.f32 %v3072, %v3206
      %v3277 = vmul.f32 %v3074, %v3206
      %v3278 = vmul.f32 %v3076, %v3206
      %v3279 = vmul.f32 %v3078, %v3207
      %v3280 = vmul.f32 %v3080, %v3207
      %v3281 = vmul.f32 %v3082, %v3207
      %v3282 = vmul.f32 %v3084, %v3207
      %v3283 = vmul.f32 %v3086, %v3207
      %v3284 = vmul.f32 %v3088, %v3208
      %v3285 = vmul.f32 %v3090, %v3208
      %v3286 = vmul.f32 %v3092, %v3208
      %v3287 = vmul.f32 %v3094, %v3208
      %v3288 = vmul.f32 %v3096, %v3208
      %3289 = vrot.lane.b32.xlu0 %v1362, 96
      %v3290 = vpop.permute.xlu0 %3289
      %3291 = vrot.lane.b32.xlu0 %v1367, 96
      %v3292 = vpop.permute.xlu0 %3291
      %3293 = vrot.lane.b32.xlu0 %v1372, 96
      %v3294 = vpop.permute.xlu0 %3293
      %3295 = vrot.lane.b32.xlu0 %v1377, 96
      %v3296 = vpop.permute.xlu0 %3295
      %3297 = vrot.lane.b32.xlu0 %v1382, 96
      %v3298 = vpop.permute.xlu0 %3297
      %3299 = vrot.lane.b32.xlu0 %v1387, 96
      %v3300 = vpop.permute.xlu0 %3299
      %3301 = vrot.lane.b32.xlu0 %v1392, 96
      %v3302 = vpop.permute.xlu0 %3301
      %3303 = vrot.lane.b32.xlu0 %v1397, 96
      %v3304 = vpop.permute.xlu0 %3303
      %3305 = vrot.lane.b32.xlu0 %v1402, 96
      %v3306 = vpop.permute.xlu0 %3305
      %3307 = vrot.lane.b32.xlu0 %v1407, 96
      %v3308 = vpop.permute.xlu0 %3307
      %3309 = vrot.lane.b32.xlu0 %v1412, 96
      %v3310 = vpop.permute.xlu0 %3309
      %3311 = vrot.lane.b32.xlu0 %v1417, 96
      %v3312 = vpop.permute.xlu0 %3311
      %3313 = vrot.lane.b32.xlu0 %v1422, 96
      %v3314 = vpop.permute.xlu0 %3313
      %3315 = vrot.lane.b32.xlu0 %v1427, 96
      %v3316 = vpop.permute.xlu0 %3315
      %3317 = vrot.lane.b32.xlu0 %v1432, 96
      %v3318 = vpop.permute.xlu0 %3317
      %3319 = vrot.lane.b32.xlu0 %v1437, 96
      %v3320 = vpop.permute.xlu0 %3319
      %3321 = vrot.lane.b32.xlu0 %v1442, 96
      %v3322 = vpop.permute.xlu0 %3321
      %3323 = vrot.lane.b32.xlu0 %v1447, 96
      %v3324 = vpop.permute.xlu0 %3323
      %3325 = vrot.lane.b32.xlu0 %v1452, 96
      %v3326 = vpop.permute.xlu0 %3325
      %3327 = vrot.lane.b32.xlu0 %v1457, 96
      %v3328 = vpop.permute.xlu0 %3327
      %3329 = vrot.lane.b32.xlu0 %v1462, 96
      %v3330 = vpop.permute.xlu0 %3329
      %3331 = vrot.lane.b32.xlu0 %v1467, 96
      %v3332 = vpop.permute.xlu0 %3331
      %3333 = vrot.lane.b32.xlu0 %v1472, 96
      %v3334 = vpop.permute.xlu0 %3333
      %3335 = vrot.lane.b32.xlu0 %v1477, 96
      %v3336 = vpop.permute.xlu0 %3335
      %3337 = vrot.lane.b32.xlu0 %v1482, 96
      %v3338 = vpop.permute.xlu0 %3337
      %3339 = vrot.lane.b32.xlu0 %v1487, 96
      %v3340 = vpop.permute.xlu0 %3339
      %3341 = vrot.lane.b32.xlu0 %v1492, 96
      %v3342 = vpop.permute.xlu0 %3341
      %3343 = vrot.lane.b32.xlu0 %v1497, 96
      %v3344 = vpop.permute.xlu0 %3343
      %3345 = vrot.lane.b32.xlu0 %v1502, 96
      %v3346 = vpop.permute.xlu0 %3345
      %3347 = vrot.lane.b32.xlu0 %v1507, 96
      %v3348 = vpop.permute.xlu0 %3347
      %3349 = vrot.lane.b32.xlu0 %v1512, 96
      %v3350 = vpop.permute.xlu0 %3349
      %3351 = vrot.lane.b32.xlu0 %v1517, 96
      %v3352 = vpop.permute.xlu0 %3351
      %3353 = vrot.lane.b32.xlu0 %v1522, 96
      %v3354 = vpop.permute.xlu0 %3353
      %3355 = vrot.lane.b32.xlu0 %v1527, 96
      %v3356 = vpop.permute.xlu0 %3355
      %3357 = vrot.lane.b32.xlu0 %v1532, 96
      %v3358 = vpop.permute.xlu0 %3357
      %3359 = vrot.lane.b32.xlu0 %v1537, 96
      %v3360 = vpop.permute.xlu0 %3359
      %3361 = vrot.lane.b32.xlu0 %v1542, 96
      %v3362 = vpop.permute.xlu0 %3361
      %3363 = vrot.lane.b32.xlu0 %v1547, 96
      %v3364 = vpop.permute.xlu0 %3363
      %3365 = vrot.lane.b32.xlu0 %v1552, 96
      %v3366 = vpop.permute.xlu0 %3365
      %3367 = vrot.lane.b32.xlu0 %v1557, 96
      %v3368 = vpop.permute.xlu0 %3367
      %3369 = vrot.lane.b32.xlu0 %v1562, 96
      %v3370 = vpop.permute.xlu0 %3369
      %3371 = vrot.lane.b32.xlu0 %v1567, 96
      %v3372 = vpop.permute.xlu0 %3371
      %3373 = vrot.lane.b32.xlu0 %v1572, 96
      %v3374 = vpop.permute.xlu0 %3373
      %3375 = vrot.lane.b32.xlu0 %v1577, 96
      %v3376 = vpop.permute.xlu0 %3375
      %3377 = vrot.lane.b32.xlu0 %v1582, 96
      %v3378 = vpop.permute.xlu0 %3377
      %3379 = vrot.lane.b32.xlu0 %v1587, 96
      %v3380 = vpop.permute.xlu0 %3379
      %3381 = vrot.lane.b32.xlu0 %v1592, 96
      %v3382 = vpop.permute.xlu0 %3381
      %3383 = vrot.lane.b32.xlu0 %v1597, 96
      %v3384 = vpop.permute.xlu0 %3383
      %3385 = vrot.lane.b32.xlu0 %v1602, 96
      %v3386 = vpop.permute.xlu0 %3385
      %3387 = vrot.lane.b32.xlu0 %v1607, 96
      %v3388 = vpop.permute.xlu0 %3387
      %3389 = vrot.lane.b32.xlu0 %v1612, 96
      %v3390 = vpop.permute.xlu0 %3389
      %3391 = vrot.lane.b32.xlu0 %v1617, 96
      %v3392 = vpop.permute.xlu0 %3391
      %3393 = vrot.lane.b32.xlu0 %v1622, 96
      %v3394 = vpop.permute.xlu0 %3393
      %3395 = vrot.lane.b32.xlu0 %v1627, 96
      %v3396 = vpop.permute.xlu0 %3395
      %3397 = vrot.lane.b32.xlu0 %v1632, 96
      %v3398 = vpop.permute.xlu0 %3397
      %3399 = vrot.lane.b32.xlu0 %v1637, 96
      %v3400 = vpop.permute.xlu0 %3399
      %3401 = vrot.lane.b32.xlu0 %v1642, 96
      %v3402 = vpop.permute.xlu0 %3401
      %3403 = vrot.lane.b32.xlu0 %v1647, 96
      %v3404 = vpop.permute.xlu0 %3403
      %3405 = vrot.lane.b32.xlu0 %v1652, 96
      %v3406 = vpop.permute.xlu0 %3405
      %3407 = vrot.lane.b32.xlu0 %v1657, 96
      %v3408 = vpop.permute.xlu0 %3407
      %3409 = vrot.lane.b32.xlu0 %v1662, 96
      %v3410 = vpop.permute.xlu0 %3409
      %3411 = vrot.lane.b32.xlu0 %v1667, 96
      %v3412 = vpop.permute.xlu0 %3411
      %3413 = vrot.lane.b32.xlu0 %v1672, 96
      %v3414 = vpop.permute.xlu0 %3413
      %3415 = vrot.lane.b32.xlu0 %v1677, 96
      %v3416 = vpop.permute.xlu0 %3415
      %3417 = vrot.lane.b32.xlu0 %v1682, 96
      %v3418 = vpop.permute.xlu0 %3417
      %3419 = vrot.lane.b32.xlu0 %v1687, 96
      %v3420 = vpop.permute.xlu0 %3419
      %3421 = vrot.lane.b32.xlu0 %v1692, 96
      %v3422 = vpop.permute.xlu0 %3421
      %3423 = vrot.lane.b32.xlu0 %v1697, 96
      %v3424 = vpop.permute.xlu0 %3423
      %3425 = vrot.lane.b32.xlu0 %v1702, 96
      %v3426 = vpop.permute.xlu0 %3425
      %3427 = vrot.lane.b32.xlu0 %v1707, 96
      %v3428 = vpop.permute.xlu0 %3427
      %3429 = vrot.lane.b32.xlu0 %v1712, 96
      %v3430 = vpop.permute.xlu0 %3429
      %3431 = vrot.lane.b32.xlu0 %v1717, 96
      %v3432 = vpop.permute.xlu0 %3431
      %3433 = vrot.lane.b32.xlu0 %v1722, 96
      %v3434 = vpop.permute.xlu0 %3433
      %3435 = vrot.lane.b32.xlu0 %v1727, 96
      %v3436 = vpop.permute.xlu0 %3435
      %3437 = vrot.lane.b32.xlu0 %v1732, 96
      %v3438 = vpop.permute.xlu0 %3437
      %3439 = vrot.lane.b32.xlu0 %v1737, 96
      %v3440 = vpop.permute.xlu0 %3439
      %3441 = vrot.lane.b32.xlu0 %v1742, 96
      %v3442 = vpop.permute.xlu0 %3441
      %3443 = vrot.lane.b32.xlu0 %v1747, 96
      %v3444 = vpop.permute.xlu0 %3443
      %3445 = vrot.lane.b32.xlu0 %v1752, 96
      %v3446 = vpop.permute.xlu0 %3445
      %3447 = vrot.lane.b32.xlu0 %v1757, 96
      %v3448 = vpop.permute.xlu0 %3447
      %3529 = vmatprep.subr.mxu0 0.0
      %3530 = vmatpush1.msra.mxu0 %v3320
      %3531 = vmatprep.subr.mxu0 0.0
      %3532 = vmatpush1.msra.mxu0 %v3318
      %3533 = vmatprep.subr.mxu0 0.0
      %3534 = vmatpush1.msra.mxu0 %v3316
      %3535 = vmatprep.subr.mxu0 0.0
      %3536 = vmatpush1.msra.mxu0 %v3314
      %3537 = vmatprep.subr.mxu0 0.0
      %3538 = vmatpush1.msra.mxu0 %v3312
      %3539 = vmatprep.subr.mxu0 0.0
      %3540 = vmatpush1.msra.mxu0 %v3310
      %3541 = vmatprep.subr.mxu0 0.0
      %3542 = vmatpush1.msra.mxu0 %v3308
      %3543 = vmatprep.subr.mxu0 0.0
      %3544 = vmatpush1.msra.mxu0 %v3306
      %3545 = vmatprep.subr.mxu0 0.0
      %3546 = vmatpush1.msra.mxu0 %v3304
      %3547 = vmatprep.subr.mxu0 0.0
      %3548 = vmatpush1.msra.mxu0 %v3302
      %3549 = vmatprep.subr.mxu0 0.0
      %3550 = vmatpush1.msra.mxu0 %v3300
      %3551 = vmatprep.subr.mxu0 0.0
      %3552 = vmatpush1.msra.mxu0 %v3298
      %3553 = vmatprep.subr.mxu0 0.0
      %3554 = vmatpush1.msra.mxu0 %v3296
      %3555 = vmatprep.subr.mxu0 0.0
      %3556 = vmatpush1.msra.mxu0 %v3294
      %3557 = vmatprep.subr.mxu0 0.0
      %3558 = vmatpush1.msra.mxu0 %v3292
      %3559 = vmatprep.subr.mxu0 0.0
      %3560 = vmatpush1.msra.mxu0 %v3290
      %3561 = vmatprep.subr.mxu0 0.0
      %3562 = vmatpush2.msra.mxu0 %v3352
      %3563 = vmatprep.subr.mxu0 0.0
      %3564 = vmatpush2.msra.mxu0 %v3350
      %3565 = vmatprep.subr.mxu0 0.0
      %3566 = vmatpush2.msra.mxu0 %v3348
      %3567 = vmatprep.subr.mxu0 0.0
      %3568 = vmatpush2.msra.mxu0 %v3346
      %3569 = vmatprep.subr.mxu0 0.0
      %3570 = vmatpush2.msra.mxu0 %v3344
      %3571 = vmatprep.subr.mxu0 0.0
      %3572 = vmatpush2.msra.mxu0 %v3342
      %3573 = vmatprep.subr.mxu0 0.0
      %3574 = vmatpush2.msra.mxu0 %v3340
      %3575 = vmatprep.subr.mxu0 0.0
      %3576 = vmatpush2.msra.mxu0 %v3338
      %3577 = vmatprep.subr.mxu0 0.0
      %3578 = vmatpush2.msra.mxu0 %v3336
      %3579 = vmatprep.subr.mxu0 0.0
      %3580 = vmatpush2.msra.mxu0 %v3334
      %3581 = vmatprep.subr.mxu0 0.0
      %3582 = vmatpush2.msra.mxu0 %v3332
      %3583 = vmatprep.subr.mxu0 0.0
      %3584 = vmatpush2.msra.mxu0 %v3330
      %3585 = vmatprep.subr.mxu0 0.0
      %3586 = vmatpush2.msra.mxu0 %v3328
      %3587 = vmatprep.subr.mxu0 0.0
      %3588 = vmatpush2.msra.mxu0 %v3326
      %3589 = vmatprep.subr.mxu0 0.0
      %3590 = vmatpush2.msra.mxu0 %v3324
      %3591 = vmatprep.subr.mxu0 0.0
      %3592 = vmatpush2.msra.mxu0 %v3322
      %3593 = vmatprep.mubr.f32.mxu0 %v3210
      %3594 = vmatmul.mubr.f32.gmra.mxu0 %v3209
      %v3595 = vpop.f32.mrf.mxu0
      %v3596 = vadd.f32 0.0, %v3595
      %v3597 = vpop.f32.mrf.mxu0
      %3598 = vmatprep.mubr.f32.mxu0 %v3215
      %3599 = vmatmul.mubr.f32.gmra.mxu0 %v3214
      %v3600 = vpop.f32.mrf.mxu0
      %v3601 = vadd.f32 0.0, %v3600
      %v3602 = vpop.f32.mrf.mxu0
      %3603 = vmatprep.mubr.f32.mxu0 %v3220
      %3604 = vmatmul.mubr.f32.gmra.mxu0 %v3219
      %v3605 = vpop.f32.mrf.mxu0
      %v3606 = vadd.f32 0.0, %v3605
      %v3607 = vpop.f32.mrf.mxu0
      %3608 = vmatprep.mubr.f32.mxu0 %v3225
      %3609 = vmatmul.mubr.f32.gmra.mxu0 %v3224
      %v3610 = vpop.f32.mrf.mxu0
      %v3611 = vadd.f32 0.0, %v3610
      %v3612 = vpop.f32.mrf.mxu0
      %3613 = vmatprep.mubr.f32.mxu0 %v3230
      %3614 = vmatmul.mubr.f32.gmra.mxu0 %v3229
      %v3615 = vpop.f32.mrf.mxu0
      %v3616 = vadd.f32 0.0, %v3615
      %v3617 = vpop.f32.mrf.mxu0
      %3618 = vmatprep.mubr.f32.mxu0 %v3235
      %3619 = vmatmul.mubr.f32.gmra.mxu0 %v3234
      %v3620 = vpop.f32.mrf.mxu0
      %v3621 = vadd.f32 0.0, %v3620
      %v3622 = vpop.f32.mrf.mxu0
      %3623 = vmatprep.mubr.f32.mxu0 %v3240
      %3624 = vmatmul.mubr.f32.gmra.mxu0 %v3239
      %v3625 = vpop.f32.mrf.mxu0
      %v3626 = vadd.f32 0.0, %v3625
      %v3627 = vpop.f32.mrf.mxu0
      %3628 = vmatprep.mubr.f32.mxu0 %v3245
      %3629 = vmatmul.mubr.f32.gmra.mxu0 %v3244
      %v3630 = vpop.f32.mrf.mxu0
      %v3631 = vadd.f32 0.0, %v3630
      %v3632 = vpop.f32.mrf.mxu0
      %3633 = vmatprep.mubr.f32.mxu0 %v3250
      %3634 = vmatmul.mubr.f32.gmra.mxu0 %v3249
      %v3635 = vpop.f32.mrf.mxu0
      %v3636 = vadd.f32 0.0, %v3635
      %v3637 = vpop.f32.mrf.mxu0
      %3638 = vmatprep.mubr.f32.mxu0 %v3255
      %3639 = vmatmul.mubr.f32.gmra.mxu0 %v3254
      %v3640 = vpop.f32.mrf.mxu0
      %v3641 = vadd.f32 0.0, %v3640
      %v3642 = vpop.f32.mrf.mxu0
      %3643 = vmatprep.mubr.f32.mxu0 %v3260
      %3644 = vmatmul.mubr.f32.gmra.mxu0 %v3259
      %v3645 = vpop.f32.mrf.mxu0
      %v3646 = vadd.f32 0.0, %v3645
      %v3647 = vpop.f32.mrf.mxu0
      %3648 = vmatprep.mubr.f32.mxu0 %v3265
      %3649 = vmatmul.mubr.f32.gmra.mxu0 %v3264
      %v3650 = vpop.f32.mrf.mxu0
      %v3651 = vadd.f32 0.0, %v3650
      %v3652 = vpop.f32.mrf.mxu0
      %3653 = vmatprep.mubr.f32.mxu0 %v3270
      %3654 = vmatmul.mubr.f32.gmra.mxu0 %v3269
      %v3655 = vpop.f32.mrf.mxu0
      %v3656 = vadd.f32 0.0, %v3655
      %v3657 = vpop.f32.mrf.mxu0
      %3658 = vmatprep.mubr.f32.mxu0 %v3275
      %3659 = vmatmul.mubr.f32.gmra.mxu0 %v3274
      %v3660 = vpop.f32.mrf.mxu0
      %v3661 = vadd.f32 0.0, %v3660
      %v3662 = vpop.f32.mrf.mxu0
      %3663 = vmatprep.mubr.f32.mxu0 %v3280
      %3664 = vmatmul.mubr.f32.gmra.mxu0 %v3279
      %v3665 = vpop.f32.mrf.mxu0
      %v3666 = vadd.f32 0.0, %v3665
      %v3667 = vpop.f32.mrf.mxu0
      %3668 = vmatprep.mubr.f32.mxu0 %v3285
      %3669 = vmatmul.mubr.f32.gmra.mxu0 %v3284
      %v3670 = vpop.f32.mrf.mxu0
      %v3671 = vadd.f32 0.0, %v3670
      %v3672 = vpop.f32.mrf.mxu0
      %3673 = vdwg.mxu0
      %3674 = vmatprep.subr.mxu0 0.0
      %3675 = vmatpush1.msra.mxu0 %v3384
      %3676 = vmatprep.subr.mxu0 0.0
      %3677 = vmatpush1.msra.mxu0 %v3382
      %3678 = vmatprep.subr.mxu0 0.0
      %3679 = vmatpush1.msra.mxu0 %v3380
      %3680 = vmatprep.subr.mxu0 0.0
      %3681 = vmatpush1.msra.mxu0 %v3378
      %3682 = vmatprep.subr.mxu0 0.0
      %3683 = vmatpush1.msra.mxu0 %v3376
      %3684 = vmatprep.subr.mxu0 0.0
      %3685 = vmatpush1.msra.mxu0 %v3374
      %3686 = vmatprep.subr.mxu0 0.0
      %3687 = vmatpush1.msra.mxu0 %v3372
      %3688 = vmatprep.subr.mxu0 0.0
      %3689 = vmatpush1.msra.mxu0 %v3370
      %3690 = vmatprep.subr.mxu0 0.0
      %3691 = vmatpush1.msra.mxu0 %v3368
      %3692 = vmatprep.subr.mxu0 0.0
      %3693 = vmatpush1.msra.mxu0 %v3366
      %3694 = vmatprep.subr.mxu0 0.0
      %3695 = vmatpush1.msra.mxu0 %v3364
      %3696 = vmatprep.subr.mxu0 0.0
      %3697 = vmatpush1.msra.mxu0 %v3362
      %3698 = vmatprep.subr.mxu0 0.0
      %3699 = vmatpush1.msra.mxu0 %v3360
      %3700 = vmatprep.subr.mxu0 0.0
      %3701 = vmatpush1.msra.mxu0 %v3358
      %3702 = vmatprep.subr.mxu0 0.0
      %3703 = vmatpush1.msra.mxu0 %v3356
      %3704 = vmatprep.subr.mxu0 0.0
      %3705 = vmatpush1.msra.mxu0 %v3354
      %3706 = vmatprep.subr.mxu0 0.0
      %3707 = vmatpush2.msra.mxu0 %v3416
      %3708 = vmatprep.subr.mxu0 0.0
      %3709 = vmatpush2.msra.mxu0 %v3414
      %3710 = vmatprep.subr.mxu0 0.0
      %3711 = vmatpush2.msra.mxu0 %v3412
      %3712 = vmatprep.subr.mxu0 0.0
      %3713 = vmatpush2.msra.mxu0 %v3410
      %3714 = vmatprep.subr.mxu0 0.0
      %3715 = vmatpush2.msra.mxu0 %v3408
      %3716 = vmatprep.subr.mxu0 0.0
      %3717 = vmatpush2.msra.mxu0 %v3406
      %3718 = vmatprep.subr.mxu0 0.0
      %3719 = vmatpush2.msra.mxu0 %v3404
      %3720 = vmatprep.subr.mxu0 0.0
      %3721 = vmatpush2.msra.mxu0 %v3402
      %3722 = vmatprep.subr.mxu0 0.0
      %3723 = vmatpush2.msra.mxu0 %v3400
      %3724 = vmatprep.subr.mxu0 0.0
      %3725 = vmatpush2.msra.mxu0 %v3398
      %3726 = vmatprep.subr.mxu0 0.0
      %3727 = vmatpush2.msra.mxu0 %v3396
      %3728 = vmatprep.subr.mxu0 0.0
      %3729 = vmatpush2.msra.mxu0 %v3394
      %3730 = vmatprep.subr.mxu0 0.0
      %3731 = vmatpush2.msra.mxu0 %v3392
      %3732 = vmatprep.subr.mxu0 0.0
      %3733 = vmatpush2.msra.mxu0 %v3390
      %3734 = vmatprep.subr.mxu0 0.0
      %3735 = vmatpush2.msra.mxu0 %v3388
      %3736 = vmatprep.subr.mxu0 0.0
      %3737 = vmatpush2.msra.mxu0 %v3386
      %3738 = vmatprep.mubr.f32.mxu0 %v3212
      %3739 = vmatmul.mubr.f32.gmra.mxu0 %v3211
      %v3740 = vpop.f32.mrf.mxu0
      %v3741 = vadd.f32 %v3596, %v3740
      %v3742 = vpop.f32.mrf.mxu0
      %3743 = vmatprep.mubr.f32.mxu0 %v3217
      %3744 = vmatmul.mubr.f32.gmra.mxu0 %v3216
      %v3745 = vpop.f32.mrf.mxu0
      %v3746 = vadd.f32 %v3601, %v3745
      %v3747 = vpop.f32.mrf.mxu0
      %3748 = vmatprep.mubr.f32.mxu0 %v3222
      %3749 = vmatmul.mubr.f32.gmra.mxu0 %v3221
      %v3750 = vpop.f32.mrf.mxu0
      %v3751 = vadd.f32 %v3606, %v3750
      %v3752 = vpop.f32.mrf.mxu0
      %3753 = vmatprep.mubr.f32.mxu0 %v3227
      %3754 = vmatmul.mubr.f32.gmra.mxu0 %v3226
      %v3755 = vpop.f32.mrf.mxu0
      %v3756 = vadd.f32 %v3611, %v3755
      %v3757 = vpop.f32.mrf.mxu0
      %3758 = vmatprep.mubr.f32.mxu0 %v3232
      %3759 = vmatmul.mubr.f32.gmra.mxu0 %v3231
      %v3760 = vpop.f32.mrf.mxu0
      %v3761 = vadd.f32 %v3616, %v3760
      %v3762 = vpop.f32.mrf.mxu0
      %3763 = vmatprep.mubr.f32.mxu0 %v3237
      %3764 = vmatmul.mubr.f32.gmra.mxu0 %v3236
      %v3765 = vpop.f32.mrf.mxu0
      %v3766 = vadd.f32 %v3621, %v3765
      %v3767 = vpop.f32.mrf.mxu0
      %3768 = vmatprep.mubr.f32.mxu0 %v3242
      %3769 = vmatmul.mubr.f32.gmra.mxu0 %v3241
      %v3770 = vpop.f32.mrf.mxu0
      %v3771 = vadd.f32 %v3626, %v3770
      %v3772 = vpop.f32.mrf.mxu0
      %3773 = vmatprep.mubr.f32.mxu0 %v3247
      %3774 = vmatmul.mubr.f32.gmra.mxu0 %v3246
      %v3775 = vpop.f32.mrf.mxu0
      %v3776 = vadd.f32 %v3631, %v3775
      %v3777 = vpop.f32.mrf.mxu0
      %3778 = vmatprep.mubr.f32.mxu0 %v3252
      %3779 = vmatmul.mubr.f32.gmra.mxu0 %v3251
      %v3780 = vpop.f32.mrf.mxu0
      %v3781 = vadd.f32 %v3636, %v3780
      %v3782 = vpop.f32.mrf.mxu0
      %3783 = vmatprep.mubr.f32.mxu0 %v3257
      %3784 = vmatmul.mubr.f32.gmra.mxu0 %v3256
      %v3785 = vpop.f32.mrf.mxu0
      %v3786 = vadd.f32 %v3641, %v3785
      %v3787 = vpop.f32.mrf.mxu0
      %3788 = vmatprep.mubr.f32.mxu0 %v3262
      %3789 = vmatmul.mubr.f32.gmra.mxu0 %v3261
      %v3790 = vpop.f32.mrf.mxu0
      %v3791 = vadd.f32 %v3646, %v3790
      %v3792 = vpop.f32.mrf.mxu0
      %3793 = vmatprep.mubr.f32.mxu0 %v3267
      %3794 = vmatmul.mubr.f32.gmra.mxu0 %v3266
      %v3795 = vpop.f32.mrf.mxu0
      %v3796 = vadd.f32 %v3651, %v3795
      %v3797 = vpop.f32.mrf.mxu0
      %3798 = vmatprep.mubr.f32.mxu0 %v3272
      %3799 = vmatmul.mubr.f32.gmra.mxu0 %v3271
      %v3800 = vpop.f32.mrf.mxu0
      %v3801 = vadd.f32 %v3656, %v3800
      %v3802 = vpop.f32.mrf.mxu0
      %3803 = vmatprep.mubr.f32.mxu0 %v3277
      %3804 = vmatmul.mubr.f32.gmra.mxu0 %v3276
      %v3805 = vpop.f32.mrf.mxu0
      %v3806 = vadd.f32 %v3661, %v3805
      %v3807 = vpop.f32.mrf.mxu0
      %3808 = vmatprep.mubr.f32.mxu0 %v3282
      %3809 = vmatmul.mubr.f32.gmra.mxu0 %v3281
      %v3810 = vpop.f32.mrf.mxu0
      %v3811 = vadd.f32 %v3666, %v3810
      %v3812 = vpop.f32.mrf.mxu0
      %3813 = vmatprep.mubr.f32.mxu0 %v3287
      %3814 = vmatmul.mubr.f32.gmra.mxu0 %v3286
      %v3815 = vpop.f32.mrf.mxu0
      %v3816 = vadd.f32 %v3671, %v3815
      %v3817 = vpop.f32.mrf.mxu0
      %3818 = vdwg.mxu0
      %3819 = vmatprep.subr.mxu0 0.0
      %3820 = vmatpush1.msra.mxu0 %v3448
      %3821 = vmatprep.subr.mxu0 0.0
      %3822 = vmatpush1.msra.mxu0 %v3446
      %3823 = vmatprep.subr.mxu0 0.0
      %3824 = vmatpush1.msra.mxu0 %v3444
      %3825 = vmatprep.subr.mxu0 0.0
      %3826 = vmatpush1.msra.mxu0 %v3442
      %3827 = vmatprep.subr.mxu0 0.0
      %3828 = vmatpush1.msra.mxu0 %v3440
      %3829 = vmatprep.subr.mxu0 0.0
      %3830 = vmatpush1.msra.mxu0 %v3438
      %3831 = vmatprep.subr.mxu0 0.0
      %3832 = vmatpush1.msra.mxu0 %v3436
      %3833 = vmatprep.subr.mxu0 0.0
      %3834 = vmatpush1.msra.mxu0 %v3434
      %3835 = vmatprep.subr.mxu0 0.0
      %3836 = vmatpush1.msra.mxu0 %v3432
      %3837 = vmatprep.subr.mxu0 0.0
      %3838 = vmatpush1.msra.mxu0 %v3430
      %3839 = vmatprep.subr.mxu0 0.0
      %3840 = vmatpush1.msra.mxu0 %v3428
      %3841 = vmatprep.subr.mxu0 0.0
      %3842 = vmatpush1.msra.mxu0 %v3426
      %3843 = vmatprep.subr.mxu0 0.0
      %3844 = vmatpush1.msra.mxu0 %v3424
      %3845 = vmatprep.subr.mxu0 0.0
      %3846 = vmatpush1.msra.mxu0 %v3422
      %3847 = vmatprep.subr.mxu0 0.0
      %3848 = vmatpush1.msra.mxu0 %v3420
      %3849 = vmatprep.subr.mxu0 0.0
      %3850 = vmatpush1.msra.mxu0 %v3418
      %3851 = vmatprep.subr.mxu0 0.0
      %3852 = vmatpush2.msra.mxu0 0.0
      %3853 = vmatprep.subr.mxu0 0.0
      %3854 = vmatpush2.msra.mxu0 0.0
      %3855 = vmatprep.subr.mxu0 0.0
      %3856 = vmatpush2.msra.mxu0 0.0
      %3857 = vmatprep.subr.mxu0 0.0
      %3858 = vmatpush2.msra.mxu0 0.0
      %3859 = vmatprep.subr.mxu0 0.0
      %3860 = vmatpush2.msra.mxu0 0.0
      %3861 = vmatprep.subr.mxu0 0.0
      %3862 = vmatpush2.msra.mxu0 0.0
      %3863 = vmatprep.subr.mxu0 0.0
      %3864 = vmatpush2.msra.mxu0 0.0
      %3865 = vmatprep.subr.mxu0 0.0
      %3866 = vmatpush2.msra.mxu0 0.0
      %3867 = vmatprep.subr.mxu0 0.0
      %3868 = vmatpush2.msra.mxu0 0.0
      %3869 = vmatprep.subr.mxu0 0.0
      %3870 = vmatpush2.msra.mxu0 0.0
      %3871 = vmatprep.subr.mxu0 0.0
      %3872 = vmatpush2.msra.mxu0 0.0
      %3873 = vmatprep.subr.mxu0 0.0
      %3874 = vmatpush2.msra.mxu0 0.0
      %3875 = vmatprep.subr.mxu0 0.0
      %3876 = vmatpush2.msra.mxu0 0.0
      %3877 = vmatprep.subr.mxu0 0.0
      %3878 = vmatpush2.msra.mxu0 0.0
      %3879 = vmatprep.subr.mxu0 0.0
      %3880 = vmatpush2.msra.mxu0 0.0
      %3881 = vmatprep.subr.mxu0 0.0
      %3882 = vmatpush2.msra.mxu0 0.0
      %3883 = vmatprep.mubr.f32.mxu0 0.0
      %3884 = vmatmul.mubr.f32.gmra.mxu0 %v3213
      %v3885 = vpop.f32.mrf.mxu0
      %v3886 = vadd.f32 %v3741, %v3885
      %v3887 = vpop.f32.mrf.mxu0
      %3888 = vmatprep.mubr.f32.mxu0 0.0
      %3889 = vmatmul.mubr.f32.gmra.mxu0 %v3218
      %v3890 = vpop.f32.mrf.mxu0
      %v3891 = vadd.f32 %v3746, %v3890
      %v3892 = vpop.f32.mrf.mxu0
      %3893 = vmatprep.mubr.f32.mxu0 0.0
      %3894 = vmatmul.mubr.f32.gmra.mxu0 %v3223
      %v3895 = vpop.f32.mrf.mxu0
      %v3896 = vadd.f32 %v3751, %v3895
      %v3897 = vpop.f32.mrf.mxu0
      %3898 = vmatprep.mubr.f32.mxu0 0.0
      %3899 = vmatmul.mubr.f32.gmra.mxu0 %v3228
      %v3900 = vpop.f32.mrf.mxu0
      %v3901 = vadd.f32 %v3756, %v3900
      %v3902 = vpop.f32.mrf.mxu0
      %3903 = vmatprep.mubr.f32.mxu0 0.0
      %3904 = vmatmul.mubr.f32.gmra.mxu0 %v3233
      %v3905 = vpop.f32.mrf.mxu0
      %v3906 = vadd.f32 %v3761, %v3905
      %v3907 = vpop.f32.mrf.mxu0
      %3908 = vmatprep.mubr.f32.mxu0 0.0
      %3909 = vmatmul.mubr.f32.gmra.mxu0 %v3238
      %v3910 = vpop.f32.mrf.mxu0
      %v3911 = vadd.f32 %v3766, %v3910
      %v3912 = vpop.f32.mrf.mxu0
      %3913 = vmatprep.mubr.f32.mxu0 0.0
      %3914 = vmatmul.mubr.f32.gmra.mxu0 %v3243
      %v3915 = vpop.f32.mrf.mxu0
      %v3916 = vadd.f32 %v3771, %v3915
      %v3917 = vpop.f32.mrf.mxu0
      %3918 = vmatprep.mubr.f32.mxu0 0.0
      %3919 = vmatmul.mubr.f32.gmra.mxu0 %v3248
      %v3920 = vpop.f32.mrf.mxu0
      %v3921 = vadd.f32 %v3776, %v3920
      %v3922 = vpop.f32.mrf.mxu0
      %3923 = vmatprep.mubr.f32.mxu0 0.0
      %3924 = vmatmul.mubr.f32.gmra.mxu0 %v3253
      %v3925 = vpop.f32.mrf.mxu0
      %v3926 = vadd.f32 %v3781, %v3925
      %v3927 = vpop.f32.mrf.mxu0
      %3928 = vmatprep.mubr.f32.mxu0 0.0
      %3929 = vmatmul.mubr.f32.gmra.mxu0 %v3258
      %v3930 = vpop.f32.mrf.mxu0
      %v3931 = vadd.f32 %v3786, %v3930
      %v3932 = vpop.f32.mrf.mxu0
      %3933 = vmatprep.mubr.f32.mxu0 0.0
      %3934 = vmatmul.mubr.f32.gmra.mxu0 %v3263
      %v3935 = vpop.f32.mrf.mxu0
      %v3936 = vadd.f32 %v3791, %v3935
      %v3937 = vpop.f32.mrf.mxu0
      %3938 = vmatprep.mubr.f32.mxu0 0.0
      %3939 = vmatmul.mubr.f32.gmra.mxu0 %v3268
      %v3940 = vpop.f32.mrf.mxu0
      %v3941 = vadd.f32 %v3796, %v3940
      %v3942 = vpop.f32.mrf.mxu0
      %3943 = vmatprep.mubr.f32.mxu0 0.0
      %3944 = vmatmul.mubr.f32.gmra.mxu0 %v3273
      %v3945 = vpop.f32.mrf.mxu0
      %v3946 = vadd.f32 %v3801, %v3945
      %v3947 = vpop.f32.mrf.mxu0
      %3948 = vmatprep.mubr.f32.mxu0 0.0
      %3949 = vmatmul.mubr.f32.gmra.mxu0 %v3278
      %v3950 = vpop.f32.mrf.mxu0
      %v3951 = vadd.f32 %v3806, %v3950
      %v3952 = vpop.f32.mrf.mxu0
      %3953 = vmatprep.mubr.f32.mxu0 0.0
      %3954 = vmatmul.mubr.f32.gmra.mxu0 %v3283
      %v3955 = vpop.f32.mrf.mxu0
      %v3956 = vadd.f32 %v3811, %v3955
      %v3957 = vpop.f32.mrf.mxu0
      %3958 = vmatprep.mubr.f32.mxu0 0.0
      %3959 = vmatmul.mubr.f32.gmra.mxu0 %v3288
      %v3960 = vpop.f32.mrf.mxu0
      %v3961 = vadd.f32 %v3816, %v3960
      %v3962 = vpop.f32.mrf.mxu0
      %3963 = vdwg.mxu0
      %3964 = vst.msk [vmem:[#allocation2] sm:$0xff] %vm2005, %v3886
      %3965 = vst.msk [vmem:[#allocation2 + $0x8] sm:$0xff] %vm2005, %v3891
      %3966 = vst.msk [vmem:[#allocation2 + $0x10] sm:$0xff] %vm2005, %v3896
      %3967 = vst.msk [vmem:[#allocation2 + $0x18] sm:$0xff] %vm2005, %v3901
      %3968 = vst.msk [vmem:[#allocation2 + $0x20] sm:$0xff] %vm2005, %v3906
      %3969 = vst.msk [vmem:[#allocation2 + $0x28] sm:$0xff] %vm2005, %v3911
      %3970 = vst.msk [vmem:[#allocation2 + $0x30] sm:$0xff] %vm2005, %v3916
      %3971 = vst.msk [vmem:[#allocation2 + $0x38] sm:$0xff] %vm2005, %v3921
      %3972 = vst.msk [vmem:[#allocation2 + $0x40] sm:$0xff] %vm2005, %v3926
      %3973 = vst.msk [vmem:[#allocation2 + $0x48] sm:$0xff] %vm2005, %v3931
      %3974 = vst.msk [vmem:[#allocation2 + $0x50] sm:$0xff] %vm2005, %v3936
      %3975 = vst.msk [vmem:[#allocation2 + $0x58] sm:$0xff] %vm2005, %v3941
      %3976 = vst.msk [vmem:[#allocation2 + $0x60] sm:$0xff] %vm2005, %v3946
      %3977 = vst.msk [vmem:[#allocation2 + $0x68] sm:$0xff] %vm2005, %v3951
      %3978 = vst.msk [vmem:[#allocation2 + $0x70] sm:$0xff] %vm2005, %v3956
      %3979 = vst.msk [vmem:[#allocation2 + $0x78] sm:$0xff] %vm2005, %v3961
      %3980 = vrot.lane.b32.xlu0 %v1153, 120
      %v3981 = vpop.permute.xlu0 %3980
      %3982 = vrot.lane.b32.xlu0 %v1158, 120
      %v3983 = vpop.permute.xlu0 %3982
      %3984 = vrot.lane.b32.xlu0 %v1163, 120
      %v3985 = vpop.permute.xlu0 %3984
      %3986 = vrot.lane.b32.xlu0 %v1168, 120
      %v3987 = vpop.permute.xlu0 %3986
      %3988 = vrot.lane.b32.xlu0 %v1173, 120
      %v3989 = vpop.permute.xlu0 %3988
      %3990 = vrot.lane.b32.xlu0 %v1178, 120
      %v3991 = vpop.permute.xlu0 %3990
      %3992 = vrot.lane.b32.xlu0 %v1183, 120
      %v3993 = vpop.permute.xlu0 %3992
      %3994 = vrot.lane.b32.xlu0 %v1188, 120
      %v3995 = vpop.permute.xlu0 %3994
      %3996 = vrot.lane.b32.xlu0 %v1193, 120
      %v3997 = vpop.permute.xlu0 %3996
      %3998 = vrot.lane.b32.xlu0 %v1198, 120
      %v3999 = vpop.permute.xlu0 %3998
      %4000 = vrot.lane.b32.xlu0 %v1203, 120
      %v4001 = vpop.permute.xlu0 %4000
      %4002 = vrot.lane.b32.xlu0 %v1208, 120
      %v4003 = vpop.permute.xlu0 %4002
      %4004 = vrot.lane.b32.xlu0 %v1213, 120
      %v4005 = vpop.permute.xlu0 %4004
      %4006 = vrot.lane.b32.xlu0 %v1218, 120
      %v4007 = vpop.permute.xlu0 %4006
      %4008 = vrot.lane.b32.xlu0 %v1223, 120
      %v4009 = vpop.permute.xlu0 %4008
      %4010 = vrot.lane.b32.xlu0 %v1228, 120
      %v4011 = vpop.permute.xlu0 %4010
      %4012 = vrot.lane.b32.xlu0 %v1362, 120
      %v4013 = vpop.permute.xlu0 %4012
      %4014 = vrot.lane.b32.xlu0 %v1367, 120
      %v4015 = vpop.permute.xlu0 %4014
      %4016 = vrot.lane.b32.xlu0 %v1372, 120
      %v4017 = vpop.permute.xlu0 %4016
      %4018 = vrot.lane.b32.xlu0 %v1377, 120
      %v4019 = vpop.permute.xlu0 %4018
      %4020 = vrot.lane.b32.xlu0 %v1382, 120
      %v4021 = vpop.permute.xlu0 %4020
      %4022 = vrot.lane.b32.xlu0 %v1387, 120
      %v4023 = vpop.permute.xlu0 %4022
      %4024 = vrot.lane.b32.xlu0 %v1392, 120
      %v4025 = vpop.permute.xlu0 %4024
      %4026 = vrot.lane.b32.xlu0 %v1397, 120
      %v4027 = vpop.permute.xlu0 %4026
      %4028 = vrot.lane.b32.xlu0 %v1402, 120
      %v4029 = vpop.permute.xlu0 %4028
      %4030 = vrot.lane.b32.xlu0 %v1407, 120
      %v4031 = vpop.permute.xlu0 %4030
      %4032 = vrot.lane.b32.xlu0 %v1412, 120
      %v4033 = vpop.permute.xlu0 %4032
      %4034 = vrot.lane.b32.xlu0 %v1417, 120
      %v4035 = vpop.permute.xlu0 %4034
      %4036 = vrot.lane.b32.xlu0 %v1422, 120
      %v4037 = vpop.permute.xlu0 %4036
      %4038 = vrot.lane.b32.xlu0 %v1427, 120
      %v4039 = vpop.permute.xlu0 %4038
      %4040 = vrot.lane.b32.xlu0 %v1432, 120
      %v4041 = vpop.permute.xlu0 %4040
      %4042 = vrot.lane.b32.xlu0 %v1437, 120
      %v4043 = vpop.permute.xlu0 %4042
      %4044 = vrot.lane.b32.xlu0 %v1442, 120
      %v4045 = vpop.permute.xlu0 %4044
      %4046 = vrot.lane.b32.xlu0 %v1447, 120
      %v4047 = vpop.permute.xlu0 %4046
      %4048 = vrot.lane.b32.xlu0 %v1452, 120
      %v4049 = vpop.permute.xlu0 %4048
      %4050 = vrot.lane.b32.xlu0 %v1457, 120
      %v4051 = vpop.permute.xlu0 %4050
      %4052 = vrot.lane.b32.xlu0 %v1462, 120
      %v4053 = vpop.permute.xlu0 %4052
      %4054 = vrot.lane.b32.xlu0 %v1467, 120
      %v4055 = vpop.permute.xlu0 %4054
      %4056 = vrot.lane.b32.xlu0 %v1472, 120
      %v4057 = vpop.permute.xlu0 %4056
      %4058 = vrot.lane.b32.xlu0 %v1477, 120
      %v4059 = vpop.permute.xlu0 %4058
      %4060 = vrot.lane.b32.xlu0 %v1482, 120
      %v4061 = vpop.permute.xlu0 %4060
      %4062 = vrot.lane.b32.xlu0 %v1487, 120
      %v4063 = vpop.permute.xlu0 %4062
      %4064 = vrot.lane.b32.xlu0 %v1492, 120
      %v4065 = vpop.permute.xlu0 %4064
      %4066 = vrot.lane.b32.xlu0 %v1497, 120
      %v4067 = vpop.permute.xlu0 %4066
      %4068 = vrot.lane.b32.xlu0 %v1502, 120
      %v4069 = vpop.permute.xlu0 %4068
      %4070 = vrot.lane.b32.xlu0 %v1507, 120
      %v4071 = vpop.permute.xlu0 %4070
      %4072 = vrot.lane.b32.xlu0 %v1512, 120
      %v4073 = vpop.permute.xlu0 %4072
      %4074 = vrot.lane.b32.xlu0 %v1517, 120
      %v4075 = vpop.permute.xlu0 %4074
      %4076 = vrot.lane.b32.xlu0 %v1522, 120
      %v4077 = vpop.permute.xlu0 %4076
      %4078 = vrot.lane.b32.xlu0 %v1527, 120
      %v4079 = vpop.permute.xlu0 %4078
      %4080 = vrot.lane.b32.xlu0 %v1532, 120
      %v4081 = vpop.permute.xlu0 %4080
      %4082 = vrot.lane.b32.xlu0 %v1537, 120
      %v4083 = vpop.permute.xlu0 %4082
      %4084 = vrot.lane.b32.xlu0 %v1542, 120
      %v4085 = vpop.permute.xlu0 %4084
      %4086 = vrot.lane.b32.xlu0 %v1547, 120
      %v4087 = vpop.permute.xlu0 %4086
      %4088 = vrot.lane.b32.xlu0 %v1552, 120
      %v4089 = vpop.permute.xlu0 %4088
      %4090 = vrot.lane.b32.xlu0 %v1557, 120
      %v4091 = vpop.permute.xlu0 %4090
      %4092 = vrot.lane.b32.xlu0 %v1562, 120
      %v4093 = vpop.permute.xlu0 %4092
      %4094 = vrot.lane.b32.xlu0 %v1567, 120
      %v4095 = vpop.permute.xlu0 %4094
      %4096 = vrot.lane.b32.xlu0 %v1572, 120
      %v4097 = vpop.permute.xlu0 %4096
      %4098 = vrot.lane.b32.xlu0 %v1577, 120
      %v4099 = vpop.permute.xlu0 %4098
      %4100 = vrot.lane.b32.xlu0 %v1582, 120
      %v4101 = vpop.permute.xlu0 %4100
      %4102 = vrot.lane.b32.xlu0 %v1587, 120
      %v4103 = vpop.permute.xlu0 %4102
      %4104 = vrot.lane.b32.xlu0 %v1592, 120
      %v4105 = vpop.permute.xlu0 %4104
      %4106 = vrot.lane.b32.xlu0 %v1597, 120
      %v4107 = vpop.permute.xlu0 %4106
      %4108 = vrot.lane.b32.xlu0 %v1602, 120
      %v4109 = vpop.permute.xlu0 %4108
      %4110 = vrot.lane.b32.xlu0 %v1607, 120
      %v4111 = vpop.permute.xlu0 %4110
      %4112 = vrot.lane.b32.xlu0 %v1612, 120
      %v4113 = vpop.permute.xlu0 %4112
      %4114 = vrot.lane.b32.xlu0 %v1617, 120
      %v4115 = vpop.permute.xlu0 %4114
      %4116 = vrot.lane.b32.xlu0 %v1622, 120
      %v4117 = vpop.permute.xlu0 %4116
      %4118 = vrot.lane.b32.xlu0 %v1627, 120
      %v4119 = vpop.permute.xlu0 %4118
      %4120 = vrot.lane.b32.xlu0 %v1632, 120
      %v4121 = vpop.permute.xlu0 %4120
      %4122 = vrot.lane.b32.xlu0 %v1637, 120
      %v4123 = vpop.permute.xlu0 %4122
      %4124 = vrot.lane.b32.xlu0 %v1642, 120
      %v4125 = vpop.permute.xlu0 %4124
      %4126 = vrot.lane.b32.xlu0 %v1647, 120
      %v4127 = vpop.permute.xlu0 %4126
      %4128 = vrot.lane.b32.xlu0 %v1652, 120
      %v4129 = vpop.permute.xlu0 %4128
      %4130 = vrot.lane.b32.xlu0 %v1657, 120
      %v4131 = vpop.permute.xlu0 %4130
      %4132 = vrot.lane.b32.xlu0 %v1662, 120
      %v4133 = vpop.permute.xlu0 %4132
      %4134 = vrot.lane.b32.xlu0 %v1667, 120
      %v4135 = vpop.permute.xlu0 %4134
      %4136 = vrot.lane.b32.xlu0 %v1672, 120
      %v4137 = vpop.permute.xlu0 %4136
      %4138 = vrot.lane.b32.xlu0 %v1677, 120
      %v4139 = vpop.permute.xlu0 %4138
      %4140 = vrot.lane.b32.xlu0 %v1682, 120
      %v4141 = vpop.permute.xlu0 %4140
      %4142 = vrot.lane.b32.xlu0 %v1687, 120
      %v4143 = vpop.permute.xlu0 %4142
      %4144 = vrot.lane.b32.xlu0 %v1692, 120
      %v4145 = vpop.permute.xlu0 %4144
      %4146 = vrot.lane.b32.xlu0 %v1697, 120
      %v4147 = vpop.permute.xlu0 %4146
      %4148 = vrot.lane.b32.xlu0 %v1702, 120
      %v4149 = vpop.permute.xlu0 %4148
      %4150 = vrot.lane.b32.xlu0 %v1707, 120
      %v4151 = vpop.permute.xlu0 %4150
      %4152 = vrot.lane.b32.xlu0 %v1712, 120
      %v4153 = vpop.permute.xlu0 %4152
      %4154 = vrot.lane.b32.xlu0 %v1717, 120
      %v4155 = vpop.permute.xlu0 %4154
      %4156 = vrot.lane.b32.xlu0 %v1722, 120
      %v4157 = vpop.permute.xlu0 %4156
      %4158 = vrot.lane.b32.xlu0 %v1727, 120
      %v4159 = vpop.permute.xlu0 %4158
      %4160 = vrot.lane.b32.xlu0 %v1732, 120
      %v4161 = vpop.permute.xlu0 %4160
      %4162 = vrot.lane.b32.xlu0 %v1737, 120
      %v4163 = vpop.permute.xlu0 %4162
      %4164 = vrot.lane.b32.xlu0 %v1742, 120
      %v4165 = vpop.permute.xlu0 %4164
      %4166 = vrot.lane.b32.xlu0 %v1747, 120
      %v4167 = vpop.permute.xlu0 %4166
      %4168 = vrot.lane.b32.xlu0 %v1752, 120
      %v4169 = vpop.permute.xlu0 %4168
      %4170 = vrot.lane.b32.xlu0 %v1757, 120
      %v4171 = vpop.permute.xlu0 %4170
      %v4172 = vsel %vm2005, %v3981, 0
      %v4174 = vsel %vm2005, %v3983, 0
      %v4176 = vsel %vm2005, %v3985, 0
      %v4178 = vsel %vm2005, %v3987, 0
      %v4180 = vsel %vm2005, %v3989, 0
      %v4182 = vsel %vm2005, %v3991, 0
      %v4184 = vsel %vm2005, %v3993, 0
      %v4186 = vsel %vm2005, %v3995, 0
      %v4188 = vsel %vm2005, %v3997, 0
      %v4190 = vsel %vm2005, %v3999, 0
      %v4192 = vsel %vm2005, %v4001, 0
      %v4194 = vsel %vm2005, %v4003, 0
      %v4196 = vsel %vm2005, %v4005, 0
      %v4198 = vsel %vm2005, %v4007, 0
      %v4200 = vsel %vm2005, %v4009, 0
      %v4202 = vsel %vm2005, %v4011, 0
      %v4204 = vsel %vm2005, %v4013, 0
      %v4206 = vsel %vm2005, %v4015, 0
      %v4208 = vsel %vm2005, %v4017, 0
      %v4210 = vsel %vm2005, %v4019, 0
      %v4212 = vsel %vm2005, %v4021, 0
      %v4214 = vsel %vm2005, %v4023, 0
      %v4216 = vsel %vm2005, %v4025, 0
      %v4218 = vsel %vm2005, %v4027, 0
      %v4220 = vsel %vm2005, %v4029, 0
      %v4222 = vsel %vm2005, %v4031, 0
      %v4224 = vsel %vm2005, %v4033, 0
      %v4226 = vsel %vm2005, %v4035, 0
      %v4228 = vsel %vm2005, %v4037, 0
      %v4230 = vsel %vm2005, %v4039, 0
      %v4232 = vsel %vm2005, %v4041, 0
      %v4234 = vsel %vm2005, %v4043, 0
      %v4236 = vsel %vm2005, %v4045, 0
      %v4238 = vsel %vm2005, %v4047, 0
      %v4240 = vsel %vm2005, %v4049, 0
      %v4242 = vsel %vm2005, %v4051, 0
      %v4244 = vsel %vm2005, %v4053, 0
      %v4246 = vsel %vm2005, %v4055, 0
      %v4248 = vsel %vm2005, %v4057, 0
      %v4250 = vsel %vm2005, %v4059, 0
      %v4252 = vsel %vm2005, %v4061, 0
      %v4254 = vsel %vm2005, %v4063, 0
      %v4256 = vsel %vm2005, %v4065, 0
      %v4258 = vsel %vm2005, %v4067, 0
      %v4260 = vsel %vm2005, %v4069, 0
      %v4262 = vsel %vm2005, %v4071, 0
      %v4264 = vsel %vm2005, %v4073, 0
      %v4266 = vsel %vm2005, %v4075, 0
      %v4268 = vsel %vm2005, %v4077, 0
      %v4270 = vsel %vm2005, %v4079, 0
      %v4272 = vsel %vm2005, %v4081, 0
      %v4274 = vsel %vm2005, %v4083, 0
      %v4276 = vsel %vm2005, %v4085, 0
      %v4278 = vsel %vm2005, %v4087, 0
      %v4280 = vsel %vm2005, %v4089, 0
      %v4282 = vsel %vm2005, %v4091, 0
      %v4284 = vsel %vm2005, %v4093, 0
      %v4286 = vsel %vm2005, %v4095, 0
      %v4288 = vsel %vm2005, %v4097, 0
      %v4290 = vsel %vm2005, %v4099, 0
      %v4292 = vsel %vm2005, %v4101, 0
      %v4294 = vsel %vm2005, %v4103, 0
      %v4296 = vsel %vm2005, %v4105, 0
      %v4298 = vsel %vm2005, %v4107, 0
      %v4300 = vsel %vm2005, %v4109, 0
      %v4302 = vsel %vm2005, %v4111, 0
      %v4304 = vsel %vm2005, %v4113, 0
      %v4306 = vsel %vm2005, %v4115, 0
      %v4308 = vsel %vm2005, %v4117, 0
      %v4310 = vsel %vm2005, %v4119, 0
      %v4312 = vsel %vm2005, %v4121, 0
      %v4314 = vsel %vm2005, %v4123, 0
      %v4316 = vsel %vm2005, %v4125, 0
      %v4318 = vsel %vm2005, %v4127, 0
      %v4320 = vsel %vm2005, %v4129, 0
      %v4322 = vsel %vm2005, %v4131, 0
      %v4324 = vsel %vm2005, %v4133, 0
      %v4326 = vsel %vm2005, %v4135, 0
      %v4328 = vsel %vm2005, %v4137, 0
      %v4330 = vsel %vm2005, %v4139, 0
      %v4332 = vsel %vm2005, %v4141, 0
      %v4334 = vsel %vm2005, %v4143, 0
      %v4336 = vsel %vm2005, %v4145, 0
      %v4338 = vsel %vm2005, %v4147, 0
      %v4340 = vsel %vm2005, %v4149, 0
      %v4342 = vsel %vm2005, %v4151, 0
      %v4344 = vsel %vm2005, %v4153, 0
      %v4346 = vsel %vm2005, %v4155, 0
      %v4348 = vsel %vm2005, %v4157, 0
      %v4350 = vsel %vm2005, %v4159, 0
      %v4352 = vsel %vm2005, %v4161, 0
      %v4354 = vsel %vm2005, %v4163, 0
      %v4356 = vsel %vm2005, %v4165, 0
      %v4358 = vsel %vm2005, %v4167, 0
      %v4360 = vsel %vm2005, %v4169, 0
      %v4362 = vsel %vm2005, %v4171, 0
      %4364 = vmatprep.subr.mxu0 0.0
      %4365 = vmatpush1.xpose.msra.mxu0 %v4234
      %4366 = vmatprep.subr.mxu0 0.0
      %4367 = vmatpush1.xpose.msra.mxu0 %v4232
      %4368 = vmatprep.subr.mxu0 0.0
      %4369 = vmatpush1.xpose.msra.mxu0 %v4230
      %4370 = vmatprep.subr.mxu0 0.0
      %4371 = vmatpush1.xpose.msra.mxu0 %v4228
      %4372 = vmatprep.subr.mxu0 0.0
      %4373 = vmatpush1.xpose.msra.mxu0 %v4226
      %4374 = vmatprep.subr.mxu0 0.0
      %4375 = vmatpush1.xpose.msra.mxu0 %v4224
      %4376 = vmatprep.subr.mxu0 0.0
      %4377 = vmatpush1.xpose.msra.mxu0 %v4222
      %4378 = vmatprep.subr.mxu0 0.0
      %4379 = vmatpush1.xpose.msra.mxu0 %v4220
      %4380 = vmatprep.subr.mxu0 0.0
      %4381 = vmatpush1.xpose.msra.mxu0 %v4218
      %4382 = vmatprep.subr.mxu0 0.0
      %4383 = vmatpush1.xpose.msra.mxu0 %v4216
      %4384 = vmatprep.subr.mxu0 0.0
      %4385 = vmatpush1.xpose.msra.mxu0 %v4214
      %4386 = vmatprep.subr.mxu0 0.0
      %4387 = vmatpush1.xpose.msra.mxu0 %v4212
      %4388 = vmatprep.subr.mxu0 0.0
      %4389 = vmatpush1.xpose.msra.mxu0 %v4210
      %4390 = vmatprep.subr.mxu0 0.0
      %4391 = vmatpush1.xpose.msra.mxu0 %v4208
      %4392 = vmatprep.subr.mxu0 0.0
      %4393 = vmatpush1.xpose.msra.mxu0 %v4206
      %4394 = vmatprep.subr.mxu0 0.0
      %4395 = vmatpush1.xpose.msra.mxu0 %v4204
      %4396 = vmatprep.subr.mxu0 0.0
      %4397 = vmatpush2.xpose.msra.mxu0 %v4266
      %4398 = vmatprep.subr.mxu0 0.0
      %4399 = vmatpush2.xpose.msra.mxu0 %v4264
      %4400 = vmatprep.subr.mxu0 0.0
      %4401 = vmatpush2.xpose.msra.mxu0 %v4262
      %4402 = vmatprep.subr.mxu0 0.0
      %4403 = vmatpush2.xpose.msra.mxu0 %v4260
      %4404 = vmatprep.subr.mxu0 0.0
      %4405 = vmatpush2.xpose.msra.mxu0 %v4258
      %4406 = vmatprep.subr.mxu0 0.0
      %4407 = vmatpush2.xpose.msra.mxu0 %v4256
      %4408 = vmatprep.subr.mxu0 0.0
      %4409 = vmatpush2.xpose.msra.mxu0 %v4254
      %4410 = vmatprep.subr.mxu0 0.0
      %4411 = vmatpush2.xpose.msra.mxu0 %v4252
      %4412 = vmatprep.subr.mxu0 0.0
      %4413 = vmatpush2.xpose.msra.mxu0 %v4250
      %4414 = vmatprep.subr.mxu0 0.0
      %4415 = vmatpush2.xpose.msra.mxu0 %v4248
      %4416 = vmatprep.subr.mxu0 0.0
      %4417 = vmatpush2.xpose.msra.mxu0 %v4246
      %4418 = vmatprep.subr.mxu0 0.0
      %4419 = vmatpush2.xpose.msra.mxu0 %v4244
      %4420 = vmatprep.subr.mxu0 0.0
      %4421 = vmatpush2.xpose.msra.mxu0 %v4242
      %4422 = vmatprep.subr.mxu0 0.0
      %4423 = vmatpush2.xpose.msra.mxu0 %v4240
      %4424 = vmatprep.subr.mxu0 0.0
      %4425 = vmatpush2.xpose.msra.mxu0 %v4238
      %4426 = vmatprep.subr.mxu0 0.0
      %4427 = vmatpush2.xpose.msra.mxu0 %v4236
      %4428 = vmatprep.mubr.f32.mxu0 0.0
      %4429 = vmatmul.mubr.f32.gmra.mxu0 %v4172
      %v4430 = vpop.f32.mrf.mxu0
      %v4431 = vadd.f32 %v1925, %v4430
      %v4432 = vpop.f32.mrf.mxu0
      %v4433 = vadd.f32 %v1926, %v4432
      %4434 = vmatprep.mubr.f32.mxu0 0.0
      %4435 = vmatmul.mubr.f32.gmra.mxu0 %v4174
      %v4436 = vpop.f32.mrf.mxu0
      %v4437 = vadd.f32 %v1930, %v4436
      %v4438 = vpop.f32.mrf.mxu0
      %v4439 = vadd.f32 %v1931, %v4438
      %4440 = vmatprep.mubr.f32.mxu0 0.0
      %4441 = vmatmul.mubr.f32.gmra.mxu0 %v4176
      %v4442 = vpop.f32.mrf.mxu0
      %v4443 = vadd.f32 %v1935, %v4442
      %v4444 = vpop.f32.mrf.mxu0
      %v4445 = vadd.f32 %v1936, %v4444
      %4446 = vmatprep.mubr.f32.mxu0 0.0
      %4447 = vmatmul.mubr.f32.gmra.mxu0 %v4178
      %v4448 = vpop.f32.mrf.mxu0
      %v4449 = vadd.f32 %v1940, %v4448
      %v4450 = vpop.f32.mrf.mxu0
      %v4451 = vadd.f32 %v1941, %v4450
      %4452 = vmatprep.mubr.f32.mxu0 0.0
      %4453 = vmatmul.mubr.f32.gmra.mxu0 %v4180
      %v4454 = vpop.f32.mrf.mxu0
      %v4455 = vadd.f32 %v1945, %v4454
      %v4456 = vpop.f32.mrf.mxu0
      %v4457 = vadd.f32 %v1946, %v4456
      %4458 = vmatprep.mubr.f32.mxu0 0.0
      %4459 = vmatmul.mubr.f32.gmra.mxu0 %v4182
      %v4460 = vpop.f32.mrf.mxu0
      %v4461 = vadd.f32 %v1950, %v4460
      %v4462 = vpop.f32.mrf.mxu0
      %v4463 = vadd.f32 %v1951, %v4462
      %4464 = vmatprep.mubr.f32.mxu0 0.0
      %4465 = vmatmul.mubr.f32.gmra.mxu0 %v4184
      %v4466 = vpop.f32.mrf.mxu0
      %v4467 = vadd.f32 %v1955, %v4466
      %v4468 = vpop.f32.mrf.mxu0
      %v4469 = vadd.f32 %v1956, %v4468
      %4470 = vmatprep.mubr.f32.mxu0 0.0
      %4471 = vmatmul.mubr.f32.gmra.mxu0 %v4186
      %v4472 = vpop.f32.mrf.mxu0
      %v4473 = vadd.f32 %v1960, %v4472
      %v4474 = vpop.f32.mrf.mxu0
      %v4475 = vadd.f32 %v1961, %v4474
      %4476 = vmatprep.mubr.f32.mxu0 0.0
      %4477 = vmatmul.mubr.f32.gmra.mxu0 %v4188
      %v4478 = vpop.f32.mrf.mxu0
      %v4479 = vadd.f32 %v1965, %v4478
      %v4480 = vpop.f32.mrf.mxu0
      %v4481 = vadd.f32 %v1966, %v4480
      %4482 = vmatprep.mubr.f32.mxu0 0.0
      %4483 = vmatmul.mubr.f32.gmra.mxu0 %v4190
      %v4484 = vpop.f32.mrf.mxu0
      %v4485 = vadd.f32 %v1970, %v4484
      %v4486 = vpop.f32.mrf.mxu0
      %v4487 = vadd.f32 %v1971, %v4486
      %4488 = vmatprep.mubr.f32.mxu0 0.0
      %4489 = vmatmul.mubr.f32.gmra.mxu0 %v4192
      %v4490 = vpop.f32.mrf.mxu0
      %v4491 = vadd.f32 %v1975, %v4490
      %v4492 = vpop.f32.mrf.mxu0
      %v4493 = vadd.f32 %v1976, %v4492
      %4494 = vmatprep.mubr.f32.mxu0 0.0
      %4495 = vmatmul.mubr.f32.gmra.mxu0 %v4194
      %v4496 = vpop.f32.mrf.mxu0
      %v4497 = vadd.f32 %v1980, %v4496
      %v4498 = vpop.f32.mrf.mxu0
      %v4499 = vadd.f32 %v1981, %v4498
      %4500 = vmatprep.mubr.f32.mxu0 0.0
      %4501 = vmatmul.mubr.f32.gmra.mxu0 %v4196
      %v4502 = vpop.f32.mrf.mxu0
      %v4503 = vadd.f32 %v1985, %v4502
      %v4504 = vpop.f32.mrf.mxu0
      %v4505 = vadd.f32 %v1986, %v4504
      %4506 = vmatprep.mubr.f32.mxu0 0.0
      %4507 = vmatmul.mubr.f32.gmra.mxu0 %v4198
      %v4508 = vpop.f32.mrf.mxu0
      %v4509 = vadd.f32 %v1990, %v4508
      %v4510 = vpop.f32.mrf.mxu0
      %v4511 = vadd.f32 %v1991, %v4510
      %4512 = vmatprep.mubr.f32.mxu0 0.0
      %4513 = vmatmul.mubr.f32.gmra.mxu0 %v4200
      %v4514 = vpop.f32.mrf.mxu0
      %v4515 = vadd.f32 %v1995, %v4514
      %v4516 = vpop.f32.mrf.mxu0
      %v4517 = vadd.f32 %v1996, %v4516
      %4518 = vmatprep.mubr.f32.mxu0 0.0
      %4519 = vmatmul.mubr.f32.gmra.mxu0 %v4202
      %v4520 = vpop.f32.mrf.mxu0
      %v4521 = vadd.f32 %v2000, %v4520
      %v4522 = vpop.f32.mrf.mxu0
      %v4523 = vadd.f32 %v2001, %v4522
      %4524 = vdwg.mxu0
      %4525 = vmatprep.subr.mxu0 0.0
      %4526 = vmatpush1.xpose.msra.mxu0 %v4298
      %4527 = vmatprep.subr.mxu0 0.0
      %4528 = vmatpush1.xpose.msra.mxu0 %v4296
      %4529 = vmatprep.subr.mxu0 0.0
      %4530 = vmatpush1.xpose.msra.mxu0 %v4294
      %4531 = vmatprep.subr.mxu0 0.0
      %4532 = vmatpush1.xpose.msra.mxu0 %v4292
      %4533 = vmatprep.subr.mxu0 0.0
      %4534 = vmatpush1.xpose.msra.mxu0 %v4290
      %4535 = vmatprep.subr.mxu0 0.0
      %4536 = vmatpush1.xpose.msra.mxu0 %v4288
      %4537 = vmatprep.subr.mxu0 0.0
      %4538 = vmatpush1.xpose.msra.mxu0 %v4286
      %4539 = vmatprep.subr.mxu0 0.0
      %4540 = vmatpush1.xpose.msra.mxu0 %v4284
      %4541 = vmatprep.subr.mxu0 0.0
      %4542 = vmatpush1.xpose.msra.mxu0 %v4282
      %4543 = vmatprep.subr.mxu0 0.0
      %4544 = vmatpush1.xpose.msra.mxu0 %v4280
      %4545 = vmatprep.subr.mxu0 0.0
      %4546 = vmatpush1.xpose.msra.mxu0 %v4278
      %4547 = vmatprep.subr.mxu0 0.0
      %4548 = vmatpush1.xpose.msra.mxu0 %v4276
      %4549 = vmatprep.subr.mxu0 0.0
      %4550 = vmatpush1.xpose.msra.mxu0 %v4274
      %4551 = vmatprep.subr.mxu0 0.0
      %4552 = vmatpush1.xpose.msra.mxu0 %v4272
      %4553 = vmatprep.subr.mxu0 0.0
      %4554 = vmatpush1.xpose.msra.mxu0 %v4270
      %4555 = vmatprep.subr.mxu0 0.0
      %4556 = vmatpush1.xpose.msra.mxu0 %v4268
      %4557 = vmatprep.subr.mxu0 0.0
      %4558 = vmatpush2.xpose.msra.mxu0 %v4330
      %4559 = vmatprep.subr.mxu0 0.0
      %4560 = vmatpush2.xpose.msra.mxu0 %v4328
      %4561 = vmatprep.subr.mxu0 0.0
      %4562 = vmatpush2.xpose.msra.mxu0 %v4326
      %4563 = vmatprep.subr.mxu0 0.0
      %4564 = vmatpush2.xpose.msra.mxu0 %v4324
      %4565 = vmatprep.subr.mxu0 0.0
      %4566 = vmatpush2.xpose.msra.mxu0 %v4322
      %4567 = vmatprep.subr.mxu0 0.0
      %4568 = vmatpush2.xpose.msra.mxu0 %v4320
      %4569 = vmatprep.subr.mxu0 0.0
      %4570 = vmatpush2.xpose.msra.mxu0 %v4318
      %4571 = vmatprep.subr.mxu0 0.0
      %4572 = vmatpush2.xpose.msra.mxu0 %v4316
      %4573 = vmatprep.subr.mxu0 0.0
      %4574 = vmatpush2.xpose.msra.mxu0 %v4314
      %4575 = vmatprep.subr.mxu0 0.0
      %4576 = vmatpush2.xpose.msra.mxu0 %v4312
      %4577 = vmatprep.subr.mxu0 0.0
      %4578 = vmatpush2.xpose.msra.mxu0 %v4310
      %4579 = vmatprep.subr.mxu0 0.0
      %4580 = vmatpush2.xpose.msra.mxu0 %v4308
      %4581 = vmatprep.subr.mxu0 0.0
      %4582 = vmatpush2.xpose.msra.mxu0 %v4306
      %4583 = vmatprep.subr.mxu0 0.0
      %4584 = vmatpush2.xpose.msra.mxu0 %v4304
      %4585 = vmatprep.subr.mxu0 0.0
      %4586 = vmatpush2.xpose.msra.mxu0 %v4302
      %4587 = vmatprep.subr.mxu0 0.0
      %4588 = vmatpush2.xpose.msra.mxu0 %v4300
      %4589 = vmatprep.mubr.f32.mxu0 0.0
      %4590 = vmatmul.mubr.f32.gmra.mxu0 %v4172
      %v4591 = vpop.f32.mrf.mxu0
      %v4592 = vadd.f32 %v1927, %v4591
      %v4593 = vpop.f32.mrf.mxu0
      %v4594 = vadd.f32 %v1928, %v4593
      %4595 = vmatprep.mubr.f32.mxu0 0.0
      %4596 = vmatmul.mubr.f32.gmra.mxu0 %v4174
      %v4597 = vpop.f32.mrf.mxu0
      %v4598 = vadd.f32 %v1932, %v4597
      %v4599 = vpop.f32.mrf.mxu0
      %v4600 = vadd.f32 %v1933, %v4599
      %4601 = vmatprep.mubr.f32.mxu0 0.0
      %4602 = vmatmul.mubr.f32.gmra.mxu0 %v4176
      %v4603 = vpop.f32.mrf.mxu0
      %v4604 = vadd.f32 %v1937, %v4603
      %v4605 = vpop.f32.mrf.mxu0
      %v4606 = vadd.f32 %v1938, %v4605
      %4607 = vmatprep.mubr.f32.mxu0 0.0
      %4608 = vmatmul.mubr.f32.gmra.mxu0 %v4178
      %v4609 = vpop.f32.mrf.mxu0
      %v4610 = vadd.f32 %v1942, %v4609
      %v4611 = vpop.f32.mrf.mxu0
      %v4612 = vadd.f32 %v1943, %v4611
      %4613 = vmatprep.mubr.f32.mxu0 0.0
      %4614 = vmatmul.mubr.f32.gmra.mxu0 %v4180
      %v4615 = vpop.f32.mrf.mxu0
      %v4616 = vadd.f32 %v1947, %v4615
      %v4617 = vpop.f32.mrf.mxu0
      %v4618 = vadd.f32 %v1948, %v4617
      %4619 = vmatprep.mubr.f32.mxu0 0.0
      %4620 = vmatmul.mubr.f32.gmra.mxu0 %v4182
      %v4621 = vpop.f32.mrf.mxu0
      %v4622 = vadd.f32 %v1952, %v4621
      %v4623 = vpop.f32.mrf.mxu0
      %v4624 = vadd.f32 %v1953, %v4623
      %4625 = vmatprep.mubr.f32.mxu0 0.0
      %4626 = vmatmul.mubr.f32.gmra.mxu0 %v4184
      %v4627 = vpop.f32.mrf.mxu0
      %v4628 = vadd.f32 %v1957, %v4627
      %v4629 = vpop.f32.mrf.mxu0
      %v4630 = vadd.f32 %v1958, %v4629
      %4631 = vmatprep.mubr.f32.mxu0 0.0
      %4632 = vmatmul.mubr.f32.gmra.mxu0 %v4186
      %v4633 = vpop.f32.mrf.mxu0
      %v4634 = vadd.f32 %v1962, %v4633
      %v4635 = vpop.f32.mrf.mxu0
      %v4636 = vadd.f32 %v1963, %v4635
      %4637 = vmatprep.mubr.f32.mxu0 0.0
      %4638 = vmatmul.mubr.f32.gmra.mxu0 %v4188
      %v4639 = vpop.f32.mrf.mxu0
      %v4640 = vadd.f32 %v1967, %v4639
      %v4641 = vpop.f32.mrf.mxu0
      %v4642 = vadd.f32 %v1968, %v4641
      %4643 = vmatprep.mubr.f32.mxu0 0.0
      %4644 = vmatmul.mubr.f32.gmra.mxu0 %v4190
      %v4645 = vpop.f32.mrf.mxu0
      %v4646 = vadd.f32 %v1972, %v4645
      %v4647 = vpop.f32.mrf.mxu0
      %v4648 = vadd.f32 %v1973, %v4647
      %4649 = vmatprep.mubr.f32.mxu0 0.0
      %4650 = vmatmul.mubr.f32.gmra.mxu0 %v4192
      %v4651 = vpop.f32.mrf.mxu0
      %v4652 = vadd.f32 %v1977, %v4651
      %v4653 = vpop.f32.mrf.mxu0
      %v4654 = vadd.f32 %v1978, %v4653
      %4655 = vmatprep.mubr.f32.mxu0 0.0
      %4656 = vmatmul.mubr.f32.gmra.mxu0 %v4194
      %v4657 = vpop.f32.mrf.mxu0
      %v4658 = vadd.f32 %v1982, %v4657
      %v4659 = vpop.f32.mrf.mxu0
      %v4660 = vadd.f32 %v1983, %v4659
      %4661 = vmatprep.mubr.f32.mxu0 0.0
      %4662 = vmatmul.mubr.f32.gmra.mxu0 %v4196
      %v4663 = vpop.f32.mrf.mxu0
      %v4664 = vadd.f32 %v1987, %v4663
      %v4665 = vpop.f32.mrf.mxu0
      %v4666 = vadd.f32 %v1988, %v4665
      %4667 = vmatprep.mubr.f32.mxu0 0.0
      %4668 = vmatmul.mubr.f32.gmra.mxu0 %v4198
      %v4669 = vpop.f32.mrf.mxu0
      %v4670 = vadd.f32 %v1992, %v4669
      %v4671 = vpop.f32.mrf.mxu0
      %v4672 = vadd.f32 %v1993, %v4671
      %4673 = vmatprep.mubr.f32.mxu0 0.0
      %4674 = vmatmul.mubr.f32.gmra.mxu0 %v4200
      %v4675 = vpop.f32.mrf.mxu0
      %v4676 = vadd.f32 %v1997, %v4675
      %v4677 = vpop.f32.mrf.mxu0
      %v4678 = vadd.f32 %v1998, %v4677
      %4679 = vmatprep.mubr.f32.mxu0 0.0
      %4680 = vmatmul.mubr.f32.gmra.mxu0 %v4202
      %v4681 = vpop.f32.mrf.mxu0
      %v4682 = vadd.f32 %v2002, %v4681
      %v4683 = vpop.f32.mrf.mxu0
      %v4684 = vadd.f32 %v2003, %v4683
      %4685 = vdwg.mxu0
      %4686 = vmatprep.subr.mxu0 0.0
      %4687 = vmatpush1.xpose.msra.mxu0 %v4362
      %4688 = vmatprep.subr.mxu0 0.0
      %4689 = vmatpush1.xpose.msra.mxu0 %v4360
      %4690 = vmatprep.subr.mxu0 0.0
      %4691 = vmatpush1.xpose.msra.mxu0 %v4358
      %4692 = vmatprep.subr.mxu0 0.0
      %4693 = vmatpush1.xpose.msra.mxu0 %v4356
      %4694 = vmatprep.subr.mxu0 0.0
      %4695 = vmatpush1.xpose.msra.mxu0 %v4354
      %4696 = vmatprep.subr.mxu0 0.0
      %4697 = vmatpush1.xpose.msra.mxu0 %v4352
      %4698 = vmatprep.subr.mxu0 0.0
      %4699 = vmatpush1.xpose.msra.mxu0 %v4350
      %4700 = vmatprep.subr.mxu0 0.0
      %4701 = vmatpush1.xpose.msra.mxu0 %v4348
      %4702 = vmatprep.subr.mxu0 0.0
      %4703 = vmatpush1.xpose.msra.mxu0 %v4346
      %4704 = vmatprep.subr.mxu0 0.0
      %4705 = vmatpush1.xpose.msra.mxu0 %v4344
      %4706 = vmatprep.subr.mxu0 0.0
      %4707 = vmatpush1.xpose.msra.mxu0 %v4342
      %4708 = vmatprep.subr.mxu0 0.0
      %4709 = vmatpush1.xpose.msra.mxu0 %v4340
      %4710 = vmatprep.subr.mxu0 0.0
      %4711 = vmatpush1.xpose.msra.mxu0 %v4338
      %4712 = vmatprep.subr.mxu0 0.0
      %4713 = vmatpush1.xpose.msra.mxu0 %v4336
      %4714 = vmatprep.subr.mxu0 0.0
      %4715 = vmatpush1.xpose.msra.mxu0 %v4334
      %4716 = vmatprep.subr.mxu0 0.0
      %4717 = vmatpush1.xpose.msra.mxu0 %v4332
      %4718 = vmatprep.subr.mxu0 0.0
      %4719 = vmatpush2.xpose.msra.mxu0 0.0
      %4720 = vmatprep.subr.mxu0 0.0
      %4721 = vmatpush2.xpose.msra.mxu0 0.0
      %4722 = vmatprep.subr.mxu0 0.0
      %4723 = vmatpush2.xpose.msra.mxu0 0.0
      %4724 = vmatprep.subr.mxu0 0.0
      %4725 = vmatpush2.xpose.msra.mxu0 0.0
      %4726 = vmatprep.subr.mxu0 0.0
      %4727 = vmatpush2.xpose.msra.mxu0 0.0
      %4728 = vmatprep.subr.mxu0 0.0
      %4729 = vmatpush2.xpose.msra.mxu0 0.0
      %4730 = vmatprep.subr.mxu0 0.0
      %4731 = vmatpush2.xpose.msra.mxu0 0.0
      %4732 = vmatprep.subr.mxu0 0.0
      %4733 = vmatpush2.xpose.msra.mxu0 0.0
      %4734 = vmatprep.subr.mxu0 0.0
      %4735 = vmatpush2.xpose.msra.mxu0 0.0
      %4736 = vmatprep.subr.mxu0 0.0
      %4737 = vmatpush2.xpose.msra.mxu0 0.0
      %4738 = vmatprep.subr.mxu0 0.0
      %4739 = vmatpush2.xpose.msra.mxu0 0.0
      %4740 = vmatprep.subr.mxu0 0.0
      %4741 = vmatpush2.xpose.msra.mxu0 0.0
      %4742 = vmatprep.subr.mxu0 0.0
      %4743 = vmatpush2.xpose.msra.mxu0 0.0
      %4744 = vmatprep.subr.mxu0 0.0
      %4745 = vmatpush2.xpose.msra.mxu0 0.0
      %4746 = vmatprep.subr.mxu0 0.0
      %4747 = vmatpush2.xpose.msra.mxu0 0.0
      %4748 = vmatprep.subr.mxu0 0.0
      %4749 = vmatpush2.xpose.msra.mxu0 0.0
      %4750 = vmatprep.mubr.f32.mxu0 0.0
      %4751 = vmatmul.mubr.f32.gmra.mxu0 %v4172
      %v4752 = vpop.f32.mrf.mxu0
      %v4753 = vadd.f32 %v1929, %v4752
      %v4754 = vpop.f32.mrf.mxu0
      %4755 = vmatprep.mubr.f32.mxu0 0.0
      %4756 = vmatmul.mubr.f32.gmra.mxu0 %v4174
      %v4757 = vpop.f32.mrf.mxu0
      %v4758 = vadd.f32 %v1934, %v4757
      %v4759 = vpop.f32.mrf.mxu0
      %4760 = vmatprep.mubr.f32.mxu0 0.0
      %4761 = vmatmul.mubr.f32.gmra.mxu0 %v4176
      %v4762 = vpop.f32.mrf.mxu0
      %v4763 = vadd.f32 %v1939, %v4762
      %v4764 = vpop.f32.mrf.mxu0
      %4765 = vmatprep.mubr.f32.mxu0 0.0
      %4766 = vmatmul.mubr.f32.gmra.mxu0 %v4178
      %v4767 = vpop.f32.mrf.mxu0
      %v4768 = vadd.f32 %v1944, %v4767
      %v4769 = vpop.f32.mrf.mxu0
      %4770 = vmatprep.mubr.f32.mxu0 0.0
      %4771 = vmatmul.mubr.f32.gmra.mxu0 %v4180
      %v4772 = vpop.f32.mrf.mxu0
      %v4773 = vadd.f32 %v1949, %v4772
      %v4774 = vpop.f32.mrf.mxu0
      %4775 = vmatprep.mubr.f32.mxu0 0.0
      %4776 = vmatmul.mubr.f32.gmra.mxu0 %v4182
      %v4777 = vpop.f32.mrf.mxu0
      %v4778 = vadd.f32 %v1954, %v4777
      %v4779 = vpop.f32.mrf.mxu0
      %4780 = vmatprep.mubr.f32.mxu0 0.0
      %4781 = vmatmul.mubr.f32.gmra.mxu0 %v4184
      %v4782 = vpop.f32.mrf.mxu0
      %v4783 = vadd.f32 %v1959, %v4782
      %v4784 = vpop.f32.mrf.mxu0
      %4785 = vmatprep.mubr.f32.mxu0 0.0
      %4786 = vmatmul.mubr.f32.gmra.mxu0 %v4186
      %v4787 = vpop.f32.mrf.mxu0
      %v4788 = vadd.f32 %v1964, %v4787
      %v4789 = vpop.f32.mrf.mxu0
      %4790 = vmatprep.mubr.f32.mxu0 0.0
      %4791 = vmatmul.mubr.f32.gmra.mxu0 %v4188
      %v4792 = vpop.f32.mrf.mxu0
      %v4793 = vadd.f32 %v1969, %v4792
      %v4794 = vpop.f32.mrf.mxu0
      %4795 = vmatprep.mubr.f32.mxu0 0.0
      %4796 = vmatmul.mubr.f32.gmra.mxu0 %v4190
      %v4797 = vpop.f32.mrf.mxu0
      %v4798 = vadd.f32 %v1974, %v4797
      %v4799 = vpop.f32.mrf.mxu0
      %4800 = vmatprep.mubr.f32.mxu0 0.0
      %4801 = vmatmul.mubr.f32.gmra.mxu0 %v4192
      %v4802 = vpop.f32.mrf.mxu0
      %v4803 = vadd.f32 %v1979, %v4802
      %v4804 = vpop.f32.mrf.mxu0
      %4805 = vmatprep.mubr.f32.mxu0 0.0
      %4806 = vmatmul.mubr.f32.gmra.mxu0 %v4194
      %v4807 = vpop.f32.mrf.mxu0
      %v4808 = vadd.f32 %v1984, %v4807
      %v4809 = vpop.f32.mrf.mxu0
      %4810 = vmatprep.mubr.f32.mxu0 0.0
      %4811 = vmatmul.mubr.f32.gmra.mxu0 %v4196
      %v4812 = vpop.f32.mrf.mxu0
      %v4813 = vadd.f32 %v1989, %v4812
      %v4814 = vpop.f32.mrf.mxu0
      %4815 = vmatprep.mubr.f32.mxu0 0.0
      %4816 = vmatmul.mubr.f32.gmra.mxu0 %v4198
      %v4817 = vpop.f32.mrf.mxu0
      %v4818 = vadd.f32 %v1994, %v4817
      %v4819 = vpop.f32.mrf.mxu0
      %4820 = vmatprep.mubr.f32.mxu0 0.0
      %4821 = vmatmul.mubr.f32.gmra.mxu0 %v4200
      %v4822 = vpop.f32.mrf.mxu0
      %v4823 = vadd.f32 %v1999, %v4822
      %v4824 = vpop.f32.mrf.mxu0
      %4825 = vmatprep.mubr.f32.mxu0 0.0
      %4826 = vmatmul.mubr.f32.gmra.mxu0 %v4202
      %v4827 = vpop.f32.mrf.mxu0
      %v4828 = vadd.f32 %v2004, %v4827
      %v4829 = vpop.f32.mrf.mxu0
      %4830 = vdwg.mxu0
      %v4831 = vmax.f32 %v4431, %v4433
      %v4832 = vmax.f32 %v4831, %v4592
      %v4833 = vmax.f32 %v4832, %v4594
      %v4834 = vmax.f32 %v4833, %v4753
      %4835 = vmax.xlane.f32.xlu0 %v4834
      %v4836 = vpop.xlane.xlu0 %4835
      %v4837 = vmax.f32 %v4437, %v4439
      %v4838 = vmax.f32 %v4837, %v4598
      %v4839 = vmax.f32 %v4838, %v4600
      %v4840 = vmax.f32 %v4839, %v4758
      %4841 = vmax.xlane.f32.xlu0 %v4840
      %v4842 = vpop.xlane.xlu0 %4841
      %v4843 = vmax.f32 %v4443, %v4445
      %v4844 = vmax.f32 %v4843, %v4604
      %v4845 = vmax.f32 %v4844, %v4606
      %v4846 = vmax.f32 %v4845, %v4763
      %4847 = vmax.xlane.f32.xlu0 %v4846
      %v4848 = vpop.xlane.xlu0 %4847
      %v4849 = vmax.f32 %v4449, %v4451
      %v4850 = vmax.f32 %v4849, %v4610
      %v4851 = vmax.f32 %v4850, %v4612
      %v4852 = vmax.f32 %v4851, %v4768
      %4853 = vmax.xlane.f32.xlu0 %v4852
      %v4854 = vpop.xlane.xlu0 %4853
      %v4855 = vmax.f32 %v4455, %v4457
      %v4856 = vmax.f32 %v4855, %v4616
      %v4857 = vmax.f32 %v4856, %v4618
      %v4858 = vmax.f32 %v4857, %v4773
      %4859 = vmax.xlane.f32.xlu0 %v4858
      %v4860 = vpop.xlane.xlu0 %4859
      %v4861 = vmax.f32 %v4461, %v4463
      %v4862 = vmax.f32 %v4861, %v4622
      %v4863 = vmax.f32 %v4862, %v4624
      %v4864 = vmax.f32 %v4863, %v4778
      %4865 = vmax.xlane.f32.xlu0 %v4864
      %v4866 = vpop.xlane.xlu0 %4865
      %v4867 = vmax.f32 %v4467, %v4469
      %v4868 = vmax.f32 %v4867, %v4628
      %v4869 = vmax.f32 %v4868, %v4630
      %v4870 = vmax.f32 %v4869, %v4783
      %4871 = vmax.xlane.f32.xlu0 %v4870
      %v4872 = vpop.xlane.xlu0 %4871
      %v4873 = vmax.f32 %v4473, %v4475
      %v4874 = vmax.f32 %v4873, %v4634
      %v4875 = vmax.f32 %v4874, %v4636
      %v4876 = vmax.f32 %v4875, %v4788
      %4877 = vmax.xlane.f32.xlu0 %v4876
      %v4878 = vpop.xlane.xlu0 %4877
      %v4879 = vmax.f32 %v4479, %v4481
      %v4880 = vmax.f32 %v4879, %v4640
      %v4881 = vmax.f32 %v4880, %v4642
      %v4882 = vmax.f32 %v4881, %v4793
      %4883 = vmax.xlane.f32.xlu0 %v4882
      %v4884 = vpop.xlane.xlu0 %4883
      %v4885 = vmax.f32 %v4485, %v4487
      %v4886 = vmax.f32 %v4885, %v4646
      %v4887 = vmax.f32 %v4886, %v4648
      %v4888 = vmax.f32 %v4887, %v4798
      %4889 = vmax.xlane.f32.xlu0 %v4888
      %v4890 = vpop.xlane.xlu0 %4889
      %v4891 = vmax.f32 %v4491, %v4493
      %v4892 = vmax.f32 %v4891, %v4652
      %v4893 = vmax.f32 %v4892, %v4654
      %v4894 = vmax.f32 %v4893, %v4803
      %4895 = vmax.xlane.f32.xlu0 %v4894
      %v4896 = vpop.xlane.xlu0 %4895
      %v4897 = vmax.f32 %v4497, %v4499
      %v4898 = vmax.f32 %v4897, %v4658
      %v4899 = vmax.f32 %v4898, %v4660
      %v4900 = vmax.f32 %v4899, %v4808
      %4901 = vmax.xlane.f32.xlu0 %v4900
      %v4902 = vpop.xlane.xlu0 %4901
      %v4903 = vmax.f32 %v4503, %v4505
      %v4904 = vmax.f32 %v4903, %v4664
      %v4905 = vmax.f32 %v4904, %v4666
      %v4906 = vmax.f32 %v4905, %v4813
      %4907 = vmax.xlane.f32.xlu0 %v4906
      %v4908 = vpop.xlane.xlu0 %4907
      %v4909 = vmax.f32 %v4509, %v4511
      %v4910 = vmax.f32 %v4909, %v4670
      %v4911 = vmax.f32 %v4910, %v4672
      %v4912 = vmax.f32 %v4911, %v4818
      %4913 = vmax.xlane.f32.xlu0 %v4912
      %v4914 = vpop.xlane.xlu0 %4913
      %v4915 = vmax.f32 %v4515, %v4517
      %v4916 = vmax.f32 %v4915, %v4676
      %v4917 = vmax.f32 %v4916, %v4678
      %v4918 = vmax.f32 %v4917, %v4823
      %4919 = vmax.xlane.f32.xlu0 %v4918
      %v4920 = vpop.xlane.xlu0 %4919
      %v4921 = vmax.f32 %v4521, %v4523
      %v4922 = vmax.f32 %v4921, %v4682
      %v4923 = vmax.f32 %v4922, %v4684
      %v4924 = vmax.f32 %v4923, %v4828
      %4925 = vmax.xlane.f32.xlu0 %v4924
      %v4926 = vpop.xlane.xlu0 %4925
      %v4927 = vsub.f32 %v4431, %v4836
      %v4928 = vsub.f32 %v4433, %v4836
      %v4929 = vsub.f32 %v4592, %v4836
      %v4930 = vsub.f32 %v4594, %v4836
      %v4931 = vsub.f32 %v4753, %v4836
      %v4932 = vsub.f32 %v4437, %v4842
      %v4933 = vsub.f32 %v4439, %v4842
      %v4934 = vsub.f32 %v4598, %v4842
      %v4935 = vsub.f32 %v4600, %v4842
      %v4936 = vsub.f32 %v4758, %v4842
      %v4937 = vsub.f32 %v4443, %v4848
      %v4938 = vsub.f32 %v4445, %v4848
      %v4939 = vsub.f32 %v4604, %v4848
      %v4940 = vsub.f32 %v4606, %v4848
      %v4941 = vsub.f32 %v4763, %v4848
      %v4942 = vsub.f32 %v4449, %v4854
      %v4943 = vsub.f32 %v4451, %v4854
      %v4944 = vsub.f32 %v4610, %v4854
      %v4945 = vsub.f32 %v4612, %v4854
      %v4946 = vsub.f32 %v4768, %v4854
      %v4947 = vsub.f32 %v4455, %v4860
      %v4948 = vsub.f32 %v4457, %v4860
      %v4949 = vsub.f32 %v4616, %v4860
      %v4950 = vsub.f32 %v4618, %v4860
      %v4951 = vsub.f32 %v4773, %v4860
      %v4952 = vsub.f32 %v4461, %v4866
      %v4953 = vsub.f32 %v4463, %v4866
      %v4954 = vsub.f32 %v4622, %v4866
      %v4955 = vsub.f32 %v4624, %v4866
      %v4956 = vsub.f32 %v4778, %v4866
      %v4957 = vsub.f32 %v4467, %v4872
      %v4958 = vsub.f32 %v4469, %v4872
      %v4959 = vsub.f32 %v4628, %v4872
      %v4960 = vsub.f32 %v4630, %v4872
      %v4961 = vsub.f32 %v4783, %v4872
      %v4962 = vsub.f32 %v4473, %v4878
      %v4963 = vsub.f32 %v4475, %v4878
      %v4964 = vsub.f32 %v4634, %v4878
      %v4965 = vsub.f32 %v4636, %v4878
      %v4966 = vsub.f32 %v4788, %v4878
      %v4967 = vsub.f32 %v4479, %v4884
      %v4968 = vsub.f32 %v4481, %v4884
      %v4969 = vsub.f32 %v4640, %v4884
      %v4970 = vsub.f32 %v4642, %v4884
      %v4971 = vsub.f32 %v4793, %v4884
      %v4972 = vsub.f32 %v4485, %v4890
      %v4973 = vsub.f32 %v4487, %v4890
      %v4974 = vsub.f32 %v4646, %v4890
      %v4975 = vsub.f32 %v4648, %v4890
      %v4976 = vsub.f32 %v4798, %v4890
      %v4977 = vsub.f32 %v4491, %v4896
      %v4978 = vsub.f32 %v4493, %v4896
      %v4979 = vsub.f32 %v4652, %v4896
      %v4980 = vsub.f32 %v4654, %v4896
      %v4981 = vsub.f32 %v4803, %v4896
      %v4982 = vsub.f32 %v4497, %v4902
      %v4983 = vsub.f32 %v4499, %v4902
      %v4984 = vsub.f32 %v4658, %v4902
      %v4985 = vsub.f32 %v4660, %v4902
      %v4986 = vsub.f32 %v4808, %v4902
      %v4987 = vsub.f32 %v4503, %v4908
      %v4988 = vsub.f32 %v4505, %v4908
      %v4989 = vsub.f32 %v4664, %v4908
      %v4990 = vsub.f32 %v4666, %v4908
      %v4991 = vsub.f32 %v4813, %v4908
      %v4992 = vsub.f32 %v4509, %v4914
      %v4993 = vsub.f32 %v4511, %v4914
      %v4994 = vsub.f32 %v4670, %v4914
      %v4995 = vsub.f32 %v4672, %v4914
      %v4996 = vsub.f32 %v4818, %v4914
      %v4997 = vsub.f32 %v4515, %v4920
      %v4998 = vsub.f32 %v4517, %v4920
      %v4999 = vsub.f32 %v4676, %v4920
      %v5000 = vsub.f32 %v4678, %v4920
      %v5001 = vsub.f32 %v4823, %v4920
      %v5002 = vsub.f32 %v4521, %v4926
      %v5003 = vsub.f32 %v4523, %v4926
      %v5004 = vsub.f32 %v4682, %v4926
      %v5005 = vsub.f32 %v4684, %v4926
      %v5006 = vsub.f32 %v4828, %v4926
      %v5007 = vmul.f32 %v4927, 1.442695
      %v5008 = vpow.pop %v5007
      %v5009 = vmul.f32 %v4928, 1.442695
      %v5010 = vpow.pop %v5009
      %v5011 = vmul.f32 %v4929, 1.442695
      %v5012 = vpow.pop %v5011
      %v5013 = vmul.f32 %v4930, 1.442695
      %v5014 = vpow.pop %v5013
      %v5015 = vmul.f32 %v4931, 1.442695
      %v5016 = vpow.pop %v5015
      %v5017 = vmul.f32 %v4932, 1.442695
      %v5018 = vpow.pop %v5017
      %v5019 = vmul.f32 %v4933, 1.442695
      %v5020 = vpow.pop %v5019
      %v5021 = vmul.f32 %v4934, 1.442695
      %v5022 = vpow.pop %v5021
      %v5023 = vmul.f32 %v4935, 1.442695
      %v5024 = vpow.pop %v5023
      %v5025 = vmul.f32 %v4936, 1.442695
      %v5026 = vpow.pop %v5025
      %v5027 = vmul.f32 %v4937, 1.442695
      %v5028 = vpow.pop %v5027
      %v5029 = vmul.f32 %v4938, 1.442695
      %v5030 = vpow.pop %v5029
      %v5031 = vmul.f32 %v4939, 1.442695
      %v5032 = vpow.pop %v5031
      %v5033 = vmul.f32 %v4940, 1.442695
      %v5034 = vpow.pop %v5033
      %v5035 = vmul.f32 %v4941, 1.442695
      %v5036 = vpow.pop %v5035
      %v5037 = vmul.f32 %v4942, 1.442695
      %v5038 = vpow.pop %v5037
      %v5039 = vmul.f32 %v4943, 1.442695
      %v5040 = vpow.pop %v5039
      %v5041 = vmul.f32 %v4944, 1.442695
      %v5042 = vpow.pop %v5041
      %v5043 = vmul.f32 %v4945, 1.442695
      %v5044 = vpow.pop %v5043
      %v5045 = vmul.f32 %v4946, 1.442695
      %v5046 = vpow.pop %v5045
      %v5047 = vmul.f32 %v4947, 1.442695
      %v5048 = vpow.pop %v5047
      %v5049 = vmul.f32 %v4948, 1.442695
      %v5050 = vpow.pop %v5049
      %v5051 = vmul.f32 %v4949, 1.442695
      %v5052 = vpow.pop %v5051
      %v5053 = vmul.f32 %v4950, 1.442695
      %v5054 = vpow.pop %v5053
      %v5055 = vmul.f32 %v4951, 1.442695
      %v5056 = vpow.pop %v5055
      %v5057 = vmul.f32 %v4952, 1.442695
      %v5058 = vpow.pop %v5057
      %v5059 = vmul.f32 %v4953, 1.442695
      %v5060 = vpow.pop %v5059
      %v5061 = vmul.f32 %v4954, 1.442695
      %v5062 = vpow.pop %v5061
      %v5063 = vmul.f32 %v4955, 1.442695
      %v5064 = vpow.pop %v5063
      %v5065 = vmul.f32 %v4956, 1.442695
      %v5066 = vpow.pop %v5065
      %v5067 = vmul.f32 %v4957, 1.442695
      %v5068 = vpow.pop %v5067
      %v5069 = vmul.f32 %v4958, 1.442695
      %v5070 = vpow.pop %v5069
      %v5071 = vmul.f32 %v4959, 1.442695
      %v5072 = vpow.pop %v5071
      %v5073 = vmul.f32 %v4960, 1.442695
      %v5074 = vpow.pop %v5073
      %v5075 = vmul.f32 %v4961, 1.442695
      %v5076 = vpow.pop %v5075
      %v5077 = vmul.f32 %v4962, 1.442695
      %v5078 = vpow.pop %v5077
      %v5079 = vmul.f32 %v4963, 1.442695
      %v5080 = vpow.pop %v5079
      %v5081 = vmul.f32 %v4964, 1.442695
      %v5082 = vpow.pop %v5081
      %v5083 = vmul.f32 %v4965, 1.442695
      %v5084 = vpow.pop %v5083
      %v5085 = vmul.f32 %v4966, 1.442695
      %v5086 = vpow.pop %v5085
      %v5087 = vmul.f32 %v4967, 1.442695
      %v5088 = vpow.pop %v5087
      %v5089 = vmul.f32 %v4968, 1.442695
      %v5090 = vpow.pop %v5089
      %v5091 = vmul.f32 %v4969, 1.442695
      %v5092 = vpow.pop %v5091
      %v5093 = vmul.f32 %v4970, 1.442695
      %v5094 = vpow.pop %v5093
      %v5095 = vmul.f32 %v4971, 1.442695
      %v5096 = vpow.pop %v5095
      %v5097 = vmul.f32 %v4972, 1.442695
      %v5098 = vpow.pop %v5097
      %v5099 = vmul.f32 %v4973, 1.442695
      %v5100 = vpow.pop %v5099
      %v5101 = vmul.f32 %v4974, 1.442695
      %v5102 = vpow.pop %v5101
      %v5103 = vmul.f32 %v4975, 1.442695
      %v5104 = vpow.pop %v5103
      %v5105 = vmul.f32 %v4976, 1.442695
      %v5106 = vpow.pop %v5105
      %v5107 = vmul.f32 %v4977, 1.442695
      %v5108 = vpow.pop %v5107
      %v5109 = vmul.f32 %v4978, 1.442695
      %v5110 = vpow.pop %v5109
      %v5111 = vmul.f32 %v4979, 1.442695
      %v5112 = vpow.pop %v5111
      %v5113 = vmul.f32 %v4980, 1.442695
      %v5114 = vpow.pop %v5113
      %v5115 = vmul.f32 %v4981, 1.442695
      %v5116 = vpow.pop %v5115
      %v5117 = vmul.f32 %v4982, 1.442695
      %v5118 = vpow.pop %v5117
      %v5119 = vmul.f32 %v4983, 1.442695
      %v5120 = vpow.pop %v5119
      %v5121 = vmul.f32 %v4984, 1.442695
      %v5122 = vpow.pop %v5121
      %v5123 = vmul.f32 %v4985, 1.442695
      %v5124 = vpow.pop %v5123
      %v5125 = vmul.f32 %v4986, 1.442695
      %v5126 = vpow.pop %v5125
      %v5127 = vmul.f32 %v4987, 1.442695
      %v5128 = vpow.pop %v5127
      %v5129 = vmul.f32 %v4988, 1.442695
      %v5130 = vpow.pop %v5129
      %v5131 = vmul.f32 %v4989, 1.442695
      %v5132 = vpow.pop %v5131
      %v5133 = vmul.f32 %v4990, 1.442695
      %v5134 = vpow.pop %v5133
      %v5135 = vmul.f32 %v4991, 1.442695
      %v5136 = vpow.pop %v5135
      %v5137 = vmul.f32 %v4992, 1.442695
      %v5138 = vpow.pop %v5137
      %v5139 = vmul.f32 %v4993, 1.442695
      %v5140 = vpow.pop %v5139
      %v5141 = vmul.f32 %v4994, 1.442695
      %v5142 = vpow.pop %v5141
      %v5143 = vmul.f32 %v4995, 1.442695
      %v5144 = vpow.pop %v5143
      %v5145 = vmul.f32 %v4996, 1.442695
      %v5146 = vpow.pop %v5145
      %v5147 = vmul.f32 %v4997, 1.442695
      %v5148 = vpow.pop %v5147
      %v5149 = vmul.f32 %v4998, 1.442695
      %v5150 = vpow.pop %v5149
      %v5151 = vmul.f32 %v4999, 1.442695
      %v5152 = vpow.pop %v5151
      %v5153 = vmul.f32 %v5000, 1.442695
      %v5154 = vpow.pop %v5153
      %v5155 = vmul.f32 %v5001, 1.442695
      %v5156 = vpow.pop %v5155
      %v5157 = vmul.f32 %v5002, 1.442695
      %v5158 = vpow.pop %v5157
      %v5159 = vmul.f32 %v5003, 1.442695
      %v5160 = vpow.pop %v5159
      %v5161 = vmul.f32 %v5004, 1.442695
      %v5162 = vpow.pop %v5161
      %v5163 = vmul.f32 %v5005, 1.442695
      %v5164 = vpow.pop %v5163
      %v5165 = vmul.f32 %v5006, 1.442695
      %v5166 = vpow.pop %v5165
      %v5167 = vadd.f32 %v5008, %v5010
      %v5168 = vadd.f32 %v5167, %v5012
      %v5169 = vadd.f32 %v5168, %v5014
      %v5170 = vadd.f32 %v5169, %v5016
      %5171 = vadd.xlane.f32.xlu0 %v5170
      %v5172 = vpop.xlane.xlu0 %5171
      %v5173 = vadd.f32 %v5018, %v5020
      %v5174 = vadd.f32 %v5173, %v5022
      %v5175 = vadd.f32 %v5174, %v5024
      %v5176 = vadd.f32 %v5175, %v5026
      %5177 = vadd.xlane.f32.xlu0 %v5176
      %v5178 = vpop.xlane.xlu0 %5177
      %v5179 = vadd.f32 %v5028, %v5030
      %v5180 = vadd.f32 %v5179, %v5032
      %v5181 = vadd.f32 %v5180, %v5034
      %v5182 = vadd.f32 %v5181, %v5036
      %5183 = vadd.xlane.f32.xlu0 %v5182
      %v5184 = vpop.xlane.xlu0 %5183
      %v5185 = vadd.f32 %v5038, %v5040
      %v5186 = vadd.f32 %v5185, %v5042
      %v5187 = vadd.f32 %v5186, %v5044
      %v5188 = vadd.f32 %v5187, %v5046
      %5189 = vadd.xlane.f32.xlu0 %v5188
      %v5190 = vpop.xlane.xlu0 %5189
      %v5191 = vadd.f32 %v5048, %v5050
      %v5192 = vadd.f32 %v5191, %v5052
      %v5193 = vadd.f32 %v5192, %v5054
      %v5194 = vadd.f32 %v5193, %v5056
      %5195 = vadd.xlane.f32.xlu0 %v5194
      %v5196 = vpop.xlane.xlu0 %5195
      %v5197 = vadd.f32 %v5058, %v5060
      %v5198 = vadd.f32 %v5197, %v5062
      %v5199 = vadd.f32 %v5198, %v5064
      %v5200 = vadd.f32 %v5199, %v5066
      %5201 = vadd.xlane.f32.xlu0 %v5200
      %v5202 = vpop.xlane.xlu0 %5201
      %v5203 = vadd.f32 %v5068, %v5070
      %v5204 = vadd.f32 %v5203, %v5072
      %v5205 = vadd.f32 %v5204, %v5074
      %v5206 = vadd.f32 %v5205, %v5076
      %5207 = vadd.xlane.f32.xlu0 %v5206
      %v5208 = vpop.xlane.xlu0 %5207
      %v5209 = vadd.f32 %v5078, %v5080
      %v5210 = vadd.f32 %v5209, %v5082
      %v5211 = vadd.f32 %v5210, %v5084
      %v5212 = vadd.f32 %v5211, %v5086
      %5213 = vadd.xlane.f32.xlu0 %v5212
      %v5214 = vpop.xlane.xlu0 %5213
      %v5215 = vadd.f32 %v5088, %v5090
      %v5216 = vadd.f32 %v5215, %v5092
      %v5217 = vadd.f32 %v5216, %v5094
      %v5218 = vadd.f32 %v5217, %v5096
      %5219 = vadd.xlane.f32.xlu0 %v5218
      %v5220 = vpop.xlane.xlu0 %5219
      %v5221 = vadd.f32 %v5098, %v5100
      %v5222 = vadd.f32 %v5221, %v5102
      %v5223 = vadd.f32 %v5222, %v5104
      %v5224 = vadd.f32 %v5223, %v5106
      %5225 = vadd.xlane.f32.xlu0 %v5224
      %v5226 = vpop.xlane.xlu0 %5225
      %v5227 = vadd.f32 %v5108, %v5110
      %v5228 = vadd.f32 %v5227, %v5112
      %v5229 = vadd.f32 %v5228, %v5114
      %v5230 = vadd.f32 %v5229, %v5116
      %5231 = vadd.xlane.f32.xlu0 %v5230
      %v5232 = vpop.xlane.xlu0 %5231
      %v5233 = vadd.f32 %v5118, %v5120
      %v5234 = vadd.f32 %v5233, %v5122
      %v5235 = vadd.f32 %v5234, %v5124
      %v5236 = vadd.f32 %v5235, %v5126
      %5237 = vadd.xlane.f32.xlu0 %v5236
      %v5238 = vpop.xlane.xlu0 %5237
      %v5239 = vadd.f32 %v5128, %v5130
      %v5240 = vadd.f32 %v5239, %v5132
      %v5241 = vadd.f32 %v5240, %v5134
      %v5242 = vadd.f32 %v5241, %v5136
      %5243 = vadd.xlane.f32.xlu0 %v5242
      %v5244 = vpop.xlane.xlu0 %5243
      %v5245 = vadd.f32 %v5138, %v5140
      %v5246 = vadd.f32 %v5245, %v5142
      %v5247 = vadd.f32 %v5246, %v5144
      %v5248 = vadd.f32 %v5247, %v5146
      %5249 = vadd.xlane.f32.xlu0 %v5248
      %v5250 = vpop.xlane.xlu0 %5249
      %v5251 = vadd.f32 %v5148, %v5150
      %v5252 = vadd.f32 %v5251, %v5152
      %v5253 = vadd.f32 %v5252, %v5154
      %v5254 = vadd.f32 %v5253, %v5156
      %5255 = vadd.xlane.f32.xlu0 %v5254
      %v5256 = vpop.xlane.xlu0 %5255
      %v5257 = vadd.f32 %v5158, %v5160
      %v5258 = vadd.f32 %v5257, %v5162
      %v5259 = vadd.f32 %v5258, %v5164
      %v5260 = vadd.f32 %v5259, %v5166
      %5261 = vadd.xlane.f32.xlu0 %v5260
      %v5262 = vpop.xlane.xlu0 %5261
      %v5263 = vrcp.pop %v5172
      %v5264 = vrcp.pop %v5178
      %v5265 = vrcp.pop %v5184
      %v5266 = vrcp.pop %v5190
      %v5267 = vrcp.pop %v5196
      %v5268 = vrcp.pop %v5202
      %v5269 = vrcp.pop %v5208
      %v5270 = vrcp.pop %v5214
      %v5271 = vrcp.pop %v5220
      %v5272 = vrcp.pop %v5226
      %v5273 = vrcp.pop %v5232
      %v5274 = vrcp.pop %v5238
      %v5275 = vrcp.pop %v5244
      %v5276 = vrcp.pop %v5250
      %v5277 = vrcp.pop %v5256
      %v5278 = vrcp.pop %v5262
      %v5279 = vmul.f32 %v5008, %v5263
      %v5280 = vmul.f32 %v5010, %v5263
      %v5281 = vmul.f32 %v5012, %v5263
      %v5282 = vmul.f32 %v5014, %v5263
      %v5283 = vmul.f32 %v5016, %v5263
      %v5284 = vmul.f32 %v5018, %v5264
      %v5285 = vmul.f32 %v5020, %v5264
      %v5286 = vmul.f32 %v5022, %v5264
      %v5287 = vmul.f32 %v5024, %v5264
      %v5288 = vmul.f32 %v5026, %v5264
      %v5289 = vmul.f32 %v5028, %v5265
      %v5290 = vmul.f32 %v5030, %v5265
      %v5291 = vmul.f32 %v5032, %v5265
      %v5292 = vmul.f32 %v5034, %v5265
      %v5293 = vmul.f32 %v5036, %v5265
      %v5294 = vmul.f32 %v5038, %v5266
      %v5295 = vmul.f32 %v5040, %v5266
      %v5296 = vmul.f32 %v5042, %v5266
      %v5297 = vmul.f32 %v5044, %v5266
      %v5298 = vmul.f32 %v5046, %v5266
      %v5299 = vmul.f32 %v5048, %v5267
      %v5300 = vmul.f32 %v5050, %v5267
      %v5301 = vmul.f32 %v5052, %v5267
      %v5302 = vmul.f32 %v5054, %v5267
      %v5303 = vmul.f32 %v5056, %v5267
      %v5304 = vmul.f32 %v5058, %v5268
      %v5305 = vmul.f32 %v5060, %v5268
      %v5306 = vmul.f32 %v5062, %v5268
      %v5307 = vmul.f32 %v5064, %v5268
      %v5308 = vmul.f32 %v5066, %v5268
      %v5309 = vmul.f32 %v5068, %v5269
      %v5310 = vmul.f32 %v5070, %v5269
      %v5311 = vmul.f32 %v5072, %v5269
      %v5312 = vmul.f32 %v5074, %v5269
      %v5313 = vmul.f32 %v5076, %v5269
      %v5314 = vmul.f32 %v5078, %v5270
      %v5315 = vmul.f32 %v5080, %v5270
      %v5316 = vmul.f32 %v5082, %v5270
      %v5317 = vmul.f32 %v5084, %v5270
      %v5318 = vmul.f32 %v5086, %v5270
      %v5319 = vmul.f32 %v5088, %v5271
      %v5320 = vmul.f32 %v5090, %v5271
      %v5321 = vmul.f32 %v5092, %v5271
      %v5322 = vmul.f32 %v5094, %v5271
      %v5323 = vmul.f32 %v5096, %v5271
      %v5324 = vmul.f32 %v5098, %v5272
      %v5325 = vmul.f32 %v5100, %v5272
      %v5326 = vmul.f32 %v5102, %v5272
      %v5327 = vmul.f32 %v5104, %v5272
      %v5328 = vmul.f32 %v5106, %v5272
      %v5329 = vmul.f32 %v5108, %v5273
      %v5330 = vmul.f32 %v5110, %v5273
      %v5331 = vmul.f32 %v5112, %v5273
      %v5332 = vmul.f32 %v5114, %v5273
      %v5333 = vmul.f32 %v5116, %v5273
      %v5334 = vmul.f32 %v5118, %v5274
      %v5335 = vmul.f32 %v5120, %v5274
      %v5336 = vmul.f32 %v5122, %v5274
      %v5337 = vmul.f32 %v5124, %v5274
      %v5338 = vmul.f32 %v5126, %v5274
      %v5339 = vmul.f32 %v5128, %v5275
      %v5340 = vmul.f32 %v5130, %v5275
      %v5341 = vmul.f32 %v5132, %v5275
      %v5342 = vmul.f32 %v5134, %v5275
      %v5343 = vmul.f32 %v5136, %v5275
      %v5344 = vmul.f32 %v5138, %v5276
      %v5345 = vmul.f32 %v5140, %v5276
      %v5346 = vmul.f32 %v5142, %v5276
      %v5347 = vmul.f32 %v5144, %v5276
      %v5348 = vmul.f32 %v5146, %v5276
      %v5349 = vmul.f32 %v5148, %v5277
      %v5350 = vmul.f32 %v5150, %v5277
      %v5351 = vmul.f32 %v5152, %v5277
      %v5352 = vmul.f32 %v5154, %v5277
      %v5353 = vmul.f32 %v5156, %v5277
      %v5354 = vmul.f32 %v5158, %v5278
      %v5355 = vmul.f32 %v5160, %v5278
      %v5356 = vmul.f32 %v5162, %v5278
      %v5357 = vmul.f32 %v5164, %v5278
      %v5358 = vmul.f32 %v5166, %v5278
      %5359 = vrot.lane.b32.xlu0 %v1362, 88
      %v5360 = vpop.permute.xlu0 %5359
      %5361 = vrot.lane.b32.xlu0 %v1367, 88
      %v5362 = vpop.permute.xlu0 %5361
      %5363 = vrot.lane.b32.xlu0 %v1372, 88
      %v5364 = vpop.permute.xlu0 %5363
      %5365 = vrot.lane.b32.xlu0 %v1377, 88
      %v5366 = vpop.permute.xlu0 %5365
      %5367 = vrot.lane.b32.xlu0 %v1382, 88
      %v5368 = vpop.permute.xlu0 %5367
      %5369 = vrot.lane.b32.xlu0 %v1387, 88
      %v5370 = vpop.permute.xlu0 %5369
      %5371 = vrot.lane.b32.xlu0 %v1392, 88
      %v5372 = vpop.permute.xlu0 %5371
      %5373 = vrot.lane.b32.xlu0 %v1397, 88
      %v5374 = vpop.permute.xlu0 %5373
      %5375 = vrot.lane.b32.xlu0 %v1402, 88
      %v5376 = vpop.permute.xlu0 %5375
      %5377 = vrot.lane.b32.xlu0 %v1407, 88
      %v5378 = vpop.permute.xlu0 %5377
      %5379 = vrot.lane.b32.xlu0 %v1412, 88
      %v5380 = vpop.permute.xlu0 %5379
      %5381 = vrot.lane.b32.xlu0 %v1417, 88
      %v5382 = vpop.permute.xlu0 %5381
      %5383 = vrot.lane.b32.xlu0 %v1422, 88
      %v5384 = vpop.permute.xlu0 %5383
      %5385 = vrot.lane.b32.xlu0 %v1427, 88
      %v5386 = vpop.permute.xlu0 %5385
      %5387 = vrot.lane.b32.xlu0 %v1432, 88
      %v5388 = vpop.permute.xlu0 %5387
      %5389 = vrot.lane.b32.xlu0 %v1437, 88
      %v5390 = vpop.permute.xlu0 %5389
      %5391 = vrot.lane.b32.xlu0 %v1442, 88
      %v5392 = vpop.permute.xlu0 %5391
      %5393 = vrot.lane.b32.xlu0 %v1447, 88
      %v5394 = vpop.permute.xlu0 %5393
      %5395 = vrot.lane.b32.xlu0 %v1452, 88
      %v5396 = vpop.permute.xlu0 %5395
      %5397 = vrot.lane.b32.xlu0 %v1457, 88
      %v5398 = vpop.permute.xlu0 %5397
      %5399 = vrot.lane.b32.xlu0 %v1462, 88
      %v5400 = vpop.permute.xlu0 %5399
      %5401 = vrot.lane.b32.xlu0 %v1467, 88
      %v5402 = vpop.permute.xlu0 %5401
      %5403 = vrot.lane.b32.xlu0 %v1472, 88
      %v5404 = vpop.permute.xlu0 %5403
      %5405 = vrot.lane.b32.xlu0 %v1477, 88
      %v5406 = vpop.permute.xlu0 %5405
      %5407 = vrot.lane.b32.xlu0 %v1482, 88
      %v5408 = vpop.permute.xlu0 %5407
      %5409 = vrot.lane.b32.xlu0 %v1487, 88
      %v5410 = vpop.permute.xlu0 %5409
      %5411 = vrot.lane.b32.xlu0 %v1492, 88
      %v5412 = vpop.permute.xlu0 %5411
      %5413 = vrot.lane.b32.xlu0 %v1497, 88
      %v5414 = vpop.permute.xlu0 %5413
      %5415 = vrot.lane.b32.xlu0 %v1502, 88
      %v5416 = vpop.permute.xlu0 %5415
      %5417 = vrot.lane.b32.xlu0 %v1507, 88
      %v5418 = vpop.permute.xlu0 %5417
      %5419 = vrot.lane.b32.xlu0 %v1512, 88
      %v5420 = vpop.permute.xlu0 %5419
      %5421 = vrot.lane.b32.xlu0 %v1517, 88
      %v5422 = vpop.permute.xlu0 %5421
      %5423 = vrot.lane.b32.xlu0 %v1522, 88
      %v5424 = vpop.permute.xlu0 %5423
      %5425 = vrot.lane.b32.xlu0 %v1527, 88
      %v5426 = vpop.permute.xlu0 %5425
      %5427 = vrot.lane.b32.xlu0 %v1532, 88
      %v5428 = vpop.permute.xlu0 %5427
      %5429 = vrot.lane.b32.xlu0 %v1537, 88
      %v5430 = vpop.permute.xlu0 %5429
      %5431 = vrot.lane.b32.xlu0 %v1542, 88
      %v5432 = vpop.permute.xlu0 %5431
      %5433 = vrot.lane.b32.xlu0 %v1547, 88
      %v5434 = vpop.permute.xlu0 %5433
      %5435 = vrot.lane.b32.xlu0 %v1552, 88
      %v5436 = vpop.permute.xlu0 %5435
      %5437 = vrot.lane.b32.xlu0 %v1557, 88
      %v5438 = vpop.permute.xlu0 %5437
      %5439 = vrot.lane.b32.xlu0 %v1562, 88
      %v5440 = vpop.permute.xlu0 %5439
      %5441 = vrot.lane.b32.xlu0 %v1567, 88
      %v5442 = vpop.permute.xlu0 %5441
      %5443 = vrot.lane.b32.xlu0 %v1572, 88
      %v5444 = vpop.permute.xlu0 %5443
      %5445 = vrot.lane.b32.xlu0 %v1577, 88
      %v5446 = vpop.permute.xlu0 %5445
      %5447 = vrot.lane.b32.xlu0 %v1582, 88
      %v5448 = vpop.permute.xlu0 %5447
      %5449 = vrot.lane.b32.xlu0 %v1587, 88
      %v5450 = vpop.permute.xlu0 %5449
      %5451 = vrot.lane.b32.xlu0 %v1592, 88
      %v5452 = vpop.permute.xlu0 %5451
      %5453 = vrot.lane.b32.xlu0 %v1597, 88
      %v5454 = vpop.permute.xlu0 %5453
      %5455 = vrot.lane.b32.xlu0 %v1602, 88
      %v5456 = vpop.permute.xlu0 %5455
      %5457 = vrot.lane.b32.xlu0 %v1607, 88
      %v5458 = vpop.permute.xlu0 %5457
      %5459 = vrot.lane.b32.xlu0 %v1612, 88
      %v5460 = vpop.permute.xlu0 %5459
      %5461 = vrot.lane.b32.xlu0 %v1617, 88
      %v5462 = vpop.permute.xlu0 %5461
      %5463 = vrot.lane.b32.xlu0 %v1622, 88
      %v5464 = vpop.permute.xlu0 %5463
      %5465 = vrot.lane.b32.xlu0 %v1627, 88
      %v5466 = vpop.permute.xlu0 %5465
      %5467 = vrot.lane.b32.xlu0 %v1632, 88
      %v5468 = vpop.permute.xlu0 %5467
      %5469 = vrot.lane.b32.xlu0 %v1637, 88
      %v5470 = vpop.permute.xlu0 %5469
      %5471 = vrot.lane.b32.xlu0 %v1642, 88
      %v5472 = vpop.permute.xlu0 %5471
      %5473 = vrot.lane.b32.xlu0 %v1647, 88
      %v5474 = vpop.permute.xlu0 %5473
      %5475 = vrot.lane.b32.xlu0 %v1652, 88
      %v5476 = vpop.permute.xlu0 %5475
      %5477 = vrot.lane.b32.xlu0 %v1657, 88
      %v5478 = vpop.permute.xlu0 %5477
      %5479 = vrot.lane.b32.xlu0 %v1662, 88
      %v5480 = vpop.permute.xlu0 %5479
      %5481 = vrot.lane.b32.xlu0 %v1667, 88
      %v5482 = vpop.permute.xlu0 %5481
      %5483 = vrot.lane.b32.xlu0 %v1672, 88
      %v5484 = vpop.permute.xlu0 %5483
      %5485 = vrot.lane.b32.xlu0 %v1677, 88
      %v5486 = vpop.permute.xlu0 %5485
      %5487 = vrot.lane.b32.xlu0 %v1682, 88
      %v5488 = vpop.permute.xlu0 %5487
      %5489 = vrot.lane.b32.xlu0 %v1687, 88
      %v5490 = vpop.permute.xlu0 %5489
      %5491 = vrot.lane.b32.xlu0 %v1692, 88
      %v5492 = vpop.permute.xlu0 %5491
      %5493 = vrot.lane.b32.xlu0 %v1697, 88
      %v5494 = vpop.permute.xlu0 %5493
      %5495 = vrot.lane.b32.xlu0 %v1702, 88
      %v5496 = vpop.permute.xlu0 %5495
      %5497 = vrot.lane.b32.xlu0 %v1707, 88
      %v5498 = vpop.permute.xlu0 %5497
      %5499 = vrot.lane.b32.xlu0 %v1712, 88
      %v5500 = vpop.permute.xlu0 %5499
      %5501 = vrot.lane.b32.xlu0 %v1717, 88
      %v5502 = vpop.permute.xlu0 %5501
      %5503 = vrot.lane.b32.xlu0 %v1722, 88
      %v5504 = vpop.permute.xlu0 %5503
      %5505 = vrot.lane.b32.xlu0 %v1727, 88
      %v5506 = vpop.permute.xlu0 %5505
      %5507 = vrot.lane.b32.xlu0 %v1732, 88
      %v5508 = vpop.permute.xlu0 %5507
      %5509 = vrot.lane.b32.xlu0 %v1737, 88
      %v5510 = vpop.permute.xlu0 %5509
      %5511 = vrot.lane.b32.xlu0 %v1742, 88
      %v5512 = vpop.permute.xlu0 %5511
      %5513 = vrot.lane.b32.xlu0 %v1747, 88
      %v5514 = vpop.permute.xlu0 %5513
      %5515 = vrot.lane.b32.xlu0 %v1752, 88
      %v5516 = vpop.permute.xlu0 %5515
      %5517 = vrot.lane.b32.xlu0 %v1757, 88
      %v5518 = vpop.permute.xlu0 %5517
      %5599 = vmatprep.subr.mxu0 0.0
      %5600 = vmatpush1.msra.mxu0 %v5390
      %5601 = vmatprep.subr.mxu0 0.0
      %5602 = vmatpush1.msra.mxu0 %v5388
      %5603 = vmatprep.subr.mxu0 0.0
      %5604 = vmatpush1.msra.mxu0 %v5386
      %5605 = vmatprep.subr.mxu0 0.0
      %5606 = vmatpush1.msra.mxu0 %v5384
      %5607 = vmatprep.subr.mxu0 0.0
      %5608 = vmatpush1.msra.mxu0 %v5382
      %5609 = vmatprep.subr.mxu0 0.0
      %5610 = vmatpush1.msra.mxu0 %v5380
      %5611 = vmatprep.subr.mxu0 0.0
      %5612 = vmatpush1.msra.mxu0 %v5378
      %5613 = vmatprep.subr.mxu0 0.0
      %5614 = vmatpush1.msra.mxu0 %v5376
      %5615 = vmatprep.subr.mxu0 0.0
      %5616 = vmatpush1.msra.mxu0 %v5374
      %5617 = vmatprep.subr.mxu0 0.0
      %5618 = vmatpush1.msra.mxu0 %v5372
      %5619 = vmatprep.subr.mxu0 0.0
      %5620 = vmatpush1.msra.mxu0 %v5370
      %5621 = vmatprep.subr.mxu0 0.0
      %5622 = vmatpush1.msra.mxu0 %v5368
      %5623 = vmatprep.subr.mxu0 0.0
      %5624 = vmatpush1.msra.mxu0 %v5366
      %5625 = vmatprep.subr.mxu0 0.0
      %5626 = vmatpush1.msra.mxu0 %v5364
      %5627 = vmatprep.subr.mxu0 0.0
      %5628 = vmatpush1.msra.mxu0 %v5362
      %5629 = vmatprep.subr.mxu0 0.0
      %5630 = vmatpush1.msra.mxu0 %v5360
      %5631 = vmatprep.subr.mxu0 0.0
      %5632 = vmatpush2.msra.mxu0 %v5422
      %5633 = vmatprep.subr.mxu0 0.0
      %5634 = vmatpush2.msra.mxu0 %v5420
      %5635 = vmatprep.subr.mxu0 0.0
      %5636 = vmatpush2.msra.mxu0 %v5418
      %5637 = vmatprep.subr.mxu0 0.0
      %5638 = vmatpush2.msra.mxu0 %v5416
      %5639 = vmatprep.subr.mxu0 0.0
      %5640 = vmatpush2.msra.mxu0 %v5414
      %5641 = vmatprep.subr.mxu0 0.0
      %5642 = vmatpush2.msra.mxu0 %v5412
      %5643 = vmatprep.subr.mxu0 0.0
      %5644 = vmatpush2.msra.mxu0 %v5410
      %5645 = vmatprep.subr.mxu0 0.0
      %5646 = vmatpush2.msra.mxu0 %v5408
      %5647 = vmatprep.subr.mxu0 0.0
      %5648 = vmatpush2.msra.mxu0 %v5406
      %5649 = vmatprep.subr.mxu0 0.0
      %5650 = vmatpush2.msra.mxu0 %v5404
      %5651 = vmatprep.subr.mxu0 0.0
      %5652 = vmatpush2.msra.mxu0 %v5402
      %5653 = vmatprep.subr.mxu0 0.0
      %5654 = vmatpush2.msra.mxu0 %v5400
      %5655 = vmatprep.subr.mxu0 0.0
      %5656 = vmatpush2.msra.mxu0 %v5398
      %5657 = vmatprep.subr.mxu0 0.0
      %5658 = vmatpush2.msra.mxu0 %v5396
      %5659 = vmatprep.subr.mxu0 0.0
      %5660 = vmatpush2.msra.mxu0 %v5394
      %5661 = vmatprep.subr.mxu0 0.0
      %5662 = vmatpush2.msra.mxu0 %v5392
      %5663 = vmatprep.mubr.f32.mxu0 %v5280
      %5664 = vmatmul.mubr.f32.gmra.mxu0 %v5279
      %v5665 = vpop.f32.mrf.mxu0
      %v5666 = vadd.f32 0.0, %v5665
      %v5667 = vpop.f32.mrf.mxu0
      %5668 = vmatprep.mubr.f32.mxu0 %v5285
      %5669 = vmatmul.mubr.f32.gmra.mxu0 %v5284
      %v5670 = vpop.f32.mrf.mxu0
      %v5671 = vadd.f32 0.0, %v5670
      %v5672 = vpop.f32.mrf.mxu0
      %5673 = vmatprep.mubr.f32.mxu0 %v5290
      %5674 = vmatmul.mubr.f32.gmra.mxu0 %v5289
      %v5675 = vpop.f32.mrf.mxu0
      %v5676 = vadd.f32 0.0, %v5675
      %v5677 = vpop.f32.mrf.mxu0
      %5678 = vmatprep.mubr.f32.mxu0 %v5295
      %5679 = vmatmul.mubr.f32.gmra.mxu0 %v5294
      %v5680 = vpop.f32.mrf.mxu0
      %v5681 = vadd.f32 0.0, %v5680
      %v5682 = vpop.f32.mrf.mxu0
      %5683 = vmatprep.mubr.f32.mxu0 %v5300
      %5684 = vmatmul.mubr.f32.gmra.mxu0 %v5299
      %v5685 = vpop.f32.mrf.mxu0
      %v5686 = vadd.f32 0.0, %v5685
      %v5687 = vpop.f32.mrf.mxu0
      %5688 = vmatprep.mubr.f32.mxu0 %v5305
      %5689 = vmatmul.mubr.f32.gmra.mxu0 %v5304
      %v5690 = vpop.f32.mrf.mxu0
      %v5691 = vadd.f32 0.0, %v5690
      %v5692 = vpop.f32.mrf.mxu0
      %5693 = vmatprep.mubr.f32.mxu0 %v5310
      %5694 = vmatmul.mubr.f32.gmra.mxu0 %v5309
      %v5695 = vpop.f32.mrf.mxu0
      %v5696 = vadd.f32 0.0, %v5695
      %v5697 = vpop.f32.mrf.mxu0
      %5698 = vmatprep.mubr.f32.mxu0 %v5315
      %5699 = vmatmul.mubr.f32.gmra.mxu0 %v5314
      %v5700 = vpop.f32.mrf.mxu0
      %v5701 = vadd.f32 0.0, %v5700
      %v5702 = vpop.f32.mrf.mxu0
      %5703 = vmatprep.mubr.f32.mxu0 %v5320
      %5704 = vmatmul.mubr.f32.gmra.mxu0 %v5319
      %v5705 = vpop.f32.mrf.mxu0
      %v5706 = vadd.f32 0.0, %v5705
      %v5707 = vpop.f32.mrf.mxu0
      %5708 = vmatprep.mubr.f32.mxu0 %v5325
      %5709 = vmatmul.mubr.f32.gmra.mxu0 %v5324
      %v5710 = vpop.f32.mrf.mxu0
      %v5711 = vadd.f32 0.0, %v5710
      %v5712 = vpop.f32.mrf.mxu0
      %5713 = vmatprep.mubr.f32.mxu0 %v5330
      %5714 = vmatmul.mubr.f32.gmra.mxu0 %v5329
      %v5715 = vpop.f32.mrf.mxu0
      %v5716 = vadd.f32 0.0, %v5715
      %v5717 = vpop.f32.mrf.mxu0
      %5718 = vmatprep.mubr.f32.mxu0 %v5335
      %5719 = vmatmul.mubr.f32.gmra.mxu0 %v5334
      %v5720 = vpop.f32.mrf.mxu0
      %v5721 = vadd.f32 0.0, %v5720
      %v5722 = vpop.f32.mrf.mxu0
      %5723 = vmatprep.mubr.f32.mxu0 %v5340
      %5724 = vmatmul.mubr.f32.gmra.mxu0 %v5339
      %v5725 = vpop.f32.mrf.mxu0
      %v5726 = vadd.f32 0.0, %v5725
      %v5727 = vpop.f32.mrf.mxu0
      %5728 = vmatprep.mubr.f32.mxu0 %v5345
      %5729 = vmatmul.mubr.f32.gmra.mxu0 %v5344
      %v5730 = vpop.f32.mrf.mxu0
      %v5731 = vadd.f32 0.0, %v5730
      %v5732 = vpop.f32.mrf.mxu0
      %5733 = vmatprep.mubr.f32.mxu0 %v5350
      %5734 = vmatmul.mubr.f32.gmra.mxu0 %v5349
      %v5735 = vpop.f32.mrf.mxu0
      %v5736 = vadd.f32 0.0, %v5735
      %v5737 = vpop.f32.mrf.mxu0
      %5738 = vmatprep.mubr.f32.mxu0 %v5355
      %5739 = vmatmul.mubr.f32.gmra.mxu0 %v5354
      %v5740 = vpop.f32.mrf.mxu0
      %v5741 = vadd.f32 0.0, %v5740
      %v5742 = vpop.f32.mrf.mxu0
      %5743 = vdwg.mxu0
      %5744 = vmatprep.subr.mxu0 0.0
      %5745 = vmatpush1.msra.mxu0 %v5454
      %5746 = vmatprep.subr.mxu0 0.0
      %5747 = vmatpush1.msra.mxu0 %v5452
      %5748 = vmatprep.subr.mxu0 0.0
      %5749 = vmatpush1.msra.mxu0 %v5450
      %5750 = vmatprep.subr.mxu0 0.0
      %5751 = vmatpush1.msra.mxu0 %v5448
      %5752 = vmatprep.subr.mxu0 0.0
      %5753 = vmatpush1.msra.mxu0 %v5446
      %5754 = vmatprep.subr.mxu0 0.0
      %5755 = vmatpush1.msra.mxu0 %v5444
      %5756 = vmatprep.subr.mxu0 0.0
      %5757 = vmatpush1.msra.mxu0 %v5442
      %5758 = vmatprep.subr.mxu0 0.0
      %5759 = vmatpush1.msra.mxu0 %v5440
      %5760 = vmatprep.subr.mxu0 0.0
      %5761 = vmatpush1.msra.mxu0 %v5438
      %5762 = vmatprep.subr.mxu0 0.0
      %5763 = vmatpush1.msra.mxu0 %v5436
      %5764 = vmatprep.subr.mxu0 0.0
      %5765 = vmatpush1.msra.mxu0 %v5434
      %5766 = vmatprep.subr.mxu0 0.0
      %5767 = vmatpush1.msra.mxu0 %v5432
      %5768 = vmatprep.subr.mxu0 0.0
      %5769 = vmatpush1.msra.mxu0 %v5430
      %5770 = vmatprep.subr.mxu0 0.0
      %5771 = vmatpush1.msra.mxu0 %v5428
      %5772 = vmatprep.subr.mxu0 0.0
      %5773 = vmatpush1.msra.mxu0 %v5426
      %5774 = vmatprep.subr.mxu0 0.0
      %5775 = vmatpush1.msra.mxu0 %v5424
      %5776 = vmatprep.subr.mxu0 0.0
      %5777 = vmatpush2.msra.mxu0 %v5486
      %5778 = vmatprep.subr.mxu0 0.0
      %5779 = vmatpush2.msra.mxu0 %v5484
      %5780 = vmatprep.subr.mxu0 0.0
      %5781 = vmatpush2.msra.mxu0 %v5482
      %5782 = vmatprep.subr.mxu0 0.0
      %5783 = vmatpush2.msra.mxu0 %v5480
      %5784 = vmatprep.subr.mxu0 0.0
      %5785 = vmatpush2.msra.mxu0 %v5478
      %5786 = vmatprep.subr.mxu0 0.0
      %5787 = vmatpush2.msra.mxu0 %v5476
      %5788 = vmatprep.subr.mxu0 0.0
      %5789 = vmatpush2.msra.mxu0 %v5474
      %5790 = vmatprep.subr.mxu0 0.0
      %5791 = vmatpush2.msra.mxu0 %v5472
      %5792 = vmatprep.subr.mxu0 0.0
      %5793 = vmatpush2.msra.mxu0 %v5470
      %5794 = vmatprep.subr.mxu0 0.0
      %5795 = vmatpush2.msra.mxu0 %v5468
      %5796 = vmatprep.subr.mxu0 0.0
      %5797 = vmatpush2.msra.mxu0 %v5466
      %5798 = vmatprep.subr.mxu0 0.0
      %5799 = vmatpush2.msra.mxu0 %v5464
      %5800 = vmatprep.subr.mxu0 0.0
      %5801 = vmatpush2.msra.mxu0 %v5462
      %5802 = vmatprep.subr.mxu0 0.0
      %5803 = vmatpush2.msra.mxu0 %v5460
      %5804 = vmatprep.subr.mxu0 0.0
      %5805 = vmatpush2.msra.mxu0 %v5458
      %5806 = vmatprep.subr.mxu0 0.0
      %5807 = vmatpush2.msra.mxu0 %v5456
      %5808 = vmatprep.mubr.f32.mxu0 %v5282
      %5809 = vmatmul.mubr.f32.gmra.mxu0 %v5281
      %v5810 = vpop.f32.mrf.mxu0
      %v5811 = vadd.f32 %v5666, %v5810
      %v5812 = vpop.f32.mrf.mxu0
      %5813 = vmatprep.mubr.f32.mxu0 %v5287
      %5814 = vmatmul.mubr.f32.gmra.mxu0 %v5286
      %v5815 = vpop.f32.mrf.mxu0
      %v5816 = vadd.f32 %v5671, %v5815
      %v5817 = vpop.f32.mrf.mxu0
      %5818 = vmatprep.mubr.f32.mxu0 %v5292
      %5819 = vmatmul.mubr.f32.gmra.mxu0 %v5291
      %v5820 = vpop.f32.mrf.mxu0
      %v5821 = vadd.f32 %v5676, %v5820
      %v5822 = vpop.f32.mrf.mxu0
      %5823 = vmatprep.mubr.f32.mxu0 %v5297
      %5824 = vmatmul.mubr.f32.gmra.mxu0 %v5296
      %v5825 = vpop.f32.mrf.mxu0
      %v5826 = vadd.f32 %v5681, %v5825
      %v5827 = vpop.f32.mrf.mxu0
      %5828 = vmatprep.mubr.f32.mxu0 %v5302
      %5829 = vmatmul.mubr.f32.gmra.mxu0 %v5301
      %v5830 = vpop.f32.mrf.mxu0
      %v5831 = vadd.f32 %v5686, %v5830
      %v5832 = vpop.f32.mrf.mxu0
      %5833 = vmatprep.mubr.f32.mxu0 %v5307
      %5834 = vmatmul.mubr.f32.gmra.mxu0 %v5306
      %v5835 = vpop.f32.mrf.mxu0
      %v5836 = vadd.f32 %v5691, %v5835
      %v5837 = vpop.f32.mrf.mxu0
      %5838 = vmatprep.mubr.f32.mxu0 %v5312
      %5839 = vmatmul.mubr.f32.gmra.mxu0 %v5311
      %v5840 = vpop.f32.mrf.mxu0
      %v5841 = vadd.f32 %v5696, %v5840
      %v5842 = vpop.f32.mrf.mxu0
      %5843 = vmatprep.mubr.f32.mxu0 %v5317
      %5844 = vmatmul.mubr.f32.gmra.mxu0 %v5316
      %v5845 = vpop.f32.mrf.mxu0
      %v5846 = vadd.f32 %v5701, %v5845
      %v5847 = vpop.f32.mrf.mxu0
      %5848 = vmatprep.mubr.f32.mxu0 %v5322
      %5849 = vmatmul.mubr.f32.gmra.mxu0 %v5321
      %v5850 = vpop.f32.mrf.mxu0
      %v5851 = vadd.f32 %v5706, %v5850
      %v5852 = vpop.f32.mrf.mxu0
      %5853 = vmatprep.mubr.f32.mxu0 %v5327
      %5854 = vmatmul.mubr.f32.gmra.mxu0 %v5326
      %v5855 = vpop.f32.mrf.mxu0
      %v5856 = vadd.f32 %v5711, %v5855
      %v5857 = vpop.f32.mrf.mxu0
      %5858 = vmatprep.mubr.f32.mxu0 %v5332
      %5859 = vmatmul.mubr.f32.gmra.mxu0 %v5331
      %v5860 = vpop.f32.mrf.mxu0
      %v5861 = vadd.f32 %v5716, %v5860
      %v5862 = vpop.f32.mrf.mxu0
      %5863 = vmatprep.mubr.f32.mxu0 %v5337
      %5864 = vmatmul.mubr.f32.gmra.mxu0 %v5336
      %v5865 = vpop.f32.mrf.mxu0
      %v5866 = vadd.f32 %v5721, %v5865
      %v5867 = vpop.f32.mrf.mxu0
      %5868 = vmatprep.mubr.f32.mxu0 %v5342
      %5869 = vmatmul.mubr.f32.gmra.mxu0 %v5341
      %v5870 = vpop.f32.mrf.mxu0
      %v5871 = vadd.f32 %v5726, %v5870
      %v5872 = vpop.f32.mrf.mxu0
      %5873 = vmatprep.mubr.f32.mxu0 %v5347
      %5874 = vmatmul.mubr.f32.gmra.mxu0 %v5346
      %v5875 = vpop.f32.mrf.mxu0
      %v5876 = vadd.f32 %v5731, %v5875
      %v5877 = vpop.f32.mrf.mxu0
      %5878 = vmatprep.mubr.f32.mxu0 %v5352
      %5879 = vmatmul.mubr.f32.gmra.mxu0 %v5351
      %v5880 = vpop.f32.mrf.mxu0
      %v5881 = vadd.f32 %v5736, %v5880
      %v5882 = vpop.f32.mrf.mxu0
      %5883 = vmatprep.mubr.f32.mxu0 %v5357
      %5884 = vmatmul.mubr.f32.gmra.mxu0 %v5356
      %v5885 = vpop.f32.mrf.mxu0
      %v5886 = vadd.f32 %v5741, %v5885
      %v5887 = vpop.f32.mrf.mxu0
      %5888 = vdwg.mxu0
      %5889 = vmatprep.subr.mxu0 0.0
      %5890 = vmatpush1.msra.mxu0 %v5518
      %5891 = vmatprep.subr.mxu0 0.0
      %5892 = vmatpush1.msra.mxu0 %v5516
      %5893 = vmatprep.subr.mxu0 0.0
      %5894 = vmatpush1.msra.mxu0 %v5514
      %5895 = vmatprep.subr.mxu0 0.0
      %5896 = vmatpush1.msra.mxu0 %v5512
      %5897 = vmatprep.subr.mxu0 0.0
      %5898 = vmatpush1.msra.mxu0 %v5510
      %5899 = vmatprep.subr.mxu0 0.0
      %5900 = vmatpush1.msra.mxu0 %v5508
      %5901 = vmatprep.subr.mxu0 0.0
      %5902 = vmatpush1.msra.mxu0 %v5506
      %5903 = vmatprep.subr.mxu0 0.0
      %5904 = vmatpush1.msra.mxu0 %v5504
      %5905 = vmatprep.subr.mxu0 0.0
      %5906 = vmatpush1.msra.mxu0 %v5502
      %5907 = vmatprep.subr.mxu0 0.0
      %5908 = vmatpush1.msra.mxu0 %v5500
      %5909 = vmatprep.subr.mxu0 0.0
      %5910 = vmatpush1.msra.mxu0 %v5498
      %5911 = vmatprep.subr.mxu0 0.0
      %5912 = vmatpush1.msra.mxu0 %v5496
      %5913 = vmatprep.subr.mxu0 0.0
      %5914 = vmatpush1.msra.mxu0 %v5494
      %5915 = vmatprep.subr.mxu0 0.0
      %5916 = vmatpush1.msra.mxu0 %v5492
      %5917 = vmatprep.subr.mxu0 0.0
      %5918 = vmatpush1.msra.mxu0 %v5490
      %5919 = vmatprep.subr.mxu0 0.0
      %5920 = vmatpush1.msra.mxu0 %v5488
      %5921 = vmatprep.subr.mxu0 0.0
      %5922 = vmatpush2.msra.mxu0 0.0
      %5923 = vmatprep.subr.mxu0 0.0
      %5924 = vmatpush2.msra.mxu0 0.0
      %5925 = vmatprep.subr.mxu0 0.0
      %5926 = vmatpush2.msra.mxu0 0.0
      %5927 = vmatprep.subr.mxu0 0.0
      %5928 = vmatpush2.msra.mxu0 0.0
      %5929 = vmatprep.subr.mxu0 0.0
      %5930 = vmatpush2.msra.mxu0 0.0
      %5931 = vmatprep.subr.mxu0 0.0
      %5932 = vmatpush2.msra.mxu0 0.0
      %5933 = vmatprep.subr.mxu0 0.0
      %5934 = vmatpush2.msra.mxu0 0.0
      %5935 = vmatprep.subr.mxu0 0.0
      %5936 = vmatpush2.msra.mxu0 0.0
      %5937 = vmatprep.subr.mxu0 0.0
      %5938 = vmatpush2.msra.mxu0 0.0
      %5939 = vmatprep.subr.mxu0 0.0
      %5940 = vmatpush2.msra.mxu0 0.0
      %5941 = vmatprep.subr.mxu0 0.0
      %5942 = vmatpush2.msra.mxu0 0.0
      %5943 = vmatprep.subr.mxu0 0.0
      %5944 = vmatpush2.msra.mxu0 0.0
      %5945 = vmatprep.subr.mxu0 0.0
      %5946 = vmatpush2.msra.mxu0 0.0
      %5947 = vmatprep.subr.mxu0 0.0
      %5948 = vmatpush2.msra.mxu0 0.0
      %5949 = vmatprep.subr.mxu0 0.0
      %5950 = vmatpush2.msra.mxu0 0.0
      %5951 = vmatprep.subr.mxu0 0.0
      %5952 = vmatpush2.msra.mxu0 0.0
      %5953 = vmatprep.mubr.f32.mxu0 0.0
      %5954 = vmatmul.mubr.f32.gmra.mxu0 %v5283
      %v5955 = vpop.f32.mrf.mxu0
      %v5956 = vadd.f32 %v5811, %v5955
      %v5957 = vpop.f32.mrf.mxu0
      %5958 = vmatprep.mubr.f32.mxu0 0.0
      %5959 = vmatmul.mubr.f32.gmra.mxu0 %v5288
      %v5960 = vpop.f32.mrf.mxu0
      %v5961 = vadd.f32 %v5816, %v5960
      %v5962 = vpop.f32.mrf.mxu0
      %5963 = vmatprep.mubr.f32.mxu0 0.0
      %5964 = vmatmul.mubr.f32.gmra.mxu0 %v5293
      %v5965 = vpop.f32.mrf.mxu0
      %v5966 = vadd.f32 %v5821, %v5965
      %v5967 = vpop.f32.mrf.mxu0
      %5968 = vmatprep.mubr.f32.mxu0 0.0
      %5969 = vmatmul.mubr.f32.gmra.mxu0 %v5298
      %v5970 = vpop.f32.mrf.mxu0
      %v5971 = vadd.f32 %v5826, %v5970
      %v5972 = vpop.f32.mrf.mxu0
      %5973 = vmatprep.mubr.f32.mxu0 0.0
      %5974 = vmatmul.mubr.f32.gmra.mxu0 %v5303
      %v5975 = vpop.f32.mrf.mxu0
      %v5976 = vadd.f32 %v5831, %v5975
      %v5977 = vpop.f32.mrf.mxu0
      %5978 = vmatprep.mubr.f32.mxu0 0.0
      %5979 = vmatmul.mubr.f32.gmra.mxu0 %v5308
      %v5980 = vpop.f32.mrf.mxu0
      %v5981 = vadd.f32 %v5836, %v5980
      %v5982 = vpop.f32.mrf.mxu0
      %5983 = vmatprep.mubr.f32.mxu0 0.0
      %5984 = vmatmul.mubr.f32.gmra.mxu0 %v5313
      %v5985 = vpop.f32.mrf.mxu0
      %v5986 = vadd.f32 %v5841, %v5985
      %v5987 = vpop.f32.mrf.mxu0
      %5988 = vmatprep.mubr.f32.mxu0 0.0
      %5989 = vmatmul.mubr.f32.gmra.mxu0 %v5318
      %v5990 = vpop.f32.mrf.mxu0
      %v5991 = vadd.f32 %v5846, %v5990
      %v5992 = vpop.f32.mrf.mxu0
      %5993 = vmatprep.mubr.f32.mxu0 0.0
      %5994 = vmatmul.mubr.f32.gmra.mxu0 %v5323
      %v5995 = vpop.f32.mrf.mxu0
      %v5996 = vadd.f32 %v5851, %v5995
      %v5997 = vpop.f32.mrf.mxu0
      %5998 = vmatprep.mubr.f32.mxu0 0.0
      %5999 = vmatmul.mubr.f32.gmra.mxu0 %v5328
      %v6000 = vpop.f32.mrf.mxu0
      %v6001 = vadd.f32 %v5856, %v6000
      %v6002 = vpop.f32.mrf.mxu0
      %6003 = vmatprep.mubr.f32.mxu0 0.0
      %6004 = vmatmul.mubr.f32.gmra.mxu0 %v5333
      %v6005 = vpop.f32.mrf.mxu0
      %v6006 = vadd.f32 %v5861, %v6005
      %v6007 = vpop.f32.mrf.mxu0
      %6008 = vmatprep.mubr.f32.mxu0 0.0
      %6009 = vmatmul.mubr.f32.gmra.mxu0 %v5338
      %v6010 = vpop.f32.mrf.mxu0
      %v6011 = vadd.f32 %v5866, %v6010
      %v6012 = vpop.f32.mrf.mxu0
      %6013 = vmatprep.mubr.f32.mxu0 0.0
      %6014 = vmatmul.mubr.f32.gmra.mxu0 %v5343
      %v6015 = vpop.f32.mrf.mxu0
      %v6016 = vadd.f32 %v5871, %v6015
      %v6017 = vpop.f32.mrf.mxu0
      %6018 = vmatprep.mubr.f32.mxu0 0.0
      %6019 = vmatmul.mubr.f32.gmra.mxu0 %v5348
      %v6020 = vpop.f32.mrf.mxu0
      %v6021 = vadd.f32 %v5876, %v6020
      %v6022 = vpop.f32.mrf.mxu0
      %6023 = vmatprep.mubr.f32.mxu0 0.0
      %6024 = vmatmul.mubr.f32.gmra.mxu0 %v5353
      %v6025 = vpop.f32.mrf.mxu0
      %v6026 = vadd.f32 %v5881, %v6025
      %v6027 = vpop.f32.mrf.mxu0
      %6028 = vmatprep.mubr.f32.mxu0 0.0
      %6029 = vmatmul.mubr.f32.gmra.mxu0 %v5358
      %v6030 = vpop.f32.mrf.mxu0
      %v6031 = vadd.f32 %v5886, %v6030
      %v6032 = vpop.f32.mrf.mxu0
      %6033 = vdwg.mxu0
      %6050 = vrot.lane.b32.xlu0 %v5956, 8
      %v6051 = vpop.permute.xlu0 %6050
      %6052 = vrot.lane.b32.xlu0 %v5961, 8
      %v6053 = vpop.permute.xlu0 %6052
      %6054 = vrot.lane.b32.xlu0 %v5966, 8
      %v6055 = vpop.permute.xlu0 %6054
      %6056 = vrot.lane.b32.xlu0 %v5971, 8
      %v6057 = vpop.permute.xlu0 %6056
      %6058 = vrot.lane.b32.xlu0 %v5976, 8
      %v6059 = vpop.permute.xlu0 %6058
      %6060 = vrot.lane.b32.xlu0 %v5981, 8
      %v6061 = vpop.permute.xlu0 %6060
      %6062 = vrot.lane.b32.xlu0 %v5986, 8
      %v6063 = vpop.permute.xlu0 %6062
      %6064 = vrot.lane.b32.xlu0 %v5991, 8
      %v6065 = vpop.permute.xlu0 %6064
      %6066 = vrot.lane.b32.xlu0 %v5996, 8
      %v6067 = vpop.permute.xlu0 %6066
      %6068 = vrot.lane.b32.xlu0 %v6001, 8
      %v6069 = vpop.permute.xlu0 %6068
      %6070 = vrot.lane.b32.xlu0 %v6006, 8
      %v6071 = vpop.permute.xlu0 %6070
      %6072 = vrot.lane.b32.xlu0 %v6011, 8
      %v6073 = vpop.permute.xlu0 %6072
      %6074 = vrot.lane.b32.xlu0 %v6016, 8
      %v6075 = vpop.permute.xlu0 %6074
      %6076 = vrot.lane.b32.xlu0 %v6021, 8
      %v6077 = vpop.permute.xlu0 %6076
      %6078 = vrot.lane.b32.xlu0 %v6026, 8
      %v6079 = vpop.permute.xlu0 %6078
      %6080 = vrot.lane.b32.xlu0 %v6031, 8
      %v6081 = vpop.permute.xlu0 %6080
      %vm6098 = vcmask 130112
      %6099 = vst.msk [vmem:[#allocation2] sm:$0xff] %vm6098, %v6051
      %6100 = vst.msk [vmem:[#allocation2 + $0x8] sm:$0xff] %vm6098, %v6053
      %6101 = vst.msk [vmem:[#allocation2 + $0x10] sm:$0xff] %vm6098, %v6055
      %6102 = vst.msk [vmem:[#allocation2 + $0x18] sm:$0xff] %vm6098, %v6057
      %6103 = vst.msk [vmem:[#allocation2 + $0x20] sm:$0xff] %vm6098, %v6059
      %6104 = vst.msk [vmem:[#allocation2 + $0x28] sm:$0xff] %vm6098, %v6061
      %6105 = vst.msk [vmem:[#allocation2 + $0x30] sm:$0xff] %vm6098, %v6063
      %6106 = vst.msk [vmem:[#allocation2 + $0x38] sm:$0xff] %vm6098, %v6065
      %6107 = vst.msk [vmem:[#allocation2 + $0x40] sm:$0xff] %vm6098, %v6067
      %6108 = vst.msk [vmem:[#allocation2 + $0x48] sm:$0xff] %vm6098, %v6069
      %6109 = vst.msk [vmem:[#allocation2 + $0x50] sm:$0xff] %vm6098, %v6071
      %6110 = vst.msk [vmem:[#allocation2 + $0x58] sm:$0xff] %vm6098, %v6073
      %6111 = vst.msk [vmem:[#allocation2 + $0x60] sm:$0xff] %vm6098, %v6075
      %6112 = vst.msk [vmem:[#allocation2 + $0x68] sm:$0xff] %vm6098, %v6077
      %6113 = vst.msk [vmem:[#allocation2 + $0x70] sm:$0xff] %vm6098, %v6079
      %6114 = vst.msk [vmem:[#allocation2 + $0x78] sm:$0xff] %vm6098, %v6081
      %6115 = vrot.lane.b32.xlu0 %v1153, 112
      %v6116 = vpop.permute.xlu0 %6115
      %6117 = vrot.lane.b32.xlu0 %v1158, 112
      %v6118 = vpop.permute.xlu0 %6117
      %6119 = vrot.lane.b32.xlu0 %v1163, 112
      %v6120 = vpop.permute.xlu0 %6119
      %6121 = vrot.lane.b32.xlu0 %v1168, 112
      %v6122 = vpop.permute.xlu0 %6121
      %6123 = vrot.lane.b32.xlu0 %v1173, 112
      %v6124 = vpop.permute.xlu0 %6123
      %6125 = vrot.lane.b32.xlu0 %v1178, 112
      %v6126 = vpop.permute.xlu0 %6125
      %6127 = vrot.lane.b32.xlu0 %v1183, 112
      %v6128 = vpop.permute.xlu0 %6127
      %6129 = vrot.lane.b32.xlu0 %v1188, 112
      %v6130 = vpop.permute.xlu0 %6129
      %6131 = vrot.lane.b32.xlu0 %v1193, 112
      %v6132 = vpop.permute.xlu0 %6131
      %6133 = vrot.lane.b32.xlu0 %v1198, 112
      %v6134 = vpop.permute.xlu0 %6133
      %6135 = vrot.lane.b32.xlu0 %v1203, 112
      %v6136 = vpop.permute.xlu0 %6135
      %6137 = vrot.lane.b32.xlu0 %v1208, 112
      %v6138 = vpop.permute.xlu0 %6137
      %6139 = vrot.lane.b32.xlu0 %v1213, 112
      %v6140 = vpop.permute.xlu0 %6139
      %6141 = vrot.lane.b32.xlu0 %v1218, 112
      %v6142 = vpop.permute.xlu0 %6141
      %6143 = vrot.lane.b32.xlu0 %v1223, 112
      %v6144 = vpop.permute.xlu0 %6143
      %6145 = vrot.lane.b32.xlu0 %v1228, 112
      %v6146 = vpop.permute.xlu0 %6145
      %6147 = vrot.lane.b32.xlu0 %v1362, 112
      %v6148 = vpop.permute.xlu0 %6147
      %6149 = vrot.lane.b32.xlu0 %v1367, 112
      %v6150 = vpop.permute.xlu0 %6149
      %6151 = vrot.lane.b32.xlu0 %v1372, 112
      %v6152 = vpop.permute.xlu0 %6151
      %6153 = vrot.lane.b32.xlu0 %v1377, 112
      %v6154 = vpop.permute.xlu0 %6153
      %6155 = vrot.lane.b32.xlu0 %v1382, 112
      %v6156 = vpop.permute.xlu0 %6155
      %6157 = vrot.lane.b32.xlu0 %v1387, 112
      %v6158 = vpop.permute.xlu0 %6157
      %6159 = vrot.lane.b32.xlu0 %v1392, 112
      %v6160 = vpop.permute.xlu0 %6159
      %6161 = vrot.lane.b32.xlu0 %v1397, 112
      %v6162 = vpop.permute.xlu0 %6161
      %6163 = vrot.lane.b32.xlu0 %v1402, 112
      %v6164 = vpop.permute.xlu0 %6163
      %6165 = vrot.lane.b32.xlu0 %v1407, 112
      %v6166 = vpop.permute.xlu0 %6165
      %6167 = vrot.lane.b32.xlu0 %v1412, 112
      %v6168 = vpop.permute.xlu0 %6167
      %6169 = vrot.lane.b32.xlu0 %v1417, 112
      %v6170 = vpop.permute.xlu0 %6169
      %6171 = vrot.lane.b32.xlu0 %v1422, 112
      %v6172 = vpop.permute.xlu0 %6171
      %6173 = vrot.lane.b32.xlu0 %v1427, 112
      %v6174 = vpop.permute.xlu0 %6173
      %6175 = vrot.lane.b32.xlu0 %v1432, 112
      %v6176 = vpop.permute.xlu0 %6175
      %6177 = vrot.lane.b32.xlu0 %v1437, 112
      %v6178 = vpop.permute.xlu0 %6177
      %6179 = vrot.lane.b32.xlu0 %v1442, 112
      %v6180 = vpop.permute.xlu0 %6179
      %6181 = vrot.lane.b32.xlu0 %v1447, 112
      %v6182 = vpop.permute.xlu0 %6181
      %6183 = vrot.lane.b32.xlu0 %v1452, 112
      %v6184 = vpop.permute.xlu0 %6183
      %6185 = vrot.lane.b32.xlu0 %v1457, 112
      %v6186 = vpop.permute.xlu0 %6185
      %6187 = vrot.lane.b32.xlu0 %v1462, 112
      %v6188 = vpop.permute.xlu0 %6187
      %6189 = vrot.lane.b32.xlu0 %v1467, 112
      %v6190 = vpop.permute.xlu0 %6189
      %6191 = vrot.lane.b32.xlu0 %v1472, 112
      %v6192 = vpop.permute.xlu0 %6191
      %6193 = vrot.lane.b32.xlu0 %v1477, 112
      %v6194 = vpop.permute.xlu0 %6193
      %6195 = vrot.lane.b32.xlu0 %v1482, 112
      %v6196 = vpop.permute.xlu0 %6195
      %6197 = vrot.lane.b32.xlu0 %v1487, 112
      %v6198 = vpop.permute.xlu0 %6197
      %6199 = vrot.lane.b32.xlu0 %v1492, 112
      %v6200 = vpop.permute.xlu0 %6199
      %6201 = vrot.lane.b32.xlu0 %v1497, 112
      %v6202 = vpop.permute.xlu0 %6201
      %6203 = vrot.lane.b32.xlu0 %v1502, 112
      %v6204 = vpop.permute.xlu0 %6203
      %6205 = vrot.lane.b32.xlu0 %v1507, 112
      %v6206 = vpop.permute.xlu0 %6205
      %6207 = vrot.lane.b32.xlu0 %v1512, 112
      %v6208 = vpop.permute.xlu0 %6207
      %6209 = vrot.lane.b32.xlu0 %v1517, 112
      %v6210 = vpop.permute.xlu0 %6209
      %6211 = vrot.lane.b32.xlu0 %v1522, 112
      %v6212 = vpop.permute.xlu0 %6211
      %6213 = vrot.lane.b32.xlu0 %v1527, 112
      %v6214 = vpop.permute.xlu0 %6213
      %6215 = vrot.lane.b32.xlu0 %v1532, 112
      %v6216 = vpop.permute.xlu0 %6215
      %6217 = vrot.lane.b32.xlu0 %v1537, 112
      %v6218 = vpop.permute.xlu0 %6217
      %6219 = vrot.lane.b32.xlu0 %v1542, 112
      %v6220 = vpop.permute.xlu0 %6219
      %6221 = vrot.lane.b32.xlu0 %v1547, 112
      %v6222 = vpop.permute.xlu0 %6221
      %6223 = vrot.lane.b32.xlu0 %v1552, 112
      %v6224 = vpop.permute.xlu0 %6223
      %6225 = vrot.lane.b32.xlu0 %v1557, 112
      %v6226 = vpop.permute.xlu0 %6225
      %6227 = vrot.lane.b32.xlu0 %v1562, 112
      %v6228 = vpop.permute.xlu0 %6227
      %6229 = vrot.lane.b32.xlu0 %v1567, 112
      %v6230 = vpop.permute.xlu0 %6229
      %6231 = vrot.lane.b32.xlu0 %v1572, 112
      %v6232 = vpop.permute.xlu0 %6231
      %6233 = vrot.lane.b32.xlu0 %v1577, 112
      %v6234 = vpop.permute.xlu0 %6233
      %6235 = vrot.lane.b32.xlu0 %v1582, 112
      %v6236 = vpop.permute.xlu0 %6235
      %6237 = vrot.lane.b32.xlu0 %v1587, 112
      %v6238 = vpop.permute.xlu0 %6237
      %6239 = vrot.lane.b32.xlu0 %v1592, 112
      %v6240 = vpop.permute.xlu0 %6239
      %6241 = vrot.lane.b32.xlu0 %v1597, 112
      %v6242 = vpop.permute.xlu0 %6241
      %6243 = vrot.lane.b32.xlu0 %v1602, 112
      %v6244 = vpop.permute.xlu0 %6243
      %6245 = vrot.lane.b32.xlu0 %v1607, 112
      %v6246 = vpop.permute.xlu0 %6245
      %6247 = vrot.lane.b32.xlu0 %v1612, 112
      %v6248 = vpop.permute.xlu0 %6247
      %6249 = vrot.lane.b32.xlu0 %v1617, 112
      %v6250 = vpop.permute.xlu0 %6249
      %6251 = vrot.lane.b32.xlu0 %v1622, 112
      %v6252 = vpop.permute.xlu0 %6251
      %6253 = vrot.lane.b32.xlu0 %v1627, 112
      %v6254 = vpop.permute.xlu0 %6253
      %6255 = vrot.lane.b32.xlu0 %v1632, 112
      %v6256 = vpop.permute.xlu0 %6255
      %6257 = vrot.lane.b32.xlu0 %v1637, 112
      %v6258 = vpop.permute.xlu0 %6257
      %6259 = vrot.lane.b32.xlu0 %v1642, 112
      %v6260 = vpop.permute.xlu0 %6259
      %6261 = vrot.lane.b32.xlu0 %v1647, 112
      %v6262 = vpop.permute.xlu0 %6261
      %6263 = vrot.lane.b32.xlu0 %v1652, 112
      %v6264 = vpop.permute.xlu0 %6263
      %6265 = vrot.lane.b32.xlu0 %v1657, 112
      %v6266 = vpop.permute.xlu0 %6265
      %6267 = vrot.lane.b32.xlu0 %v1662, 112
      %v6268 = vpop.permute.xlu0 %6267
      %6269 = vrot.lane.b32.xlu0 %v1667, 112
      %v6270 = vpop.permute.xlu0 %6269
      %6271 = vrot.lane.b32.xlu0 %v1672, 112
      %v6272 = vpop.permute.xlu0 %6271
      %6273 = vrot.lane.b32.xlu0 %v1677, 112
      %v6274 = vpop.permute.xlu0 %6273
      %6275 = vrot.lane.b32.xlu0 %v1682, 112
      %v6276 = vpop.permute.xlu0 %6275
      %6277 = vrot.lane.b32.xlu0 %v1687, 112
      %v6278 = vpop.permute.xlu0 %6277
      %6279 = vrot.lane.b32.xlu0 %v1692, 112
      %v6280 = vpop.permute.xlu0 %6279
      %6281 = vrot.lane.b32.xlu0 %v1697, 112
      %v6282 = vpop.permute.xlu0 %6281
      %6283 = vrot.lane.b32.xlu0 %v1702, 112
      %v6284 = vpop.permute.xlu0 %6283
      %6285 = vrot.lane.b32.xlu0 %v1707, 112
      %v6286 = vpop.permute.xlu0 %6285
      %6287 = vrot.lane.b32.xlu0 %v1712, 112
      %v6288 = vpop.permute.xlu0 %6287
      %6289 = vrot.lane.b32.xlu0 %v1717, 112
      %v6290 = vpop.permute.xlu0 %6289
      %6291 = vrot.lane.b32.xlu0 %v1722, 112
      %v6292 = vpop.permute.xlu0 %6291
      %6293 = vrot.lane.b32.xlu0 %v1727, 112
      %v6294 = vpop.permute.xlu0 %6293
      %6295 = vrot.lane.b32.xlu0 %v1732, 112
      %v6296 = vpop.permute.xlu0 %6295
      %6297 = vrot.lane.b32.xlu0 %v1737, 112
      %v6298 = vpop.permute.xlu0 %6297
      %6299 = vrot.lane.b32.xlu0 %v1742, 112
      %v6300 = vpop.permute.xlu0 %6299
      %6301 = vrot.lane.b32.xlu0 %v1747, 112
      %v6302 = vpop.permute.xlu0 %6301
      %6303 = vrot.lane.b32.xlu0 %v1752, 112
      %v6304 = vpop.permute.xlu0 %6303
      %6305 = vrot.lane.b32.xlu0 %v1757, 112
      %v6306 = vpop.permute.xlu0 %6305
      %v6307 = vsel %vm2005, %v6116, 0
      %v6309 = vsel %vm2005, %v6118, 0
      %v6311 = vsel %vm2005, %v6120, 0
      %v6313 = vsel %vm2005, %v6122, 0
      %v6315 = vsel %vm2005, %v6124, 0
      %v6317 = vsel %vm2005, %v6126, 0
      %v6319 = vsel %vm2005, %v6128, 0
      %v6321 = vsel %vm2005, %v6130, 0
      %v6323 = vsel %vm2005, %v6132, 0
      %v6325 = vsel %vm2005, %v6134, 0
      %v6327 = vsel %vm2005, %v6136, 0
      %v6329 = vsel %vm2005, %v6138, 0
      %v6331 = vsel %vm2005, %v6140, 0
      %v6333 = vsel %vm2005, %v6142, 0
      %v6335 = vsel %vm2005, %v6144, 0
      %v6337 = vsel %vm2005, %v6146, 0
      %v6339 = vsel %vm2005, %v6148, 0
      %v6341 = vsel %vm2005, %v6150, 0
      %v6343 = vsel %vm2005, %v6152, 0
      %v6345 = vsel %vm2005, %v6154, 0
      %v6347 = vsel %vm2005, %v6156, 0
      %v6349 = vsel %vm2005, %v6158, 0
      %v6351 = vsel %vm2005, %v6160, 0
      %v6353 = vsel %vm2005, %v6162, 0
      %v6355 = vsel %vm2005, %v6164, 0
      %v6357 = vsel %vm2005, %v6166, 0
      %v6359 = vsel %vm2005, %v6168, 0
      %v6361 = vsel %vm2005, %v6170, 0
      %v6363 = vsel %vm2005, %v6172, 0
      %v6365 = vsel %vm2005, %v6174, 0
      %v6367 = vsel %vm2005, %v6176, 0
      %v6369 = vsel %vm2005, %v6178, 0
      %v6371 = vsel %vm2005, %v6180, 0
      %v6373 = vsel %vm2005, %v6182, 0
      %v6375 = vsel %vm2005, %v6184, 0
      %v6377 = vsel %vm2005, %v6186, 0
      %v6379 = vsel %vm2005, %v6188, 0
      %v6381 = vsel %vm2005, %v6190, 0
      %v6383 = vsel %vm2005, %v6192, 0
      %v6385 = vsel %vm2005, %v6194, 0
      %v6387 = vsel %vm2005, %v6196, 0
      %v6389 = vsel %vm2005, %v6198, 0
      %v6391 = vsel %vm2005, %v6200, 0
      %v6393 = vsel %vm2005, %v6202, 0
      %v6395 = vsel %vm2005, %v6204, 0
      %v6397 = vsel %vm2005, %v6206, 0
      %v6399 = vsel %vm2005, %v6208, 0
      %v6401 = vsel %vm2005, %v6210, 0
      %v6403 = vsel %vm2005, %v6212, 0
      %v6405 = vsel %vm2005, %v6214, 0
      %v6407 = vsel %vm2005, %v6216, 0
      %v6409 = vsel %vm2005, %v6218, 0
      %v6411 = vsel %vm2005, %v6220, 0
      %v6413 = vsel %vm2005, %v6222, 0
      %v6415 = vsel %vm2005, %v6224, 0
      %v6417 = vsel %vm2005, %v6226, 0
      %v6419 = vsel %vm2005, %v6228, 0
      %v6421 = vsel %vm2005, %v6230, 0
      %v6423 = vsel %vm2005, %v6232, 0
      %v6425 = vsel %vm2005, %v6234, 0
      %v6427 = vsel %vm2005, %v6236, 0
      %v6429 = vsel %vm2005, %v6238, 0
      %v6431 = vsel %vm2005, %v6240, 0
      %v6433 = vsel %vm2005, %v6242, 0
      %v6435 = vsel %vm2005, %v6244, 0
      %v6437 = vsel %vm2005, %v6246, 0
      %v6439 = vsel %vm2005, %v6248, 0
      %v6441 = vsel %vm2005, %v6250, 0
      %v6443 = vsel %vm2005, %v6252, 0
      %v6445 = vsel %vm2005, %v6254, 0
      %v6447 = vsel %vm2005, %v6256, 0
      %v6449 = vsel %vm2005, %v6258, 0
      %v6451 = vsel %vm2005, %v6260, 0
      %v6453 = vsel %vm2005, %v6262, 0
      %v6455 = vsel %vm2005, %v6264, 0
      %v6457 = vsel %vm2005, %v6266, 0
      %v6459 = vsel %vm2005, %v6268, 0
      %v6461 = vsel %vm2005, %v6270, 0
      %v6463 = vsel %vm2005, %v6272, 0
      %v6465 = vsel %vm2005, %v6274, 0
      %v6467 = vsel %vm2005, %v6276, 0
      %v6469 = vsel %vm2005, %v6278, 0
      %v6471 = vsel %vm2005, %v6280, 0
      %v6473 = vsel %vm2005, %v6282, 0
      %v6475 = vsel %vm2005, %v6284, 0
      %v6477 = vsel %vm2005, %v6286, 0
      %v6479 = vsel %vm2005, %v6288, 0
      %v6481 = vsel %vm2005, %v6290, 0
      %v6483 = vsel %vm2005, %v6292, 0
      %v6485 = vsel %vm2005, %v6294, 0
      %v6487 = vsel %vm2005, %v6296, 0
      %v6489 = vsel %vm2005, %v6298, 0
      %v6491 = vsel %vm2005, %v6300, 0
      %v6493 = vsel %vm2005, %v6302, 0
      %v6495 = vsel %vm2005, %v6304, 0
      %v6497 = vsel %vm2005, %v6306, 0
      %6499 = vmatprep.subr.mxu0 0.0
      %6500 = vmatpush1.xpose.msra.mxu0 %v6369
      %6501 = vmatprep.subr.mxu0 0.0
      %6502 = vmatpush1.xpose.msra.mxu0 %v6367
      %6503 = vmatprep.subr.mxu0 0.0
      %6504 = vmatpush1.xpose.msra.mxu0 %v6365
      %6505 = vmatprep.subr.mxu0 0.0
      %6506 = vmatpush1.xpose.msra.mxu0 %v6363
      %6507 = vmatprep.subr.mxu0 0.0
      %6508 = vmatpush1.xpose.msra.mxu0 %v6361
      %6509 = vmatprep.subr.mxu0 0.0
      %6510 = vmatpush1.xpose.msra.mxu0 %v6359
      %6511 = vmatprep.subr.mxu0 0.0
      %6512 = vmatpush1.xpose.msra.mxu0 %v6357
      %6513 = vmatprep.subr.mxu0 0.0
      %6514 = vmatpush1.xpose.msra.mxu0 %v6355
      %6515 = vmatprep.subr.mxu0 0.0
      %6516 = vmatpush1.xpose.msra.mxu0 %v6353
      %6517 = vmatprep.subr.mxu0 0.0
      %6518 = vmatpush1.xpose.msra.mxu0 %v6351
      %6519 = vmatprep.subr.mxu0 0.0
      %6520 = vmatpush1.xpose.msra.mxu0 %v6349
      %6521 = vmatprep.subr.mxu0 0.0
      %6522 = vmatpush1.xpose.msra.mxu0 %v6347
      %6523 = vmatprep.subr.mxu0 0.0
      %6524 = vmatpush1.xpose.msra.mxu0 %v6345
      %6525 = vmatprep.subr.mxu0 0.0
      %6526 = vmatpush1.xpose.msra.mxu0 %v6343
      %6527 = vmatprep.subr.mxu0 0.0
      %6528 = vmatpush1.xpose.msra.mxu0 %v6341
      %6529 = vmatprep.subr.mxu0 0.0
      %6530 = vmatpush1.xpose.msra.mxu0 %v6339
      %6531 = vmatprep.subr.mxu0 0.0
      %6532 = vmatpush2.xpose.msra.mxu0 %v6401
      %6533 = vmatprep.subr.mxu0 0.0
      %6534 = vmatpush2.xpose.msra.mxu0 %v6399
      %6535 = vmatprep.subr.mxu0 0.0
      %6536 = vmatpush2.xpose.msra.mxu0 %v6397
      %6537 = vmatprep.subr.mxu0 0.0
      %6538 = vmatpush2.xpose.msra.mxu0 %v6395
      %6539 = vmatprep.subr.mxu0 0.0
      %6540 = vmatpush2.xpose.msra.mxu0 %v6393
      %6541 = vmatprep.subr.mxu0 0.0
      %6542 = vmatpush2.xpose.msra.mxu0 %v6391
      %6543 = vmatprep.subr.mxu0 0.0
      %6544 = vmatpush2.xpose.msra.mxu0 %v6389
      %6545 = vmatprep.subr.mxu0 0.0
      %6546 = vmatpush2.xpose.msra.mxu0 %v6387
      %6547 = vmatprep.subr.mxu0 0.0
      %6548 = vmatpush2.xpose.msra.mxu0 %v6385
      %6549 = vmatprep.subr.mxu0 0.0
      %6550 = vmatpush2.xpose.msra.mxu0 %v6383
      %6551 = vmatprep.subr.mxu0 0.0
      %6552 = vmatpush2.xpose.msra.mxu0 %v6381
      %6553 = vmatprep.subr.mxu0 0.0
      %6554 = vmatpush2.xpose.msra.mxu0 %v6379
      %6555 = vmatprep.subr.mxu0 0.0
      %6556 = vmatpush2.xpose.msra.mxu0 %v6377
      %6557 = vmatprep.subr.mxu0 0.0
      %6558 = vmatpush2.xpose.msra.mxu0 %v6375
      %6559 = vmatprep.subr.mxu0 0.0
      %6560 = vmatpush2.xpose.msra.mxu0 %v6373
      %6561 = vmatprep.subr.mxu0 0.0
      %6562 = vmatpush2.xpose.msra.mxu0 %v6371
      %6563 = vmatprep.mubr.f32.mxu0 0.0
      %6564 = vmatmul.mubr.f32.gmra.mxu0 %v6307
      %v6565 = vpop.f32.mrf.mxu0
      %v6566 = vadd.f32 %v1925, %v6565
      %v6567 = vpop.f32.mrf.mxu0
      %v6568 = vadd.f32 %v1926, %v6567
      %6569 = vmatprep.mubr.f32.mxu0 0.0
      %6570 = vmatmul.mubr.f32.gmra.mxu0 %v6309
      %v6571 = vpop.f32.mrf.mxu0
      %v6572 = vadd.f32 %v1930, %v6571
      %v6573 = vpop.f32.mrf.mxu0
      %v6574 = vadd.f32 %v1931, %v6573
      %6575 = vmatprep.mubr.f32.mxu0 0.0
      %6576 = vmatmul.mubr.f32.gmra.mxu0 %v6311
      %v6577 = vpop.f32.mrf.mxu0
      %v6578 = vadd.f32 %v1935, %v6577
      %v6579 = vpop.f32.mrf.mxu0
      %v6580 = vadd.f32 %v1936, %v6579
      %6581 = vmatprep.mubr.f32.mxu0 0.0
      %6582 = vmatmul.mubr.f32.gmra.mxu0 %v6313
      %v6583 = vpop.f32.mrf.mxu0
      %v6584 = vadd.f32 %v1940, %v6583
      %v6585 = vpop.f32.mrf.mxu0
      %v6586 = vadd.f32 %v1941, %v6585
      %6587 = vmatprep.mubr.f32.mxu0 0.0
      %6588 = vmatmul.mubr.f32.gmra.mxu0 %v6315
      %v6589 = vpop.f32.mrf.mxu0
      %v6590 = vadd.f32 %v1945, %v6589
      %v6591 = vpop.f32.mrf.mxu0
      %v6592 = vadd.f32 %v1946, %v6591
      %6593 = vmatprep.mubr.f32.mxu0 0.0
      %6594 = vmatmul.mubr.f32.gmra.mxu0 %v6317
      %v6595 = vpop.f32.mrf.mxu0
      %v6596 = vadd.f32 %v1950, %v6595
      %v6597 = vpop.f32.mrf.mxu0
      %v6598 = vadd.f32 %v1951, %v6597
      %6599 = vmatprep.mubr.f32.mxu0 0.0
      %6600 = vmatmul.mubr.f32.gmra.mxu0 %v6319
      %v6601 = vpop.f32.mrf.mxu0
      %v6602 = vadd.f32 %v1955, %v6601
      %v6603 = vpop.f32.mrf.mxu0
      %v6604 = vadd.f32 %v1956, %v6603
      %6605 = vmatprep.mubr.f32.mxu0 0.0
      %6606 = vmatmul.mubr.f32.gmra.mxu0 %v6321
      %v6607 = vpop.f32.mrf.mxu0
      %v6608 = vadd.f32 %v1960, %v6607
      %v6609 = vpop.f32.mrf.mxu0
      %v6610 = vadd.f32 %v1961, %v6609
      %6611 = vmatprep.mubr.f32.mxu0 0.0
      %6612 = vmatmul.mubr.f32.gmra.mxu0 %v6323
      %v6613 = vpop.f32.mrf.mxu0
      %v6614 = vadd.f32 %v1965, %v6613
      %v6615 = vpop.f32.mrf.mxu0
      %v6616 = vadd.f32 %v1966, %v6615
      %6617 = vmatprep.mubr.f32.mxu0 0.0
      %6618 = vmatmul.mubr.f32.gmra.mxu0 %v6325
      %v6619 = vpop.f32.mrf.mxu0
      %v6620 = vadd.f32 %v1970, %v6619
      %v6621 = vpop.f32.mrf.mxu0
      %v6622 = vadd.f32 %v1971, %v6621
      %6623 = vmatprep.mubr.f32.mxu0 0.0
      %6624 = vmatmul.mubr.f32.gmra.mxu0 %v6327
      %v6625 = vpop.f32.mrf.mxu0
      %v6626 = vadd.f32 %v1975, %v6625
      %v6627 = vpop.f32.mrf.mxu0
      %v6628 = vadd.f32 %v1976, %v6627
      %6629 = vmatprep.mubr.f32.mxu0 0.0
      %6630 = vmatmul.mubr.f32.gmra.mxu0 %v6329
      %v6631 = vpop.f32.mrf.mxu0
      %v6632 = vadd.f32 %v1980, %v6631
      %v6633 = vpop.f32.mrf.mxu0
      %v6634 = vadd.f32 %v1981, %v6633
      %6635 = vmatprep.mubr.f32.mxu0 0.0
      %6636 = vmatmul.mubr.f32.gmra.mxu0 %v6331
      %v6637 = vpop.f32.mrf.mxu0
      %v6638 = vadd.f32 %v1985, %v6637
      %v6639 = vpop.f32.mrf.mxu0
      %v6640 = vadd.f32 %v1986, %v6639
      %6641 = vmatprep.mubr.f32.mxu0 0.0
      %6642 = vmatmul.mubr.f32.gmra.mxu0 %v6333
      %v6643 = vpop.f32.mrf.mxu0
      %v6644 = vadd.f32 %v1990, %v6643
      %v6645 = vpop.f32.mrf.mxu0
      %v6646 = vadd.f32 %v1991, %v6645
      %6647 = vmatprep.mubr.f32.mxu0 0.0
      %6648 = vmatmul.mubr.f32.gmra.mxu0 %v6335
      %v6649 = vpop.f32.mrf.mxu0
      %v6650 = vadd.f32 %v1995, %v6649
      %v6651 = vpop.f32.mrf.mxu0
      %v6652 = vadd.f32 %v1996, %v6651
      %6653 = vmatprep.mubr.f32.mxu0 0.0
      %6654 = vmatmul.mubr.f32.gmra.mxu0 %v6337
      %v6655 = vpop.f32.mrf.mxu0
      %v6656 = vadd.f32 %v2000, %v6655
      %v6657 = vpop.f32.mrf.mxu0
      %v6658 = vadd.f32 %v2001, %v6657
      %6659 = vdwg.mxu0
      %6660 = vmatprep.subr.mxu0 0.0
      %6661 = vmatpush1.xpose.msra.mxu0 %v6433
      %6662 = vmatprep.subr.mxu0 0.0
      %6663 = vmatpush1.xpose.msra.mxu0 %v6431
      %6664 = vmatprep.subr.mxu0 0.0
      %6665 = vmatpush1.xpose.msra.mxu0 %v6429
      %6666 = vmatprep.subr.mxu0 0.0
      %6667 = vmatpush1.xpose.msra.mxu0 %v6427
      %6668 = vmatprep.subr.mxu0 0.0
      %6669 = vmatpush1.xpose.msra.mxu0 %v6425
      %6670 = vmatprep.subr.mxu0 0.0
      %6671 = vmatpush1.xpose.msra.mxu0 %v6423
      %6672 = vmatprep.subr.mxu0 0.0
      %6673 = vmatpush1.xpose.msra.mxu0 %v6421
      %6674 = vmatprep.subr.mxu0 0.0
      %6675 = vmatpush1.xpose.msra.mxu0 %v6419
      %6676 = vmatprep.subr.mxu0 0.0
      %6677 = vmatpush1.xpose.msra.mxu0 %v6417
      %6678 = vmatprep.subr.mxu0 0.0
      %6679 = vmatpush1.xpose.msra.mxu0 %v6415
      %6680 = vmatprep.subr.mxu0 0.0
      %6681 = vmatpush1.xpose.msra.mxu0 %v6413
      %6682 = vmatprep.subr.mxu0 0.0
      %6683 = vmatpush1.xpose.msra.mxu0 %v6411
      %6684 = vmatprep.subr.mxu0 0.0
      %6685 = vmatpush1.xpose.msra.mxu0 %v6409
      %6686 = vmatprep.subr.mxu0 0.0
      %6687 = vmatpush1.xpose.msra.mxu0 %v6407
      %6688 = vmatprep.subr.mxu0 0.0
      %6689 = vmatpush1.xpose.msra.mxu0 %v6405
      %6690 = vmatprep.subr.mxu0 0.0
      %6691 = vmatpush1.xpose.msra.mxu0 %v6403
      %6692 = vmatprep.subr.mxu0 0.0
      %6693 = vmatpush2.xpose.msra.mxu0 %v6465
      %6694 = vmatprep.subr.mxu0 0.0
      %6695 = vmatpush2.xpose.msra.mxu0 %v6463
      %6696 = vmatprep.subr.mxu0 0.0
      %6697 = vmatpush2.xpose.msra.mxu0 %v6461
      %6698 = vmatprep.subr.mxu0 0.0
      %6699 = vmatpush2.xpose.msra.mxu0 %v6459
      %6700 = vmatprep.subr.mxu0 0.0
      %6701 = vmatpush2.xpose.msra.mxu0 %v6457
      %6702 = vmatprep.subr.mxu0 0.0
      %6703 = vmatpush2.xpose.msra.mxu0 %v6455
      %6704 = vmatprep.subr.mxu0 0.0
      %6705 = vmatpush2.xpose.msra.mxu0 %v6453
      %6706 = vmatprep.subr.mxu0 0.0
      %6707 = vmatpush2.xpose.msra.mxu0 %v6451
      %6708 = vmatprep.subr.mxu0 0.0
      %6709 = vmatpush2.xpose.msra.mxu0 %v6449
      %6710 = vmatprep.subr.mxu0 0.0
      %6711 = vmatpush2.xpose.msra.mxu0 %v6447
      %6712 = vmatprep.subr.mxu0 0.0
      %6713 = vmatpush2.xpose.msra.mxu0 %v6445
      %6714 = vmatprep.subr.mxu0 0.0
      %6715 = vmatpush2.xpose.msra.mxu0 %v6443
      %6716 = vmatprep.subr.mxu0 0.0
      %6717 = vmatpush2.xpose.msra.mxu0 %v6441
      %6718 = vmatprep.subr.mxu0 0.0
      %6719 = vmatpush2.xpose.msra.mxu0 %v6439
      %6720 = vmatprep.subr.mxu0 0.0
      %6721 = vmatpush2.xpose.msra.mxu0 %v6437
      %6722 = vmatprep.subr.mxu0 0.0
      %6723 = vmatpush2.xpose.msra.mxu0 %v6435
      %6724 = vmatprep.mubr.f32.mxu0 0.0
      %6725 = vmatmul.mubr.f32.gmra.mxu0 %v6307
      %v6726 = vpop.f32.mrf.mxu0
      %v6727 = vadd.f32 %v1927, %v6726
      %v6728 = vpop.f32.mrf.mxu0
      %v6729 = vadd.f32 %v1928, %v6728
      %6730 = vmatprep.mubr.f32.mxu0 0.0
      %6731 = vmatmul.mubr.f32.gmra.mxu0 %v6309
      %v6732 = vpop.f32.mrf.mxu0
      %v6733 = vadd.f32 %v1932, %v6732
      %v6734 = vpop.f32.mrf.mxu0
      %v6735 = vadd.f32 %v1933, %v6734
      %6736 = vmatprep.mubr.f32.mxu0 0.0
      %6737 = vmatmul.mubr.f32.gmra.mxu0 %v6311
      %v6738 = vpop.f32.mrf.mxu0
      %v6739 = vadd.f32 %v1937, %v6738
      %v6740 = vpop.f32.mrf.mxu0
      %v6741 = vadd.f32 %v1938, %v6740
      %6742 = vmatprep.mubr.f32.mxu0 0.0
      %6743 = vmatmul.mubr.f32.gmra.mxu0 %v6313
      %v6744 = vpop.f32.mrf.mxu0
      %v6745 = vadd.f32 %v1942, %v6744
      %v6746 = vpop.f32.mrf.mxu0
      %v6747 = vadd.f32 %v1943, %v6746
      %6748 = vmatprep.mubr.f32.mxu0 0.0
      %6749 = vmatmul.mubr.f32.gmra.mxu0 %v6315
      %v6750 = vpop.f32.mrf.mxu0
      %v6751 = vadd.f32 %v1947, %v6750
      %v6752 = vpop.f32.mrf.mxu0
      %v6753 = vadd.f32 %v1948, %v6752
      %6754 = vmatprep.mubr.f32.mxu0 0.0
      %6755 = vmatmul.mubr.f32.gmra.mxu0 %v6317
      %v6756 = vpop.f32.mrf.mxu0
      %v6757 = vadd.f32 %v1952, %v6756
      %v6758 = vpop.f32.mrf.mxu0
      %v6759 = vadd.f32 %v1953, %v6758
      %6760 = vmatprep.mubr.f32.mxu0 0.0
      %6761 = vmatmul.mubr.f32.gmra.mxu0 %v6319
      %v6762 = vpop.f32.mrf.mxu0
      %v6763 = vadd.f32 %v1957, %v6762
      %v6764 = vpop.f32.mrf.mxu0
      %v6765 = vadd.f32 %v1958, %v6764
      %6766 = vmatprep.mubr.f32.mxu0 0.0
      %6767 = vmatmul.mubr.f32.gmra.mxu0 %v6321
      %v6768 = vpop.f32.mrf.mxu0
      %v6769 = vadd.f32 %v1962, %v6768
      %v6770 = vpop.f32.mrf.mxu0
      %v6771 = vadd.f32 %v1963, %v6770
      %6772 = vmatprep.mubr.f32.mxu0 0.0
      %6773 = vmatmul.mubr.f32.gmra.mxu0 %v6323
      %v6774 = vpop.f32.mrf.mxu0
      %v6775 = vadd.f32 %v1967, %v6774
      %v6776 = vpop.f32.mrf.mxu0
      %v6777 = vadd.f32 %v1968, %v6776
      %6778 = vmatprep.mubr.f32.mxu0 0.0
      %6779 = vmatmul.mubr.f32.gmra.mxu0 %v6325
      %v6780 = vpop.f32.mrf.mxu0
      %v6781 = vadd.f32 %v1972, %v6780
      %v6782 = vpop.f32.mrf.mxu0
      %v6783 = vadd.f32 %v1973, %v6782
      %6784 = vmatprep.mubr.f32.mxu0 0.0
      %6785 = vmatmul.mubr.f32.gmra.mxu0 %v6327
      %v6786 = vpop.f32.mrf.mxu0
      %v6787 = vadd.f32 %v1977, %v6786
      %v6788 = vpop.f32.mrf.mxu0
      %v6789 = vadd.f32 %v1978, %v6788
      %6790 = vmatprep.mubr.f32.mxu0 0.0
      %6791 = vmatmul.mubr.f32.gmra.mxu0 %v6329
      %v6792 = vpop.f32.mrf.mxu0
      %v6793 = vadd.f32 %v1982, %v6792
      %v6794 = vpop.f32.mrf.mxu0
      %v6795 = vadd.f32 %v1983, %v6794
      %6796 = vmatprep.mubr.f32.mxu0 0.0
      %6797 = vmatmul.mubr.f32.gmra.mxu0 %v6331
      %v6798 = vpop.f32.mrf.mxu0
      %v6799 = vadd.f32 %v1987, %v6798
      %v6800 = vpop.f32.mrf.mxu0
      %v6801 = vadd.f32 %v1988, %v6800
      %6802 = vmatprep.mubr.f32.mxu0 0.0
      %6803 = vmatmul.mubr.f32.gmra.mxu0 %v6333
      %v6804 = vpop.f32.mrf.mxu0
      %v6805 = vadd.f32 %v1992, %v6804
      %v6806 = vpop.f32.mrf.mxu0
      %v6807 = vadd.f32 %v1993, %v6806
      %6808 = vmatprep.mubr.f32.mxu0 0.0
      %6809 = vmatmul.mubr.f32.gmra.mxu0 %v6335
      %v6810 = vpop.f32.mrf.mxu0
      %v6811 = vadd.f32 %v1997, %v6810
      %v6812 = vpop.f32.mrf.mxu0
      %v6813 = vadd.f32 %v1998, %v6812
      %6814 = vmatprep.mubr.f32.mxu0 0.0
      %6815 = vmatmul.mubr.f32.gmra.mxu0 %v6337
      %v6816 = vpop.f32.mrf.mxu0
      %v6817 = vadd.f32 %v2002, %v6816
      %v6818 = vpop.f32.mrf.mxu0
      %v6819 = vadd.f32 %v2003, %v6818
      %6820 = vdwg.mxu0
      %6821 = vmatprep.subr.mxu0 0.0
      %6822 = vmatpush1.xpose.msra.mxu0 %v6497
      %6823 = vmatprep.subr.mxu0 0.0
      %6824 = vmatpush1.xpose.msra.mxu0 %v6495
      %6825 = vmatprep.subr.mxu0 0.0
      %6826 = vmatpush1.xpose.msra.mxu0 %v6493
      %6827 = vmatprep.subr.mxu0 0.0
      %6828 = vmatpush1.xpose.msra.mxu0 %v6491
      %6829 = vmatprep.subr.mxu0 0.0
      %6830 = vmatpush1.xpose.msra.mxu0 %v6489
      %6831 = vmatprep.subr.mxu0 0.0
      %6832 = vmatpush1.xpose.msra.mxu0 %v6487
      %6833 = vmatprep.subr.mxu0 0.0
      %6834 = vmatpush1.xpose.msra.mxu0 %v6485
      %6835 = vmatprep.subr.mxu0 0.0
      %6836 = vmatpush1.xpose.msra.mxu0 %v6483
      %6837 = vmatprep.subr.mxu0 0.0
      %6838 = vmatpush1.xpose.msra.mxu0 %v6481
      %6839 = vmatprep.subr.mxu0 0.0
      %6840 = vmatpush1.xpose.msra.mxu0 %v6479
      %6841 = vmatprep.subr.mxu0 0.0
      %6842 = vmatpush1.xpose.msra.mxu0 %v6477
      %6843 = vmatprep.subr.mxu0 0.0
      %6844 = vmatpush1.xpose.msra.mxu0 %v6475
      %6845 = vmatprep.subr.mxu0 0.0
      %6846 = vmatpush1.xpose.msra.mxu0 %v6473
      %6847 = vmatprep.subr.mxu0 0.0
      %6848 = vmatpush1.xpose.msra.mxu0 %v6471
      %6849 = vmatprep.subr.mxu0 0.0
      %6850 = vmatpush1.xpose.msra.mxu0 %v6469
      %6851 = vmatprep.subr.mxu0 0.0
      %6852 = vmatpush1.xpose.msra.mxu0 %v6467
      %6853 = vmatprep.subr.mxu0 0.0
      %6854 = vmatpush2.xpose.msra.mxu0 0.0
      %6855 = vmatprep.subr.mxu0 0.0
      %6856 = vmatpush2.xpose.msra.mxu0 0.0
      %6857 = vmatprep.subr.mxu0 0.0
      %6858 = vmatpush2.xpose.msra.mxu0 0.0
      %6859 = vmatprep.subr.mxu0 0.0
      %6860 = vmatpush2.xpose.msra.mxu0 0.0
      %6861 = vmatprep.subr.mxu0 0.0
      %6862 = vmatpush2.xpose.msra.mxu0 0.0
      %6863 = vmatprep.subr.mxu0 0.0
      %6864 = vmatpush2.xpose.msra.mxu0 0.0
      %6865 = vmatprep.subr.mxu0 0.0
      %6866 = vmatpush2.xpose.msra.mxu0 0.0
      %6867 = vmatprep.subr.mxu0 0.0
      %6868 = vmatpush2.xpose.msra.mxu0 0.0
      %6869 = vmatprep.subr.mxu0 0.0
      %6870 = vmatpush2.xpose.msra.mxu0 0.0
      %6871 = vmatprep.subr.mxu0 0.0
      %6872 = vmatpush2.xpose.msra.mxu0 0.0
      %6873 = vmatprep.subr.mxu0 0.0
      %6874 = vmatpush2.xpose.msra.mxu0 0.0
      %6875 = vmatprep.subr.mxu0 0.0
      %6876 = vmatpush2.xpose.msra.mxu0 0.0
      %6877 = vmatprep.subr.mxu0 0.0
      %6878 = vmatpush2.xpose.msra.mxu0 0.0
      %6879 = vmatprep.subr.mxu0 0.0
      %6880 = vmatpush2.xpose.msra.mxu0 0.0
      %6881 = vmatprep.subr.mxu0 0.0
      %6882 = vmatpush2.xpose.msra.mxu0 0.0
      %6883 = vmatprep.subr.mxu0 0.0
      %6884 = vmatpush2.xpose.msra.mxu0 0.0
      %6885 = vmatprep.mubr.f32.mxu0 0.0
      %6886 = vmatmul.mubr.f32.gmra.mxu0 %v6307
      %v6887 = vpop.f32.mrf.mxu0
      %v6888 = vadd.f32 %v1929, %v6887
      %v6889 = vpop.f32.mrf.mxu0
      %6890 = vmatprep.mubr.f32.mxu0 0.0
      %6891 = vmatmul.mubr.f32.gmra.mxu0 %v6309
      %v6892 = vpop.f32.mrf.mxu0
      %v6893 = vadd.f32 %v1934, %v6892
      %v6894 = vpop.f32.mrf.mxu0
      %6895 = vmatprep.mubr.f32.mxu0 0.0
      %6896 = vmatmul.mubr.f32.gmra.mxu0 %v6311
      %v6897 = vpop.f32.mrf.mxu0
      %v6898 = vadd.f32 %v1939, %v6897
      %v6899 = vpop.f32.mrf.mxu0
      %6900 = vmatprep.mubr.f32.mxu0 0.0
      %6901 = vmatmul.mubr.f32.gmra.mxu0 %v6313
      %v6902 = vpop.f32.mrf.mxu0
      %v6903 = vadd.f32 %v1944, %v6902
      %v6904 = vpop.f32.mrf.mxu0
      %6905 = vmatprep.mubr.f32.mxu0 0.0
      %6906 = vmatmul.mubr.f32.gmra.mxu0 %v6315
      %v6907 = vpop.f32.mrf.mxu0
      %v6908 = vadd.f32 %v1949, %v6907
      %v6909 = vpop.f32.mrf.mxu0
      %6910 = vmatprep.mubr.f32.mxu0 0.0
      %6911 = vmatmul.mubr.f32.gmra.mxu0 %v6317
      %v6912 = vpop.f32.mrf.mxu0
      %v6913 = vadd.f32 %v1954, %v6912
      %v6914 = vpop.f32.mrf.mxu0
      %6915 = vmatprep.mubr.f32.mxu0 0.0
      %6916 = vmatmul.mubr.f32.gmra.mxu0 %v6319
      %v6917 = vpop.f32.mrf.mxu0
      %v6918 = vadd.f32 %v1959, %v6917
      %v6919 = vpop.f32.mrf.mxu0
      %6920 = vmatprep.mubr.f32.mxu0 0.0
      %6921 = vmatmul.mubr.f32.gmra.mxu0 %v6321
      %v6922 = vpop.f32.mrf.mxu0
      %v6923 = vadd.f32 %v1964, %v6922
      %v6924 = vpop.f32.mrf.mxu0
      %6925 = vmatprep.mubr.f32.mxu0 0.0
      %6926 = vmatmul.mubr.f32.gmra.mxu0 %v6323
      %v6927 = vpop.f32.mrf.mxu0
      %v6928 = vadd.f32 %v1969, %v6927
      %v6929 = vpop.f32.mrf.mxu0
      %6930 = vmatprep.mubr.f32.mxu0 0.0
      %6931 = vmatmul.mubr.f32.gmra.mxu0 %v6325
      %v6932 = vpop.f32.mrf.mxu0
      %v6933 = vadd.f32 %v1974, %v6932
      %v6934 = vpop.f32.mrf.mxu0
      %6935 = vmatprep.mubr.f32.mxu0 0.0
      %6936 = vmatmul.mubr.f32.gmra.mxu0 %v6327
      %v6937 = vpop.f32.mrf.mxu0
      %v6938 = vadd.f32 %v1979, %v6937
      %v6939 = vpop.f32.mrf.mxu0
      %6940 = vmatprep.mubr.f32.mxu0 0.0
      %6941 = vmatmul.mubr.f32.gmra.mxu0 %v6329
      %v6942 = vpop.f32.mrf.mxu0
      %v6943 = vadd.f32 %v1984, %v6942
      %v6944 = vpop.f32.mrf.mxu0
      %6945 = vmatprep.mubr.f32.mxu0 0.0
      %6946 = vmatmul.mubr.f32.gmra.mxu0 %v6331
      %v6947 = vpop.f32.mrf.mxu0
      %v6948 = vadd.f32 %v1989, %v6947
      %v6949 = vpop.f32.mrf.mxu0
      %6950 = vmatprep.mubr.f32.mxu0 0.0
      %6951 = vmatmul.mubr.f32.gmra.mxu0 %v6333
      %v6952 = vpop.f32.mrf.mxu0
      %v6953 = vadd.f32 %v1994, %v6952
      %v6954 = vpop.f32.mrf.mxu0
      %6955 = vmatprep.mubr.f32.mxu0 0.0
      %6956 = vmatmul.mubr.f32.gmra.mxu0 %v6335
      %v6957 = vpop.f32.mrf.mxu0
      %v6958 = vadd.f32 %v1999, %v6957
      %v6959 = vpop.f32.mrf.mxu0
      %6960 = vmatprep.mubr.f32.mxu0 0.0
      %6961 = vmatmul.mubr.f32.gmra.mxu0 %v6337
      %v6962 = vpop.f32.mrf.mxu0
      %v6963 = vadd.f32 %v2004, %v6962
      %v6964 = vpop.f32.mrf.mxu0
      %6965 = vdwg.mxu0
      %v6966 = vmax.f32 %v6566, %v6568
      %v6967 = vmax.f32 %v6966, %v6727
      %v6968 = vmax.f32 %v6967, %v6729
      %v6969 = vmax.f32 %v6968, %v6888
      %6970 = vmax.xlane.f32.xlu0 %v6969
      %v6971 = vpop.xlane.xlu0 %6970
      %v6972 = vmax.f32 %v6572, %v6574
      %v6973 = vmax.f32 %v6972, %v6733
      %v6974 = vmax.f32 %v6973, %v6735
      %v6975 = vmax.f32 %v6974, %v6893
      %6976 = vmax.xlane.f32.xlu0 %v6975
      %v6977 = vpop.xlane.xlu0 %6976
      %v6978 = vmax.f32 %v6578, %v6580
      %v6979 = vmax.f32 %v6978, %v6739
      %v6980 = vmax.f32 %v6979, %v6741
      %v6981 = vmax.f32 %v6980, %v6898
      %6982 = vmax.xlane.f32.xlu0 %v6981
      %v6983 = vpop.xlane.xlu0 %6982
      %v6984 = vmax.f32 %v6584, %v6586
      %v6985 = vmax.f32 %v6984, %v6745
      %v6986 = vmax.f32 %v6985, %v6747
      %v6987 = vmax.f32 %v6986, %v6903
      %6988 = vmax.xlane.f32.xlu0 %v6987
      %v6989 = vpop.xlane.xlu0 %6988
      %v6990 = vmax.f32 %v6590, %v6592
      %v6991 = vmax.f32 %v6990, %v6751
      %v6992 = vmax.f32 %v6991, %v6753
      %v6993 = vmax.f32 %v6992, %v6908
      %6994 = vmax.xlane.f32.xlu0 %v6993
      %v6995 = vpop.xlane.xlu0 %6994
      %v6996 = vmax.f32 %v6596, %v6598
      %v6997 = vmax.f32 %v6996, %v6757
      %v6998 = vmax.f32 %v6997, %v6759
      %v6999 = vmax.f32 %v6998, %v6913
      %7000 = vmax.xlane.f32.xlu0 %v6999
      %v7001 = vpop.xlane.xlu0 %7000
      %v7002 = vmax.f32 %v6602, %v6604
      %v7003 = vmax.f32 %v7002, %v6763
      %v7004 = vmax.f32 %v7003, %v6765
      %v7005 = vmax.f32 %v7004, %v6918
      %7006 = vmax.xlane.f32.xlu0 %v7005
      %v7007 = vpop.xlane.xlu0 %7006
      %v7008 = vmax.f32 %v6608, %v6610
      %v7009 = vmax.f32 %v7008, %v6769
      %v7010 = vmax.f32 %v7009, %v6771
      %v7011 = vmax.f32 %v7010, %v6923
      %7012 = vmax.xlane.f32.xlu0 %v7011
      %v7013 = vpop.xlane.xlu0 %7012
      %v7014 = vmax.f32 %v6614, %v6616
      %v7015 = vmax.f32 %v7014, %v6775
      %v7016 = vmax.f32 %v7015, %v6777
      %v7017 = vmax.f32 %v7016, %v6928
      %7018 = vmax.xlane.f32.xlu0 %v7017
      %v7019 = vpop.xlane.xlu0 %7018
      %v7020 = vmax.f32 %v6620, %v6622
      %v7021 = vmax.f32 %v7020, %v6781
      %v7022 = vmax.f32 %v7021, %v6783
      %v7023 = vmax.f32 %v7022, %v6933
      %7024 = vmax.xlane.f32.xlu0 %v7023
      %v7025 = vpop.xlane.xlu0 %7024
      %v7026 = vmax.f32 %v6626, %v6628
      %v7027 = vmax.f32 %v7026, %v6787
      %v7028 = vmax.f32 %v7027, %v6789
      %v7029 = vmax.f32 %v7028, %v6938
      %7030 = vmax.xlane.f32.xlu0 %v7029
      %v7031 = vpop.xlane.xlu0 %7030
      %v7032 = vmax.f32 %v6632, %v6634
      %v7033 = vmax.f32 %v7032, %v6793
      %v7034 = vmax.f32 %v7033, %v6795
      %v7035 = vmax.f32 %v7034, %v6943
      %7036 = vmax.xlane.f32.xlu0 %v7035
      %v7037 = vpop.xlane.xlu0 %7036
      %v7038 = vmax.f32 %v6638, %v6640
      %v7039 = vmax.f32 %v7038, %v6799
      %v7040 = vmax.f32 %v7039, %v6801
      %v7041 = vmax.f32 %v7040, %v6948
      %7042 = vmax.xlane.f32.xlu0 %v7041
      %v7043 = vpop.xlane.xlu0 %7042
      %v7044 = vmax.f32 %v6644, %v6646
      %v7045 = vmax.f32 %v7044, %v6805
      %v7046 = vmax.f32 %v7045, %v6807
      %v7047 = vmax.f32 %v7046, %v6953
      %7048 = vmax.xlane.f32.xlu0 %v7047
      %v7049 = vpop.xlane.xlu0 %7048
      %v7050 = vmax.f32 %v6650, %v6652
      %v7051 = vmax.f32 %v7050, %v6811
      %v7052 = vmax.f32 %v7051, %v6813
      %v7053 = vmax.f32 %v7052, %v6958
      %7054 = vmax.xlane.f32.xlu0 %v7053
      %v7055 = vpop.xlane.xlu0 %7054
      %v7056 = vmax.f32 %v6656, %v6658
      %v7057 = vmax.f32 %v7056, %v6817
      %v7058 = vmax.f32 %v7057, %v6819
      %v7059 = vmax.f32 %v7058, %v6963
      %7060 = vmax.xlane.f32.xlu0 %v7059
      %v7061 = vpop.xlane.xlu0 %7060
      %v7062 = vsub.f32 %v6566, %v6971
      %v7063 = vsub.f32 %v6568, %v6971
      %v7064 = vsub.f32 %v6727, %v6971
      %v7065 = vsub.f32 %v6729, %v6971
      %v7066 = vsub.f32 %v6888, %v6971
      %v7067 = vsub.f32 %v6572, %v6977
      %v7068 = vsub.f32 %v6574, %v6977
      %v7069 = vsub.f32 %v6733, %v6977
      %v7070 = vsub.f32 %v6735, %v6977
      %v7071 = vsub.f32 %v6893, %v6977
      %v7072 = vsub.f32 %v6578, %v6983
      %v7073 = vsub.f32 %v6580, %v6983
      %v7074 = vsub.f32 %v6739, %v6983
      %v7075 = vsub.f32 %v6741, %v6983
      %v7076 = vsub.f32 %v6898, %v6983
      %v7077 = vsub.f32 %v6584, %v6989
      %v7078 = vsub.f32 %v6586, %v6989
      %v7079 = vsub.f32 %v6745, %v6989
      %v7080 = vsub.f32 %v6747, %v6989
      %v7081 = vsub.f32 %v6903, %v6989
      %v7082 = vsub.f32 %v6590, %v6995
      %v7083 = vsub.f32 %v6592, %v6995
      %v7084 = vsub.f32 %v6751, %v6995
      %v7085 = vsub.f32 %v6753, %v6995
      %v7086 = vsub.f32 %v6908, %v6995
      %v7087 = vsub.f32 %v6596, %v7001
      %v7088 = vsub.f32 %v6598, %v7001
      %v7089 = vsub.f32 %v6757, %v7001
      %v7090 = vsub.f32 %v6759, %v7001
      %v7091 = vsub.f32 %v6913, %v7001
      %v7092 = vsub.f32 %v6602, %v7007
      %v7093 = vsub.f32 %v6604, %v7007
      %v7094 = vsub.f32 %v6763, %v7007
      %v7095 = vsub.f32 %v6765, %v7007
      %v7096 = vsub.f32 %v6918, %v7007
      %v7097 = vsub.f32 %v6608, %v7013
      %v7098 = vsub.f32 %v6610, %v7013
      %v7099 = vsub.f32 %v6769, %v7013
      %v7100 = vsub.f32 %v6771, %v7013
      %v7101 = vsub.f32 %v6923, %v7013
      %v7102 = vsub.f32 %v6614, %v7019
      %v7103 = vsub.f32 %v6616, %v7019
      %v7104 = vsub.f32 %v6775, %v7019
      %v7105 = vsub.f32 %v6777, %v7019
      %v7106 = vsub.f32 %v6928, %v7019
      %v7107 = vsub.f32 %v6620, %v7025
      %v7108 = vsub.f32 %v6622, %v7025
      %v7109 = vsub.f32 %v6781, %v7025
      %v7110 = vsub.f32 %v6783, %v7025
      %v7111 = vsub.f32 %v6933, %v7025
      %v7112 = vsub.f32 %v6626, %v7031
      %v7113 = vsub.f32 %v6628, %v7031
      %v7114 = vsub.f32 %v6787, %v7031
      %v7115 = vsub.f32 %v6789, %v7031
      %v7116 = vsub.f32 %v6938, %v7031
      %v7117 = vsub.f32 %v6632, %v7037
      %v7118 = vsub.f32 %v6634, %v7037
      %v7119 = vsub.f32 %v6793, %v7037
      %v7120 = vsub.f32 %v6795, %v7037
      %v7121 = vsub.f32 %v6943, %v7037
      %v7122 = vsub.f32 %v6638, %v7043
      %v7123 = vsub.f32 %v6640, %v7043
      %v7124 = vsub.f32 %v6799, %v7043
      %v7125 = vsub.f32 %v6801, %v7043
      %v7126 = vsub.f32 %v6948, %v7043
      %v7127 = vsub.f32 %v6644, %v7049
      %v7128 = vsub.f32 %v6646, %v7049
      %v7129 = vsub.f32 %v6805, %v7049
      %v7130 = vsub.f32 %v6807, %v7049
      %v7131 = vsub.f32 %v6953, %v7049
      %v7132 = vsub.f32 %v6650, %v7055
      %v7133 = vsub.f32 %v6652, %v7055
      %v7134 = vsub.f32 %v6811, %v7055
      %v7135 = vsub.f32 %v6813, %v7055
      %v7136 = vsub.f32 %v6958, %v7055
      %v7137 = vsub.f32 %v6656, %v7061
      %v7138 = vsub.f32 %v6658, %v7061
      %v7139 = vsub.f32 %v6817, %v7061
      %v7140 = vsub.f32 %v6819, %v7061
      %v7141 = vsub.f32 %v6963, %v7061
      %v7142 = vmul.f32 %v7062, 1.442695
      %v7143 = vpow.pop %v7142
      %v7144 = vmul.f32 %v7063, 1.442695
      %v7145 = vpow.pop %v7144
      %v7146 = vmul.f32 %v7064, 1.442695
      %v7147 = vpow.pop %v7146
      %v7148 = vmul.f32 %v7065, 1.442695
      %v7149 = vpow.pop %v7148
      %v7150 = vmul.f32 %v7066, 1.442695
      %v7151 = vpow.pop %v7150
      %v7152 = vmul.f32 %v7067, 1.442695
      %v7153 = vpow.pop %v7152
      %v7154 = vmul.f32 %v7068, 1.442695
      %v7155 = vpow.pop %v7154
      %v7156 = vmul.f32 %v7069, 1.442695
      %v7157 = vpow.pop %v7156
      %v7158 = vmul.f32 %v7070, 1.442695
      %v7159 = vpow.pop %v7158
      %v7160 = vmul.f32 %v7071, 1.442695
      %v7161 = vpow.pop %v7160
      %v7162 = vmul.f32 %v7072, 1.442695
      %v7163 = vpow.pop %v7162
      %v7164 = vmul.f32 %v7073, 1.442695
      %v7165 = vpow.pop %v7164
      %v7166 = vmul.f32 %v7074, 1.442695
      %v7167 = vpow.pop %v7166
      %v7168 = vmul.f32 %v7075, 1.442695
      %v7169 = vpow.pop %v7168
      %v7170 = vmul.f32 %v7076, 1.442695
      %v7171 = vpow.pop %v7170
      %v7172 = vmul.f32 %v7077, 1.442695
      %v7173 = vpow.pop %v7172
      %v7174 = vmul.f32 %v7078, 1.442695
      %v7175 = vpow.pop %v7174
      %v7176 = vmul.f32 %v7079, 1.442695
      %v7177 = vpow.pop %v7176
      %v7178 = vmul.f32 %v7080, 1.442695
      %v7179 = vpow.pop %v7178
      %v7180 = vmul.f32 %v7081, 1.442695
      %v7181 = vpow.pop %v7180
      %v7182 = vmul.f32 %v7082, 1.442695
      %v7183 = vpow.pop %v7182
      %v7184 = vmul.f32 %v7083, 1.442695
      %v7185 = vpow.pop %v7184
      %v7186 = vmul.f32 %v7084, 1.442695
      %v7187 = vpow.pop %v7186
      %v7188 = vmul.f32 %v7085, 1.442695
      %v7189 = vpow.pop %v7188
      %v7190 = vmul.f32 %v7086, 1.442695
      %v7191 = vpow.pop %v7190
      %v7192 = vmul.f32 %v7087, 1.442695
      %v7193 = vpow.pop %v7192
      %v7194 = vmul.f32 %v7088, 1.442695
      %v7195 = vpow.pop %v7194
      %v7196 = vmul.f32 %v7089, 1.442695
      %v7197 = vpow.pop %v7196
      %v7198 = vmul.f32 %v7090, 1.442695
      %v7199 = vpow.pop %v7198
      %v7200 = vmul.f32 %v7091, 1.442695
      %v7201 = vpow.pop %v7200
      %v7202 = vmul.f32 %v7092, 1.442695
      %v7203 = vpow.pop %v7202
      %v7204 = vmul.f32 %v7093, 1.442695
      %v7205 = vpow.pop %v7204
      %v7206 = vmul.f32 %v7094, 1.442695
      %v7207 = vpow.pop %v7206
      %v7208 = vmul.f32 %v7095, 1.442695
      %v7209 = vpow.pop %v7208
      %v7210 = vmul.f32 %v7096, 1.442695
      %v7211 = vpow.pop %v7210
      %v7212 = vmul.f32 %v7097, 1.442695
      %v7213 = vpow.pop %v7212
      %v7214 = vmul.f32 %v7098, 1.442695
      %v7215 = vpow.pop %v7214
      %v7216 = vmul.f32 %v7099, 1.442695
      %v7217 = vpow.pop %v7216
      %v7218 = vmul.f32 %v7100, 1.442695
      %v7219 = vpow.pop %v7218
      %v7220 = vmul.f32 %v7101, 1.442695
      %v7221 = vpow.pop %v7220
      %v7222 = vmul.f32 %v7102, 1.442695
      %v7223 = vpow.pop %v7222
      %v7224 = vmul.f32 %v7103, 1.442695
      %v7225 = vpow.pop %v7224
      %v7226 = vmul.f32 %v7104, 1.442695
      %v7227 = vpow.pop %v7226
      %v7228 = vmul.f32 %v7105, 1.442695
      %v7229 = vpow.pop %v7228
      %v7230 = vmul.f32 %v7106, 1.442695
      %v7231 = vpow.pop %v7230
      %v7232 = vmul.f32 %v7107, 1.442695
      %v7233 = vpow.pop %v7232
      %v7234 = vmul.f32 %v7108, 1.442695
      %v7235 = vpow.pop %v7234
      %v7236 = vmul.f32 %v7109, 1.442695
      %v7237 = vpow.pop %v7236
      %v7238 = vmul.f32 %v7110, 1.442695
      %v7239 = vpow.pop %v7238
      %v7240 = vmul.f32 %v7111, 1.442695
      %v7241 = vpow.pop %v7240
      %v7242 = vmul.f32 %v7112, 1.442695
      %v7243 = vpow.pop %v7242
      %v7244 = vmul.f32 %v7113, 1.442695
      %v7245 = vpow.pop %v7244
      %v7246 = vmul.f32 %v7114, 1.442695
      %v7247 = vpow.pop %v7246
      %v7248 = vmul.f32 %v7115, 1.442695
      %v7249 = vpow.pop %v7248
      %v7250 = vmul.f32 %v7116, 1.442695
      %v7251 = vpow.pop %v7250
      %v7252 = vmul.f32 %v7117, 1.442695
      %v7253 = vpow.pop %v7252
      %v7254 = vmul.f32 %v7118, 1.442695
      %v7255 = vpow.pop %v7254
      %v7256 = vmul.f32 %v7119, 1.442695
      %v7257 = vpow.pop %v7256
      %v7258 = vmul.f32 %v7120, 1.442695
      %v7259 = vpow.pop %v7258
      %v7260 = vmul.f32 %v7121, 1.442695
      %v7261 = vpow.pop %v7260
      %v7262 = vmul.f32 %v7122, 1.442695
      %v7263 = vpow.pop %v7262
      %v7264 = vmul.f32 %v7123, 1.442695
      %v7265 = vpow.pop %v7264
      %v7266 = vmul.f32 %v7124, 1.442695
      %v7267 = vpow.pop %v7266
      %v7268 = vmul.f32 %v7125, 1.442695
      %v7269 = vpow.pop %v7268
      %v7270 = vmul.f32 %v7126, 1.442695
      %v7271 = vpow.pop %v7270
      %v7272 = vmul.f32 %v7127, 1.442695
      %v7273 = vpow.pop %v7272
      %v7274 = vmul.f32 %v7128, 1.442695
      %v7275 = vpow.pop %v7274
      %v7276 = vmul.f32 %v7129, 1.442695
      %v7277 = vpow.pop %v7276
      %v7278 = vmul.f32 %v7130, 1.442695
      %v7279 = vpow.pop %v7278
      %v7280 = vmul.f32 %v7131, 1.442695
      %v7281 = vpow.pop %v7280
      %v7282 = vmul.f32 %v7132, 1.442695
      %v7283 = vpow.pop %v7282
      %v7284 = vmul.f32 %v7133, 1.442695
      %v7285 = vpow.pop %v7284
      %v7286 = vmul.f32 %v7134, 1.442695
      %v7287 = vpow.pop %v7286
      %v7288 = vmul.f32 %v7135, 1.442695
      %v7289 = vpow.pop %v7288
      %v7290 = vmul.f32 %v7136, 1.442695
      %v7291 = vpow.pop %v7290
      %v7292 = vmul.f32 %v7137, 1.442695
      %v7293 = vpow.pop %v7292
      %v7294 = vmul.f32 %v7138, 1.442695
      %v7295 = vpow.pop %v7294
      %v7296 = vmul.f32 %v7139, 1.442695
      %v7297 = vpow.pop %v7296
      %v7298 = vmul.f32 %v7140, 1.442695
      %v7299 = vpow.pop %v7298
      %v7300 = vmul.f32 %v7141, 1.442695
      %v7301 = vpow.pop %v7300
      %v7302 = vadd.f32 %v7143, %v7145
      %v7303 = vadd.f32 %v7302, %v7147
      %v7304 = vadd.f32 %v7303, %v7149
      %v7305 = vadd.f32 %v7304, %v7151
      %7306 = vadd.xlane.f32.xlu0 %v7305
      %v7307 = vpop.xlane.xlu0 %7306
      %v7308 = vadd.f32 %v7153, %v7155
      %v7309 = vadd.f32 %v7308, %v7157
      %v7310 = vadd.f32 %v7309, %v7159
      %v7311 = vadd.f32 %v7310, %v7161
      %7312 = vadd.xlane.f32.xlu0 %v7311
      %v7313 = vpop.xlane.xlu0 %7312
      %v7314 = vadd.f32 %v7163, %v7165
      %v7315 = vadd.f32 %v7314, %v7167
      %v7316 = vadd.f32 %v7315, %v7169
      %v7317 = vadd.f32 %v7316, %v7171
      %7318 = vadd.xlane.f32.xlu0 %v7317
      %v7319 = vpop.xlane.xlu0 %7318
      %v7320 = vadd.f32 %v7173, %v7175
      %v7321 = vadd.f32 %v7320, %v7177
      %v7322 = vadd.f32 %v7321, %v7179
      %v7323 = vadd.f32 %v7322, %v7181
      %7324 = vadd.xlane.f32.xlu0 %v7323
      %v7325 = vpop.xlane.xlu0 %7324
      %v7326 = vadd.f32 %v7183, %v7185
      %v7327 = vadd.f32 %v7326, %v7187
      %v7328 = vadd.f32 %v7327, %v7189
      %v7329 = vadd.f32 %v7328, %v7191
      %7330 = vadd.xlane.f32.xlu0 %v7329
      %v7331 = vpop.xlane.xlu0 %7330
      %v7332 = vadd.f32 %v7193, %v7195
      %v7333 = vadd.f32 %v7332, %v7197
      %v7334 = vadd.f32 %v7333, %v7199
      %v7335 = vadd.f32 %v7334, %v7201
      %7336 = vadd.xlane.f32.xlu0 %v7335
      %v7337 = vpop.xlane.xlu0 %7336
      %v7338 = vadd.f32 %v7203, %v7205
      %v7339 = vadd.f32 %v7338, %v7207
      %v7340 = vadd.f32 %v7339, %v7209
      %v7341 = vadd.f32 %v7340, %v7211
      %7342 = vadd.xlane.f32.xlu0 %v7341
      %v7343 = vpop.xlane.xlu0 %7342
      %v7344 = vadd.f32 %v7213, %v7215
      %v7345 = vadd.f32 %v7344, %v7217
      %v7346 = vadd.f32 %v7345, %v7219
      %v7347 = vadd.f32 %v7346, %v7221
      %7348 = vadd.xlane.f32.xlu0 %v7347
      %v7349 = vpop.xlane.xlu0 %7348
      %v7350 = vadd.f32 %v7223, %v7225
      %v7351 = vadd.f32 %v7350, %v7227
      %v7352 = vadd.f32 %v7351, %v7229
      %v7353 = vadd.f32 %v7352, %v7231
      %7354 = vadd.xlane.f32.xlu0 %v7353
      %v7355 = vpop.xlane.xlu0 %7354
      %v7356 = vadd.f32 %v7233, %v7235
      %v7357 = vadd.f32 %v7356, %v7237
      %v7358 = vadd.f32 %v7357, %v7239
      %v7359 = vadd.f32 %v7358, %v7241
      %7360 = vadd.xlane.f32.xlu0 %v7359
      %v7361 = vpop.xlane.xlu0 %7360
      %v7362 = vadd.f32 %v7243, %v7245
      %v7363 = vadd.f32 %v7362, %v7247
      %v7364 = vadd.f32 %v7363, %v7249
      %v7365 = vadd.f32 %v7364, %v7251
      %7366 = vadd.xlane.f32.xlu0 %v7365
      %v7367 = vpop.xlane.xlu0 %7366
      %v7368 = vadd.f32 %v7253, %v7255
      %v7369 = vadd.f32 %v7368, %v7257
      %v7370 = vadd.f32 %v7369, %v7259
      %v7371 = vadd.f32 %v7370, %v7261
      %7372 = vadd.xlane.f32.xlu0 %v7371
      %v7373 = vpop.xlane.xlu0 %7372
      %v7374 = vadd.f32 %v7263, %v7265
      %v7375 = vadd.f32 %v7374, %v7267
      %v7376 = vadd.f32 %v7375, %v7269
      %v7377 = vadd.f32 %v7376, %v7271
      %7378 = vadd.xlane.f32.xlu0 %v7377
      %v7379 = vpop.xlane.xlu0 %7378
      %v7380 = vadd.f32 %v7273, %v7275
      %v7381 = vadd.f32 %v7380, %v7277
      %v7382 = vadd.f32 %v7381, %v7279
      %v7383 = vadd.f32 %v7382, %v7281
      %7384 = vadd.xlane.f32.xlu0 %v7383
      %v7385 = vpop.xlane.xlu0 %7384
      %v7386 = vadd.f32 %v7283, %v7285
      %v7387 = vadd.f32 %v7386, %v7287
      %v7388 = vadd.f32 %v7387, %v7289
      %v7389 = vadd.f32 %v7388, %v7291
      %7390 = vadd.xlane.f32.xlu0 %v7389
      %v7391 = vpop.xlane.xlu0 %7390
      %v7392 = vadd.f32 %v7293, %v7295
      %v7393 = vadd.f32 %v7392, %v7297
      %v7394 = vadd.f32 %v7393, %v7299
      %v7395 = vadd.f32 %v7394, %v7301
      %7396 = vadd.xlane.f32.xlu0 %v7395
      %v7397 = vpop.xlane.xlu0 %7396
      %v7398 = vrcp.pop %v7307
      %v7399 = vrcp.pop %v7313
      %v7400 = vrcp.pop %v7319
      %v7401 = vrcp.pop %v7325
      %v7402 = vrcp.pop %v7331
      %v7403 = vrcp.pop %v7337
      %v7404 = vrcp.pop %v7343
      %v7405 = vrcp.pop %v7349
      %v7406 = vrcp.pop %v7355
      %v7407 = vrcp.pop %v7361
      %v7408 = vrcp.pop %v7367
      %v7409 = vrcp.pop %v7373
      %v7410 = vrcp.pop %v7379
      %v7411 = vrcp.pop %v7385
      %v7412 = vrcp.pop %v7391
      %v7413 = vrcp.pop %v7397
      %v7414 = vmul.f32 %v7143, %v7398
      %v7415 = vmul.f32 %v7145, %v7398
      %v7416 = vmul.f32 %v7147, %v7398
      %v7417 = vmul.f32 %v7149, %v7398
      %v7418 = vmul.f32 %v7151, %v7398
      %v7419 = vmul.f32 %v7153, %v7399
      %v7420 = vmul.f32 %v7155, %v7399
      %v7421 = vmul.f32 %v7157, %v7399
      %v7422 = vmul.f32 %v7159, %v7399
      %v7423 = vmul.f32 %v7161, %v7399
      %v7424 = vmul.f32 %v7163, %v7400
      %v7425 = vmul.f32 %v7165, %v7400
      %v7426 = vmul.f32 %v7167, %v7400
      %v7427 = vmul.f32 %v7169, %v7400
      %v7428 = vmul.f32 %v7171, %v7400
      %v7429 = vmul.f32 %v7173, %v7401
      %v7430 = vmul.f32 %v7175, %v7401
      %v7431 = vmul.f32 %v7177, %v7401
      %v7432 = vmul.f32 %v7179, %v7401
      %v7433 = vmul.f32 %v7181, %v7401
      %v7434 = vmul.f32 %v7183, %v7402
      %v7435 = vmul.f32 %v7185, %v7402
      %v7436 = vmul.f32 %v7187, %v7402
      %v7437 = vmul.f32 %v7189, %v7402
      %v7438 = vmul.f32 %v7191, %v7402
      %v7439 = vmul.f32 %v7193, %v7403
      %v7440 = vmul.f32 %v7195, %v7403
      %v7441 = vmul.f32 %v7197, %v7403
      %v7442 = vmul.f32 %v7199, %v7403
      %v7443 = vmul.f32 %v7201, %v7403
      %v7444 = vmul.f32 %v7203, %v7404
      %v7445 = vmul.f32 %v7205, %v7404
      %v7446 = vmul.f32 %v7207, %v7404
      %v7447 = vmul.f32 %v7209, %v7404
      %v7448 = vmul.f32 %v7211, %v7404
      %v7449 = vmul.f32 %v7213, %v7405
      %v7450 = vmul.f32 %v7215, %v7405
      %v7451 = vmul.f32 %v7217, %v7405
      %v7452 = vmul.f32 %v7219, %v7405
      %v7453 = vmul.f32 %v7221, %v7405
      %v7454 = vmul.f32 %v7223, %v7406
      %v7455 = vmul.f32 %v7225, %v7406
      %v7456 = vmul.f32 %v7227, %v7406
      %v7457 = vmul.f32 %v7229, %v7406
      %v7458 = vmul.f32 %v7231, %v7406
      %v7459 = vmul.f32 %v7233, %v7407
      %v7460 = vmul.f32 %v7235, %v7407
      %v7461 = vmul.f32 %v7237, %v7407
      %v7462 = vmul.f32 %v7239, %v7407
      %v7463 = vmul.f32 %v7241, %v7407
      %v7464 = vmul.f32 %v7243, %v7408
      %v7465 = vmul.f32 %v7245, %v7408
      %v7466 = vmul.f32 %v7247, %v7408
      %v7467 = vmul.f32 %v7249, %v7408
      %v7468 = vmul.f32 %v7251, %v7408
      %v7469 = vmul.f32 %v7253, %v7409
      %v7470 = vmul.f32 %v7255, %v7409
      %v7471 = vmul.f32 %v7257, %v7409
      %v7472 = vmul.f32 %v7259, %v7409
      %v7473 = vmul.f32 %v7261, %v7409
      %v7474 = vmul.f32 %v7263, %v7410
      %v7475 = vmul.f32 %v7265, %v7410
      %v7476 = vmul.f32 %v7267, %v7410
      %v7477 = vmul.f32 %v7269, %v7410
      %v7478 = vmul.f32 %v7271, %v7410
      %v7479 = vmul.f32 %v7273, %v7411
      %v7480 = vmul.f32 %v7275, %v7411
      %v7481 = vmul.f32 %v7277, %v7411
      %v7482 = vmul.f32 %v7279, %v7411
      %v7483 = vmul.f32 %v7281, %v7411
      %v7484 = vmul.f32 %v7283, %v7412
      %v7485 = vmul.f32 %v7285, %v7412
      %v7486 = vmul.f32 %v7287, %v7412
      %v7487 = vmul.f32 %v7289, %v7412
      %v7488 = vmul.f32 %v7291, %v7412
      %v7489 = vmul.f32 %v7293, %v7413
      %v7490 = vmul.f32 %v7295, %v7413
      %v7491 = vmul.f32 %v7297, %v7413
      %v7492 = vmul.f32 %v7299, %v7413
      %v7493 = vmul.f32 %v7301, %v7413
      %7494 = vrot.lane.b32.xlu0 %v1362, 80
      %v7495 = vpop.permute.xlu0 %7494
      %7496 = vrot.lane.b32.xlu0 %v1367, 80
      %v7497 = vpop.permute.xlu0 %7496
      %7498 = vrot.lane.b32.xlu0 %v1372, 80
      %v7499 = vpop.permute.xlu0 %7498
      %7500 = vrot.lane.b32.xlu0 %v1377, 80
      %v7501 = vpop.permute.xlu0 %7500
      %7502 = vrot.lane.b32.xlu0 %v1382, 80
      %v7503 = vpop.permute.xlu0 %7502
      %7504 = vrot.lane.b32.xlu0 %v1387, 80
      %v7505 = vpop.permute.xlu0 %7504
      %7506 = vrot.lane.b32.xlu0 %v1392, 80
      %v7507 = vpop.permute.xlu0 %7506
      %7508 = vrot.lane.b32.xlu0 %v1397, 80
      %v7509 = vpop.permute.xlu0 %7508
      %7510 = vrot.lane.b32.xlu0 %v1402, 80
      %v7511 = vpop.permute.xlu0 %7510
      %7512 = vrot.lane.b32.xlu0 %v1407, 80
      %v7513 = vpop.permute.xlu0 %7512
      %7514 = vrot.lane.b32.xlu0 %v1412, 80
      %v7515 = vpop.permute.xlu0 %7514
      %7516 = vrot.lane.b32.xlu0 %v1417, 80
      %v7517 = vpop.permute.xlu0 %7516
      %7518 = vrot.lane.b32.xlu0 %v1422, 80
      %v7519 = vpop.permute.xlu0 %7518
      %7520 = vrot.lane.b32.xlu0 %v1427, 80
      %v7521 = vpop.permute.xlu0 %7520
      %7522 = vrot.lane.b32.xlu0 %v1432, 80
      %v7523 = vpop.permute.xlu0 %7522
      %7524 = vrot.lane.b32.xlu0 %v1437, 80
      %v7525 = vpop.permute.xlu0 %7524
      %7526 = vrot.lane.b32.xlu0 %v1442, 80
      %v7527 = vpop.permute.xlu0 %7526
      %7528 = vrot.lane.b32.xlu0 %v1447, 80
      %v7529 = vpop.permute.xlu0 %7528
      %7530 = vrot.lane.b32.xlu0 %v1452, 80
      %v7531 = vpop.permute.xlu0 %7530
      %7532 = vrot.lane.b32.xlu0 %v1457, 80
      %v7533 = vpop.permute.xlu0 %7532
      %7534 = vrot.lane.b32.xlu0 %v1462, 80
      %v7535 = vpop.permute.xlu0 %7534
      %7536 = vrot.lane.b32.xlu0 %v1467, 80
      %v7537 = vpop.permute.xlu0 %7536
      %7538 = vrot.lane.b32.xlu0 %v1472, 80
      %v7539 = vpop.permute.xlu0 %7538
      %7540 = vrot.lane.b32.xlu0 %v1477, 80
      %v7541 = vpop.permute.xlu0 %7540
      %7542 = vrot.lane.b32.xlu0 %v1482, 80
      %v7543 = vpop.permute.xlu0 %7542
      %7544 = vrot.lane.b32.xlu0 %v1487, 80
      %v7545 = vpop.permute.xlu0 %7544
      %7546 = vrot.lane.b32.xlu0 %v1492, 80
      %v7547 = vpop.permute.xlu0 %7546
      %7548 = vrot.lane.b32.xlu0 %v1497, 80
      %v7549 = vpop.permute.xlu0 %7548
      %7550 = vrot.lane.b32.xlu0 %v1502, 80
      %v7551 = vpop.permute.xlu0 %7550
      %7552 = vrot.lane.b32.xlu0 %v1507, 80
      %v7553 = vpop.permute.xlu0 %7552
      %7554 = vrot.lane.b32.xlu0 %v1512, 80
      %v7555 = vpop.permute.xlu0 %7554
      %7556 = vrot.lane.b32.xlu0 %v1517, 80
      %v7557 = vpop.permute.xlu0 %7556
      %7558 = vrot.lane.b32.xlu0 %v1522, 80
      %v7559 = vpop.permute.xlu0 %7558
      %7560 = vrot.lane.b32.xlu0 %v1527, 80
      %v7561 = vpop.permute.xlu0 %7560
      %7562 = vrot.lane.b32.xlu0 %v1532, 80
      %v7563 = vpop.permute.xlu0 %7562
      %7564 = vrot.lane.b32.xlu0 %v1537, 80
      %v7565 = vpop.permute.xlu0 %7564
      %7566 = vrot.lane.b32.xlu0 %v1542, 80
      %v7567 = vpop.permute.xlu0 %7566
      %7568 = vrot.lane.b32.xlu0 %v1547, 80
      %v7569 = vpop.permute.xlu0 %7568
      %7570 = vrot.lane.b32.xlu0 %v1552, 80
      %v7571 = vpop.permute.xlu0 %7570
      %7572 = vrot.lane.b32.xlu0 %v1557, 80
      %v7573 = vpop.permute.xlu0 %7572
      %7574 = vrot.lane.b32.xlu0 %v1562, 80
      %v7575 = vpop.permute.xlu0 %7574
      %7576 = vrot.lane.b32.xlu0 %v1567, 80
      %v7577 = vpop.permute.xlu0 %7576
      %7578 = vrot.lane.b32.xlu0 %v1572, 80
      %v7579 = vpop.permute.xlu0 %7578
      %7580 = vrot.lane.b32.xlu0 %v1577, 80
      %v7581 = vpop.permute.xlu0 %7580
      %7582 = vrot.lane.b32.xlu0 %v1582, 80
      %v7583 = vpop.permute.xlu0 %7582
      %7584 = vrot.lane.b32.xlu0 %v1587, 80
      %v7585 = vpop.permute.xlu0 %7584
      %7586 = vrot.lane.b32.xlu0 %v1592, 80
      %v7587 = vpop.permute.xlu0 %7586
      %7588 = vrot.lane.b32.xlu0 %v1597, 80
      %v7589 = vpop.permute.xlu0 %7588
      %7590 = vrot.lane.b32.xlu0 %v1602, 80
      %v7591 = vpop.permute.xlu0 %7590
      %7592 = vrot.lane.b32.xlu0 %v1607, 80
      %v7593 = vpop.permute.xlu0 %7592
      %7594 = vrot.lane.b32.xlu0 %v1612, 80
      %v7595 = vpop.permute.xlu0 %7594
      %7596 = vrot.lane.b32.xlu0 %v1617, 80
      %v7597 = vpop.permute.xlu0 %7596
      %7598 = vrot.lane.b32.xlu0 %v1622, 80
      %v7599 = vpop.permute.xlu0 %7598
      %7600 = vrot.lane.b32.xlu0 %v1627, 80
      %v7601 = vpop.permute.xlu0 %7600
      %7602 = vrot.lane.b32.xlu0 %v1632, 80
      %v7603 = vpop.permute.xlu0 %7602
      %7604 = vrot.lane.b32.xlu0 %v1637, 80
      %v7605 = vpop.permute.xlu0 %7604
      %7606 = vrot.lane.b32.xlu0 %v1642, 80
      %v7607 = vpop.permute.xlu0 %7606
      %7608 = vrot.lane.b32.xlu0 %v1647, 80
      %v7609 = vpop.permute.xlu0 %7608
      %7610 = vrot.lane.b32.xlu0 %v1652, 80
      %v7611 = vpop.permute.xlu0 %7610
      %7612 = vrot.lane.b32.xlu0 %v1657, 80
      %v7613 = vpop.permute.xlu0 %7612
      %7614 = vrot.lane.b32.xlu0 %v1662, 80
      %v7615 = vpop.permute.xlu0 %7614
      %7616 = vrot.lane.b32.xlu0 %v1667, 80
      %v7617 = vpop.permute.xlu0 %7616
      %7618 = vrot.lane.b32.xlu0 %v1672, 80
      %v7619 = vpop.permute.xlu0 %7618
      %7620 = vrot.lane.b32.xlu0 %v1677, 80
      %v7621 = vpop.permute.xlu0 %7620
      %7622 = vrot.lane.b32.xlu0 %v1682, 80
      %v7623 = vpop.permute.xlu0 %7622
      %7624 = vrot.lane.b32.xlu0 %v1687, 80
      %v7625 = vpop.permute.xlu0 %7624
      %7626 = vrot.lane.b32.xlu0 %v1692, 80
      %v7627 = vpop.permute.xlu0 %7626
      %7628 = vrot.lane.b32.xlu0 %v1697, 80
      %v7629 = vpop.permute.xlu0 %7628
      %7630 = vrot.lane.b32.xlu0 %v1702, 80
      %v7631 = vpop.permute.xlu0 %7630
      %7632 = vrot.lane.b32.xlu0 %v1707, 80
      %v7633 = vpop.permute.xlu0 %7632
      %7634 = vrot.lane.b32.xlu0 %v1712, 80
      %v7635 = vpop.permute.xlu0 %7634
      %7636 = vrot.lane.b32.xlu0 %v1717, 80
      %v7637 = vpop.permute.xlu0 %7636
      %7638 = vrot.lane.b32.xlu0 %v1722, 80
      %v7639 = vpop.permute.xlu0 %7638
      %7640 = vrot.lane.b32.xlu0 %v1727, 80
      %v7641 = vpop.permute.xlu0 %7640
      %7642 = vrot.lane.b32.xlu0 %v1732, 80
      %v7643 = vpop.permute.xlu0 %7642
      %7644 = vrot.lane.b32.xlu0 %v1737, 80
      %v7645 = vpop.permute.xlu0 %7644
      %7646 = vrot.lane.b32.xlu0 %v1742, 80
      %v7647 = vpop.permute.xlu0 %7646
      %7648 = vrot.lane.b32.xlu0 %v1747, 80
      %v7649 = vpop.permute.xlu0 %7648
      %7650 = vrot.lane.b32.xlu0 %v1752, 80
      %v7651 = vpop.permute.xlu0 %7650
      %7652 = vrot.lane.b32.xlu0 %v1757, 80
      %v7653 = vpop.permute.xlu0 %7652
      %7734 = vmatprep.subr.mxu0 0.0
      %7735 = vmatpush1.msra.mxu0 %v7525
      %7736 = vmatprep.subr.mxu0 0.0
      %7737 = vmatpush1.msra.mxu0 %v7523
      %7738 = vmatprep.subr.mxu0 0.0
      %7739 = vmatpush1.msra.mxu0 %v7521
      %7740 = vmatprep.subr.mxu0 0.0
      %7741 = vmatpush1.msra.mxu0 %v7519
      %7742 = vmatprep.subr.mxu0 0.0
      %7743 = vmatpush1.msra.mxu0 %v7517
      %7744 = vmatprep.subr.mxu0 0.0
      %7745 = vmatpush1.msra.mxu0 %v7515
      %7746 = vmatprep.subr.mxu0 0.0
      %7747 = vmatpush1.msra.mxu0 %v7513
      %7748 = vmatprep.subr.mxu0 0.0
      %7749 = vmatpush1.msra.mxu0 %v7511
      %7750 = vmatprep.subr.mxu0 0.0
      %7751 = vmatpush1.msra.mxu0 %v7509
      %7752 = vmatprep.subr.mxu0 0.0
      %7753 = vmatpush1.msra.mxu0 %v7507
      %7754 = vmatprep.subr.mxu0 0.0
      %7755 = vmatpush1.msra.mxu0 %v7505
      %7756 = vmatprep.subr.mxu0 0.0
      %7757 = vmatpush1.msra.mxu0 %v7503
      %7758 = vmatprep.subr.mxu0 0.0
      %7759 = vmatpush1.msra.mxu0 %v7501
      %7760 = vmatprep.subr.mxu0 0.0
      %7761 = vmatpush1.msra.mxu0 %v7499
      %7762 = vmatprep.subr.mxu0 0.0
      %7763 = vmatpush1.msra.mxu0 %v7497
      %7764 = vmatprep.subr.mxu0 0.0
      %7765 = vmatpush1.msra.mxu0 %v7495
      %7766 = vmatprep.subr.mxu0 0.0
      %7767 = vmatpush2.msra.mxu0 %v7557
      %7768 = vmatprep.subr.mxu0 0.0
      %7769 = vmatpush2.msra.mxu0 %v7555
      %7770 = vmatprep.subr.mxu0 0.0
      %7771 = vmatpush2.msra.mxu0 %v7553
      %7772 = vmatprep.subr.mxu0 0.0
      %7773 = vmatpush2.msra.mxu0 %v7551
      %7774 = vmatprep.subr.mxu0 0.0
      %7775 = vmatpush2.msra.mxu0 %v7549
      %7776 = vmatprep.subr.mxu0 0.0
      %7777 = vmatpush2.msra.mxu0 %v7547
      %7778 = vmatprep.subr.mxu0 0.0
      %7779 = vmatpush2.msra.mxu0 %v7545
      %7780 = vmatprep.subr.mxu0 0.0
      %7781 = vmatpush2.msra.mxu0 %v7543
      %7782 = vmatprep.subr.mxu0 0.0
      %7783 = vmatpush2.msra.mxu0 %v7541
      %7784 = vmatprep.subr.mxu0 0.0
      %7785 = vmatpush2.msra.mxu0 %v7539
      %7786 = vmatprep.subr.mxu0 0.0
      %7787 = vmatpush2.msra.mxu0 %v7537
      %7788 = vmatprep.subr.mxu0 0.0
      %7789 = vmatpush2.msra.mxu0 %v7535
      %7790 = vmatprep.subr.mxu0 0.0
      %7791 = vmatpush2.msra.mxu0 %v7533
      %7792 = vmatprep.subr.mxu0 0.0
      %7793 = vmatpush2.msra.mxu0 %v7531
      %7794 = vmatprep.subr.mxu0 0.0
      %7795 = vmatpush2.msra.mxu0 %v7529
      %7796 = vmatprep.subr.mxu0 0.0
      %7797 = vmatpush2.msra.mxu0 %v7527
      %7798 = vmatprep.mubr.f32.mxu0 %v7415
      %7799 = vmatmul.mubr.f32.gmra.mxu0 %v7414
      %v7800 = vpop.f32.mrf.mxu0
      %v7801 = vadd.f32 0.0, %v7800
      %v7802 = vpop.f32.mrf.mxu0
      %7803 = vmatprep.mubr.f32.mxu0 %v7420
      %7804 = vmatmul.mubr.f32.gmra.mxu0 %v7419
      %v7805 = vpop.f32.mrf.mxu0
      %v7806 = vadd.f32 0.0, %v7805
      %v7807 = vpop.f32.mrf.mxu0
      %7808 = vmatprep.mubr.f32.mxu0 %v7425
      %7809 = vmatmul.mubr.f32.gmra.mxu0 %v7424
      %v7810 = vpop.f32.mrf.mxu0
      %v7811 = vadd.f32 0.0, %v7810
      %v7812 = vpop.f32.mrf.mxu0
      %7813 = vmatprep.mubr.f32.mxu0 %v7430
      %7814 = vmatmul.mubr.f32.gmra.mxu0 %v7429
      %v7815 = vpop.f32.mrf.mxu0
      %v7816 = vadd.f32 0.0, %v7815
      %v7817 = vpop.f32.mrf.mxu0
      %7818 = vmatprep.mubr.f32.mxu0 %v7435
      %7819 = vmatmul.mubr.f32.gmra.mxu0 %v7434
      %v7820 = vpop.f32.mrf.mxu0
      %v7821 = vadd.f32 0.0, %v7820
      %v7822 = vpop.f32.mrf.mxu0
      %7823 = vmatprep.mubr.f32.mxu0 %v7440
      %7824 = vmatmul.mubr.f32.gmra.mxu0 %v7439
      %v7825 = vpop.f32.mrf.mxu0
      %v7826 = vadd.f32 0.0, %v7825
      %v7827 = vpop.f32.mrf.mxu0
      %7828 = vmatprep.mubr.f32.mxu0 %v7445
      %7829 = vmatmul.mubr.f32.gmra.mxu0 %v7444
      %v7830 = vpop.f32.mrf.mxu0
      %v7831 = vadd.f32 0.0, %v7830
      %v7832 = vpop.f32.mrf.mxu0
      %7833 = vmatprep.mubr.f32.mxu0 %v7450
      %7834 = vmatmul.mubr.f32.gmra.mxu0 %v7449
      %v7835 = vpop.f32.mrf.mxu0
      %v7836 = vadd.f32 0.0, %v7835
      %v7837 = vpop.f32.mrf.mxu0
      %7838 = vmatprep.mubr.f32.mxu0 %v7455
      %7839 = vmatmul.mubr.f32.gmra.mxu0 %v7454
      %v7840 = vpop.f32.mrf.mxu0
      %v7841 = vadd.f32 0.0, %v7840
      %v7842 = vpop.f32.mrf.mxu0
      %7843 = vmatprep.mubr.f32.mxu0 %v7460
      %7844 = vmatmul.mubr.f32.gmra.mxu0 %v7459
      %v7845 = vpop.f32.mrf.mxu0
      %v7846 = vadd.f32 0.0, %v7845
      %v7847 = vpop.f32.mrf.mxu0
      %7848 = vmatprep.mubr.f32.mxu0 %v7465
      %7849 = vmatmul.mubr.f32.gmra.mxu0 %v7464
      %v7850 = vpop.f32.mrf.mxu0
      %v7851 = vadd.f32 0.0, %v7850
      %v7852 = vpop.f32.mrf.mxu0
      %7853 = vmatprep.mubr.f32.mxu0 %v7470
      %7854 = vmatmul.mubr.f32.gmra.mxu0 %v7469
      %v7855 = vpop.f32.mrf.mxu0
      %v7856 = vadd.f32 0.0, %v7855
      %v7857 = vpop.f32.mrf.mxu0
      %7858 = vmatprep.mubr.f32.mxu0 %v7475
      %7859 = vmatmul.mubr.f32.gmra.mxu0 %v7474
      %v7860 = vpop.f32.mrf.mxu0
      %v7861 = vadd.f32 0.0, %v7860
      %v7862 = vpop.f32.mrf.mxu0
      %7863 = vmatprep.mubr.f32.mxu0 %v7480
      %7864 = vmatmul.mubr.f32.gmra.mxu0 %v7479
      %v7865 = vpop.f32.mrf.mxu0
      %v7866 = vadd.f32 0.0, %v7865
      %v7867 = vpop.f32.mrf.mxu0
      %7868 = vmatprep.mubr.f32.mxu0 %v7485
      %7869 = vmatmul.mubr.f32.gmra.mxu0 %v7484
      %v7870 = vpop.f32.mrf.mxu0
      %v7871 = vadd.f32 0.0, %v7870
      %v7872 = vpop.f32.mrf.mxu0
      %7873 = vmatprep.mubr.f32.mxu0 %v7490
      %7874 = vmatmul.mubr.f32.gmra.mxu0 %v7489
      %v7875 = vpop.f32.mrf.mxu0
      %v7876 = vadd.f32 0.0, %v7875
      %v7877 = vpop.f32.mrf.mxu0
      %7878 = vdwg.mxu0
      %7879 = vmatprep.subr.mxu0 0.0
      %7880 = vmatpush1.msra.mxu0 %v7589
      %7881 = vmatprep.subr.mxu0 0.0
      %7882 = vmatpush1.msra.mxu0 %v7587
      %7883 = vmatprep.subr.mxu0 0.0
      %7884 = vmatpush1.msra.mxu0 %v7585
      %7885 = vmatprep.subr.mxu0 0.0
      %7886 = vmatpush1.msra.mxu0 %v7583
      %7887 = vmatprep.subr.mxu0 0.0
      %7888 = vmatpush1.msra.mxu0 %v7581
      %7889 = vmatprep.subr.mxu0 0.0
      %7890 = vmatpush1.msra.mxu0 %v7579
      %7891 = vmatprep.subr.mxu0 0.0
      %7892 = vmatpush1.msra.mxu0 %v7577
      %7893 = vmatprep.subr.mxu0 0.0
      %7894 = vmatpush1.msra.mxu0 %v7575
      %7895 = vmatprep.subr.mxu0 0.0
      %7896 = vmatpush1.msra.mxu0 %v7573
      %7897 = vmatprep.subr.mxu0 0.0
      %7898 = vmatpush1.msra.mxu0 %v7571
      %7899 = vmatprep.subr.mxu0 0.0
      %7900 = vmatpush1.msra.mxu0 %v7569
      %7901 = vmatprep.subr.mxu0 0.0
      %7902 = vmatpush1.msra.mxu0 %v7567
      %7903 = vmatprep.subr.mxu0 0.0
      %7904 = vmatpush1.msra.mxu0 %v7565
      %7905 = vmatprep.subr.mxu0 0.0
      %7906 = vmatpush1.msra.mxu0 %v7563
      %7907 = vmatprep.subr.mxu0 0.0
      %7908 = vmatpush1.msra.mxu0 %v7561
      %7909 = vmatprep.subr.mxu0 0.0
      %7910 = vmatpush1.msra.mxu0 %v7559
      %7911 = vmatprep.subr.mxu0 0.0
      %7912 = vmatpush2.msra.mxu0 %v7621
      %7913 = vmatprep.subr.mxu0 0.0
      %7914 = vmatpush2.msra.mxu0 %v7619
      %7915 = vmatprep.subr.mxu0 0.0
      %7916 = vmatpush2.msra.mxu0 %v7617
      %7917 = vmatprep.subr.mxu0 0.0
      %7918 = vmatpush2.msra.mxu0 %v7615
      %7919 = vmatprep.subr.mxu0 0.0
      %7920 = vmatpush2.msra.mxu0 %v7613
      %7921 = vmatprep.subr.mxu0 0.0
      %7922 = vmatpush2.msra.mxu0 %v7611
      %7923 = vmatprep.subr.mxu0 0.0
      %7924 = vmatpush2.msra.mxu0 %v7609
      %7925 = vmatprep.subr.mxu0 0.0
      %7926 = vmatpush2.msra.mxu0 %v7607
      %7927 = vmatprep.subr.mxu0 0.0
      %7928 = vmatpush2.msra.mxu0 %v7605
      %7929 = vmatprep.subr.mxu0 0.0
      %7930 = vmatpush2.msra.mxu0 %v7603
      %7931 = vmatprep.subr.mxu0 0.0
      %7932 = vmatpush2.msra.mxu0 %v7601
      %7933 = vmatprep.subr.mxu0 0.0
      %7934 = vmatpush2.msra.mxu0 %v7599
      %7935 = vmatprep.subr.mxu0 0.0
      %7936 = vmatpush2.msra.mxu0 %v7597
      %7937 = vmatprep.subr.mxu0 0.0
      %7938 = vmatpush2.msra.mxu0 %v7595
      %7939 = vmatprep.subr.mxu0 0.0
      %7940 = vmatpush2.msra.mxu0 %v7593
      %7941 = vmatprep.subr.mxu0 0.0
      %7942 = vmatpush2.msra.mxu0 %v7591
      %7943 = vmatprep.mubr.f32.mxu0 %v7417
      %7944 = vmatmul.mubr.f32.gmra.mxu0 %v7416
      %v7945 = vpop.f32.mrf.mxu0
      %v7946 = vadd.f32 %v7801, %v7945
      %v7947 = vpop.f32.mrf.mxu0
      %7948 = vmatprep.mubr.f32.mxu0 %v7422
      %7949 = vmatmul.mubr.f32.gmra.mxu0 %v7421
      %v7950 = vpop.f32.mrf.mxu0
      %v7951 = vadd.f32 %v7806, %v7950
      %v7952 = vpop.f32.mrf.mxu0
      %7953 = vmatprep.mubr.f32.mxu0 %v7427
      %7954 = vmatmul.mubr.f32.gmra.mxu0 %v7426
      %v7955 = vpop.f32.mrf.mxu0
      %v7956 = vadd.f32 %v7811, %v7955
      %v7957 = vpop.f32.mrf.mxu0
      %7958 = vmatprep.mubr.f32.mxu0 %v7432
      %7959 = vmatmul.mubr.f32.gmra.mxu0 %v7431
      %v7960 = vpop.f32.mrf.mxu0
      %v7961 = vadd.f32 %v7816, %v7960
      %v7962 = vpop.f32.mrf.mxu0
      %7963 = vmatprep.mubr.f32.mxu0 %v7437
      %7964 = vmatmul.mubr.f32.gmra.mxu0 %v7436
      %v7965 = vpop.f32.mrf.mxu0
      %v7966 = vadd.f32 %v7821, %v7965
      %v7967 = vpop.f32.mrf.mxu0
      %7968 = vmatprep.mubr.f32.mxu0 %v7442
      %7969 = vmatmul.mubr.f32.gmra.mxu0 %v7441
      %v7970 = vpop.f32.mrf.mxu0
      %v7971 = vadd.f32 %v7826, %v7970
      %v7972 = vpop.f32.mrf.mxu0
      %7973 = vmatprep.mubr.f32.mxu0 %v7447
      %7974 = vmatmul.mubr.f32.gmra.mxu0 %v7446
      %v7975 = vpop.f32.mrf.mxu0
      %v7976 = vadd.f32 %v7831, %v7975
      %v7977 = vpop.f32.mrf.mxu0
      %7978 = vmatprep.mubr.f32.mxu0 %v7452
      %7979 = vmatmul.mubr.f32.gmra.mxu0 %v7451
      %v7980 = vpop.f32.mrf.mxu0
      %v7981 = vadd.f32 %v7836, %v7980
      %v7982 = vpop.f32.mrf.mxu0
      %7983 = vmatprep.mubr.f32.mxu0 %v7457
      %7984 = vmatmul.mubr.f32.gmra.mxu0 %v7456
      %v7985 = vpop.f32.mrf.mxu0
      %v7986 = vadd.f32 %v7841, %v7985
      %v7987 = vpop.f32.mrf.mxu0
      %7988 = vmatprep.mubr.f32.mxu0 %v7462
      %7989 = vmatmul.mubr.f32.gmra.mxu0 %v7461
      %v7990 = vpop.f32.mrf.mxu0
      %v7991 = vadd.f32 %v7846, %v7990
      %v7992 = vpop.f32.mrf.mxu0
      %7993 = vmatprep.mubr.f32.mxu0 %v7467
      %7994 = vmatmul.mubr.f32.gmra.mxu0 %v7466
      %v7995 = vpop.f32.mrf.mxu0
      %v7996 = vadd.f32 %v7851, %v7995
      %v7997 = vpop.f32.mrf.mxu0
      %7998 = vmatprep.mubr.f32.mxu0 %v7472
      %7999 = vmatmul.mubr.f32.gmra.mxu0 %v7471
      %v8000 = vpop.f32.mrf.mxu0
      %v8001 = vadd.f32 %v7856, %v8000
      %v8002 = vpop.f32.mrf.mxu0
      %8003 = vmatprep.mubr.f32.mxu0 %v7477
      %8004 = vmatmul.mubr.f32.gmra.mxu0 %v7476
      %v8005 = vpop.f32.mrf.mxu0
      %v8006 = vadd.f32 %v7861, %v8005
      %v8007 = vpop.f32.mrf.mxu0
      %8008 = vmatprep.mubr.f32.mxu0 %v7482
      %8009 = vmatmul.mubr.f32.gmra.mxu0 %v7481
      %v8010 = vpop.f32.mrf.mxu0
      %v8011 = vadd.f32 %v7866, %v8010
      %v8012 = vpop.f32.mrf.mxu0
      %8013 = vmatprep.mubr.f32.mxu0 %v7487
      %8014 = vmatmul.mubr.f32.gmra.mxu0 %v7486
      %v8015 = vpop.f32.mrf.mxu0
      %v8016 = vadd.f32 %v7871, %v8015
      %v8017 = vpop.f32.mrf.mxu0
      %8018 = vmatprep.mubr.f32.mxu0 %v7492
      %8019 = vmatmul.mubr.f32.gmra.mxu0 %v7491
      %v8020 = vpop.f32.mrf.mxu0
      %v8021 = vadd.f32 %v7876, %v8020
      %v8022 = vpop.f32.mrf.mxu0
      %8023 = vdwg.mxu0
      %8024 = vmatprep.subr.mxu0 0.0
      %8025 = vmatpush1.msra.mxu0 %v7653
      %8026 = vmatprep.subr.mxu0 0.0
      %8027 = vmatpush1.msra.mxu0 %v7651
      %8028 = vmatprep.subr.mxu0 0.0
      %8029 = vmatpush1.msra.mxu0 %v7649
      %8030 = vmatprep.subr.mxu0 0.0
      %8031 = vmatpush1.msra.mxu0 %v7647
      %8032 = vmatprep.subr.mxu0 0.0
      %8033 = vmatpush1.msra.mxu0 %v7645
      %8034 = vmatprep.subr.mxu0 0.0
      %8035 = vmatpush1.msra.mxu0 %v7643
      %8036 = vmatprep.subr.mxu0 0.0
      %8037 = vmatpush1.msra.mxu0 %v7641
      %8038 = vmatprep.subr.mxu0 0.0
      %8039 = vmatpush1.msra.mxu0 %v7639
      %8040 = vmatprep.subr.mxu0 0.0
      %8041 = vmatpush1.msra.mxu0 %v7637
      %8042 = vmatprep.subr.mxu0 0.0
      %8043 = vmatpush1.msra.mxu0 %v7635
      %8044 = vmatprep.subr.mxu0 0.0
      %8045 = vmatpush1.msra.mxu0 %v7633
      %8046 = vmatprep.subr.mxu0 0.0
      %8047 = vmatpush1.msra.mxu0 %v7631
      %8048 = vmatprep.subr.mxu0 0.0
      %8049 = vmatpush1.msra.mxu0 %v7629
      %8050 = vmatprep.subr.mxu0 0.0
      %8051 = vmatpush1.msra.mxu0 %v7627
      %8052 = vmatprep.subr.mxu0 0.0
      %8053 = vmatpush1.msra.mxu0 %v7625
      %8054 = vmatprep.subr.mxu0 0.0
      %8055 = vmatpush1.msra.mxu0 %v7623
      %8056 = vmatprep.subr.mxu0 0.0
      %8057 = vmatpush2.msra.mxu0 0.0
      %8058 = vmatprep.subr.mxu0 0.0
      %8059 = vmatpush2.msra.mxu0 0.0
      %8060 = vmatprep.subr.mxu0 0.0
      %8061 = vmatpush2.msra.mxu0 0.0
      %8062 = vmatprep.subr.mxu0 0.0
      %8063 = vmatpush2.msra.mxu0 0.0
      %8064 = vmatprep.subr.mxu0 0.0
      %8065 = vmatpush2.msra.mxu0 0.0
      %8066 = vmatprep.subr.mxu0 0.0
      %8067 = vmatpush2.msra.mxu0 0.0
      %8068 = vmatprep.subr.mxu0 0.0
      %8069 = vmatpush2.msra.mxu0 0.0
      %8070 = vmatprep.subr.mxu0 0.0
      %8071 = vmatpush2.msra.mxu0 0.0
      %8072 = vmatprep.subr.mxu0 0.0
      %8073 = vmatpush2.msra.mxu0 0.0
      %8074 = vmatprep.subr.mxu0 0.0
      %8075 = vmatpush2.msra.mxu0 0.0
      %8076 = vmatprep.subr.mxu0 0.0
      %8077 = vmatpush2.msra.mxu0 0.0
      %8078 = vmatprep.subr.mxu0 0.0
      %8079 = vmatpush2.msra.mxu0 0.0
      %8080 = vmatprep.subr.mxu0 0.0
      %8081 = vmatpush2.msra.mxu0 0.0
      %8082 = vmatprep.subr.mxu0 0.0
      %8083 = vmatpush2.msra.mxu0 0.0
      %8084 = vmatprep.subr.mxu0 0.0
      %8085 = vmatpush2.msra.mxu0 0.0
      %8086 = vmatprep.subr.mxu0 0.0
      %8087 = vmatpush2.msra.mxu0 0.0
      %8088 = vmatprep.mubr.f32.mxu0 0.0
      %8089 = vmatmul.mubr.f32.gmra.mxu0 %v7418
      %v8090 = vpop.f32.mrf.mxu0
      %v8091 = vadd.f32 %v7946, %v8090
      %v8092 = vpop.f32.mrf.mxu0
      %8093 = vmatprep.mubr.f32.mxu0 0.0
      %8094 = vmatmul.mubr.f32.gmra.mxu0 %v7423
      %v8095 = vpop.f32.mrf.mxu0
      %v8096 = vadd.f32 %v7951, %v8095
      %v8097 = vpop.f32.mrf.mxu0
      %8098 = vmatprep.mubr.f32.mxu0 0.0
      %8099 = vmatmul.mubr.f32.gmra.mxu0 %v7428
      %v8100 = vpop.f32.mrf.mxu0
      %v8101 = vadd.f32 %v7956, %v8100
      %v8102 = vpop.f32.mrf.mxu0
      %8103 = vmatprep.mubr.f32.mxu0 0.0
      %8104 = vmatmul.mubr.f32.gmra.mxu0 %v7433
      %v8105 = vpop.f32.mrf.mxu0
      %v8106 = vadd.f32 %v7961, %v8105
      %v8107 = vpop.f32.mrf.mxu0
      %8108 = vmatprep.mubr.f32.mxu0 0.0
      %8109 = vmatmul.mubr.f32.gmra.mxu0 %v7438
      %v8110 = vpop.f32.mrf.mxu0
      %v8111 = vadd.f32 %v7966, %v8110
      %v8112 = vpop.f32.mrf.mxu0
      %8113 = vmatprep.mubr.f32.mxu0 0.0
      %8114 = vmatmul.mubr.f32.gmra.mxu0 %v7443
      %v8115 = vpop.f32.mrf.mxu0
      %v8116 = vadd.f32 %v7971, %v8115
      %v8117 = vpop.f32.mrf.mxu0
      %8118 = vmatprep.mubr.f32.mxu0 0.0
      %8119 = vmatmul.mubr.f32.gmra.mxu0 %v7448
      %v8120 = vpop.f32.mrf.mxu0
      %v8121 = vadd.f32 %v7976, %v8120
      %v8122 = vpop.f32.mrf.mxu0
      %8123 = vmatprep.mubr.f32.mxu0 0.0
      %8124 = vmatmul.mubr.f32.gmra.mxu0 %v7453
      %v8125 = vpop.f32.mrf.mxu0
      %v8126 = vadd.f32 %v7981, %v8125
      %v8127 = vpop.f32.mrf.mxu0
      %8128 = vmatprep.mubr.f32.mxu0 0.0
      %8129 = vmatmul.mubr.f32.gmra.mxu0 %v7458
      %v8130 = vpop.f32.mrf.mxu0
      %v8131 = vadd.f32 %v7986, %v8130
      %v8132 = vpop.f32.mrf.mxu0
      %8133 = vmatprep.mubr.f32.mxu0 0.0
      %8134 = vmatmul.mubr.f32.gmra.mxu0 %v7463
      %v8135 = vpop.f32.mrf.mxu0
      %v8136 = vadd.f32 %v7991, %v8135
      %v8137 = vpop.f32.mrf.mxu0
      %8138 = vmatprep.mubr.f32.mxu0 0.0
      %8139 = vmatmul.mubr.f32.gmra.mxu0 %v7468
      %v8140 = vpop.f32.mrf.mxu0
      %v8141 = vadd.f32 %v7996, %v8140
      %v8142 = vpop.f32.mrf.mxu0
      %8143 = vmatprep.mubr.f32.mxu0 0.0
      %8144 = vmatmul.mubr.f32.gmra.mxu0 %v7473
      %v8145 = vpop.f32.mrf.mxu0
      %v8146 = vadd.f32 %v8001, %v8145
      %v8147 = vpop.f32.mrf.mxu0
      %8148 = vmatprep.mubr.f32.mxu0 0.0
      %8149 = vmatmul.mubr.f32.gmra.mxu0 %v7478
      %v8150 = vpop.f32.mrf.mxu0
      %v8151 = vadd.f32 %v8006, %v8150
      %v8152 = vpop.f32.mrf.mxu0
      %8153 = vmatprep.mubr.f32.mxu0 0.0
      %8154 = vmatmul.mubr.f32.gmra.mxu0 %v7483
      %v8155 = vpop.f32.mrf.mxu0
      %v8156 = vadd.f32 %v8011, %v8155
      %v8157 = vpop.f32.mrf.mxu0
      %8158 = vmatprep.mubr.f32.mxu0 0.0
      %8159 = vmatmul.mubr.f32.gmra.mxu0 %v7488
      %v8160 = vpop.f32.mrf.mxu0
      %v8161 = vadd.f32 %v8016, %v8160
      %v8162 = vpop.f32.mrf.mxu0
      %8163 = vmatprep.mubr.f32.mxu0 0.0
      %8164 = vmatmul.mubr.f32.gmra.mxu0 %v7493
      %v8165 = vpop.f32.mrf.mxu0
      %v8166 = vadd.f32 %v8021, %v8165
      %v8167 = vpop.f32.mrf.mxu0
      %8168 = vdwg.mxu0
      %8185 = vrot.lane.b32.xlu0 %v8091, 16
      %v8186 = vpop.permute.xlu0 %8185
      %8187 = vrot.lane.b32.xlu0 %v8096, 16
      %v8188 = vpop.permute.xlu0 %8187
      %8189 = vrot.lane.b32.xlu0 %v8101, 16
      %v8190 = vpop.permute.xlu0 %8189
      %8191 = vrot.lane.b32.xlu0 %v8106, 16
      %v8192 = vpop.permute.xlu0 %8191
      %8193 = vrot.lane.b32.xlu0 %v8111, 16
      %v8194 = vpop.permute.xlu0 %8193
      %8195 = vrot.lane.b32.xlu0 %v8116, 16
      %v8196 = vpop.permute.xlu0 %8195
      %8197 = vrot.lane.b32.xlu0 %v8121, 16
      %v8198 = vpop.permute.xlu0 %8197
      %8199 = vrot.lane.b32.xlu0 %v8126, 16
      %v8200 = vpop.permute.xlu0 %8199
      %8201 = vrot.lane.b32.xlu0 %v8131, 16
      %v8202 = vpop.permute.xlu0 %8201
      %8203 = vrot.lane.b32.xlu0 %v8136, 16
      %v8204 = vpop.permute.xlu0 %8203
      %8205 = vrot.lane.b32.xlu0 %v8141, 16
      %v8206 = vpop.permute.xlu0 %8205
      %8207 = vrot.lane.b32.xlu0 %v8146, 16
      %v8208 = vpop.permute.xlu0 %8207
      %8209 = vrot.lane.b32.xlu0 %v8151, 16
      %v8210 = vpop.permute.xlu0 %8209
      %8211 = vrot.lane.b32.xlu0 %v8156, 16
      %v8212 = vpop.permute.xlu0 %8211
      %8213 = vrot.lane.b32.xlu0 %v8161, 16
      %v8214 = vpop.permute.xlu0 %8213
      %8215 = vrot.lane.b32.xlu0 %v8166, 16
      %v8216 = vpop.permute.xlu0 %8215
      %vm8233 = vcmask 195712
      %8234 = vst.msk [vmem:[#allocation2] sm:$0xff] %vm8233, %v8186
      %8235 = vst.msk [vmem:[#allocation2 + $0x8] sm:$0xff] %vm8233, %v8188
      %8236 = vst.msk [vmem:[#allocation2 + $0x10] sm:$0xff] %vm8233, %v8190
      %8237 = vst.msk [vmem:[#allocation2 + $0x18] sm:$0xff] %vm8233, %v8192
      %8238 = vst.msk [vmem:[#allocation2 + $0x20] sm:$0xff] %vm8233, %v8194
      %8239 = vst.msk [vmem:[#allocation2 + $0x28] sm:$0xff] %vm8233, %v8196
      %8240 = vst.msk [vmem:[#allocation2 + $0x30] sm:$0xff] %vm8233, %v8198
      %8241 = vst.msk [vmem:[#allocation2 + $0x38] sm:$0xff] %vm8233, %v8200
      %8242 = vst.msk [vmem:[#allocation2 + $0x40] sm:$0xff] %vm8233, %v8202
      %8243 = vst.msk [vmem:[#allocation2 + $0x48] sm:$0xff] %vm8233, %v8204
      %8244 = vst.msk [vmem:[#allocation2 + $0x50] sm:$0xff] %vm8233, %v8206
      %8245 = vst.msk [vmem:[#allocation2 + $0x58] sm:$0xff] %vm8233, %v8208
      %8246 = vst.msk [vmem:[#allocation2 + $0x60] sm:$0xff] %vm8233, %v8210
      %8247 = vst.msk [vmem:[#allocation2 + $0x68] sm:$0xff] %vm8233, %v8212
      %8248 = vst.msk [vmem:[#allocation2 + $0x70] sm:$0xff] %vm8233, %v8214
      %8249 = vst.msk [vmem:[#allocation2 + $0x78] sm:$0xff] %vm8233, %v8216
      %8250 = vrot.lane.b32.xlu0 %v1153, 104
      %v8251 = vpop.permute.xlu0 %8250
      %8252 = vrot.lane.b32.xlu0 %v1158, 104
      %v8253 = vpop.permute.xlu0 %8252
      %8254 = vrot.lane.b32.xlu0 %v1163, 104
      %v8255 = vpop.permute.xlu0 %8254
      %8256 = vrot.lane.b32.xlu0 %v1168, 104
      %v8257 = vpop.permute.xlu0 %8256
      %8258 = vrot.lane.b32.xlu0 %v1173, 104
      %v8259 = vpop.permute.xlu0 %8258
      %8260 = vrot.lane.b32.xlu0 %v1178, 104
      %v8261 = vpop.permute.xlu0 %8260
      %8262 = vrot.lane.b32.xlu0 %v1183, 104
      %v8263 = vpop.permute.xlu0 %8262
      %8264 = vrot.lane.b32.xlu0 %v1188, 104
      %v8265 = vpop.permute.xlu0 %8264
      %8266 = vrot.lane.b32.xlu0 %v1193, 104
      %v8267 = vpop.permute.xlu0 %8266
      %8268 = vrot.lane.b32.xlu0 %v1198, 104
      %v8269 = vpop.permute.xlu0 %8268
      %8270 = vrot.lane.b32.xlu0 %v1203, 104
      %v8271 = vpop.permute.xlu0 %8270
      %8272 = vrot.lane.b32.xlu0 %v1208, 104
      %v8273 = vpop.permute.xlu0 %8272
      %8274 = vrot.lane.b32.xlu0 %v1213, 104
      %v8275 = vpop.permute.xlu0 %8274
      %8276 = vrot.lane.b32.xlu0 %v1218, 104
      %v8277 = vpop.permute.xlu0 %8276
      %8278 = vrot.lane.b32.xlu0 %v1223, 104
      %v8279 = vpop.permute.xlu0 %8278
      %8280 = vrot.lane.b32.xlu0 %v1228, 104
      %v8281 = vpop.permute.xlu0 %8280
      %8282 = vrot.lane.b32.xlu0 %v1362, 104
      %v8283 = vpop.permute.xlu0 %8282
      %8284 = vrot.lane.b32.xlu0 %v1367, 104
      %v8285 = vpop.permute.xlu0 %8284
      %8286 = vrot.lane.b32.xlu0 %v1372, 104
      %v8287 = vpop.permute.xlu0 %8286
      %8288 = vrot.lane.b32.xlu0 %v1377, 104
      %v8289 = vpop.permute.xlu0 %8288
      %8290 = vrot.lane.b32.xlu0 %v1382, 104
      %v8291 = vpop.permute.xlu0 %8290
      %8292 = vrot.lane.b32.xlu0 %v1387, 104
      %v8293 = vpop.permute.xlu0 %8292
      %8294 = vrot.lane.b32.xlu0 %v1392, 104
      %v8295 = vpop.permute.xlu0 %8294
      %8296 = vrot.lane.b32.xlu0 %v1397, 104
      %v8297 = vpop.permute.xlu0 %8296
      %8298 = vrot.lane.b32.xlu0 %v1402, 104
      %v8299 = vpop.permute.xlu0 %8298
      %8300 = vrot.lane.b32.xlu0 %v1407, 104
      %v8301 = vpop.permute.xlu0 %8300
      %8302 = vrot.lane.b32.xlu0 %v1412, 104
      %v8303 = vpop.permute.xlu0 %8302
      %8304 = vrot.lane.b32.xlu0 %v1417, 104
      %v8305 = vpop.permute.xlu0 %8304
      %8306 = vrot.lane.b32.xlu0 %v1422, 104
      %v8307 = vpop.permute.xlu0 %8306
      %8308 = vrot.lane.b32.xlu0 %v1427, 104
      %v8309 = vpop.permute.xlu0 %8308
      %8310 = vrot.lane.b32.xlu0 %v1432, 104
      %v8311 = vpop.permute.xlu0 %8310
      %8312 = vrot.lane.b32.xlu0 %v1437, 104
      %v8313 = vpop.permute.xlu0 %8312
      %8314 = vrot.lane.b32.xlu0 %v1442, 104
      %v8315 = vpop.permute.xlu0 %8314
      %8316 = vrot.lane.b32.xlu0 %v1447, 104
      %v8317 = vpop.permute.xlu0 %8316
      %8318 = vrot.lane.b32.xlu0 %v1452, 104
      %v8319 = vpop.permute.xlu0 %8318
      %8320 = vrot.lane.b32.xlu0 %v1457, 104
      %v8321 = vpop.permute.xlu0 %8320
      %8322 = vrot.lane.b32.xlu0 %v1462, 104
      %v8323 = vpop.permute.xlu0 %8322
      %8324 = vrot.lane.b32.xlu0 %v1467, 104
      %v8325 = vpop.permute.xlu0 %8324
      %8326 = vrot.lane.b32.xlu0 %v1472, 104
      %v8327 = vpop.permute.xlu0 %8326
      %8328 = vrot.lane.b32.xlu0 %v1477, 104
      %v8329 = vpop.permute.xlu0 %8328
      %8330 = vrot.lane.b32.xlu0 %v1482, 104
      %v8331 = vpop.permute.xlu0 %8330
      %8332 = vrot.lane.b32.xlu0 %v1487, 104
      %v8333 = vpop.permute.xlu0 %8332
      %8334 = vrot.lane.b32.xlu0 %v1492, 104
      %v8335 = vpop.permute.xlu0 %8334
      %8336 = vrot.lane.b32.xlu0 %v1497, 104
      %v8337 = vpop.permute.xlu0 %8336
      %8338 = vrot.lane.b32.xlu0 %v1502, 104
      %v8339 = vpop.permute.xlu0 %8338
      %8340 = vrot.lane.b32.xlu0 %v1507, 104
      %v8341 = vpop.permute.xlu0 %8340
      %8342 = vrot.lane.b32.xlu0 %v1512, 104
      %v8343 = vpop.permute.xlu0 %8342
      %8344 = vrot.lane.b32.xlu0 %v1517, 104
      %v8345 = vpop.permute.xlu0 %8344
      %8346 = vrot.lane.b32.xlu0 %v1522, 104
      %v8347 = vpop.permute.xlu0 %8346
      %8348 = vrot.lane.b32.xlu0 %v1527, 104
      %v8349 = vpop.permute.xlu0 %8348
      %8350 = vrot.lane.b32.xlu0 %v1532, 104
      %v8351 = vpop.permute.xlu0 %8350
      %8352 = vrot.lane.b32.xlu0 %v1537, 104
      %v8353 = vpop.permute.xlu0 %8352
      %8354 = vrot.lane.b32.xlu0 %v1542, 104
      %v8355 = vpop.permute.xlu0 %8354
      %8356 = vrot.lane.b32.xlu0 %v1547, 104
      %v8357 = vpop.permute.xlu0 %8356
      %8358 = vrot.lane.b32.xlu0 %v1552, 104
      %v8359 = vpop.permute.xlu0 %8358
      %8360 = vrot.lane.b32.xlu0 %v1557, 104
      %v8361 = vpop.permute.xlu0 %8360
      %8362 = vrot.lane.b32.xlu0 %v1562, 104
      %v8363 = vpop.permute.xlu0 %8362
      %8364 = vrot.lane.b32.xlu0 %v1567, 104
      %v8365 = vpop.permute.xlu0 %8364
      %8366 = vrot.lane.b32.xlu0 %v1572, 104
      %v8367 = vpop.permute.xlu0 %8366
      %8368 = vrot.lane.b32.xlu0 %v1577, 104
      %v8369 = vpop.permute.xlu0 %8368
      %8370 = vrot.lane.b32.xlu0 %v1582, 104
      %v8371 = vpop.permute.xlu0 %8370
      %8372 = vrot.lane.b32.xlu0 %v1587, 104
      %v8373 = vpop.permute.xlu0 %8372
      %8374 = vrot.lane.b32.xlu0 %v1592, 104
      %v8375 = vpop.permute.xlu0 %8374
      %8376 = vrot.lane.b32.xlu0 %v1597, 104
      %v8377 = vpop.permute.xlu0 %8376
      %8378 = vrot.lane.b32.xlu0 %v1602, 104
      %v8379 = vpop.permute.xlu0 %8378
      %8380 = vrot.lane.b32.xlu0 %v1607, 104
      %v8381 = vpop.permute.xlu0 %8380
      %8382 = vrot.lane.b32.xlu0 %v1612, 104
      %v8383 = vpop.permute.xlu0 %8382
      %8384 = vrot.lane.b32.xlu0 %v1617, 104
      %v8385 = vpop.permute.xlu0 %8384
      %8386 = vrot.lane.b32.xlu0 %v1622, 104
      %v8387 = vpop.permute.xlu0 %8386
      %8388 = vrot.lane.b32.xlu0 %v1627, 104
      %v8389 = vpop.permute.xlu0 %8388
      %8390 = vrot.lane.b32.xlu0 %v1632, 104
      %v8391 = vpop.permute.xlu0 %8390
      %8392 = vrot.lane.b32.xlu0 %v1637, 104
      %v8393 = vpop.permute.xlu0 %8392
      %8394 = vrot.lane.b32.xlu0 %v1642, 104
      %v8395 = vpop.permute.xlu0 %8394
      %8396 = vrot.lane.b32.xlu0 %v1647, 104
      %v8397 = vpop.permute.xlu0 %8396
      %8398 = vrot.lane.b32.xlu0 %v1652, 104
      %v8399 = vpop.permute.xlu0 %8398
      %8400 = vrot.lane.b32.xlu0 %v1657, 104
      %v8401 = vpop.permute.xlu0 %8400
      %8402 = vrot.lane.b32.xlu0 %v1662, 104
      %v8403 = vpop.permute.xlu0 %8402
      %8404 = vrot.lane.b32.xlu0 %v1667, 104
      %v8405 = vpop.permute.xlu0 %8404
      %8406 = vrot.lane.b32.xlu0 %v1672, 104
      %v8407 = vpop.permute.xlu0 %8406
      %8408 = vrot.lane.b32.xlu0 %v1677, 104
      %v8409 = vpop.permute.xlu0 %8408
      %8410 = vrot.lane.b32.xlu0 %v1682, 104
      %v8411 = vpop.permute.xlu0 %8410
      %8412 = vrot.lane.b32.xlu0 %v1687, 104
      %v8413 = vpop.permute.xlu0 %8412
      %8414 = vrot.lane.b32.xlu0 %v1692, 104
      %v8415 = vpop.permute.xlu0 %8414
      %8416 = vrot.lane.b32.xlu0 %v1697, 104
      %v8417 = vpop.permute.xlu0 %8416
      %8418 = vrot.lane.b32.xlu0 %v1702, 104
      %v8419 = vpop.permute.xlu0 %8418
      %8420 = vrot.lane.b32.xlu0 %v1707, 104
      %v8421 = vpop.permute.xlu0 %8420
      %8422 = vrot.lane.b32.xlu0 %v1712, 104
      %v8423 = vpop.permute.xlu0 %8422
      %8424 = vrot.lane.b32.xlu0 %v1717, 104
      %v8425 = vpop.permute.xlu0 %8424
      %8426 = vrot.lane.b32.xlu0 %v1722, 104
      %v8427 = vpop.permute.xlu0 %8426
      %8428 = vrot.lane.b32.xlu0 %v1727, 104
      %v8429 = vpop.permute.xlu0 %8428
      %8430 = vrot.lane.b32.xlu0 %v1732, 104
      %v8431 = vpop.permute.xlu0 %8430
      %8432 = vrot.lane.b32.xlu0 %v1737, 104
      %v8433 = vpop.permute.xlu0 %8432
      %8434 = vrot.lane.b32.xlu0 %v1742, 104
      %v8435 = vpop.permute.xlu0 %8434
      %8436 = vrot.lane.b32.xlu0 %v1747, 104
      %v8437 = vpop.permute.xlu0 %8436
      %8438 = vrot.lane.b32.xlu0 %v1752, 104
      %v8439 = vpop.permute.xlu0 %8438
      %8440 = vrot.lane.b32.xlu0 %v1757, 104
      %v8441 = vpop.permute.xlu0 %8440
      %v8442 = vsel %vm2005, %v8251, 0
      %v8444 = vsel %vm2005, %v8253, 0
      %v8446 = vsel %vm2005, %v8255, 0
      %v8448 = vsel %vm2005, %v8257, 0
      %v8450 = vsel %vm2005, %v8259, 0
      %v8452 = vsel %vm2005, %v8261, 0
      %v8454 = vsel %vm2005, %v8263, 0
      %v8456 = vsel %vm2005, %v8265, 0
      %v8458 = vsel %vm2005, %v8267, 0
      %v8460 = vsel %vm2005, %v8269, 0
      %v8462 = vsel %vm2005, %v8271, 0
      %v8464 = vsel %vm2005, %v8273, 0
      %v8466 = vsel %vm2005, %v8275, 0
      %v8468 = vsel %vm2005, %v8277, 0
      %v8470 = vsel %vm2005, %v8279, 0
      %v8472 = vsel %vm2005, %v8281, 0
      %v8474 = vsel %vm2005, %v8283, 0
      %v8476 = vsel %vm2005, %v8285, 0
      %v8478 = vsel %vm2005, %v8287, 0
      %v8480 = vsel %vm2005, %v8289, 0
      %v8482 = vsel %vm2005, %v8291, 0
      %v8484 = vsel %vm2005, %v8293, 0
      %v8486 = vsel %vm2005, %v8295, 0
      %v8488 = vsel %vm2005, %v8297, 0
      %v8490 = vsel %vm2005, %v8299, 0
      %v8492 = vsel %vm2005, %v8301, 0
      %v8494 = vsel %vm2005, %v8303, 0
      %v8496 = vsel %vm2005, %v8305, 0
      %v8498 = vsel %vm2005, %v8307, 0
      %v8500 = vsel %vm2005, %v8309, 0
      %v8502 = vsel %vm2005, %v8311, 0
      %v8504 = vsel %vm2005, %v8313, 0
      %v8506 = vsel %vm2005, %v8315, 0
      %v8508 = vsel %vm2005, %v8317, 0
      %v8510 = vsel %vm2005, %v8319, 0
      %v8512 = vsel %vm2005, %v8321, 0
      %v8514 = vsel %vm2005, %v8323, 0
      %v8516 = vsel %vm2005, %v8325, 0
      %v8518 = vsel %vm2005, %v8327, 0
      %v8520 = vsel %vm2005, %v8329, 0
      %v8522 = vsel %vm2005, %v8331, 0
      %v8524 = vsel %vm2005, %v8333, 0
      %v8526 = vsel %vm2005, %v8335, 0
      %v8528 = vsel %vm2005, %v8337, 0
      %v8530 = vsel %vm2005, %v8339, 0
      %v8532 = vsel %vm2005, %v8341, 0
      %v8534 = vsel %vm2005, %v8343, 0
      %v8536 = vsel %vm2005, %v8345, 0
      %v8538 = vsel %vm2005, %v8347, 0
      %v8540 = vsel %vm2005, %v8349, 0
      %v8542 = vsel %vm2005, %v8351, 0
      %v8544 = vsel %vm2005, %v8353, 0
      %v8546 = vsel %vm2005, %v8355, 0
      %v8548 = vsel %vm2005, %v8357, 0
      %v8550 = vsel %vm2005, %v8359, 0
      %v8552 = vsel %vm2005, %v8361, 0
      %v8554 = vsel %vm2005, %v8363, 0
      %v8556 = vsel %vm2005, %v8365, 0
      %v8558 = vsel %vm2005, %v8367, 0
      %v8560 = vsel %vm2005, %v8369, 0
      %v8562 = vsel %vm2005, %v8371, 0
      %v8564 = vsel %vm2005, %v8373, 0
      %v8566 = vsel %vm2005, %v8375, 0
      %v8568 = vsel %vm2005, %v8377, 0
      %v8570 = vsel %vm2005, %v8379, 0
      %v8572 = vsel %vm2005, %v8381, 0
      %v8574 = vsel %vm2005, %v8383, 0
      %v8576 = vsel %vm2005, %v8385, 0
      %v8578 = vsel %vm2005, %v8387, 0
      %v8580 = vsel %vm2005, %v8389, 0
      %v8582 = vsel %vm2005, %v8391, 0
      %v8584 = vsel %vm2005, %v8393, 0
      %v8586 = vsel %vm2005, %v8395, 0
      %v8588 = vsel %vm2005, %v8397, 0
      %v8590 = vsel %vm2005, %v8399, 0
      %v8592 = vsel %vm2005, %v8401, 0
      %v8594 = vsel %vm2005, %v8403, 0
      %v8596 = vsel %vm2005, %v8405, 0
      %v8598 = vsel %vm2005, %v8407, 0
      %v8600 = vsel %vm2005, %v8409, 0
      %v8602 = vsel %vm2005, %v8411, 0
      %v8604 = vsel %vm2005, %v8413, 0
      %v8606 = vsel %vm2005, %v8415, 0
      %v8608 = vsel %vm2005, %v8417, 0
      %v8610 = vsel %vm2005, %v8419, 0
      %v8612 = vsel %vm2005, %v8421, 0
      %v8614 = vsel %vm2005, %v8423, 0
      %v8616 = vsel %vm2005, %v8425, 0
      %v8618 = vsel %vm2005, %v8427, 0
      %v8620 = vsel %vm2005, %v8429, 0
      %v8622 = vsel %vm2005, %v8431, 0
      %v8624 = vsel %vm2005, %v8433, 0
      %v8626 = vsel %vm2005, %v8435, 0
      %v8628 = vsel %vm2005, %v8437, 0
      %v8630 = vsel %vm2005, %v8439, 0
      %v8632 = vsel %vm2005, %v8441, 0
      %8634 = vmatprep.subr.mxu0 0.0
      %8635 = vmatpush1.xpose.msra.mxu0 %v8504
      %8636 = vmatprep.subr.mxu0 0.0
      %8637 = vmatpush1.xpose.msra.mxu0 %v8502
      %8638 = vmatprep.subr.mxu0 0.0
      %8639 = vmatpush1.xpose.msra.mxu0 %v8500
      %8640 = vmatprep.subr.mxu0 0.0
      %8641 = vmatpush1.xpose.msra.mxu0 %v8498
      %8642 = vmatprep.subr.mxu0 0.0
      %8643 = vmatpush1.xpose.msra.mxu0 %v8496
      %8644 = vmatprep.subr.mxu0 0.0
      %8645 = vmatpush1.xpose.msra.mxu0 %v8494
      %8646 = vmatprep.subr.mxu0 0.0
      %8647 = vmatpush1.xpose.msra.mxu0 %v8492
      %8648 = vmatprep.subr.mxu0 0.0
      %8649 = vmatpush1.xpose.msra.mxu0 %v8490
      %8650 = vmatprep.subr.mxu0 0.0
      %8651 = vmatpush1.xpose.msra.mxu0 %v8488
      %8652 = vmatprep.subr.mxu0 0.0
      %8653 = vmatpush1.xpose.msra.mxu0 %v8486
      %8654 = vmatprep.subr.mxu0 0.0
      %8655 = vmatpush1.xpose.msra.mxu0 %v8484
      %8656 = vmatprep.subr.mxu0 0.0
      %8657 = vmatpush1.xpose.msra.mxu0 %v8482
      %8658 = vmatprep.subr.mxu0 0.0
      %8659 = vmatpush1.xpose.msra.mxu0 %v8480
      %8660 = vmatprep.subr.mxu0 0.0
      %8661 = vmatpush1.xpose.msra.mxu0 %v8478
      %8662 = vmatprep.subr.mxu0 0.0
      %8663 = vmatpush1.xpose.msra.mxu0 %v8476
      %8664 = vmatprep.subr.mxu0 0.0
      %8665 = vmatpush1.xpose.msra.mxu0 %v8474
      %8666 = vmatprep.subr.mxu0 0.0
      %8667 = vmatpush2.xpose.msra.mxu0 %v8536
      %8668 = vmatprep.subr.mxu0 0.0
      %8669 = vmatpush2.xpose.msra.mxu0 %v8534
      %8670 = vmatprep.subr.mxu0 0.0
      %8671 = vmatpush2.xpose.msra.mxu0 %v8532
      %8672 = vmatprep.subr.mxu0 0.0
      %8673 = vmatpush2.xpose.msra.mxu0 %v8530
      %8674 = vmatprep.subr.mxu0 0.0
      %8675 = vmatpush2.xpose.msra.mxu0 %v8528
      %8676 = vmatprep.subr.mxu0 0.0
      %8677 = vmatpush2.xpose.msra.mxu0 %v8526
      %8678 = vmatprep.subr.mxu0 0.0
      %8679 = vmatpush2.xpose.msra.mxu0 %v8524
      %8680 = vmatprep.subr.mxu0 0.0
      %8681 = vmatpush2.xpose.msra.mxu0 %v8522
      %8682 = vmatprep.subr.mxu0 0.0
      %8683 = vmatpush2.xpose.msra.mxu0 %v8520
      %8684 = vmatprep.subr.mxu0 0.0
      %8685 = vmatpush2.xpose.msra.mxu0 %v8518
      %8686 = vmatprep.subr.mxu0 0.0
      %8687 = vmatpush2.xpose.msra.mxu0 %v8516
      %8688 = vmatprep.subr.mxu0 0.0
      %8689 = vmatpush2.xpose.msra.mxu0 %v8514
      %8690 = vmatprep.subr.mxu0 0.0
      %8691 = vmatpush2.xpose.msra.mxu0 %v8512
      %8692 = vmatprep.subr.mxu0 0.0
      %8693 = vmatpush2.xpose.msra.mxu0 %v8510
      %8694 = vmatprep.subr.mxu0 0.0
      %8695 = vmatpush2.xpose.msra.mxu0 %v8508
      %8696 = vmatprep.subr.mxu0 0.0
      %8697 = vmatpush2.xpose.msra.mxu0 %v8506
      %8698 = vmatprep.mubr.f32.mxu0 0.0
      %8699 = vmatmul.mubr.f32.gmra.mxu0 %v8442
      %v8700 = vpop.f32.mrf.mxu0
      %v8701 = vadd.f32 %v1925, %v8700
      %v8702 = vpop.f32.mrf.mxu0
      %v8703 = vadd.f32 %v1926, %v8702
      %8704 = vmatprep.mubr.f32.mxu0 0.0
      %8705 = vmatmul.mubr.f32.gmra.mxu0 %v8444
      %v8706 = vpop.f32.mrf.mxu0
      %v8707 = vadd.f32 %v1930, %v8706
      %v8708 = vpop.f32.mrf.mxu0
      %v8709 = vadd.f32 %v1931, %v8708
      %8710 = vmatprep.mubr.f32.mxu0 0.0
      %8711 = vmatmul.mubr.f32.gmra.mxu0 %v8446
      %v8712 = vpop.f32.mrf.mxu0
      %v8713 = vadd.f32 %v1935, %v8712
      %v8714 = vpop.f32.mrf.mxu0
      %v8715 = vadd.f32 %v1936, %v8714
      %8716 = vmatprep.mubr.f32.mxu0 0.0
      %8717 = vmatmul.mubr.f32.gmra.mxu0 %v8448
      %v8718 = vpop.f32.mrf.mxu0
      %v8719 = vadd.f32 %v1940, %v8718
      %v8720 = vpop.f32.mrf.mxu0
      %v8721 = vadd.f32 %v1941, %v8720
      %8722 = vmatprep.mubr.f32.mxu0 0.0
      %8723 = vmatmul.mubr.f32.gmra.mxu0 %v8450
      %v8724 = vpop.f32.mrf.mxu0
      %v8725 = vadd.f32 %v1945, %v8724
      %v8726 = vpop.f32.mrf.mxu0
      %v8727 = vadd.f32 %v1946, %v8726
      %8728 = vmatprep.mubr.f32.mxu0 0.0
      %8729 = vmatmul.mubr.f32.gmra.mxu0 %v8452
      %v8730 = vpop.f32.mrf.mxu0
      %v8731 = vadd.f32 %v1950, %v8730
      %v8732 = vpop.f32.mrf.mxu0
      %v8733 = vadd.f32 %v1951, %v8732
      %8734 = vmatprep.mubr.f32.mxu0 0.0
      %8735 = vmatmul.mubr.f32.gmra.mxu0 %v8454
      %v8736 = vpop.f32.mrf.mxu0
      %v8737 = vadd.f32 %v1955, %v8736
      %v8738 = vpop.f32.mrf.mxu0
      %v8739 = vadd.f32 %v1956, %v8738
      %8740 = vmatprep.mubr.f32.mxu0 0.0
      %8741 = vmatmul.mubr.f32.gmra.mxu0 %v8456
      %v8742 = vpop.f32.mrf.mxu0
      %v8743 = vadd.f32 %v1960, %v8742
      %v8744 = vpop.f32.mrf.mxu0
      %v8745 = vadd.f32 %v1961, %v8744
      %8746 = vmatprep.mubr.f32.mxu0 0.0
      %8747 = vmatmul.mubr.f32.gmra.mxu0 %v8458
      %v8748 = vpop.f32.mrf.mxu0
      %v8749 = vadd.f32 %v1965, %v8748
      %v8750 = vpop.f32.mrf.mxu0
      %v8751 = vadd.f32 %v1966, %v8750
      %8752 = vmatprep.mubr.f32.mxu0 0.0
      %8753 = vmatmul.mubr.f32.gmra.mxu0 %v8460
      %v8754 = vpop.f32.mrf.mxu0
      %v8755 = vadd.f32 %v1970, %v8754
      %v8756 = vpop.f32.mrf.mxu0
      %v8757 = vadd.f32 %v1971, %v8756
      %8758 = vmatprep.mubr.f32.mxu0 0.0
      %8759 = vmatmul.mubr.f32.gmra.mxu0 %v8462
      %v8760 = vpop.f32.mrf.mxu0
      %v8761 = vadd.f32 %v1975, %v8760
      %v8762 = vpop.f32.mrf.mxu0
      %v8763 = vadd.f32 %v1976, %v8762
      %8764 = vmatprep.mubr.f32.mxu0 0.0
      %8765 = vmatmul.mubr.f32.gmra.mxu0 %v8464
      %v8766 = vpop.f32.mrf.mxu0
      %v8767 = vadd.f32 %v1980, %v8766
      %v8768 = vpop.f32.mrf.mxu0
      %v8769 = vadd.f32 %v1981, %v8768
      %8770 = vmatprep.mubr.f32.mxu0 0.0
      %8771 = vmatmul.mubr.f32.gmra.mxu0 %v8466
      %v8772 = vpop.f32.mrf.mxu0
      %v8773 = vadd.f32 %v1985, %v8772
      %v8774 = vpop.f32.mrf.mxu0
      %v8775 = vadd.f32 %v1986, %v8774
      %8776 = vmatprep.mubr.f32.mxu0 0.0
      %8777 = vmatmul.mubr.f32.gmra.mxu0 %v8468
      %v8778 = vpop.f32.mrf.mxu0
      %v8779 = vadd.f32 %v1990, %v8778
      %v8780 = vpop.f32.mrf.mxu0
      %v8781 = vadd.f32 %v1991, %v8780
      %8782 = vmatprep.mubr.f32.mxu0 0.0
      %8783 = vmatmul.mubr.f32.gmra.mxu0 %v8470
      %v8784 = vpop.f32.mrf.mxu0
      %v8785 = vadd.f32 %v1995, %v8784
      %v8786 = vpop.f32.mrf.mxu0
      %v8787 = vadd.f32 %v1996, %v8786
      %8788 = vmatprep.mubr.f32.mxu0 0.0
      %8789 = vmatmul.mubr.f32.gmra.mxu0 %v8472
      %v8790 = vpop.f32.mrf.mxu0
      %v8791 = vadd.f32 %v2000, %v8790
      %v8792 = vpop.f32.mrf.mxu0
      %v8793 = vadd.f32 %v2001, %v8792
      %8794 = vdwg.mxu0
      %8795 = vmatprep.subr.mxu0 0.0
      %8796 = vmatpush1.xpose.msra.mxu0 %v8568
      %8797 = vmatprep.subr.mxu0 0.0
      %8798 = vmatpush1.xpose.msra.mxu0 %v8566
      %8799 = vmatprep.subr.mxu0 0.0
      %8800 = vmatpush1.xpose.msra.mxu0 %v8564
      %8801 = vmatprep.subr.mxu0 0.0
      %8802 = vmatpush1.xpose.msra.mxu0 %v8562
      %8803 = vmatprep.subr.mxu0 0.0
      %8804 = vmatpush1.xpose.msra.mxu0 %v8560
      %8805 = vmatprep.subr.mxu0 0.0
      %8806 = vmatpush1.xpose.msra.mxu0 %v8558
      %8807 = vmatprep.subr.mxu0 0.0
      %8808 = vmatpush1.xpose.msra.mxu0 %v8556
      %8809 = vmatprep.subr.mxu0 0.0
      %8810 = vmatpush1.xpose.msra.mxu0 %v8554
      %8811 = vmatprep.subr.mxu0 0.0
      %8812 = vmatpush1.xpose.msra.mxu0 %v8552
      %8813 = vmatprep.subr.mxu0 0.0
      %8814 = vmatpush1.xpose.msra.mxu0 %v8550
      %8815 = vmatprep.subr.mxu0 0.0
      %8816 = vmatpush1.xpose.msra.mxu0 %v8548
      %8817 = vmatprep.subr.mxu0 0.0
      %8818 = vmatpush1.xpose.msra.mxu0 %v8546
      %8819 = vmatprep.subr.mxu0 0.0
      %8820 = vmatpush1.xpose.msra.mxu0 %v8544
      %8821 = vmatprep.subr.mxu0 0.0
      %8822 = vmatpush1.xpose.msra.mxu0 %v8542
      %8823 = vmatprep.subr.mxu0 0.0
      %8824 = vmatpush1.xpose.msra.mxu0 %v8540
      %8825 = vmatprep.subr.mxu0 0.0
      %8826 = vmatpush1.xpose.msra.mxu0 %v8538
      %8827 = vmatprep.subr.mxu0 0.0
      %8828 = vmatpush2.xpose.msra.mxu0 %v8600
      %8829 = vmatprep.subr.mxu0 0.0
      %8830 = vmatpush2.xpose.msra.mxu0 %v8598
      %8831 = vmatprep.subr.mxu0 0.0
      %8832 = vmatpush2.xpose.msra.mxu0 %v8596
      %8833 = vmatprep.subr.mxu0 0.0
      %8834 = vmatpush2.xpose.msra.mxu0 %v8594
      %8835 = vmatprep.subr.mxu0 0.0
      %8836 = vmatpush2.xpose.msra.mxu0 %v8592
      %8837 = vmatprep.subr.mxu0 0.0
      %8838 = vmatpush2.xpose.msra.mxu0 %v8590
      %8839 = vmatprep.subr.mxu0 0.0
      %8840 = vmatpush2.xpose.msra.mxu0 %v8588
      %8841 = vmatprep.subr.mxu0 0.0
      %8842 = vmatpush2.xpose.msra.mxu0 %v8586
      %8843 = vmatprep.subr.mxu0 0.0
      %8844 = vmatpush2.xpose.msra.mxu0 %v8584
      %8845 = vmatprep.subr.mxu0 0.0
      %8846 = vmatpush2.xpose.msra.mxu0 %v8582
      %8847 = vmatprep.subr.mxu0 0.0
      %8848 = vmatpush2.xpose.msra.mxu0 %v8580
      %8849 = vmatprep.subr.mxu0 0.0
      %8850 = vmatpush2.xpose.msra.mxu0 %v8578
      %8851 = vmatprep.subr.mxu0 0.0
      %8852 = vmatpush2.xpose.msra.mxu0 %v8576
      %8853 = vmatprep.subr.mxu0 0.0
      %8854 = vmatpush2.xpose.msra.mxu0 %v8574
      %8855 = vmatprep.subr.mxu0 0.0
      %8856 = vmatpush2.xpose.msra.mxu0 %v8572
      %8857 = vmatprep.subr.mxu0 0.0
      %8858 = vmatpush2.xpose.msra.mxu0 %v8570
      %8859 = vmatprep.mubr.f32.mxu0 0.0
      %8860 = vmatmul.mubr.f32.gmra.mxu0 %v8442
      %v8861 = vpop.f32.mrf.mxu0
      %v8862 = vadd.f32 %v1927, %v8861
      %v8863 = vpop.f32.mrf.mxu0
      %v8864 = vadd.f32 %v1928, %v8863
      %8865 = vmatprep.mubr.f32.mxu0 0.0
      %8866 = vmatmul.mubr.f32.gmra.mxu0 %v8444
      %v8867 = vpop.f32.mrf.mxu0
      %v8868 = vadd.f32 %v1932, %v8867
      %v8869 = vpop.f32.mrf.mxu0
      %v8870 = vadd.f32 %v1933, %v8869
      %8871 = vmatprep.mubr.f32.mxu0 0.0
      %8872 = vmatmul.mubr.f32.gmra.mxu0 %v8446
      %v8873 = vpop.f32.mrf.mxu0
      %v8874 = vadd.f32 %v1937, %v8873
      %v8875 = vpop.f32.mrf.mxu0
      %v8876 = vadd.f32 %v1938, %v8875
      %8877 = vmatprep.mubr.f32.mxu0 0.0
      %8878 = vmatmul.mubr.f32.gmra.mxu0 %v8448
      %v8879 = vpop.f32.mrf.mxu0
      %v8880 = vadd.f32 %v1942, %v8879
      %v8881 = vpop.f32.mrf.mxu0
      %v8882 = vadd.f32 %v1943, %v8881
      %8883 = vmatprep.mubr.f32.mxu0 0.0
      %8884 = vmatmul.mubr.f32.gmra.mxu0 %v8450
      %v8885 = vpop.f32.mrf.mxu0
      %v8886 = vadd.f32 %v1947, %v8885
      %v8887 = vpop.f32.mrf.mxu0
      %v8888 = vadd.f32 %v1948, %v8887
      %8889 = vmatprep.mubr.f32.mxu0 0.0
      %8890 = vmatmul.mubr.f32.gmra.mxu0 %v8452
      %v8891 = vpop.f32.mrf.mxu0
      %v8892 = vadd.f32 %v1952, %v8891
      %v8893 = vpop.f32.mrf.mxu0
      %v8894 = vadd.f32 %v1953, %v8893
      %8895 = vmatprep.mubr.f32.mxu0 0.0
      %8896 = vmatmul.mubr.f32.gmra.mxu0 %v8454
      %v8897 = vpop.f32.mrf.mxu0
      %v8898 = vadd.f32 %v1957, %v8897
      %v8899 = vpop.f32.mrf.mxu0
      %v8900 = vadd.f32 %v1958, %v8899
      %8901 = vmatprep.mubr.f32.mxu0 0.0
      %8902 = vmatmul.mubr.f32.gmra.mxu0 %v8456
      %v8903 = vpop.f32.mrf.mxu0
      %v8904 = vadd.f32 %v1962, %v8903
      %v8905 = vpop.f32.mrf.mxu0
      %v8906 = vadd.f32 %v1963, %v8905
      %8907 = vmatprep.mubr.f32.mxu0 0.0
      %8908 = vmatmul.mubr.f32.gmra.mxu0 %v8458
      %v8909 = vpop.f32.mrf.mxu0
      %v8910 = vadd.f32 %v1967, %v8909
      %v8911 = vpop.f32.mrf.mxu0
      %v8912 = vadd.f32 %v1968, %v8911
      %8913 = vmatprep.mubr.f32.mxu0 0.0
      %8914 = vmatmul.mubr.f32.gmra.mxu0 %v8460
      %v8915 = vpop.f32.mrf.mxu0
      %v8916 = vadd.f32 %v1972, %v8915
      %v8917 = vpop.f32.mrf.mxu0
      %v8918 = vadd.f32 %v1973, %v8917
      %8919 = vmatprep.mubr.f32.mxu0 0.0
      %8920 = vmatmul.mubr.f32.gmra.mxu0 %v8462
      %v8921 = vpop.f32.mrf.mxu0
      %v8922 = vadd.f32 %v1977, %v8921
      %v8923 = vpop.f32.mrf.mxu0
      %v8924 = vadd.f32 %v1978, %v8923
      %8925 = vmatprep.mubr.f32.mxu0 0.0
      %8926 = vmatmul.mubr.f32.gmra.mxu0 %v8464
      %v8927 = vpop.f32.mrf.mxu0
      %v8928 = vadd.f32 %v1982, %v8927
      %v8929 = vpop.f32.mrf.mxu0
      %v8930 = vadd.f32 %v1983, %v8929
      %8931 = vmatprep.mubr.f32.mxu0 0.0
      %8932 = vmatmul.mubr.f32.gmra.mxu0 %v8466
      %v8933 = vpop.f32.mrf.mxu0
      %v8934 = vadd.f32 %v1987, %v8933
      %v8935 = vpop.f32.mrf.mxu0
      %v8936 = vadd.f32 %v1988, %v8935
      %8937 = vmatprep.mubr.f32.mxu0 0.0
      %8938 = vmatmul.mubr.f32.gmra.mxu0 %v8468
      %v8939 = vpop.f32.mrf.mxu0
      %v8940 = vadd.f32 %v1992, %v8939
      %v8941 = vpop.f32.mrf.mxu0
      %v8942 = vadd.f32 %v1993, %v8941
      %8943 = vmatprep.mubr.f32.mxu0 0.0
      %8944 = vmatmul.mubr.f32.gmra.mxu0 %v8470
      %v8945 = vpop.f32.mrf.mxu0
      %v8946 = vadd.f32 %v1997, %v8945
      %v8947 = vpop.f32.mrf.mxu0
      %v8948 = vadd.f32 %v1998, %v8947
      %8949 = vmatprep.mubr.f32.mxu0 0.0
      %8950 = vmatmul.mubr.f32.gmra.mxu0 %v8472
      %v8951 = vpop.f32.mrf.mxu0
      %v8952 = vadd.f32 %v2002, %v8951
      %v8953 = vpop.f32.mrf.mxu0
      %v8954 = vadd.f32 %v2003, %v8953
      %8955 = vdwg.mxu0
      %8956 = vmatprep.subr.mxu0 0.0
      %8957 = vmatpush1.xpose.msra.mxu0 %v8632
      %8958 = vmatprep.subr.mxu0 0.0
      %8959 = vmatpush1.xpose.msra.mxu0 %v8630
      %8960 = vmatprep.subr.mxu0 0.0
      %8961 = vmatpush1.xpose.msra.mxu0 %v8628
      %8962 = vmatprep.subr.mxu0 0.0
      %8963 = vmatpush1.xpose.msra.mxu0 %v8626
      %8964 = vmatprep.subr.mxu0 0.0
      %8965 = vmatpush1.xpose.msra.mxu0 %v8624
      %8966 = vmatprep.subr.mxu0 0.0
      %8967 = vmatpush1.xpose.msra.mxu0 %v8622
      %8968 = vmatprep.subr.mxu0 0.0
      %8969 = vmatpush1.xpose.msra.mxu0 %v8620
      %8970 = vmatprep.subr.mxu0 0.0
      %8971 = vmatpush1.xpose.msra.mxu0 %v8618
      %8972 = vmatprep.subr.mxu0 0.0
      %8973 = vmatpush1.xpose.msra.mxu0 %v8616
      %8974 = vmatprep.subr.mxu0 0.0
      %8975 = vmatpush1.xpose.msra.mxu0 %v8614
      %8976 = vmatprep.subr.mxu0 0.0
      %8977 = vmatpush1.xpose.msra.mxu0 %v8612
      %8978 = vmatprep.subr.mxu0 0.0
      %8979 = vmatpush1.xpose.msra.mxu0 %v8610
      %8980 = vmatprep.subr.mxu0 0.0
      %8981 = vmatpush1.xpose.msra.mxu0 %v8608
      %8982 = vmatprep.subr.mxu0 0.0
      %8983 = vmatpush1.xpose.msra.mxu0 %v8606
      %8984 = vmatprep.subr.mxu0 0.0
      %8985 = vmatpush1.xpose.msra.mxu0 %v8604
      %8986 = vmatprep.subr.mxu0 0.0
      %8987 = vmatpush1.xpose.msra.mxu0 %v8602
      %8988 = vmatprep.subr.mxu0 0.0
      %8989 = vmatpush2.xpose.msra.mxu0 0.0
      %8990 = vmatprep.subr.mxu0 0.0
      %8991 = vmatpush2.xpose.msra.mxu0 0.0
      %8992 = vmatprep.subr.mxu0 0.0
      %8993 = vmatpush2.xpose.msra.mxu0 0.0
      %8994 = vmatprep.subr.mxu0 0.0
      %8995 = vmatpush2.xpose.msra.mxu0 0.0
      %8996 = vmatprep.subr.mxu0 0.0
      %8997 = vmatpush2.xpose.msra.mxu0 0.0
      %8998 = vmatprep.subr.mxu0 0.0
      %8999 = vmatpush2.xpose.msra.mxu0 0.0
      %9000 = vmatprep.subr.mxu0 0.0
      %9001 = vmatpush2.xpose.msra.mxu0 0.0
      %9002 = vmatprep.subr.mxu0 0.0
      %9003 = vmatpush2.xpose.msra.mxu0 0.0
      %9004 = vmatprep.subr.mxu0 0.0
      %9005 = vmatpush2.xpose.msra.mxu0 0.0
      %9006 = vmatprep.subr.mxu0 0.0
      %9007 = vmatpush2.xpose.msra.mxu0 0.0
      %9008 = vmatprep.subr.mxu0 0.0
      %9009 = vmatpush2.xpose.msra.mxu0 0.0
      %9010 = vmatprep.subr.mxu0 0.0
      %9011 = vmatpush2.xpose.msra.mxu0 0.0
      %9012 = vmatprep.subr.mxu0 0.0
      %9013 = vmatpush2.xpose.msra.mxu0 0.0
      %9014 = vmatprep.subr.mxu0 0.0
      %9015 = vmatpush2.xpose.msra.mxu0 0.0
      %9016 = vmatprep.subr.mxu0 0.0
      %9017 = vmatpush2.xpose.msra.mxu0 0.0
      %9018 = vmatprep.subr.mxu0 0.0
      %9019 = vmatpush2.xpose.msra.mxu0 0.0
      %9020 = vmatprep.mubr.f32.mxu0 0.0
      %9021 = vmatmul.mubr.f32.gmra.mxu0 %v8442
      %v9022 = vpop.f32.mrf.mxu0
      %v9023 = vadd.f32 %v1929, %v9022
      %v9024 = vpop.f32.mrf.mxu0
      %9025 = vmatprep.mubr.f32.mxu0 0.0
      %9026 = vmatmul.mubr.f32.gmra.mxu0 %v8444
      %v9027 = vpop.f32.mrf.mxu0
      %v9028 = vadd.f32 %v1934, %v9027
      %v9029 = vpop.f32.mrf.mxu0
      %9030 = vmatprep.mubr.f32.mxu0 0.0
      %9031 = vmatmul.mubr.f32.gmra.mxu0 %v8446
      %v9032 = vpop.f32.mrf.mxu0
      %v9033 = vadd.f32 %v1939, %v9032
      %v9034 = vpop.f32.mrf.mxu0
      %9035 = vmatprep.mubr.f32.mxu0 0.0
      %9036 = vmatmul.mubr.f32.gmra.mxu0 %v8448
      %v9037 = vpop.f32.mrf.mxu0
      %v9038 = vadd.f32 %v1944, %v9037
      %v9039 = vpop.f32.mrf.mxu0
      %9040 = vmatprep.mubr.f32.mxu0 0.0
      %9041 = vmatmul.mubr.f32.gmra.mxu0 %v8450
      %v9042 = vpop.f32.mrf.mxu0
      %v9043 = vadd.f32 %v1949, %v9042
      %v9044 = vpop.f32.mrf.mxu0
      %9045 = vmatprep.mubr.f32.mxu0 0.0
      %9046 = vmatmul.mubr.f32.gmra.mxu0 %v8452
      %v9047 = vpop.f32.mrf.mxu0
      %v9048 = vadd.f32 %v1954, %v9047
      %v9049 = vpop.f32.mrf.mxu0
      %9050 = vmatprep.mubr.f32.mxu0 0.0
      %9051 = vmatmul.mubr.f32.gmra.mxu0 %v8454
      %v9052 = vpop.f32.mrf.mxu0
      %v9053 = vadd.f32 %v1959, %v9052
      %v9054 = vpop.f32.mrf.mxu0
      %9055 = vmatprep.mubr.f32.mxu0 0.0
      %9056 = vmatmul.mubr.f32.gmra.mxu0 %v8456
      %v9057 = vpop.f32.mrf.mxu0
      %v9058 = vadd.f32 %v1964, %v9057
      %v9059 = vpop.f32.mrf.mxu0
      %9060 = vmatprep.mubr.f32.mxu0 0.0
      %9061 = vmatmul.mubr.f32.gmra.mxu0 %v8458
      %v9062 = vpop.f32.mrf.mxu0
      %v9063 = vadd.f32 %v1969, %v9062
      %v9064 = vpop.f32.mrf.mxu0
      %9065 = vmatprep.mubr.f32.mxu0 0.0
      %9066 = vmatmul.mubr.f32.gmra.mxu0 %v8460
      %v9067 = vpop.f32.mrf.mxu0
      %v9068 = vadd.f32 %v1974, %v9067
      %v9069 = vpop.f32.mrf.mxu0
      %9070 = vmatprep.mubr.f32.mxu0 0.0
      %9071 = vmatmul.mubr.f32.gmra.mxu0 %v8462
      %v9072 = vpop.f32.mrf.mxu0
      %v9073 = vadd.f32 %v1979, %v9072
      %v9074 = vpop.f32.mrf.mxu0
      %9075 = vmatprep.mubr.f32.mxu0 0.0
      %9076 = vmatmul.mubr.f32.gmra.mxu0 %v8464
      %v9077 = vpop.f32.mrf.mxu0
      %v9078 = vadd.f32 %v1984, %v9077
      %v9079 = vpop.f32.mrf.mxu0
      %9080 = vmatprep.mubr.f32.mxu0 0.0
      %9081 = vmatmul.mubr.f32.gmra.mxu0 %v8466
      %v9082 = vpop.f32.mrf.mxu0
      %v9083 = vadd.f32 %v1989, %v9082
      %v9084 = vpop.f32.mrf.mxu0
      %9085 = vmatprep.mubr.f32.mxu0 0.0
      %9086 = vmatmul.mubr.f32.gmra.mxu0 %v8468
      %v9087 = vpop.f32.mrf.mxu0
      %v9088 = vadd.f32 %v1994, %v9087
      %v9089 = vpop.f32.mrf.mxu0
      %9090 = vmatprep.mubr.f32.mxu0 0.0
      %9091 = vmatmul.mubr.f32.gmra.mxu0 %v8470
      %v9092 = vpop.f32.mrf.mxu0
      %v9093 = vadd.f32 %v1999, %v9092
      %v9094 = vpop.f32.mrf.mxu0
      %9095 = vmatprep.mubr.f32.mxu0 0.0
      %9096 = vmatmul.mubr.f32.gmra.mxu0 %v8472
      %v9097 = vpop.f32.mrf.mxu0
      %v9098 = vadd.f32 %v2004, %v9097
      %v9099 = vpop.f32.mrf.mxu0
      %9100 = vdwg.mxu0
      %v9101 = vmax.f32 %v8701, %v8703
      %v9102 = vmax.f32 %v9101, %v8862
      %v9103 = vmax.f32 %v9102, %v8864
      %v9104 = vmax.f32 %v9103, %v9023
      %9105 = vmax.xlane.f32.xlu0 %v9104
      %v9106 = vpop.xlane.xlu0 %9105
      %v9107 = vmax.f32 %v8707, %v8709
      %v9108 = vmax.f32 %v9107, %v8868
      %v9109 = vmax.f32 %v9108, %v8870
      %v9110 = vmax.f32 %v9109, %v9028
      %9111 = vmax.xlane.f32.xlu0 %v9110
      %v9112 = vpop.xlane.xlu0 %9111
      %v9113 = vmax.f32 %v8713, %v8715
      %v9114 = vmax.f32 %v9113, %v8874
      %v9115 = vmax.f32 %v9114, %v8876
      %v9116 = vmax.f32 %v9115, %v9033
      %9117 = vmax.xlane.f32.xlu0 %v9116
      %v9118 = vpop.xlane.xlu0 %9117
      %v9119 = vmax.f32 %v8719, %v8721
      %v9120 = vmax.f32 %v9119, %v8880
      %v9121 = vmax.f32 %v9120, %v8882
      %v9122 = vmax.f32 %v9121, %v9038
      %9123 = vmax.xlane.f32.xlu0 %v9122
      %v9124 = vpop.xlane.xlu0 %9123
      %v9125 = vmax.f32 %v8725, %v8727
      %v9126 = vmax.f32 %v9125, %v8886
      %v9127 = vmax.f32 %v9126, %v8888
      %v9128 = vmax.f32 %v9127, %v9043
      %9129 = vmax.xlane.f32.xlu0 %v9128
      %v9130 = vpop.xlane.xlu0 %9129
      %v9131 = vmax.f32 %v8731, %v8733
      %v9132 = vmax.f32 %v9131, %v8892
      %v9133 = vmax.f32 %v9132, %v8894
      %v9134 = vmax.f32 %v9133, %v9048
      %9135 = vmax.xlane.f32.xlu0 %v9134
      %v9136 = vpop.xlane.xlu0 %9135
      %v9137 = vmax.f32 %v8737, %v8739
      %v9138 = vmax.f32 %v9137, %v8898
      %v9139 = vmax.f32 %v9138, %v8900
      %v9140 = vmax.f32 %v9139, %v9053
      %9141 = vmax.xlane.f32.xlu0 %v9140
      %v9142 = vpop.xlane.xlu0 %9141
      %v9143 = vmax.f32 %v8743, %v8745
      %v9144 = vmax.f32 %v9143, %v8904
      %v9145 = vmax.f32 %v9144, %v8906
      %v9146 = vmax.f32 %v9145, %v9058
      %9147 = vmax.xlane.f32.xlu0 %v9146
      %v9148 = vpop.xlane.xlu0 %9147
      %v9149 = vmax.f32 %v8749, %v8751
      %v9150 = vmax.f32 %v9149, %v8910
      %v9151 = vmax.f32 %v9150, %v8912
      %v9152 = vmax.f32 %v9151, %v9063
      %9153 = vmax.xlane.f32.xlu0 %v9152
      %v9154 = vpop.xlane.xlu0 %9153
      %v9155 = vmax.f32 %v8755, %v8757
      %v9156 = vmax.f32 %v9155, %v8916
      %v9157 = vmax.f32 %v9156, %v8918
      %v9158 = vmax.f32 %v9157, %v9068
      %9159 = vmax.xlane.f32.xlu0 %v9158
      %v9160 = vpop.xlane.xlu0 %9159
      %v9161 = vmax.f32 %v8761, %v8763
      %v9162 = vmax.f32 %v9161, %v8922
      %v9163 = vmax.f32 %v9162, %v8924
      %v9164 = vmax.f32 %v9163, %v9073
      %9165 = vmax.xlane.f32.xlu0 %v9164
      %v9166 = vpop.xlane.xlu0 %9165
      %v9167 = vmax.f32 %v8767, %v8769
      %v9168 = vmax.f32 %v9167, %v8928
      %v9169 = vmax.f32 %v9168, %v8930
      %v9170 = vmax.f32 %v9169, %v9078
      %9171 = vmax.xlane.f32.xlu0 %v9170
      %v9172 = vpop.xlane.xlu0 %9171
      %v9173 = vmax.f32 %v8773, %v8775
      %v9174 = vmax.f32 %v9173, %v8934
      %v9175 = vmax.f32 %v9174, %v8936
      %v9176 = vmax.f32 %v9175, %v9083
      %9177 = vmax.xlane.f32.xlu0 %v9176
      %v9178 = vpop.xlane.xlu0 %9177
      %v9179 = vmax.f32 %v8779, %v8781
      %v9180 = vmax.f32 %v9179, %v8940
      %v9181 = vmax.f32 %v9180, %v8942
      %v9182 = vmax.f32 %v9181, %v9088
      %9183 = vmax.xlane.f32.xlu0 %v9182
      %v9184 = vpop.xlane.xlu0 %9183
      %v9185 = vmax.f32 %v8785, %v8787
      %v9186 = vmax.f32 %v9185, %v8946
      %v9187 = vmax.f32 %v9186, %v8948
      %v9188 = vmax.f32 %v9187, %v9093
      %9189 = vmax.xlane.f32.xlu0 %v9188
      %v9190 = vpop.xlane.xlu0 %9189
      %v9191 = vmax.f32 %v8791, %v8793
      %v9192 = vmax.f32 %v9191, %v8952
      %v9193 = vmax.f32 %v9192, %v8954
      %v9194 = vmax.f32 %v9193, %v9098
      %9195 = vmax.xlane.f32.xlu0 %v9194
      %v9196 = vpop.xlane.xlu0 %9195
      %v9197 = vsub.f32 %v8701, %v9106
      %v9198 = vsub.f32 %v8703, %v9106
      %v9199 = vsub.f32 %v8862, %v9106
      %v9200 = vsub.f32 %v8864, %v9106
      %v9201 = vsub.f32 %v9023, %v9106
      %v9202 = vsub.f32 %v8707, %v9112
      %v9203 = vsub.f32 %v8709, %v9112
      %v9204 = vsub.f32 %v8868, %v9112
      %v9205 = vsub.f32 %v8870, %v9112
      %v9206 = vsub.f32 %v9028, %v9112
      %v9207 = vsub.f32 %v8713, %v9118
      %v9208 = vsub.f32 %v8715, %v9118
      %v9209 = vsub.f32 %v8874, %v9118
      %v9210 = vsub.f32 %v8876, %v9118
      %v9211 = vsub.f32 %v9033, %v9118
      %v9212 = vsub.f32 %v8719, %v9124
      %v9213 = vsub.f32 %v8721, %v9124
      %v9214 = vsub.f32 %v8880, %v9124
      %v9215 = vsub.f32 %v8882, %v9124
      %v9216 = vsub.f32 %v9038, %v9124
      %v9217 = vsub.f32 %v8725, %v9130
      %v9218 = vsub.f32 %v8727, %v9130
      %v9219 = vsub.f32 %v8886, %v9130
      %v9220 = vsub.f32 %v8888, %v9130
      %v9221 = vsub.f32 %v9043, %v9130
      %v9222 = vsub.f32 %v8731, %v9136
      %v9223 = vsub.f32 %v8733, %v9136
      %v9224 = vsub.f32 %v8892, %v9136
      %v9225 = vsub.f32 %v8894, %v9136
      %v9226 = vsub.f32 %v9048, %v9136
      %v9227 = vsub.f32 %v8737, %v9142
      %v9228 = vsub.f32 %v8739, %v9142
      %v9229 = vsub.f32 %v8898, %v9142
      %v9230 = vsub.f32 %v8900, %v9142
      %v9231 = vsub.f32 %v9053, %v9142
      %v9232 = vsub.f32 %v8743, %v9148
      %v9233 = vsub.f32 %v8745, %v9148
      %v9234 = vsub.f32 %v8904, %v9148
      %v9235 = vsub.f32 %v8906, %v9148
      %v9236 = vsub.f32 %v9058, %v9148
      %v9237 = vsub.f32 %v8749, %v9154
      %v9238 = vsub.f32 %v8751, %v9154
      %v9239 = vsub.f32 %v8910, %v9154
      %v9240 = vsub.f32 %v8912, %v9154
      %v9241 = vsub.f32 %v9063, %v9154
      %v9242 = vsub.f32 %v8755, %v9160
      %v9243 = vsub.f32 %v8757, %v9160
      %v9244 = vsub.f32 %v8916, %v9160
      %v9245 = vsub.f32 %v8918, %v9160
      %v9246 = vsub.f32 %v9068, %v9160
      %v9247 = vsub.f32 %v8761, %v9166
      %v9248 = vsub.f32 %v8763, %v9166
      %v9249 = vsub.f32 %v8922, %v9166
      %v9250 = vsub.f32 %v8924, %v9166
      %v9251 = vsub.f32 %v9073, %v9166
      %v9252 = vsub.f32 %v8767, %v9172
      %v9253 = vsub.f32 %v8769, %v9172
      %v9254 = vsub.f32 %v8928, %v9172
      %v9255 = vsub.f32 %v8930, %v9172
      %v9256 = vsub.f32 %v9078, %v9172
      %v9257 = vsub.f32 %v8773, %v9178
      %v9258 = vsub.f32 %v8775, %v9178
      %v9259 = vsub.f32 %v8934, %v9178
      %v9260 = vsub.f32 %v8936, %v9178
      %v9261 = vsub.f32 %v9083, %v9178
      %v9262 = vsub.f32 %v8779, %v9184
      %v9263 = vsub.f32 %v8781, %v9184
      %v9264 = vsub.f32 %v8940, %v9184
      %v9265 = vsub.f32 %v8942, %v9184
      %v9266 = vsub.f32 %v9088, %v9184
      %v9267 = vsub.f32 %v8785, %v9190
      %v9268 = vsub.f32 %v8787, %v9190
      %v9269 = vsub.f32 %v8946, %v9190
      %v9270 = vsub.f32 %v8948, %v9190
      %v9271 = vsub.f32 %v9093, %v9190
      %v9272 = vsub.f32 %v8791, %v9196
      %v9273 = vsub.f32 %v8793, %v9196
      %v9274 = vsub.f32 %v8952, %v9196
      %v9275 = vsub.f32 %v8954, %v9196
      %v9276 = vsub.f32 %v9098, %v9196
      %v9277 = vmul.f32 %v9197, 1.442695
      %v9278 = vpow.pop %v9277
      %v9279 = vmul.f32 %v9198, 1.442695
      %v9280 = vpow.pop %v9279
      %v9281 = vmul.f32 %v9199, 1.442695
      %v9282 = vpow.pop %v9281
      %v9283 = vmul.f32 %v9200, 1.442695
      %v9284 = vpow.pop %v9283
      %v9285 = vmul.f32 %v9201, 1.442695
      %v9286 = vpow.pop %v9285
      %v9287 = vmul.f32 %v9202, 1.442695
      %v9288 = vpow.pop %v9287
      %v9289 = vmul.f32 %v9203, 1.442695
      %v9290 = vpow.pop %v9289
      %v9291 = vmul.f32 %v9204, 1.442695
      %v9292 = vpow.pop %v9291
      %v9293 = vmul.f32 %v9205, 1.442695
      %v9294 = vpow.pop %v9293
      %v9295 = vmul.f32 %v9206, 1.442695
      %v9296 = vpow.pop %v9295
      %v9297 = vmul.f32 %v9207, 1.442695
      %v9298 = vpow.pop %v9297
      %v9299 = vmul.f32 %v9208, 1.442695
      %v9300 = vpow.pop %v9299
      %v9301 = vmul.f32 %v9209, 1.442695
      %v9302 = vpow.pop %v9301
      %v9303 = vmul.f32 %v9210, 1.442695
      %v9304 = vpow.pop %v9303
      %v9305 = vmul.f32 %v9211, 1.442695
      %v9306 = vpow.pop %v9305
      %v9307 = vmul.f32 %v9212, 1.442695
      %v9308 = vpow.pop %v9307
      %v9309 = vmul.f32 %v9213, 1.442695
      %v9310 = vpow.pop %v9309
      %v9311 = vmul.f32 %v9214, 1.442695
      %v9312 = vpow.pop %v9311
      %v9313 = vmul.f32 %v9215, 1.442695
      %v9314 = vpow.pop %v9313
      %v9315 = vmul.f32 %v9216, 1.442695
      %v9316 = vpow.pop %v9315
      %v9317 = vmul.f32 %v9217, 1.442695
      %v9318 = vpow.pop %v9317
      %v9319 = vmul.f32 %v9218, 1.442695
      %v9320 = vpow.pop %v9319
      %v9321 = vmul.f32 %v9219, 1.442695
      %v9322 = vpow.pop %v9321
      %v9323 = vmul.f32 %v9220, 1.442695
      %v9324 = vpow.pop %v9323
      %v9325 = vmul.f32 %v9221, 1.442695
      %v9326 = vpow.pop %v9325
      %v9327 = vmul.f32 %v9222, 1.442695
      %v9328 = vpow.pop %v9327
      %v9329 = vmul.f32 %v9223, 1.442695
      %v9330 = vpow.pop %v9329
      %v9331 = vmul.f32 %v9224, 1.442695
      %v9332 = vpow.pop %v9331
      %v9333 = vmul.f32 %v9225, 1.442695
      %v9334 = vpow.pop %v9333
      %v9335 = vmul.f32 %v9226, 1.442695
      %v9336 = vpow.pop %v9335
      %v9337 = vmul.f32 %v9227, 1.442695
      %v9338 = vpow.pop %v9337
      %v9339 = vmul.f32 %v9228, 1.442695
      %v9340 = vpow.pop %v9339
      %v9341 = vmul.f32 %v9229, 1.442695
      %v9342 = vpow.pop %v9341
      %v9343 = vmul.f32 %v9230, 1.442695
      %v9344 = vpow.pop %v9343
      %v9345 = vmul.f32 %v9231, 1.442695
      %v9346 = vpow.pop %v9345
      %v9347 = vmul.f32 %v9232, 1.442695
      %v9348 = vpow.pop %v9347
      %v9349 = vmul.f32 %v9233, 1.442695
      %v9350 = vpow.pop %v9349
      %v9351 = vmul.f32 %v9234, 1.442695
      %v9352 = vpow.pop %v9351
      %v9353 = vmul.f32 %v9235, 1.442695
      %v9354 = vpow.pop %v9353
      %v9355 = vmul.f32 %v9236, 1.442695
      %v9356 = vpow.pop %v9355
      %v9357 = vmul.f32 %v9237, 1.442695
      %v9358 = vpow.pop %v9357
      %v9359 = vmul.f32 %v9238, 1.442695
      %v9360 = vpow.pop %v9359
      %v9361 = vmul.f32 %v9239, 1.442695
      %v9362 = vpow.pop %v9361
      %v9363 = vmul.f32 %v9240, 1.442695
      %v9364 = vpow.pop %v9363
      %v9365 = vmul.f32 %v9241, 1.442695
      %v9366 = vpow.pop %v9365
      %v9367 = vmul.f32 %v9242, 1.442695
      %v9368 = vpow.pop %v9367
      %v9369 = vmul.f32 %v9243, 1.442695
      %v9370 = vpow.pop %v9369
      %v9371 = vmul.f32 %v9244, 1.442695
      %v9372 = vpow.pop %v9371
      %v9373 = vmul.f32 %v9245, 1.442695
      %v9374 = vpow.pop %v9373
      %v9375 = vmul.f32 %v9246, 1.442695
      %v9376 = vpow.pop %v9375
      %v9377 = vmul.f32 %v9247, 1.442695
      %v9378 = vpow.pop %v9377
      %v9379 = vmul.f32 %v9248, 1.442695
      %v9380 = vpow.pop %v9379
      %v9381 = vmul.f32 %v9249, 1.442695
      %v9382 = vpow.pop %v9381
      %v9383 = vmul.f32 %v9250, 1.442695
      %v9384 = vpow.pop %v9383
      %v9385 = vmul.f32 %v9251, 1.442695
      %v9386 = vpow.pop %v9385
      %v9387 = vmul.f32 %v9252, 1.442695
      %v9388 = vpow.pop %v9387
      %v9389 = vmul.f32 %v9253, 1.442695
      %v9390 = vpow.pop %v9389
      %v9391 = vmul.f32 %v9254, 1.442695
      %v9392 = vpow.pop %v9391
      %v9393 = vmul.f32 %v9255, 1.442695
      %v9394 = vpow.pop %v9393
      %v9395 = vmul.f32 %v9256, 1.442695
      %v9396 = vpow.pop %v9395
      %v9397 = vmul.f32 %v9257, 1.442695
      %v9398 = vpow.pop %v9397
      %v9399 = vmul.f32 %v9258, 1.442695
      %v9400 = vpow.pop %v9399
      %v9401 = vmul.f32 %v9259, 1.442695
      %v9402 = vpow.pop %v9401
      %v9403 = vmul.f32 %v9260, 1.442695
      %v9404 = vpow.pop %v9403
      %v9405 = vmul.f32 %v9261, 1.442695
      %v9406 = vpow.pop %v9405
      %v9407 = vmul.f32 %v9262, 1.442695
      %v9408 = vpow.pop %v9407
      %v9409 = vmul.f32 %v9263, 1.442695
      %v9410 = vpow.pop %v9409
      %v9411 = vmul.f32 %v9264, 1.442695
      %v9412 = vpow.pop %v9411
      %v9413 = vmul.f32 %v9265, 1.442695
      %v9414 = vpow.pop %v9413
      %v9415 = vmul.f32 %v9266, 1.442695
      %v9416 = vpow.pop %v9415
      %v9417 = vmul.f32 %v9267, 1.442695
      %v9418 = vpow.pop %v9417
      %v9419 = vmul.f32 %v9268, 1.442695
      %v9420 = vpow.pop %v9419
      %v9421 = vmul.f32 %v9269, 1.442695
      %v9422 = vpow.pop %v9421
      %v9423 = vmul.f32 %v9270, 1.442695
      %v9424 = vpow.pop %v9423
      %v9425 = vmul.f32 %v9271, 1.442695
      %v9426 = vpow.pop %v9425
      %v9427 = vmul.f32 %v9272, 1.442695
      %v9428 = vpow.pop %v9427
      %v9429 = vmul.f32 %v9273, 1.442695
      %v9430 = vpow.pop %v9429
      %v9431 = vmul.f32 %v9274, 1.442695
      %v9432 = vpow.pop %v9431
      %v9433 = vmul.f32 %v9275, 1.442695
      %v9434 = vpow.pop %v9433
      %v9435 = vmul.f32 %v9276, 1.442695
      %v9436 = vpow.pop %v9435
      %v9437 = vadd.f32 %v9278, %v9280
      %v9438 = vadd.f32 %v9437, %v9282
      %v9439 = vadd.f32 %v9438, %v9284
      %v9440 = vadd.f32 %v9439, %v9286
      %9441 = vadd.xlane.f32.xlu0 %v9440
      %v9442 = vpop.xlane.xlu0 %9441
      %v9443 = vadd.f32 %v9288, %v9290
      %v9444 = vadd.f32 %v9443, %v9292
      %v9445 = vadd.f32 %v9444, %v9294
      %v9446 = vadd.f32 %v9445, %v9296
      %9447 = vadd.xlane.f32.xlu0 %v9446
      %v9448 = vpop.xlane.xlu0 %9447
      %v9449 = vadd.f32 %v9298, %v9300
      %v9450 = vadd.f32 %v9449, %v9302
      %v9451 = vadd.f32 %v9450, %v9304
      %v9452 = vadd.f32 %v9451, %v9306
      %9453 = vadd.xlane.f32.xlu0 %v9452
      %v9454 = vpop.xlane.xlu0 %9453
      %v9455 = vadd.f32 %v9308, %v9310
      %v9456 = vadd.f32 %v9455, %v9312
      %v9457 = vadd.f32 %v9456, %v9314
      %v9458 = vadd.f32 %v9457, %v9316
      %9459 = vadd.xlane.f32.xlu0 %v9458
      %v9460 = vpop.xlane.xlu0 %9459
      %v9461 = vadd.f32 %v9318, %v9320
      %v9462 = vadd.f32 %v9461, %v9322
      %v9463 = vadd.f32 %v9462, %v9324
      %v9464 = vadd.f32 %v9463, %v9326
      %9465 = vadd.xlane.f32.xlu0 %v9464
      %v9466 = vpop.xlane.xlu0 %9465
      %v9467 = vadd.f32 %v9328, %v9330
      %v9468 = vadd.f32 %v9467, %v9332
      %v9469 = vadd.f32 %v9468, %v9334
      %v9470 = vadd.f32 %v9469, %v9336
      %9471 = vadd.xlane.f32.xlu0 %v9470
      %v9472 = vpop.xlane.xlu0 %9471
      %v9473 = vadd.f32 %v9338, %v9340
      %v9474 = vadd.f32 %v9473, %v9342
      %v9475 = vadd.f32 %v9474, %v9344
      %v9476 = vadd.f32 %v9475, %v9346
      %9477 = vadd.xlane.f32.xlu0 %v9476
      %v9478 = vpop.xlane.xlu0 %9477
      %v9479 = vadd.f32 %v9348, %v9350
      %v9480 = vadd.f32 %v9479, %v9352
      %v9481 = vadd.f32 %v9480, %v9354
      %v9482 = vadd.f32 %v9481, %v9356
      %9483 = vadd.xlane.f32.xlu0 %v9482
      %v9484 = vpop.xlane.xlu0 %9483
      %v9485 = vadd.f32 %v9358, %v9360
      %v9486 = vadd.f32 %v9485, %v9362
      %v9487 = vadd.f32 %v9486, %v9364
      %v9488 = vadd.f32 %v9487, %v9366
      %9489 = vadd.xlane.f32.xlu0 %v9488
      %v9490 = vpop.xlane.xlu0 %9489
      %v9491 = vadd.f32 %v9368, %v9370
      %v9492 = vadd.f32 %v9491, %v9372
      %v9493 = vadd.f32 %v9492, %v9374
      %v9494 = vadd.f32 %v9493, %v9376
      %9495 = vadd.xlane.f32.xlu0 %v9494
      %v9496 = vpop.xlane.xlu0 %9495
      %v9497 = vadd.f32 %v9378, %v9380
      %v9498 = vadd.f32 %v9497, %v9382
      %v9499 = vadd.f32 %v9498, %v9384
      %v9500 = vadd.f32 %v9499, %v9386
      %9501 = vadd.xlane.f32.xlu0 %v9500
      %v9502 = vpop.xlane.xlu0 %9501
      %v9503 = vadd.f32 %v9388, %v9390
      %v9504 = vadd.f32 %v9503, %v9392
      %v9505 = vadd.f32 %v9504, %v9394
      %v9506 = vadd.f32 %v9505, %v9396
      %9507 = vadd.xlane.f32.xlu0 %v9506
      %v9508 = vpop.xlane.xlu0 %9507
      %v9509 = vadd.f32 %v9398, %v9400
      %v9510 = vadd.f32 %v9509, %v9402
      %v9511 = vadd.f32 %v9510, %v9404
      %v9512 = vadd.f32 %v9511, %v9406
      %9513 = vadd.xlane.f32.xlu0 %v9512
      %v9514 = vpop.xlane.xlu0 %9513
      %v9515 = vadd.f32 %v9408, %v9410
      %v9516 = vadd.f32 %v9515, %v9412
      %v9517 = vadd.f32 %v9516, %v9414
      %v9518 = vadd.f32 %v9517, %v9416
      %9519 = vadd.xlane.f32.xlu0 %v9518
      %v9520 = vpop.xlane.xlu0 %9519
      %v9521 = vadd.f32 %v9418, %v9420
      %v9522 = vadd.f32 %v9521, %v9422
      %v9523 = vadd.f32 %v9522, %v9424
      %v9524 = vadd.f32 %v9523, %v9426
      %9525 = vadd.xlane.f32.xlu0 %v9524
      %v9526 = vpop.xlane.xlu0 %9525
      %v9527 = vadd.f32 %v9428, %v9430
      %v9528 = vadd.f32 %v9527, %v9432
      %v9529 = vadd.f32 %v9528, %v9434
      %v9530 = vadd.f32 %v9529, %v9436
      %9531 = vadd.xlane.f32.xlu0 %v9530
      %v9532 = vpop.xlane.xlu0 %9531
      %v9533 = vrcp.pop %v9442
      %v9534 = vrcp.pop %v9448
      %v9535 = vrcp.pop %v9454
      %v9536 = vrcp.pop %v9460
      %v9537 = vrcp.pop %v9466
      %v9538 = vrcp.pop %v9472
      %v9539 = vrcp.pop %v9478
      %v9540 = vrcp.pop %v9484
      %v9541 = vrcp.pop %v9490
      %v9542 = vrcp.pop %v9496
      %v9543 = vrcp.pop %v9502
      %v9544 = vrcp.pop %v9508
      %v9545 = vrcp.pop %v9514
      %v9546 = vrcp.pop %v9520
      %v9547 = vrcp.pop %v9526
      %v9548 = vrcp.pop %v9532
      %v9549 = vmul.f32 %v9278, %v9533
      %v9550 = vmul.f32 %v9280, %v9533
      %v9551 = vmul.f32 %v9282, %v9533
      %v9552 = vmul.f32 %v9284, %v9533
      %v9553 = vmul.f32 %v9286, %v9533
      %v9554 = vmul.f32 %v9288, %v9534
      %v9555 = vmul.f32 %v9290, %v9534
      %v9556 = vmul.f32 %v9292, %v9534
      %v9557 = vmul.f32 %v9294, %v9534
      %v9558 = vmul.f32 %v9296, %v9534
      %v9559 = vmul.f32 %v9298, %v9535
      %v9560 = vmul.f32 %v9300, %v9535
      %v9561 = vmul.f32 %v9302, %v9535
      %v9562 = vmul.f32 %v9304, %v9535
      %v9563 = vmul.f32 %v9306, %v9535
      %v9564 = vmul.f32 %v9308, %v9536
      %v9565 = vmul.f32 %v9310, %v9536
      %v9566 = vmul.f32 %v9312, %v9536
      %v9567 = vmul.f32 %v9314, %v9536
      %v9568 = vmul.f32 %v9316, %v9536
      %v9569 = vmul.f32 %v9318, %v9537
      %v9570 = vmul.f32 %v9320, %v9537
      %v9571 = vmul.f32 %v9322, %v9537
      %v9572 = vmul.f32 %v9324, %v9537
      %v9573 = vmul.f32 %v9326, %v9537
      %v9574 = vmul.f32 %v9328, %v9538
      %v9575 = vmul.f32 %v9330, %v9538
      %v9576 = vmul.f32 %v9332, %v9538
      %v9577 = vmul.f32 %v9334, %v9538
      %v9578 = vmul.f32 %v9336, %v9538
      %v9579 = vmul.f32 %v9338, %v9539
      %v9580 = vmul.f32 %v9340, %v9539
      %v9581 = vmul.f32 %v9342, %v9539
      %v9582 = vmul.f32 %v9344, %v9539
      %v9583 = vmul.f32 %v9346, %v9539
      %v9584 = vmul.f32 %v9348, %v9540
      %v9585 = vmul.f32 %v9350, %v9540
      %v9586 = vmul.f32 %v9352, %v9540
      %v9587 = vmul.f32 %v9354, %v9540
      %v9588 = vmul.f32 %v9356, %v9540
      %v9589 = vmul.f32 %v9358, %v9541
      %v9590 = vmul.f32 %v9360, %v9541
      %v9591 = vmul.f32 %v9362, %v9541
      %v9592 = vmul.f32 %v9364, %v9541
      %v9593 = vmul.f32 %v9366, %v9541
      %v9594 = vmul.f32 %v9368, %v9542
      %v9595 = vmul.f32 %v9370, %v9542
      %v9596 = vmul.f32 %v9372, %v9542
      %v9597 = vmul.f32 %v9374, %v9542
      %v9598 = vmul.f32 %v9376, %v9542
      %v9599 = vmul.f32 %v9378, %v9543
      %v9600 = vmul.f32 %v9380, %v9543
      %v9601 = vmul.f32 %v9382, %v9543
      %v9602 = vmul.f32 %v9384, %v9543
      %v9603 = vmul.f32 %v9386, %v9543
      %v9604 = vmul.f32 %v9388, %v9544
      %v9605 = vmul.f32 %v9390, %v9544
      %v9606 = vmul.f32 %v9392, %v9544
      %v9607 = vmul.f32 %v9394, %v9544
      %v9608 = vmul.f32 %v9396, %v9544
      %v9609 = vmul.f32 %v9398, %v9545
      %v9610 = vmul.f32 %v9400, %v9545
      %v9611 = vmul.f32 %v9402, %v9545
      %v9612 = vmul.f32 %v9404, %v9545
      %v9613 = vmul.f32 %v9406, %v9545
      %v9614 = vmul.f32 %v9408, %v9546
      %v9615 = vmul.f32 %v9410, %v9546
      %v9616 = vmul.f32 %v9412, %v9546
      %v9617 = vmul.f32 %v9414, %v9546
      %v9618 = vmul.f32 %v9416, %v9546
      %v9619 = vmul.f32 %v9418, %v9547
      %v9620 = vmul.f32 %v9420, %v9547
      %v9621 = vmul.f32 %v9422, %v9547
      %v9622 = vmul.f32 %v9424, %v9547
      %v9623 = vmul.f32 %v9426, %v9547
      %v9624 = vmul.f32 %v9428, %v9548
      %v9625 = vmul.f32 %v9430, %v9548
      %v9626 = vmul.f32 %v9432, %v9548
      %v9627 = vmul.f32 %v9434, %v9548
      %v9628 = vmul.f32 %v9436, %v9548
      %9629 = vrot.lane.b32.xlu0 %v1362, 72
      %v9630 = vpop.permute.xlu0 %9629
      %9631 = vrot.lane.b32.xlu0 %v1367, 72
      %v9632 = vpop.permute.xlu0 %9631
      %9633 = vrot.lane.b32.xlu0 %v1372, 72
      %v9634 = vpop.permute.xlu0 %9633
      %9635 = vrot.lane.b32.xlu0 %v1377, 72
      %v9636 = vpop.permute.xlu0 %9635
      %9637 = vrot.lane.b32.xlu0 %v1382, 72
      %v9638 = vpop.permute.xlu0 %9637
      %9639 = vrot.lane.b32.xlu0 %v1387, 72
      %v9640 = vpop.permute.xlu0 %9639
      %9641 = vrot.lane.b32.xlu0 %v1392, 72
      %v9642 = vpop.permute.xlu0 %9641
      %9643 = vrot.lane.b32.xlu0 %v1397, 72
      %v9644 = vpop.permute.xlu0 %9643
      %9645 = vrot.lane.b32.xlu0 %v1402, 72
      %v9646 = vpop.permute.xlu0 %9645
      %9647 = vrot.lane.b32.xlu0 %v1407, 72
      %v9648 = vpop.permute.xlu0 %9647
      %9649 = vrot.lane.b32.xlu0 %v1412, 72
      %v9650 = vpop.permute.xlu0 %9649
      %9651 = vrot.lane.b32.xlu0 %v1417, 72
      %v9652 = vpop.permute.xlu0 %9651
      %9653 = vrot.lane.b32.xlu0 %v1422, 72
      %v9654 = vpop.permute.xlu0 %9653
      %9655 = vrot.lane.b32.xlu0 %v1427, 72
      %v9656 = vpop.permute.xlu0 %9655
      %9657 = vrot.lane.b32.xlu0 %v1432, 72
      %v9658 = vpop.permute.xlu0 %9657
      %9659 = vrot.lane.b32.xlu0 %v1437, 72
      %v9660 = vpop.permute.xlu0 %9659
      %9661 = vrot.lane.b32.xlu0 %v1442, 72
      %v9662 = vpop.permute.xlu0 %9661
      %9663 = vrot.lane.b32.xlu0 %v1447, 72
      %v9664 = vpop.permute.xlu0 %9663
      %9665 = vrot.lane.b32.xlu0 %v1452, 72
      %v9666 = vpop.permute.xlu0 %9665
      %9667 = vrot.lane.b32.xlu0 %v1457, 72
      %v9668 = vpop.permute.xlu0 %9667
      %9669 = vrot.lane.b32.xlu0 %v1462, 72
      %v9670 = vpop.permute.xlu0 %9669
      %9671 = vrot.lane.b32.xlu0 %v1467, 72
      %v9672 = vpop.permute.xlu0 %9671
      %9673 = vrot.lane.b32.xlu0 %v1472, 72
      %v9674 = vpop.permute.xlu0 %9673
      %9675 = vrot.lane.b32.xlu0 %v1477, 72
      %v9676 = vpop.permute.xlu0 %9675
      %9677 = vrot.lane.b32.xlu0 %v1482, 72
      %v9678 = vpop.permute.xlu0 %9677
      %9679 = vrot.lane.b32.xlu0 %v1487, 72
      %v9680 = vpop.permute.xlu0 %9679
      %9681 = vrot.lane.b32.xlu0 %v1492, 72
      %v9682 = vpop.permute.xlu0 %9681
      %9683 = vrot.lane.b32.xlu0 %v1497, 72
      %v9684 = vpop.permute.xlu0 %9683
      %9685 = vrot.lane.b32.xlu0 %v1502, 72
      %v9686 = vpop.permute.xlu0 %9685
      %9687 = vrot.lane.b32.xlu0 %v1507, 72
      %v9688 = vpop.permute.xlu0 %9687
      %9689 = vrot.lane.b32.xlu0 %v1512, 72
      %v9690 = vpop.permute.xlu0 %9689
      %9691 = vrot.lane.b32.xlu0 %v1517, 72
      %v9692 = vpop.permute.xlu0 %9691
      %9693 = vrot.lane.b32.xlu0 %v1522, 72
      %v9694 = vpop.permute.xlu0 %9693
      %9695 = vrot.lane.b32.xlu0 %v1527, 72
      %v9696 = vpop.permute.xlu0 %9695
      %9697 = vrot.lane.b32.xlu0 %v1532, 72
      %v9698 = vpop.permute.xlu0 %9697
      %9699 = vrot.lane.b32.xlu0 %v1537, 72
      %v9700 = vpop.permute.xlu0 %9699
      %9701 = vrot.lane.b32.xlu0 %v1542, 72
      %v9702 = vpop.permute.xlu0 %9701
      %9703 = vrot.lane.b32.xlu0 %v1547, 72
      %v9704 = vpop.permute.xlu0 %9703
      %9705 = vrot.lane.b32.xlu0 %v1552, 72
      %v9706 = vpop.permute.xlu0 %9705
      %9707 = vrot.lane.b32.xlu0 %v1557, 72
      %v9708 = vpop.permute.xlu0 %9707
      %9709 = vrot.lane.b32.xlu0 %v1562, 72
      %v9710 = vpop.permute.xlu0 %9709
      %9711 = vrot.lane.b32.xlu0 %v1567, 72
      %v9712 = vpop.permute.xlu0 %9711
      %9713 = vrot.lane.b32.xlu0 %v1572, 72
      %v9714 = vpop.permute.xlu0 %9713
      %9715 = vrot.lane.b32.xlu0 %v1577, 72
      %v9716 = vpop.permute.xlu0 %9715
      %9717 = vrot.lane.b32.xlu0 %v1582, 72
      %v9718 = vpop.permute.xlu0 %9717
      %9719 = vrot.lane.b32.xlu0 %v1587, 72
      %v9720 = vpop.permute.xlu0 %9719
      %9721 = vrot.lane.b32.xlu0 %v1592, 72
      %v9722 = vpop.permute.xlu0 %9721
      %9723 = vrot.lane.b32.xlu0 %v1597, 72
      %v9724 = vpop.permute.xlu0 %9723
      %9725 = vrot.lane.b32.xlu0 %v1602, 72
      %v9726 = vpop.permute.xlu0 %9725
      %9727 = vrot.lane.b32.xlu0 %v1607, 72
      %v9728 = vpop.permute.xlu0 %9727
      %9729 = vrot.lane.b32.xlu0 %v1612, 72
      %v9730 = vpop.permute.xlu0 %9729
      %9731 = vrot.lane.b32.xlu0 %v1617, 72
      %v9732 = vpop.permute.xlu0 %9731
      %9733 = vrot.lane.b32.xlu0 %v1622, 72
      %v9734 = vpop.permute.xlu0 %9733
      %9735 = vrot.lane.b32.xlu0 %v1627, 72
      %v9736 = vpop.permute.xlu0 %9735
      %9737 = vrot.lane.b32.xlu0 %v1632, 72
      %v9738 = vpop.permute.xlu0 %9737
      %9739 = vrot.lane.b32.xlu0 %v1637, 72
      %v9740 = vpop.permute.xlu0 %9739
      %9741 = vrot.lane.b32.xlu0 %v1642, 72
      %v9742 = vpop.permute.xlu0 %9741
      %9743 = vrot.lane.b32.xlu0 %v1647, 72
      %v9744 = vpop.permute.xlu0 %9743
      %9745 = vrot.lane.b32.xlu0 %v1652, 72
      %v9746 = vpop.permute.xlu0 %9745
      %9747 = vrot.lane.b32.xlu0 %v1657, 72
      %v9748 = vpop.permute.xlu0 %9747
      %9749 = vrot.lane.b32.xlu0 %v1662, 72
      %v9750 = vpop.permute.xlu0 %9749
      %9751 = vrot.lane.b32.xlu0 %v1667, 72
      %v9752 = vpop.permute.xlu0 %9751
      %9753 = vrot.lane.b32.xlu0 %v1672, 72
      %v9754 = vpop.permute.xlu0 %9753
      %9755 = vrot.lane.b32.xlu0 %v1677, 72
      %v9756 = vpop.permute.xlu0 %9755
      %9757 = vrot.lane.b32.xlu0 %v1682, 72
      %v9758 = vpop.permute.xlu0 %9757
      %9759 = vrot.lane.b32.xlu0 %v1687, 72
      %v9760 = vpop.permute.xlu0 %9759
      %9761 = vrot.lane.b32.xlu0 %v1692, 72
      %v9762 = vpop.permute.xlu0 %9761
      %9763 = vrot.lane.b32.xlu0 %v1697, 72
      %v9764 = vpop.permute.xlu0 %9763
      %9765 = vrot.lane.b32.xlu0 %v1702, 72
      %v9766 = vpop.permute.xlu0 %9765
      %9767 = vrot.lane.b32.xlu0 %v1707, 72
      %v9768 = vpop.permute.xlu0 %9767
      %9769 = vrot.lane.b32.xlu0 %v1712, 72
      %v9770 = vpop.permute.xlu0 %9769
      %9771 = vrot.lane.b32.xlu0 %v1717, 72
      %v9772 = vpop.permute.xlu0 %9771
      %9773 = vrot.lane.b32.xlu0 %v1722, 72
      %v9774 = vpop.permute.xlu0 %9773
      %9775 = vrot.lane.b32.xlu0 %v1727, 72
      %v9776 = vpop.permute.xlu0 %9775
      %9777 = vrot.lane.b32.xlu0 %v1732, 72
      %v9778 = vpop.permute.xlu0 %9777
      %9779 = vrot.lane.b32.xlu0 %v1737, 72
      %v9780 = vpop.permute.xlu0 %9779
      %9781 = vrot.lane.b32.xlu0 %v1742, 72
      %v9782 = vpop.permute.xlu0 %9781
      %9783 = vrot.lane.b32.xlu0 %v1747, 72
      %v9784 = vpop.permute.xlu0 %9783
      %9785 = vrot.lane.b32.xlu0 %v1752, 72
      %v9786 = vpop.permute.xlu0 %9785
      %9787 = vrot.lane.b32.xlu0 %v1757, 72
      %v9788 = vpop.permute.xlu0 %9787
      %9869 = vmatprep.subr.mxu0 0.0
      %9870 = vmatpush1.msra.mxu0 %v9660
      %9871 = vmatprep.subr.mxu0 0.0
      %9872 = vmatpush1.msra.mxu0 %v9658
      %9873 = vmatprep.subr.mxu0 0.0
      %9874 = vmatpush1.msra.mxu0 %v9656
      %9875 = vmatprep.subr.mxu0 0.0
      %9876 = vmatpush1.msra.mxu0 %v9654
      %9877 = vmatprep.subr.mxu0 0.0
      %9878 = vmatpush1.msra.mxu0 %v9652
      %9879 = vmatprep.subr.mxu0 0.0
      %9880 = vmatpush1.msra.mxu0 %v9650
      %9881 = vmatprep.subr.mxu0 0.0
      %9882 = vmatpush1.msra.mxu0 %v9648
      %9883 = vmatprep.subr.mxu0 0.0
      %9884 = vmatpush1.msra.mxu0 %v9646
      %9885 = vmatprep.subr.mxu0 0.0
      %9886 = vmatpush1.msra.mxu0 %v9644
      %9887 = vmatprep.subr.mxu0 0.0
      %9888 = vmatpush1.msra.mxu0 %v9642
      %9889 = vmatprep.subr.mxu0 0.0
      %9890 = vmatpush1.msra.mxu0 %v9640
      %9891 = vmatprep.subr.mxu0 0.0
      %9892 = vmatpush1.msra.mxu0 %v9638
      %9893 = vmatprep.subr.mxu0 0.0
      %9894 = vmatpush1.msra.mxu0 %v9636
      %9895 = vmatprep.subr.mxu0 0.0
      %9896 = vmatpush1.msra.mxu0 %v9634
      %9897 = vmatprep.subr.mxu0 0.0
      %9898 = vmatpush1.msra.mxu0 %v9632
      %9899 = vmatprep.subr.mxu0 0.0
      %9900 = vmatpush1.msra.mxu0 %v9630
      %9901 = vmatprep.subr.mxu0 0.0
      %9902 = vmatpush2.msra.mxu0 %v9692
      %9903 = vmatprep.subr.mxu0 0.0
      %9904 = vmatpush2.msra.mxu0 %v9690
      %9905 = vmatprep.subr.mxu0 0.0
      %9906 = vmatpush2.msra.mxu0 %v9688
      %9907 = vmatprep.subr.mxu0 0.0
      %9908 = vmatpush2.msra.mxu0 %v9686
      %9909 = vmatprep.subr.mxu0 0.0
      %9910 = vmatpush2.msra.mxu0 %v9684
      %9911 = vmatprep.subr.mxu0 0.0
      %9912 = vmatpush2.msra.mxu0 %v9682
      %9913 = vmatprep.subr.mxu0 0.0
      %9914 = vmatpush2.msra.mxu0 %v9680
      %9915 = vmatprep.subr.mxu0 0.0
      %9916 = vmatpush2.msra.mxu0 %v9678
      %9917 = vmatprep.subr.mxu0 0.0
      %9918 = vmatpush2.msra.mxu0 %v9676
      %9919 = vmatprep.subr.mxu0 0.0
      %9920 = vmatpush2.msra.mxu0 %v9674
      %9921 = vmatprep.subr.mxu0 0.0
      %9922 = vmatpush2.msra.mxu0 %v9672
      %9923 = vmatprep.subr.mxu0 0.0
      %9924 = vmatpush2.msra.mxu0 %v9670
      %9925 = vmatprep.subr.mxu0 0.0
      %9926 = vmatpush2.msra.mxu0 %v9668
      %9927 = vmatprep.subr.mxu0 0.0
      %9928 = vmatpush2.msra.mxu0 %v9666
      %9929 = vmatprep.subr.mxu0 0.0
      %9930 = vmatpush2.msra.mxu0 %v9664
      %9931 = vmatprep.subr.mxu0 0.0
      %9932 = vmatpush2.msra.mxu0 %v9662
      %9933 = vmatprep.mubr.f32.mxu0 %v9550
      %9934 = vmatmul.mubr.f32.gmra.mxu0 %v9549
      %v9935 = vpop.f32.mrf.mxu0
      %v9936 = vadd.f32 0.0, %v9935
      %v9937 = vpop.f32.mrf.mxu0
      %9938 = vmatprep.mubr.f32.mxu0 %v9555
      %9939 = vmatmul.mubr.f32.gmra.mxu0 %v9554
      %v9940 = vpop.f32.mrf.mxu0
      %v9941 = vadd.f32 0.0, %v9940
      %v9942 = vpop.f32.mrf.mxu0
      %9943 = vmatprep.mubr.f32.mxu0 %v9560
      %9944 = vmatmul.mubr.f32.gmra.mxu0 %v9559
      %v9945 = vpop.f32.mrf.mxu0
      %v9946 = vadd.f32 0.0, %v9945
      %v9947 = vpop.f32.mrf.mxu0
      %9948 = vmatprep.mubr.f32.mxu0 %v9565
      %9949 = vmatmul.mubr.f32.gmra.mxu0 %v9564
      %v9950 = vpop.f32.mrf.mxu0
      %v9951 = vadd.f32 0.0, %v9950
      %v9952 = vpop.f32.mrf.mxu0
      %9953 = vmatprep.mubr.f32.mxu0 %v9570
      %9954 = vmatmul.mubr.f32.gmra.mxu0 %v9569
      %v9955 = vpop.f32.mrf.mxu0
      %v9956 = vadd.f32 0.0, %v9955
      %v9957 = vpop.f32.mrf.mxu0
      %9958 = vmatprep.mubr.f32.mxu0 %v9575
      %9959 = vmatmul.mubr.f32.gmra.mxu0 %v9574
      %v9960 = vpop.f32.mrf.mxu0
      %v9961 = vadd.f32 0.0, %v9960
      %v9962 = vpop.f32.mrf.mxu0
      %9963 = vmatprep.mubr.f32.mxu0 %v9580
      %9964 = vmatmul.mubr.f32.gmra.mxu0 %v9579
      %v9965 = vpop.f32.mrf.mxu0
      %v9966 = vadd.f32 0.0, %v9965
      %v9967 = vpop.f32.mrf.mxu0
      %9968 = vmatprep.mubr.f32.mxu0 %v9585
      %9969 = vmatmul.mubr.f32.gmra.mxu0 %v9584
      %v9970 = vpop.f32.mrf.mxu0
      %v9971 = vadd.f32 0.0, %v9970
      %v9972 = vpop.f32.mrf.mxu0
      %9973 = vmatprep.mubr.f32.mxu0 %v9590
      %9974 = vmatmul.mubr.f32.gmra.mxu0 %v9589
      %v9975 = vpop.f32.mrf.mxu0
      %v9976 = vadd.f32 0.0, %v9975
      %v9977 = vpop.f32.mrf.mxu0
      %9978 = vmatprep.mubr.f32.mxu0 %v9595
      %9979 = vmatmul.mubr.f32.gmra.mxu0 %v9594
      %v9980 = vpop.f32.mrf.mxu0
      %v9981 = vadd.f32 0.0, %v9980
      %v9982 = vpop.f32.mrf.mxu0
      %9983 = vmatprep.mubr.f32.mxu0 %v9600
      %9984 = vmatmul.mubr.f32.gmra.mxu0 %v9599
      %v9985 = vpop.f32.mrf.mxu0
      %v9986 = vadd.f32 0.0, %v9985
      %v9987 = vpop.f32.mrf.mxu0
      %9988 = vmatprep.mubr.f32.mxu0 %v9605
      %9989 = vmatmul.mubr.f32.gmra.mxu0 %v9604
      %v9990 = vpop.f32.mrf.mxu0
      %v9991 = vadd.f32 0.0, %v9990
      %v9992 = vpop.f32.mrf.mxu0
      %9993 = vmatprep.mubr.f32.mxu0 %v9610
      %9994 = vmatmul.mubr.f32.gmra.mxu0 %v9609
      %v9995 = vpop.f32.mrf.mxu0
      %v9996 = vadd.f32 0.0, %v9995
      %v9997 = vpop.f32.mrf.mxu0
      %9998 = vmatprep.mubr.f32.mxu0 %v9615
      %9999 = vmatmul.mubr.f32.gmra.mxu0 %v9614
      %v10000 = vpop.f32.mrf.mxu0
      %v10001 = vadd.f32 0.0, %v10000
      %v10002 = vpop.f32.mrf.mxu0
      %10003 = vmatprep.mubr.f32.mxu0 %v9620
      %10004 = vmatmul.mubr.f32.gmra.mxu0 %v9619
      %v10005 = vpop.f32.mrf.mxu0
      %v10006 = vadd.f32 0.0, %v10005
      %v10007 = vpop.f32.mrf.mxu0
      %10008 = vmatprep.mubr.f32.mxu0 %v9625
      %10009 = vmatmul.mubr.f32.gmra.mxu0 %v9624
      %v10010 = vpop.f32.mrf.mxu0
      %v10011 = vadd.f32 0.0, %v10010
      %v10012 = vpop.f32.mrf.mxu0
      %10013 = vdwg.mxu0
      %10014 = vmatprep.subr.mxu0 0.0
      %10015 = vmatpush1.msra.mxu0 %v9724
      %10016 = vmatprep.subr.mxu0 0.0
      %10017 = vmatpush1.msra.mxu0 %v9722
      %10018 = vmatprep.subr.mxu0 0.0
      %10019 = vmatpush1.msra.mxu0 %v9720
      %10020 = vmatprep.subr.mxu0 0.0
      %10021 = vmatpush1.msra.mxu0 %v9718
      %10022 = vmatprep.subr.mxu0 0.0
      %10023 = vmatpush1.msra.mxu0 %v9716
      %10024 = vmatprep.subr.mxu0 0.0
      %10025 = vmatpush1.msra.mxu0 %v9714
      %10026 = vmatprep.subr.mxu0 0.0
      %10027 = vmatpush1.msra.mxu0 %v9712
      %10028 = vmatprep.subr.mxu0 0.0
      %10029 = vmatpush1.msra.mxu0 %v9710
      %10030 = vmatprep.subr.mxu0 0.0
      %10031 = vmatpush1.msra.mxu0 %v9708
      %10032 = vmatprep.subr.mxu0 0.0
      %10033 = vmatpush1.msra.mxu0 %v9706
      %10034 = vmatprep.subr.mxu0 0.0
      %10035 = vmatpush1.msra.mxu0 %v9704
      %10036 = vmatprep.subr.mxu0 0.0
      %10037 = vmatpush1.msra.mxu0 %v9702
      %10038 = vmatprep.subr.mxu0 0.0
      %10039 = vmatpush1.msra.mxu0 %v9700
      %10040 = vmatprep.subr.mxu0 0.0
      %10041 = vmatpush1.msra.mxu0 %v9698
      %10042 = vmatprep.subr.mxu0 0.0
      %10043 = vmatpush1.msra.mxu0 %v9696
      %10044 = vmatprep.subr.mxu0 0.0
      %10045 = vmatpush1.msra.mxu0 %v9694
      %10046 = vmatprep.subr.mxu0 0.0
      %10047 = vmatpush2.msra.mxu0 %v9756
      %10048 = vmatprep.subr.mxu0 0.0
      %10049 = vmatpush2.msra.mxu0 %v9754
      %10050 = vmatprep.subr.mxu0 0.0
      %10051 = vmatpush2.msra.mxu0 %v9752
      %10052 = vmatprep.subr.mxu0 0.0
      %10053 = vmatpush2.msra.mxu0 %v9750
      %10054 = vmatprep.subr.mxu0 0.0
      %10055 = vmatpush2.msra.mxu0 %v9748
      %10056 = vmatprep.subr.mxu0 0.0
      %10057 = vmatpush2.msra.mxu0 %v9746
      %10058 = vmatprep.subr.mxu0 0.0
      %10059 = vmatpush2.msra.mxu0 %v9744
      %10060 = vmatprep.subr.mxu0 0.0
      %10061 = vmatpush2.msra.mxu0 %v9742
      %10062 = vmatprep.subr.mxu0 0.0
      %10063 = vmatpush2.msra.mxu0 %v9740
      %10064 = vmatprep.subr.mxu0 0.0
      %10065 = vmatpush2.msra.mxu0 %v9738
      %10066 = vmatprep.subr.mxu0 0.0
      %10067 = vmatpush2.msra.mxu0 %v9736
      %10068 = vmatprep.subr.mxu0 0.0
      %10069 = vmatpush2.msra.mxu0 %v9734
      %10070 = vmatprep.subr.mxu0 0.0
      %10071 = vmatpush2.msra.mxu0 %v9732
      %10072 = vmatprep.subr.mxu0 0.0
      %10073 = vmatpush2.msra.mxu0 %v9730
      %10074 = vmatprep.subr.mxu0 0.0
      %10075 = vmatpush2.msra.mxu0 %v9728
      %10076 = vmatprep.subr.mxu0 0.0
      %10077 = vmatpush2.msra.mxu0 %v9726
      %10078 = vmatprep.mubr.f32.mxu0 %v9552
      %10079 = vmatmul.mubr.f32.gmra.mxu0 %v9551
      %v10080 = vpop.f32.mrf.mxu0
      %v10081 = vadd.f32 %v9936, %v10080
      %v10082 = vpop.f32.mrf.mxu0
      %10083 = vmatprep.mubr.f32.mxu0 %v9557
      %10084 = vmatmul.mubr.f32.gmra.mxu0 %v9556
      %v10085 = vpop.f32.mrf.mxu0
      %v10086 = vadd.f32 %v9941, %v10085
      %v10087 = vpop.f32.mrf.mxu0
      %10088 = vmatprep.mubr.f32.mxu0 %v9562
      %10089 = vmatmul.mubr.f32.gmra.mxu0 %v9561
      %v10090 = vpop.f32.mrf.mxu0
      %v10091 = vadd.f32 %v9946, %v10090
      %v10092 = vpop.f32.mrf.mxu0
      %10093 = vmatprep.mubr.f32.mxu0 %v9567
      %10094 = vmatmul.mubr.f32.gmra.mxu0 %v9566
      %v10095 = vpop.f32.mrf.mxu0
      %v10096 = vadd.f32 %v9951, %v10095
      %v10097 = vpop.f32.mrf.mxu0
      %10098 = vmatprep.mubr.f32.mxu0 %v9572
      %10099 = vmatmul.mubr.f32.gmra.mxu0 %v9571
      %v10100 = vpop.f32.mrf.mxu0
      %v10101 = vadd.f32 %v9956, %v10100
      %v10102 = vpop.f32.mrf.mxu0
      %10103 = vmatprep.mubr.f32.mxu0 %v9577
      %10104 = vmatmul.mubr.f32.gmra.mxu0 %v9576
      %v10105 = vpop.f32.mrf.mxu0
      %v10106 = vadd.f32 %v9961, %v10105
      %v10107 = vpop.f32.mrf.mxu0
      %10108 = vmatprep.mubr.f32.mxu0 %v9582
      %10109 = vmatmul.mubr.f32.gmra.mxu0 %v9581
      %v10110 = vpop.f32.mrf.mxu0
      %v10111 = vadd.f32 %v9966, %v10110
      %v10112 = vpop.f32.mrf.mxu0
      %10113 = vmatprep.mubr.f32.mxu0 %v9587
      %10114 = vmatmul.mubr.f32.gmra.mxu0 %v9586
      %v10115 = vpop.f32.mrf.mxu0
      %v10116 = vadd.f32 %v9971, %v10115
      %v10117 = vpop.f32.mrf.mxu0
      %10118 = vmatprep.mubr.f32.mxu0 %v9592
      %10119 = vmatmul.mubr.f32.gmra.mxu0 %v9591
      %v10120 = vpop.f32.mrf.mxu0
      %v10121 = vadd.f32 %v9976, %v10120
      %v10122 = vpop.f32.mrf.mxu0
      %10123 = vmatprep.mubr.f32.mxu0 %v9597
      %10124 = vmatmul.mubr.f32.gmra.mxu0 %v9596
      %v10125 = vpop.f32.mrf.mxu0
      %v10126 = vadd.f32 %v9981, %v10125
      %v10127 = vpop.f32.mrf.mxu0
      %10128 = vmatprep.mubr.f32.mxu0 %v9602
      %10129 = vmatmul.mubr.f32.gmra.mxu0 %v9601
      %v10130 = vpop.f32.mrf.mxu0
      %v10131 = vadd.f32 %v9986, %v10130
      %v10132 = vpop.f32.mrf.mxu0
      %10133 = vmatprep.mubr.f32.mxu0 %v9607
      %10134 = vmatmul.mubr.f32.gmra.mxu0 %v9606
      %v10135 = vpop.f32.mrf.mxu0
      %v10136 = vadd.f32 %v9991, %v10135
      %v10137 = vpop.f32.mrf.mxu0
      %10138 = vmatprep.mubr.f32.mxu0 %v9612
      %10139 = vmatmul.mubr.f32.gmra.mxu0 %v9611
      %v10140 = vpop.f32.mrf.mxu0
      %v10141 = vadd.f32 %v9996, %v10140
      %v10142 = vpop.f32.mrf.mxu0
      %10143 = vmatprep.mubr.f32.mxu0 %v9617
      %10144 = vmatmul.mubr.f32.gmra.mxu0 %v9616
      %v10145 = vpop.f32.mrf.mxu0
      %v10146 = vadd.f32 %v10001, %v10145
      %v10147 = vpop.f32.mrf.mxu0
      %10148 = vmatprep.mubr.f32.mxu0 %v9622
      %10149 = vmatmul.mubr.f32.gmra.mxu0 %v9621
      %v10150 = vpop.f32.mrf.mxu0
      %v10151 = vadd.f32 %v10006, %v10150
      %v10152 = vpop.f32.mrf.mxu0
      %10153 = vmatprep.mubr.f32.mxu0 %v9627
      %10154 = vmatmul.mubr.f32.gmra.mxu0 %v9626
      %v10155 = vpop.f32.mrf.mxu0
      %v10156 = vadd.f32 %v10011, %v10155
      %v10157 = vpop.f32.mrf.mxu0
      %10158 = vdwg.mxu0
      %10159 = vmatprep.subr.mxu0 0.0
      %10160 = vmatpush1.msra.mxu0 %v9788
      %10161 = vmatprep.subr.mxu0 0.0
      %10162 = vmatpush1.msra.mxu0 %v9786
      %10163 = vmatprep.subr.mxu0 0.0
      %10164 = vmatpush1.msra.mxu0 %v9784
      %10165 = vmatprep.subr.mxu0 0.0
      %10166 = vmatpush1.msra.mxu0 %v9782
      %10167 = vmatprep.subr.mxu0 0.0
      %10168 = vmatpush1.msra.mxu0 %v9780
      %10169 = vmatprep.subr.mxu0 0.0
      %10170 = vmatpush1.msra.mxu0 %v9778
      %10171 = vmatprep.subr.mxu0 0.0
      %10172 = vmatpush1.msra.mxu0 %v9776
      %10173 = vmatprep.subr.mxu0 0.0
      %10174 = vmatpush1.msra.mxu0 %v9774
      %10175 = vmatprep.subr.mxu0 0.0
      %10176 = vmatpush1.msra.mxu0 %v9772
      %10177 = vmatprep.subr.mxu0 0.0
      %10178 = vmatpush1.msra.mxu0 %v9770
      %10179 = vmatprep.subr.mxu0 0.0
      %10180 = vmatpush1.msra.mxu0 %v9768
      %10181 = vmatprep.subr.mxu0 0.0
      %10182 = vmatpush1.msra.mxu0 %v9766
      %10183 = vmatprep.subr.mxu0 0.0
      %10184 = vmatpush1.msra.mxu0 %v9764
      %10185 = vmatprep.subr.mxu0 0.0
      %10186 = vmatpush1.msra.mxu0 %v9762
      %10187 = vmatprep.subr.mxu0 0.0
      %10188 = vmatpush1.msra.mxu0 %v9760
      %10189 = vmatprep.subr.mxu0 0.0
      %10190 = vmatpush1.msra.mxu0 %v9758
      %10191 = vmatprep.subr.mxu0 0.0
      %10192 = vmatpush2.msra.mxu0 0.0
      %10193 = vmatprep.subr.mxu0 0.0
      %10194 = vmatpush2.msra.mxu0 0.0
      %10195 = vmatprep.subr.mxu0 0.0
      %10196 = vmatpush2.msra.mxu0 0.0
      %10197 = vmatprep.subr.mxu0 0.0
      %10198 = vmatpush2.msra.mxu0 0.0
      %10199 = vmatprep.subr.mxu0 0.0
      %10200 = vmatpush2.msra.mxu0 0.0
      %10201 = vmatprep.subr.mxu0 0.0
      %10202 = vmatpush2.msra.mxu0 0.0
      %10203 = vmatprep.subr.mxu0 0.0
      %10204 = vmatpush2.msra.mxu0 0.0
      %10205 = vmatprep.subr.mxu0 0.0
      %10206 = vmatpush2.msra.mxu0 0.0
      %10207 = vmatprep.subr.mxu0 0.0
      %10208 = vmatpush2.msra.mxu0 0.0
      %10209 = vmatprep.subr.mxu0 0.0
      %10210 = vmatpush2.msra.mxu0 0.0
      %10211 = vmatprep.subr.mxu0 0.0
      %10212 = vmatpush2.msra.mxu0 0.0
      %10213 = vmatprep.subr.mxu0 0.0
      %10214 = vmatpush2.msra.mxu0 0.0
      %10215 = vmatprep.subr.mxu0 0.0
      %10216 = vmatpush2.msra.mxu0 0.0
      %10217 = vmatprep.subr.mxu0 0.0
      %10218 = vmatpush2.msra.mxu0 0.0
      %10219 = vmatprep.subr.mxu0 0.0
      %10220 = vmatpush2.msra.mxu0 0.0
      %10221 = vmatprep.subr.mxu0 0.0
      %10222 = vmatpush2.msra.mxu0 0.0
      %10223 = vmatprep.mubr.f32.mxu0 0.0
      %10224 = vmatmul.mubr.f32.gmra.mxu0 %v9553
      %v10225 = vpop.f32.mrf.mxu0
      %v10226 = vadd.f32 %v10081, %v10225
      %v10227 = vpop.f32.mrf.mxu0
      %10228 = vmatprep.mubr.f32.mxu0 0.0
      %10229 = vmatmul.mubr.f32.gmra.mxu0 %v9558
      %v10230 = vpop.f32.mrf.mxu0
      %v10231 = vadd.f32 %v10086, %v10230
      %v10232 = vpop.f32.mrf.mxu0
      %10233 = vmatprep.mubr.f32.mxu0 0.0
      %10234 = vmatmul.mubr.f32.gmra.mxu0 %v9563
      %v10235 = vpop.f32.mrf.mxu0
      %v10236 = vadd.f32 %v10091, %v10235
      %v10237 = vpop.f32.mrf.mxu0
      %10238 = vmatprep.mubr.f32.mxu0 0.0
      %10239 = vmatmul.mubr.f32.gmra.mxu0 %v9568
      %v10240 = vpop.f32.mrf.mxu0
      %v10241 = vadd.f32 %v10096, %v10240
      %v10242 = vpop.f32.mrf.mxu0
      %10243 = vmatprep.mubr.f32.mxu0 0.0
      %10244 = vmatmul.mubr.f32.gmra.mxu0 %v9573
      %v10245 = vpop.f32.mrf.mxu0
      %v10246 = vadd.f32 %v10101, %v10245
      %v10247 = vpop.f32.mrf.mxu0
      %10248 = vmatprep.mubr.f32.mxu0 0.0
      %10249 = vmatmul.mubr.f32.gmra.mxu0 %v9578
      %v10250 = vpop.f32.mrf.mxu0
      %v10251 = vadd.f32 %v10106, %v10250
      %v10252 = vpop.f32.mrf.mxu0
      %10253 = vmatprep.mubr.f32.mxu0 0.0
      %10254 = vmatmul.mubr.f32.gmra.mxu0 %v9583
      %v10255 = vpop.f32.mrf.mxu0
      %v10256 = vadd.f32 %v10111, %v10255
      %v10257 = vpop.f32.mrf.mxu0
      %10258 = vmatprep.mubr.f32.mxu0 0.0
      %10259 = vmatmul.mubr.f32.gmra.mxu0 %v9588
      %v10260 = vpop.f32.mrf.mxu0
      %v10261 = vadd.f32 %v10116, %v10260
      %v10262 = vpop.f32.mrf.mxu0
      %10263 = vmatprep.mubr.f32.mxu0 0.0
      %10264 = vmatmul.mubr.f32.gmra.mxu0 %v9593
      %v10265 = vpop.f32.mrf.mxu0
      %v10266 = vadd.f32 %v10121, %v10265
      %v10267 = vpop.f32.mrf.mxu0
      %10268 = vmatprep.mubr.f32.mxu0 0.0
      %10269 = vmatmul.mubr.f32.gmra.mxu0 %v9598
      %v10270 = vpop.f32.mrf.mxu0
      %v10271 = vadd.f32 %v10126, %v10270
      %v10272 = vpop.f32.mrf.mxu0
      %10273 = vmatprep.mubr.f32.mxu0 0.0
      %10274 = vmatmul.mubr.f32.gmra.mxu0 %v9603
      %v10275 = vpop.f32.mrf.mxu0
      %v10276 = vadd.f32 %v10131, %v10275
      %v10277 = vpop.f32.mrf.mxu0
      %10278 = vmatprep.mubr.f32.mxu0 0.0
      %10279 = vmatmul.mubr.f32.gmra.mxu0 %v9608
      %v10280 = vpop.f32.mrf.mxu0
      %v10281 = vadd.f32 %v10136, %v10280
      %v10282 = vpop.f32.mrf.mxu0
      %10283 = vmatprep.mubr.f32.mxu0 0.0
      %10284 = vmatmul.mubr.f32.gmra.mxu0 %v9613
      %v10285 = vpop.f32.mrf.mxu0
      %v10286 = vadd.f32 %v10141, %v10285
      %v10287 = vpop.f32.mrf.mxu0
      %10288 = vmatprep.mubr.f32.mxu0 0.0
      %10289 = vmatmul.mubr.f32.gmra.mxu0 %v9618
      %v10290 = vpop.f32.mrf.mxu0
      %v10291 = vadd.f32 %v10146, %v10290
      %v10292 = vpop.f32.mrf.mxu0
      %10293 = vmatprep.mubr.f32.mxu0 0.0
      %10294 = vmatmul.mubr.f32.gmra.mxu0 %v9623
      %v10295 = vpop.f32.mrf.mxu0
      %v10296 = vadd.f32 %v10151, %v10295
      %v10297 = vpop.f32.mrf.mxu0
      %10298 = vmatprep.mubr.f32.mxu0 0.0
      %10299 = vmatmul.mubr.f32.gmra.mxu0 %v9628
      %v10300 = vpop.f32.mrf.mxu0
      %v10301 = vadd.f32 %v10156, %v10300
      %v10302 = vpop.f32.mrf.mxu0
      %10303 = vdwg.mxu0
      %10320 = vrot.lane.b32.xlu0 %v10226, 24
      %v10321 = vpop.permute.xlu0 %10320
      %10322 = vrot.lane.b32.xlu0 %v10231, 24
      %v10323 = vpop.permute.xlu0 %10322
      %10324 = vrot.lane.b32.xlu0 %v10236, 24
      %v10325 = vpop.permute.xlu0 %10324
      %10326 = vrot.lane.b32.xlu0 %v10241, 24
      %v10327 = vpop.permute.xlu0 %10326
      %10328 = vrot.lane.b32.xlu0 %v10246, 24
      %v10329 = vpop.permute.xlu0 %10328
      %10330 = vrot.lane.b32.xlu0 %v10251, 24
      %v10331 = vpop.permute.xlu0 %10330
      %10332 = vrot.lane.b32.xlu0 %v10256, 24
      %v10333 = vpop.permute.xlu0 %10332
      %10334 = vrot.lane.b32.xlu0 %v10261, 24
      %v10335 = vpop.permute.xlu0 %10334
      %10336 = vrot.lane.b32.xlu0 %v10266, 24
      %v10337 = vpop.permute.xlu0 %10336
      %10338 = vrot.lane.b32.xlu0 %v10271, 24
      %v10339 = vpop.permute.xlu0 %10338
      %10340 = vrot.lane.b32.xlu0 %v10276, 24
      %v10341 = vpop.permute.xlu0 %10340
      %10342 = vrot.lane.b32.xlu0 %v10281, 24
      %v10343 = vpop.permute.xlu0 %10342
      %10344 = vrot.lane.b32.xlu0 %v10286, 24
      %v10345 = vpop.permute.xlu0 %10344
      %10346 = vrot.lane.b32.xlu0 %v10291, 24
      %v10347 = vpop.permute.xlu0 %10346
      %10348 = vrot.lane.b32.xlu0 %v10296, 24
      %v10349 = vpop.permute.xlu0 %10348
      %10350 = vrot.lane.b32.xlu0 %v10301, 24
      %v10351 = vpop.permute.xlu0 %10350
      %vm10368 = vcmask 261312
      %10369 = vst.msk [vmem:[#allocation2] sm:$0xff] %vm10368, %v10321
      %10370 = vst.msk [vmem:[#allocation2 + $0x8] sm:$0xff] %vm10368, %v10323
      %10371 = vst.msk [vmem:[#allocation2 + $0x10] sm:$0xff] %vm10368, %v10325
      %10372 = vst.msk [vmem:[#allocation2 + $0x18] sm:$0xff] %vm10368, %v10327
      %10373 = vst.msk [vmem:[#allocation2 + $0x20] sm:$0xff] %vm10368, %v10329
      %10374 = vst.msk [vmem:[#allocation2 + $0x28] sm:$0xff] %vm10368, %v10331
      %10375 = vst.msk [vmem:[#allocation2 + $0x30] sm:$0xff] %vm10368, %v10333
      %10376 = vst.msk [vmem:[#allocation2 + $0x38] sm:$0xff] %vm10368, %v10335
      %10377 = vst.msk [vmem:[#allocation2 + $0x40] sm:$0xff] %vm10368, %v10337
      %10378 = vst.msk [vmem:[#allocation2 + $0x48] sm:$0xff] %vm10368, %v10339
      %10379 = vst.msk [vmem:[#allocation2 + $0x50] sm:$0xff] %vm10368, %v10341
      %10380 = vst.msk [vmem:[#allocation2 + $0x58] sm:$0xff] %vm10368, %v10343
      %10381 = vst.msk [vmem:[#allocation2 + $0x60] sm:$0xff] %vm10368, %v10345
      %10382 = vst.msk [vmem:[#allocation2 + $0x68] sm:$0xff] %vm10368, %v10347
      %10383 = vst.msk [vmem:[#allocation2 + $0x70] sm:$0xff] %vm10368, %v10349
      %10384 = vst.msk [vmem:[#allocation2 + $0x78] sm:$0xff] %vm10368, %v10351
      %v10385 = vld [vmem:[#allocation2] sm:$0xff]
      %v10386 = vld [vmem:[#allocation2 + $0x8] sm:$0xff]
      %v10387 = vld [vmem:[#allocation2 + $0x10] sm:$0xff]
      %v10388 = vld [vmem:[#allocation2 + $0x18] sm:$0xff]
      %v10389 = vld [vmem:[#allocation2 + $0x20] sm:$0xff]
      %v10390 = vld [vmem:[#allocation2 + $0x28] sm:$0xff]
      %v10391 = vld [vmem:[#allocation2 + $0x30] sm:$0xff]
      %v10392 = vld [vmem:[#allocation2 + $0x38] sm:$0xff]
      %v10393 = vld [vmem:[#allocation2 + $0x40] sm:$0xff]
      %v10394 = vld [vmem:[#allocation2 + $0x48] sm:$0xff]
      %v10395 = vld [vmem:[#allocation2 + $0x50] sm:$0xff]
      %v10396 = vld [vmem:[#allocation2 + $0x58] sm:$0xff]
      %v10397 = vld [vmem:[#allocation2 + $0x60] sm:$0xff]
      %v10398 = vld [vmem:[#allocation2 + $0x68] sm:$0xff]
      %v10399 = vld [vmem:[#allocation2 + $0x70] sm:$0xff]
      %v10400 = vld [vmem:[#allocation2 + $0x78] sm:$0xff]
      %v10401 = vlaneseq
      %v10402 = vshrl.u32 %v10401, 7
      %v10403 = vsub.s32 0, %v10402
      %v10404 = vrot.slane %v218, %v10403
      %vm10405 = vcmask 261120
      %v10407 = vsel %vm10405, %v10385, 0
      %v10410 = vsel %vm10405, %v10386, 0
      %v10413 = vsel %vm10405, %v10387, 0
      %v10416 = vsel %vm10405, %v10388, 0
      %v10419 = vsel %vm10405, %v10389, 0
      %v10422 = vsel %vm10405, %v10390, 0
      %v10425 = vsel %vm10405, %v10391, 0
      %v10428 = vsel %vm10405, %v10392, 0
      %v10431 = vsel %vm10405, %v10393, 0
      %v10434 = vsel %vm10405, %v10394, 0
      %v10437 = vsel %vm10405, %v10395, 0
      %v10440 = vsel %vm10405, %v10396, 0
      %v10443 = vsel %vm10405, %v10397, 0
      %v10446 = vsel %vm10405, %v10398, 0
      %v10449 = vsel %vm10405, %v10399, 0
      %v10452 = vsel %vm10405, %v10400, 0
      %10454 = vmatprep.subr.mxu0 0.0
      %10455 = vmatpush1.msra.mxu0 0.0
      %10456 = vmatprep.subr.mxu0 0.0
      %10457 = vmatpush1.msra.mxu0 0.0
      %10458 = vmatprep.subr.mxu0 0.0
      %10459 = vmatpush1.msra.mxu0 0.0
      %10460 = vmatprep.subr.mxu0 0.0
      %10461 = vmatpush1.msra.mxu0 0.0
      %10462 = vmatprep.subr.mxu0 0.0
      %10463 = vmatpush1.msra.mxu0 0.0
      %10464 = vmatprep.subr.mxu0 0.0
      %10465 = vmatpush1.msra.mxu0 0.0
      %10466 = vmatprep.subr.mxu0 0.0
      %10467 = vmatpush1.msra.mxu0 0.0
      %10468 = vmatprep.subr.mxu0 0.0
      %10469 = vmatpush1.msra.mxu0 0.0
      %10470 = vmatprep.subr.mxu0 0.0
      %10471 = vmatpush1.msra.mxu0 0.0
      %10472 = vmatprep.subr.mxu0 0.0
      %10473 = vmatpush1.msra.mxu0 0.0
      %10474 = vmatprep.subr.mxu0 0.0
      %10475 = vmatpush1.msra.mxu0 0.0
      %10476 = vmatprep.subr.mxu0 0.0
      %10477 = vmatpush1.msra.mxu0 0.0
      %10478 = vmatprep.subr.mxu0 0.0
      %10479 = vmatpush1.msra.mxu0 %v217
      %10480 = vmatprep.subr.mxu0 0.0
      %10481 = vmatpush1.msra.mxu0 %v216
      %10482 = vmatprep.subr.mxu0 0.0
      %10483 = vmatpush1.msra.mxu0 %v215
      %10484 = vmatprep.subr.mxu0 0.0
      %10485 = vmatpush1.msra.mxu0 %v214
      %10486 = vmatprep.subr.mxu0 0.0
      %10487 = vmatpush2.msra.mxu0 0.0
      %10488 = vmatprep.subr.mxu0 0.0
      %10489 = vmatpush2.msra.mxu0 0.0
      %10490 = vmatprep.subr.mxu0 0.0
      %10491 = vmatpush2.msra.mxu0 0.0
      %10492 = vmatprep.subr.mxu0 0.0
      %10493 = vmatpush2.msra.mxu0 0.0
      %10494 = vmatprep.subr.mxu0 0.0
      %10495 = vmatpush2.msra.mxu0 0.0
      %10496 = vmatprep.subr.mxu0 0.0
      %10497 = vmatpush2.msra.mxu0 0.0
      %10498 = vmatprep.subr.mxu0 0.0
      %10499 = vmatpush2.msra.mxu0 0.0
      %10500 = vmatprep.subr.mxu0 0.0
      %10501 = vmatpush2.msra.mxu0 0.0
      %10502 = vmatprep.subr.mxu0 0.0
      %10503 = vmatpush2.msra.mxu0 0.0
      %10504 = vmatprep.subr.mxu0 0.0
      %10505 = vmatpush2.msra.mxu0 0.0
      %10506 = vmatprep.subr.mxu0 0.0
      %10507 = vmatpush2.msra.mxu0 0.0
      %10508 = vmatprep.subr.mxu0 0.0
      %10509 = vmatpush2.msra.mxu0 0.0
      %10510 = vmatprep.subr.mxu0 0.0
      %10511 = vmatpush2.msra.mxu0 0.0
      %10512 = vmatprep.subr.mxu0 0.0
      %10513 = vmatpush2.msra.mxu0 0.0
      %10514 = vmatprep.subr.mxu0 0.0
      %10515 = vmatpush2.msra.mxu0 0.0
      %10516 = vmatprep.subr.mxu0 0.0
      %10517 = vmatpush2.msra.mxu0 0.0
      %10518 = vmatprep.mubr.f32.mxu0 0.0
      %10519 = vmatmul.mubr.f32.gmra.mxu0 %v10407
      %v10520 = vpop.f32.mrf.mxu0
      %v10521 = vadd.f32 %v10404, %v10520
      %v10522 = vpop.f32.mrf.mxu0
      %10523 = vmatprep.mubr.f32.mxu0 0.0
      %10524 = vmatmul.mubr.f32.gmra.mxu0 %v10410
      %v10525 = vpop.f32.mrf.mxu0
      %v10526 = vadd.f32 %v10404, %v10525
      %v10527 = vpop.f32.mrf.mxu0
      %10528 = vmatprep.mubr.f32.mxu0 0.0
      %10529 = vmatmul.mubr.f32.gmra.mxu0 %v10413
      %v10530 = vpop.f32.mrf.mxu0
      %v10531 = vadd.f32 %v10404, %v10530
      %v10532 = vpop.f32.mrf.mxu0
      %10533 = vmatprep.mubr.f32.mxu0 0.0
      %10534 = vmatmul.mubr.f32.gmra.mxu0 %v10416
      %v10535 = vpop.f32.mrf.mxu0
      %v10536 = vadd.f32 %v10404, %v10535
      %v10537 = vpop.f32.mrf.mxu0
      %10538 = vmatprep.mubr.f32.mxu0 0.0
      %10539 = vmatmul.mubr.f32.gmra.mxu0 %v10419
      %v10540 = vpop.f32.mrf.mxu0
      %v10541 = vadd.f32 %v10404, %v10540
      %v10542 = vpop.f32.mrf.mxu0
      %10543 = vmatprep.mubr.f32.mxu0 0.0
      %10544 = vmatmul.mubr.f32.gmra.mxu0 %v10422
      %v10545 = vpop.f32.mrf.mxu0
      %v10546 = vadd.f32 %v10404, %v10545
      %v10547 = vpop.f32.mrf.mxu0
      %10548 = vmatprep.mubr.f32.mxu0 0.0
      %10549 = vmatmul.mubr.f32.gmra.mxu0 %v10425
      %v10550 = vpop.f32.mrf.mxu0
      %v10551 = vadd.f32 %v10404, %v10550
      %v10552 = vpop.f32.mrf.mxu0
      %10553 = vmatprep.mubr.f32.mxu0 0.0
      %10554 = vmatmul.mubr.f32.gmra.mxu0 %v10428
      %v10555 = vpop.f32.mrf.mxu0
      %v10556 = vadd.f32 %v10404, %v10555
      %v10557 = vpop.f32.mrf.mxu0
      %10558 = vmatprep.mubr.f32.mxu0 0.0
      %10559 = vmatmul.mubr.f32.gmra.mxu0 %v10431
      %v10560 = vpop.f32.mrf.mxu0
      %v10561 = vadd.f32 %v10404, %v10560
      %v10562 = vpop.f32.mrf.mxu0
      %10563 = vmatprep.mubr.f32.mxu0 0.0
      %10564 = vmatmul.mubr.f32.gmra.mxu0 %v10434
      %v10565 = vpop.f32.mrf.mxu0
      %v10566 = vadd.f32 %v10404, %v10565
      %v10567 = vpop.f32.mrf.mxu0
      %10568 = vmatprep.mubr.f32.mxu0 0.0
      %10569 = vmatmul.mubr.f32.gmra.mxu0 %v10437
      %v10570 = vpop.f32.mrf.mxu0
      %v10571 = vadd.f32 %v10404, %v10570
      %v10572 = vpop.f32.mrf.mxu0
      %10573 = vmatprep.mubr.f32.mxu0 0.0
      %10574 = vmatmul.mubr.f32.gmra.mxu0 %v10440
      %v10575 = vpop.f32.mrf.mxu0
      %v10576 = vadd.f32 %v10404, %v10575
      %v10577 = vpop.f32.mrf.mxu0
      %10578 = vmatprep.mubr.f32.mxu0 0.0
      %10579 = vmatmul.mubr.f32.gmra.mxu0 %v10443
      %v10580 = vpop.f32.mrf.mxu0
      %v10581 = vadd.f32 %v10404, %v10580
      %v10582 = vpop.f32.mrf.mxu0
      %10583 = vmatprep.mubr.f32.mxu0 0.0
      %10584 = vmatmul.mubr.f32.gmra.mxu0 %v10446
      %v10585 = vpop.f32.mrf.mxu0
      %v10586 = vadd.f32 %v10404, %v10585
      %v10587 = vpop.f32.mrf.mxu0
      %10588 = vmatprep.mubr.f32.mxu0 0.0
      %10589 = vmatmul.mubr.f32.gmra.mxu0 %v10449
      %v10590 = vpop.f32.mrf.mxu0
      %v10591 = vadd.f32 %v10404, %v10590
      %v10592 = vpop.f32.mrf.mxu0
      %10593 = vmatprep.mubr.f32.mxu0 0.0
      %10594 = vmatmul.mubr.f32.gmra.mxu0 %v10452
      %v10595 = vpop.f32.mrf.mxu0
      %v10596 = vadd.f32 %v10404, %v10595
      %v10597 = vpop.f32.mrf.mxu0
      %10598 = vdwg.mxu0
      %v10599 = vmax.f32 %v10521, 0.0
      %v10600 = vmax.f32 %v10526, 0.0
      %v10601 = vmax.f32 %v10531, 0.0
      %v10602 = vmax.f32 %v10536, 0.0
      %v10603 = vmax.f32 %v10541, 0.0
      %v10604 = vmax.f32 %v10546, 0.0
      %v10605 = vmax.f32 %v10551, 0.0
      %v10606 = vmax.f32 %v10556, 0.0
      %v10607 = vmax.f32 %v10561, 0.0
      %v10608 = vmax.f32 %v10566, 0.0
      %v10609 = vmax.f32 %v10571, 0.0
      %v10610 = vmax.f32 %v10576, 0.0
      %v10611 = vmax.f32 %v10581, 0.0
      %v10612 = vmax.f32 %v10586, 0.0
      %v10613 = vmax.f32 %v10591, 0.0
      %v10614 = vmax.f32 %v10596, 0.0
      %10619 = vrot.lane.b32.xlu0 %v214, 96
      %v10620 = vpop.permute.xlu0 %10619
      %10621 = vrot.lane.b32.xlu0 %v215, 96
      %v10622 = vpop.permute.xlu0 %10621
      %10623 = vrot.lane.b32.xlu0 %v216, 96
      %v10624 = vpop.permute.xlu0 %10623
      %10625 = vrot.lane.b32.xlu0 %v217, 96
      %v10626 = vpop.permute.xlu0 %10625
      %10632 = vrot.lane.b32.xlu0 %v10404, 96
      %v10633 = vpop.permute.xlu0 %10632
      %v10636 = vsel %vm10405, %v10599, 0
      %v10639 = vsel %vm10405, %v10600, 0
      %v10642 = vsel %vm10405, %v10601, 0
      %v10645 = vsel %vm10405, %v10602, 0
      %v10648 = vsel %vm10405, %v10603, 0
      %v10651 = vsel %vm10405, %v10604, 0
      %v10654 = vsel %vm10405, %v10605, 0
      %v10657 = vsel %vm10405, %v10606, 0
      %v10660 = vsel %vm10405, %v10607, 0
      %v10663 = vsel %vm10405, %v10608, 0
      %v10666 = vsel %vm10405, %v10609, 0
      %v10669 = vsel %vm10405, %v10610, 0
      %v10672 = vsel %vm10405, %v10611, 0
      %v10675 = vsel %vm10405, %v10612, 0
      %v10678 = vsel %vm10405, %v10613, 0
      %v10681 = vsel %vm10405, %v10614, 0
      %10683 = vmatprep.subr.mxu0 0.0
      %10684 = vmatpush1.msra.mxu0 0.0
      %10685 = vmatprep.subr.mxu0 0.0
      %10686 = vmatpush1.msra.mxu0 0.0
      %10687 = vmatprep.subr.mxu0 0.0
      %10688 = vmatpush1.msra.mxu0 0.0
      %10689 = vmatprep.subr.mxu0 0.0
      %10690 = vmatpush1.msra.mxu0 0.0
      %10691 = vmatprep.subr.mxu0 0.0
      %10692 = vmatpush1.msra.mxu0 0.0
      %10693 = vmatprep.subr.mxu0 0.0
      %10694 = vmatpush1.msra.mxu0 0.0
      %10695 = vmatprep.subr.mxu0 0.0
      %10696 = vmatpush1.msra.mxu0 0.0
      %10697 = vmatprep.subr.mxu0 0.0
      %10698 = vmatpush1.msra.mxu0 0.0
      %10699 = vmatprep.subr.mxu0 0.0
      %10700 = vmatpush1.msra.mxu0 0.0
      %10701 = vmatprep.subr.mxu0 0.0
      %10702 = vmatpush1.msra.mxu0 0.0
      %10703 = vmatprep.subr.mxu0 0.0
      %10704 = vmatpush1.msra.mxu0 0.0
      %10705 = vmatprep.subr.mxu0 0.0
      %10706 = vmatpush1.msra.mxu0 0.0
      %10707 = vmatprep.subr.mxu0 0.0
      %10708 = vmatpush1.msra.mxu0 %v10626
      %10709 = vmatprep.subr.mxu0 0.0
      %10710 = vmatpush1.msra.mxu0 %v10624
      %10711 = vmatprep.subr.mxu0 0.0
      %10712 = vmatpush1.msra.mxu0 %v10622
      %10713 = vmatprep.subr.mxu0 0.0
      %10714 = vmatpush1.msra.mxu0 %v10620
      %10715 = vmatprep.subr.mxu0 0.0
      %10716 = vmatpush2.msra.mxu0 0.0
      %10717 = vmatprep.subr.mxu0 0.0
      %10718 = vmatpush2.msra.mxu0 0.0
      %10719 = vmatprep.subr.mxu0 0.0
      %10720 = vmatpush2.msra.mxu0 0.0
      %10721 = vmatprep.subr.mxu0 0.0
      %10722 = vmatpush2.msra.mxu0 0.0
      %10723 = vmatprep.subr.mxu0 0.0
      %10724 = vmatpush2.msra.mxu0 0.0
      %10725 = vmatprep.subr.mxu0 0.0
      %10726 = vmatpush2.msra.mxu0 0.0
      %10727 = vmatprep.subr.mxu0 0.0
      %10728 = vmatpush2.msra.mxu0 0.0
      %10729 = vmatprep.subr.mxu0 0.0
      %10730 = vmatpush2.msra.mxu0 0.0
      %10731 = vmatprep.subr.mxu0 0.0
      %10732 = vmatpush2.msra.mxu0 0.0
      %10733 = vmatprep.subr.mxu0 0.0
      %10734 = vmatpush2.msra.mxu0 0.0
      %10735 = vmatprep.subr.mxu0 0.0
      %10736 = vmatpush2.msra.mxu0 0.0
      %10737 = vmatprep.subr.mxu0 0.0
      %10738 = vmatpush2.msra.mxu0 0.0
      %10739 = vmatprep.subr.mxu0 0.0
      %10740 = vmatpush2.msra.mxu0 0.0
      %10741 = vmatprep.subr.mxu0 0.0
      %10742 = vmatpush2.msra.mxu0 0.0
      %10743 = vmatprep.subr.mxu0 0.0
      %10744 = vmatpush2.msra.mxu0 0.0
      %10745 = vmatprep.subr.mxu0 0.0
      %10746 = vmatpush2.msra.mxu0 0.0
      %10747 = vmatprep.mubr.f32.mxu0 0.0
      %10748 = vmatmul.mubr.f32.gmra.mxu0 %v10636
      %v10749 = vpop.f32.mrf.mxu0
      %v10750 = vadd.f32 %v10633, %v10749
      %v10751 = vpop.f32.mrf.mxu0
      %10752 = vmatprep.mubr.f32.mxu0 0.0
      %10753 = vmatmul.mubr.f32.gmra.mxu0 %v10639
      %v10754 = vpop.f32.mrf.mxu0
      %v10755 = vadd.f32 %v10633, %v10754
      %v10756 = vpop.f32.mrf.mxu0
      %10757 = vmatprep.mubr.f32.mxu0 0.0
      %10758 = vmatmul.mubr.f32.gmra.mxu0 %v10642
      %v10759 = vpop.f32.mrf.mxu0
      %v10760 = vadd.f32 %v10633, %v10759
      %v10761 = vpop.f32.mrf.mxu0
      %10762 = vmatprep.mubr.f32.mxu0 0.0
      %10763 = vmatmul.mubr.f32.gmra.mxu0 %v10645
      %v10764 = vpop.f32.mrf.mxu0
      %v10765 = vadd.f32 %v10633, %v10764
      %v10766 = vpop.f32.mrf.mxu0
      %10767 = vmatprep.mubr.f32.mxu0 0.0
      %10768 = vmatmul.mubr.f32.gmra.mxu0 %v10648
      %v10769 = vpop.f32.mrf.mxu0
      %v10770 = vadd.f32 %v10633, %v10769
      %v10771 = vpop.f32.mrf.mxu0
      %10772 = vmatprep.mubr.f32.mxu0 0.0
      %10773 = vmatmul.mubr.f32.gmra.mxu0 %v10651
      %v10774 = vpop.f32.mrf.mxu0
      %v10775 = vadd.f32 %v10633, %v10774
      %v10776 = vpop.f32.mrf.mxu0
      %10777 = vmatprep.mubr.f32.mxu0 0.0
      %10778 = vmatmul.mubr.f32.gmra.mxu0 %v10654
      %v10779 = vpop.f32.mrf.mxu0
      %v10780 = vadd.f32 %v10633, %v10779
      %v10781 = vpop.f32.mrf.mxu0
      %10782 = vmatprep.mubr.f32.mxu0 0.0
      %10783 = vmatmul.mubr.f32.gmra.mxu0 %v10657
      %v10784 = vpop.f32.mrf.mxu0
      %v10785 = vadd.f32 %v10633, %v10784
      %v10786 = vpop.f32.mrf.mxu0
      %10787 = vmatprep.mubr.f32.mxu0 0.0
      %10788 = vmatmul.mubr.f32.gmra.mxu0 %v10660
      %v10789 = vpop.f32.mrf.mxu0
      %v10790 = vadd.f32 %v10633, %v10789
      %v10791 = vpop.f32.mrf.mxu0
      %10792 = vmatprep.mubr.f32.mxu0 0.0
      %10793 = vmatmul.mubr.f32.gmra.mxu0 %v10663
      %v10794 = vpop.f32.mrf.mxu0
      %v10795 = vadd.f32 %v10633, %v10794
      %v10796 = vpop.f32.mrf.mxu0
      %10797 = vmatprep.mubr.f32.mxu0 0.0
      %10798 = vmatmul.mubr.f32.gmra.mxu0 %v10666
      %v10799 = vpop.f32.mrf.mxu0
      %v10800 = vadd.f32 %v10633, %v10799
      %v10801 = vpop.f32.mrf.mxu0
      %10802 = vmatprep.mubr.f32.mxu0 0.0
      %10803 = vmatmul.mubr.f32.gmra.mxu0 %v10669
      %v10804 = vpop.f32.mrf.mxu0
      %v10805 = vadd.f32 %v10633, %v10804
      %v10806 = vpop.f32.mrf.mxu0
      %10807 = vmatprep.mubr.f32.mxu0 0.0
      %10808 = vmatmul.mubr.f32.gmra.mxu0 %v10672
      %v10809 = vpop.f32.mrf.mxu0
      %v10810 = vadd.f32 %v10633, %v10809
      %v10811 = vpop.f32.mrf.mxu0
      %10812 = vmatprep.mubr.f32.mxu0 0.0
      %10813 = vmatmul.mubr.f32.gmra.mxu0 %v10675
      %v10814 = vpop.f32.mrf.mxu0
      %v10815 = vadd.f32 %v10633, %v10814
      %v10816 = vpop.f32.mrf.mxu0
      %10817 = vmatprep.mubr.f32.mxu0 0.0
      %10818 = vmatmul.mubr.f32.gmra.mxu0 %v10678
      %v10819 = vpop.f32.mrf.mxu0
      %v10820 = vadd.f32 %v10633, %v10819
      %v10821 = vpop.f32.mrf.mxu0
      %10822 = vmatprep.mubr.f32.mxu0 0.0
      %10823 = vmatmul.mubr.f32.gmra.mxu0 %v10681
      %v10824 = vpop.f32.mrf.mxu0
      %v10825 = vadd.f32 %v10633, %v10824
      %v10826 = vpop.f32.mrf.mxu0
      %10827 = vdwg.mxu0
      %v10828 = vmax.f32 %v10750, 0.0
      %v10829 = vmax.f32 %v10755, 0.0
      %v10830 = vmax.f32 %v10760, 0.0
      %v10831 = vmax.f32 %v10765, 0.0
      %v10832 = vmax.f32 %v10770, 0.0
      %v10833 = vmax.f32 %v10775, 0.0
      %v10834 = vmax.f32 %v10780, 0.0
      %v10835 = vmax.f32 %v10785, 0.0
      %v10836 = vmax.f32 %v10790, 0.0
      %v10837 = vmax.f32 %v10795, 0.0
      %v10838 = vmax.f32 %v10800, 0.0
      %v10839 = vmax.f32 %v10805, 0.0
      %v10840 = vmax.f32 %v10810, 0.0
      %v10841 = vmax.f32 %v10815, 0.0
      %v10842 = vmax.f32 %v10820, 0.0
      %v10843 = vmax.f32 %v10825, 0.0
      %10845 = vrot.lane.b32.xlu0 %v219, 32
      %v10846 = vpop.permute.xlu0 %10845
      %v10847 = vsel %vm10405, %v10846, 0
      %v10850 = vsel %vm10405, %v10828, 0
      %v10853 = vsel %vm10405, %v10829, 0
      %v10856 = vsel %vm10405, %v10830, 0
      %v10859 = vsel %vm10405, %v10831, 0
      %v10862 = vsel %vm10405, %v10832, 0
      %v10865 = vsel %vm10405, %v10833, 0
      %v10868 = vsel %vm10405, %v10834, 0
      %v10871 = vsel %vm10405, %v10835, 0
      %v10874 = vsel %vm10405, %v10836, 0
      %v10877 = vsel %vm10405, %v10837, 0
      %v10880 = vsel %vm10405, %v10838, 0
      %v10883 = vsel %vm10405, %v10839, 0
      %v10886 = vsel %vm10405, %v10840, 0
      %v10889 = vsel %vm10405, %v10841, 0
      %v10892 = vsel %vm10405, %v10842, 0
      %v10895 = vsel %vm10405, %v10843, 0
      %10897 = vmatprep.subr.mxu0 0.0
      %10898 = vmatpush1.xpose.msra.mxu0 %v10895
      %10899 = vmatprep.subr.mxu0 0.0
      %10900 = vmatpush1.xpose.msra.mxu0 %v10892
      %10901 = vmatprep.subr.mxu0 0.0
      %10902 = vmatpush1.xpose.msra.mxu0 %v10889
      %10903 = vmatprep.subr.mxu0 0.0
      %10904 = vmatpush1.xpose.msra.mxu0 %v10886
      %10905 = vmatprep.subr.mxu0 0.0
      %10906 = vmatpush1.xpose.msra.mxu0 %v10883
      %10907 = vmatprep.subr.mxu0 0.0
      %10908 = vmatpush1.xpose.msra.mxu0 %v10880
      %10909 = vmatprep.subr.mxu0 0.0
      %10910 = vmatpush1.xpose.msra.mxu0 %v10877
      %10911 = vmatprep.subr.mxu0 0.0
      %10912 = vmatpush1.xpose.msra.mxu0 %v10874
      %10913 = vmatprep.subr.mxu0 0.0
      %10914 = vmatpush1.xpose.msra.mxu0 %v10871
      %10915 = vmatprep.subr.mxu0 0.0
      %10916 = vmatpush1.xpose.msra.mxu0 %v10868
      %10917 = vmatprep.subr.mxu0 0.0
      %10918 = vmatpush1.xpose.msra.mxu0 %v10865
      %10919 = vmatprep.subr.mxu0 0.0
      %10920 = vmatpush1.xpose.msra.mxu0 %v10862
      %10921 = vmatprep.subr.mxu0 0.0
      %10922 = vmatpush1.xpose.msra.mxu0 %v10859
      %10923 = vmatprep.subr.mxu0 0.0
      %10924 = vmatpush1.xpose.msra.mxu0 %v10856
      %10925 = vmatprep.subr.mxu0 0.0
      %10926 = vmatpush1.xpose.msra.mxu0 %v10853
      %10927 = vmatprep.subr.mxu0 0.0
      %10928 = vmatpush1.xpose.msra.mxu0 %v10850
      %10929 = vmatprep.subr.mxu0 0.0
      %10930 = vmatpush2.xpose.msra.mxu0 0.0
      %10931 = vmatprep.subr.mxu0 0.0
      %10932 = vmatpush2.xpose.msra.mxu0 0.0
      %10933 = vmatprep.subr.mxu0 0.0
      %10934 = vmatpush2.xpose.msra.mxu0 0.0
      %10935 = vmatprep.subr.mxu0 0.0
      %10936 = vmatpush2.xpose.msra.mxu0 0.0
      %10937 = vmatprep.subr.mxu0 0.0
      %10938 = vmatpush2.xpose.msra.mxu0 0.0
      %10939 = vmatprep.subr.mxu0 0.0
      %10940 = vmatpush2.xpose.msra.mxu0 0.0
      %10941 = vmatprep.subr.mxu0 0.0
      %10942 = vmatpush2.xpose.msra.mxu0 0.0
      %10943 = vmatprep.subr.mxu0 0.0
      %10944 = vmatpush2.xpose.msra.mxu0 0.0
      %10945 = vmatprep.subr.mxu0 0.0
      %10946 = vmatpush2.xpose.msra.mxu0 0.0
      %10947 = vmatprep.subr.mxu0 0.0
      %10948 = vmatpush2.xpose.msra.mxu0 0.0
      %10949 = vmatprep.subr.mxu0 0.0
      %10950 = vmatpush2.xpose.msra.mxu0 0.0
      %10951 = vmatprep.subr.mxu0 0.0
      %10952 = vmatpush2.xpose.msra.mxu0 0.0
      %10953 = vmatprep.subr.mxu0 0.0
      %10954 = vmatpush2.xpose.msra.mxu0 0.0
      %10955 = vmatprep.subr.mxu0 0.0
      %10956 = vmatpush2.xpose.msra.mxu0 0.0
      %10957 = vmatprep.subr.mxu0 0.0
      %10958 = vmatpush2.xpose.msra.mxu0 0.0
      %10959 = vmatprep.subr.mxu0 0.0
      %10960 = vmatpush2.xpose.msra.mxu0 0.0
      %10961 = vmatprep.mubr.f32.mxu0 0.0
      %10962 = vmatmul.mubr.f32.gmra.mxu0 %v10847
      %v10963 = vpop.f32.mrf.mxu0
      %v10964 = vadd.f32 0.0, %v10963
      %v10965 = vpop.f32.mrf.mxu0
      %10966 = vdwg.mxu0
      %10968 = vset.pattern.permute.xlu0 64
      %10969 = vperm.xlu0 %10968, %v218
      %v10970 = vpop.permute.xlu0 %10969
      %v10972 = vadd.f32 %v10964, %v10970
      %v10973 = vtanh.pop %v10972
      %10974 = vst [vmem:[%s195] sm:$0x1] %v10973
      %p10975 = scmp.lt.s32.totalorder %s15, 1
      %s10976 = scalar_select %p10975, %s15, 1
      %s10977 = scalar_lea.vmem %s4, %s10976
      // Predicated region
      $region37: #{predator_attn_actor.1} parent=35 // pred_check
        %p10978 = pneg %p122
      $region38: #{predator_attn_actor.1} parent=35 // pred_check_branch
        %10980 = sbr.rel (%p10978) target = $region40
      $region39: #{predator_attn_actor.1} parent=35 // pred_region
        _
      $region40: #{predator_attn_actor.1} parent=35 // pred_fallthru
        _
    $region36: #{predator_attn_actor.1} parent=5 // pred_fallthru
      _
    %p10981 = scmp.le.s32.totalorder 2, %s10
    // Predicated region
    $region41: #{predator_attn_actor.1} parent=5 // pred_check
      %p10982 = pneg %p10981
    $region42: #{predator_attn_actor.1} parent=5 // pred_check_branch
      %10984 = sbr.rel (%p10982) target = $region44
    $region43: #{predator_attn_actor.1} parent=5 // pred_region
      %s10985 = ssub.s32 %s10, 2
      // Predicated region
      $region45: #{predator_attn_actor.1} parent=43 // pred_check
        %p10986 = pneg %p128
      $region46: #{predator_attn_actor.1} parent=43 // pred_check_branch
        %10988 = sbr.rel (%p10986) target = $region48
      $region47: #{predator_attn_actor.1} parent=43 // pred_region
        %p10989 = scmp.lt.s32.totalorder %s16, 1
        %s10990 = scalar_select %p10989, %s16, 1
        %s10991 = scalar_lea.vmem %s4, %s10990
      $region48: #{predator_attn_actor.1} parent=43 // pred_fallthru
        _
    $region44: #{predator_attn_actor.1} parent=5 // pred_fallthru
      _
  $region6: #{predator_attn_actor.1} parent=0 // loop_footer
    %s14 = sadd.s32 1, %s10
  $region7: #{predator_attn_actor.1} parent=0 // loop_footer_branch
    %9 = sbr.rel target = $region3
  $region8: #{predator_attn_actor.1} parent=0 // loop_exit
    _

</llo_original>
